<compile_context>
chip_gen: v7x
topology: tpu7x:2x2x1
jax: 0.10.0
libtpu: 0.0.40
codegen_flags: <defaults>
</compile_context>

<pallas_src>
import jax
import jax.numpy as jnp
from jax.experimental import pallas as pl
from jax.experimental.pallas import tpu as pltpu


def _leaky(x, slope=0.33):
    # F.leaky_relu(x, negative_slope=0.33)
    return jnp.where(x > 0, x, slope * x)


def _round_up(n, m):
    return ((n + m - 1) // m) * m


def brainnet_kernel(xf_ref, xt_ref, wc_ref, wr_ref, w2_ref, b2_ref,
                    w3_ref, b3_ref, w4_ref, b4_ref, w5_ref, b5_ref,
                    out_ref, concept_ref):
    f32 = jnp.float32
    bf16 = jnp.bfloat16

    # ---- E2E as two lane-dense MXU matmuls (no (B,P1,d,d) intermediate) -------
    # rsT[i, b, j*P1+p] = sum_j' x[b,i,j'] * w1[p,i,j']   (rowsum, j-broadcast
    # baked into WR; batched over row i)
    rsT = jax.lax.dot_general(
        xt_ref[...], wr_ref[...],
        dimension_numbers=(((2,), (1,)), ((0,), (0,))),
        preferred_element_type=f32)                         # (d, TB, d*P1)

    # colsum[b, j*P1+p] = sum_i' x[b,i',j] * w1[p,i',j]
    colsum = jnp.dot(xf_ref[...], wc_ref[...],
                     preferred_element_type=f32)            # (TB, d*P1)

    # h1[i, b, j*P1+p] = leaky(rowsum[b,p,i] + colsum[b,p,j])  — lane-dense 512
    h1 = _leaky(rsT + colsum[None, :, :]).astype(bf16)      # (d, TB, d*P1)

    # ---- E2N: one batched contraction over (j, p); batch dim = row i ----------
    out2 = jax.lax.dot_general(
        h1, w2_ref[...],
        dimension_numbers=(((2,), (1,)), ((0,), (0,))),
        preferred_element_type=f32)                         # (d, TB, P2)
    out2 = _leaky(out2 + b2_ref[...]).astype(bf16)

    # ---- N2G: batched contraction over q, then a cheap reduce over rows i -----
    # (Mosaic does not reliably lower a dot_general contracting both i and q,
    # so keep the 16-slice leading-axis VPU reduce — it is negligible.)
    parts = jax.lax.dot_general(
        out2, w3_ref[...],
        dimension_numbers=(((2,), (1,)), ((0,), (0,))),
        preferred_element_type=f32)                         # (d, TB, P3)
    out3 = _leaky(jnp.sum(parts, axis=0) + b3_ref[...])     # (TB, P3)

    # ---- dense1 -> concept -----------------------------------------------------
    concept = _leaky(jnp.dot(out3.astype(bf16), w4_ref[...],
                             preferred_element_type=f32) + b4_ref[...])
    concept_ref[...] = concept                              # (TB, H) f32

    # ---- dense2 (N = 1): VPU/XLU lane reduce instead of an MXU dot -------------
    logits = jnp.sum(concept * w5_ref[...], axis=-1, keepdims=True) + b5_ref[...]
    out_ref[...] = jax.nn.sigmoid(logits)                   # (TB, 1)


def brainnet_forward(x, params, batch_tile=256):
    """x: (B, 1, d, d) NCHW like the torch module. Returns (out (B,1), concept (B,256))."""
    B, C, d, _ = x.shape
    assert C == 1
    w1 = params["w1"][:, 0]                                 # (P1, d, d)
    w2, b2 = params["w2"], params["b2"]
    w3, b3 = params["w3"], params["b3"]
    w4, b4 = params["w4"], params["b4"]
    w5, b5 = params["w5"], params["b5"]
    P1, P2, P3, H = w1.shape[0], w2.shape[0], w3.shape[0], w4.shape[0]
    bf16 = jnp.bfloat16

    # ---- batch tiling ----------------------------------------------------------
    # Tile is always a multiple of 8; keep >= 2 grid steps when the padded batch
    # allows it so the "parallel" axis can shard across both v7x TensorCores.
    batch_tile = max(8, _round_up(int(batch_tile), 8))
    B_pad8 = _round_up(B, 8)
    if B_pad8 >= 16:
        TB = min(batch_tile, _round_up((B_pad8 + 1) // 2, 8))
    else:
        TB = B_pad8
    B_pad = _round_up(B, TB)

    # ---- input re-layouts (bf16: only batch-varying, per-step streamed data) --
    x_sq = x[:, 0].astype(bf16)                             # (B, d, d)
    x_flat = x_sq.reshape(B, d * d)                         # (B, 256)
    xT = jnp.transpose(x_sq, (1, 0, 2))                     # (d, B, d)  [i, b, j]
    if B_pad != B:
        x_flat = jnp.pad(x_flat, ((0, B_pad - B), (0, 0)))
        xT = jnp.pad(xT, ((0, 0), (0, B_pad - B), (0, 0)))

    # ---- weight re-layouts (done once on params, outside the kernel) ----------
    w1f = w1.reshape(P1, d * d)                             # (P1, 256)
    jj = jnp.arange(d * d) % d
    onehot_j = (jj[:, None] == jnp.arange(d)[None, :]).astype(w1f.dtype)   # (256, d)
    # WC[k, j*P1 + p] = w1f[p, k] if (k % d == j) else 0
    WC = (onehot_j[:, :, None] * w1f.T[:, None, :]).reshape(d * d, d * P1).astype(bf16)
    # WR[i, j', j*P1 + p] = w1[p, i, j']  (independent of j -> baked broadcast)
    w1_t = jnp.transpose(w1, (1, 2, 0))                     # (d, d, P1)   [i, j', p]
    WR = jnp.broadcast_to(w1_t[:, :, None, :], (d, d, d, P1)).reshape(
        d, d, d * P1).astype(bf16)                          # (d, d, d*P1)
    w2_k = jnp.transpose(w2, (2, 3, 1, 0)).reshape(d, d * P1, P2).astype(bf16)
    w3b = jnp.transpose(w3[:, :, :, 0], (2, 1, 0)).astype(bf16)   # (d, P2, P3)
    w4_k = w4.T.astype(bf16)                                # (P3, H)
    w5_row = w5.reshape(1, H)                               # keep f32 (VPU reduce)
    b2_k = b2.reshape(1, P2)
    b3_k = b3.reshape(1, P3)
    b4_k = b4.reshape(1, H)
    b5_k = b5.reshape(1, 1)

    grid = (B_pad // TB,)
    in_specs = [
        pl.BlockSpec((TB, d * d), lambda b: (b, 0)),            # x_flat
        pl.BlockSpec((d, TB, d), lambda b: (0, b, 0)),          # xT
        pl.BlockSpec((d * d, d * P1), lambda b: (0, 0)),        # WC
        pl.BlockSpec((d, d, d * P1), lambda b: (0, 0, 0)),      # WR
        pl.BlockSpec((d, d * P1, P2), lambda b: (0, 0, 0)),     # w2_k
        pl.BlockSpec((1, P2), lambda b: (0, 0)),                # b2
        pl.BlockSpec((d, P2, P3), lambda b: (0, 0, 0)),         # w3b
        pl.BlockSpec((1, P3), lambda b: (0, 0)),                # b3
        pl.BlockSpec((P3, H), lambda b: (0, 0)),                # w4_k
        pl.BlockSpec((1, H), lambda b: (0, 0)),                 # b4
        pl.BlockSpec((1, H), lambda b: (0, 0)),                 # w5_row
        pl.BlockSpec((1, 1), lambda b: (0, 0)),                 # b5
    ]
    out_specs = (
        pl.BlockSpec((TB, 1), lambda b: (b, 0)),
        pl.BlockSpec((TB, H), lambda b: (b, 0)),
    )

    out, concept = pl.pallas_call(
        brainnet_kernel,
        out_shape=(jax.ShapeDtypeStruct((B_pad, 1), jnp.float32),
                   jax.ShapeDtypeStruct((B_pad, H), jnp.float32)),
        grid=grid,
        in_specs=in_specs,
        out_specs=out_specs,
        compiler_params=pltpu.CompilerParams(
            dimension_semantics=("parallel",),
            # <= default on v6e/v7x; raises v5e's 16 MiB scoped default enough
            # for the TB=256 f32 intermediates (~20 MiB peak).
            vmem_limit_bytes=32 * 1024 * 1024),
    )(x_flat, xT, WC, WR, w2_k, b2_k, w3b, b3_k, w4_k, b4_k, w5_row, b5_k)
    return out[:B], concept[:B]


def brainnet_reference(x, params):
    """Pure-JAX f32 reference mirroring the torch forward exactly."""
    xs = x[:, 0]                                            # (B,d,d)
    w1 = params["w1"][:, 0]                                 # (P1,d,d)
    xw = xs[:, None] * w1[None]                             # (B,P1,d,d)
    rowsum = xw.sum(axis=3)                                 # (B,P1,d)
    colsum = xw.sum(axis=2)                                 # (B,P1,d)
    h1 = _leaky(rowsum[:, :, :, None] + colsum[:, :, None, :])      # (B,P1,d,d)
    out2 = jnp.einsum('bpij,qpij->bqi', h1, params["w2"],
                      precision='highest') + params["b2"][None, :, None]
    out2 = _leaky(out2)
    out3 = jnp.einsum('bqi,rqi->br', out2, params["w3"][:, :, :, 0],
                      precision='highest') + params["b3"]
    out3 = _leaky(out3)
    concept = _leaky(out3 @ params["w4"].T + params["b4"])
    out = jax.nn.sigmoid(concept @ params["w5"].T + params["b5"])
    return out, concept


def make_params(key, d):
    P1, P2, P3, H = 32, 64, 128, 256
    ks = jax.random.split(key, 8)

    def init(k, shape, fan_in):
        return (jax.random.normal(k, shape, jnp.float32) / jnp.sqrt(fan_in)).astype(jnp.float32)

    return {
        # EdgeToEdgeElementWis(1, 32): weight (32, 1, d, d), no bias
        "w1": init(ks[0], (P1, 1, d, d), 1 * d * d),
        # EdgeToNodeElementWis(32, 64): weight (64, 32, d, d), bias zeros
        "w2": init(ks[1], (P2, P1, d, d), P1 * d * d),
        "b2": jnp.zeros((P2,), jnp.float32),
        # N2G Conv2d(64, 128, (d, 1)): weight (128, 64, d, 1), bias (128,)
        "w3": init(ks[2], (P3, P2, d, 1), P2 * d),
        "b3": 0.01 * jax.random.normal(ks[3], (P3,), jnp.float32),
        # dense1: Linear(128, 256)
        "w4": init(ks[4], (H, P3), P3),
        "b4": 0.01 * jax.random.normal(ks[5], (H,), jnp.float32),
        # dense2: Linear(256, 1)
        "w5": init(ks[6], (1, H), H),
        "b5": 0.01 * jax.random.normal(ks[7], (1,), jnp.float32),
    }


if __name__ == "__main__":
    d = 16
    key = jax.random.PRNGKey(0)
    kx, kp, kx2 = jax.random.split(key, 3)
    params = make_params(kp, d)

    fwd = jax.jit(brainnet_forward)

    # Small-batch path (single grid step).
    B = 2
    x = jax.random.normal(kx, (B, 1, d, d), jnp.float32)
    out, concept = fwd(x, params)
    out = jax.block_until_ready(out)
    concept = jax.block_until_ready(concept)
    ref_out, ref_concept = brainnet_reference(x, params)
    assert out.shape == (B, 1) and concept.shape == (B, 256)
    # bf16 MXU operands / bf16 inputs with f32 accumulation vs a pure-f32
    # reference: typical |err| ~1e-3 on O(0.05-0.5) activations, so 2e-2 is safe.
    assert jnp.allclose(concept, ref_concept, atol=2e-2, rtol=2e-2)
    assert jnp.allclose(out, ref_out, atol=2e-2, rtol=2e-2)

    # Multi-tile path (exercises the batch grid + padding).
    B2 = 24
    x2 = jax.random.normal(kx2, (B2, 1, d, d), jnp.float32)
    out2, concept2 = fwd(x2, params)
    out2 = jax.block_until_ready(out2)
    concept2 = jax.block_until_ready(concept2)
    ref_out2, ref_concept2 = brainnet_reference(x2, params)
    assert out2.shape == (B2, 1) and concept2.shape == (B2, 256)
    assert jnp.allclose(concept2, ref_concept2, atol=2e-2, rtol=2e-2)
    assert jnp.allclose(out2, ref_out2, atol=2e-2, rtol=2e-2)

    print("KERNEL_OK")
</pallas_src>

<mosaic_0001>
module attributes {stable_mosaic.version = 11 : i64} {
  func.func @brainnet_kernel(%arg0: i32, %arg1: memref<8x256xbf16, #tpu.memory_space<vmem>>, %arg2: memref<16x8x16xbf16, #tpu.memory_space<vmem>>, %arg3: memref<256x512xbf16, #tpu.memory_space<vmem>>, %arg4: memref<16x16x512xbf16, #tpu.memory_space<vmem>>, %arg5: memref<16x512x64xbf16, #tpu.memory_space<vmem>>, %arg6: memref<1x64xf32, #tpu.memory_space<vmem>>, %arg7: memref<16x64x128xbf16, #tpu.memory_space<vmem>>, %arg8: memref<1x128xf32, #tpu.memory_space<vmem>>, %arg9: memref<128x256xbf16, #tpu.memory_space<vmem>>, %arg10: memref<1x256xf32, #tpu.memory_space<vmem>>, %arg11: memref<1x256xf32, #tpu.memory_space<vmem>>, %arg12: memref<1x1xf32, #tpu.memory_space<vmem>>, %arg13: memref<8x1xf32, #tpu.memory_space<vmem>>, %arg14: memref<8x256xf32, #tpu.memory_space<vmem>>) attributes {dimension_semantics = [#tpu.dimension_semantics<parallel>], iteration_bounds = array<i64: 1>, scalar_prefetch = 0 : i64, scratch_operands = 0 : i64, tpu.core_type = #tpu.core_type<tc>, window_params = [{transform_indices = @transform_0, window_bounds = array<i64: 8, 256>}, {transform_indices = @transform_1, window_bounds = array<i64: 16, 8, 16>}, {pipeline_mode = #tpu.pipeline_mode<synchronous>, transform_indices = @transform_2, window_bounds = array<i64: 256, 512>}, {pipeline_mode = #tpu.pipeline_mode<synchronous>, transform_indices = @transform_3, window_bounds = array<i64: 16, 16, 512>}, {pipeline_mode = #tpu.pipeline_mode<synchronous>, transform_indices = @transform_4, window_bounds = array<i64: 16, 512, 64>}, {pipeline_mode = #tpu.pipeline_mode<synchronous>, transform_indices = @transform_5, window_bounds = array<i64: 1, 64>}, {pipeline_mode = #tpu.pipeline_mode<synchronous>, transform_indices = @transform_6, window_bounds = array<i64: 16, 64, 128>}, {pipeline_mode = #tpu.pipeline_mode<synchronous>, transform_indices = @transform_7, window_bounds = array<i64: 1, 128>}, {pipeline_mode = #tpu.pipeline_mode<synchronous>, transform_indices = @transform_8, window_bounds = array<i64: 128, 256>}, {pipeline_mode = #tpu.pipeline_mode<synchronous>, transform_indices = @transform_9, window_bounds = array<i64: 1, 256>}, {pipeline_mode = #tpu.pipeline_mode<synchronous>, transform_indices = @transform_10, window_bounds = array<i64: 1, 256>}, {pipeline_mode = #tpu.pipeline_mode<synchronous>, transform_indices = @transform_11, window_bounds = array<i64: 1, 1>}, {transform_indices = @transform_12, window_bounds = array<i64: 8, 1>}, {transform_indices = @transform_13, window_bounds = array<i64: 8, 256>}]} {
    %c0 = arith.constant 0 : index
    %c0_0 = arith.constant 0 : index
    %c0_1 = arith.constant 0 : index
    %0 = vector.load %arg2[%c0, %c0_0, %c0_1] : memref<16x8x16xbf16, #tpu.memory_space<vmem>>, vector<16x8x16xbf16>
    %c0_2 = arith.constant 0 : index
    %c0_3 = arith.constant 0 : index
    %c0_4 = arith.constant 0 : index
    %1 = vector.load %arg4[%c0_2, %c0_3, %c0_4] : memref<16x16x512xbf16, #tpu.memory_space<vmem>>, vector<16x16x512xbf16>
    %cst = arith.constant dense<0.000000e+00> : vector<16x8x512xf32>
    %2 = tpu.matmul %0, %1, %cst {dimension_numbers = #tpu.dot_dimension_numbers<[2], [1], [1], [2], [0, 0, 0, 1, 1, 2], [0], [0]>} : vector<16x8x16xbf16>, vector<16x16x512xbf16>, vector<16x8x512xf32> -> vector<16x8x512xf32>
    %c0_5 = arith.constant 0 : index
    %c0_6 = arith.constant 0 : index
    %3 = vector.load %arg1[%c0_5, %c0_6] : memref<8x256xbf16, #tpu.memory_space<vmem>>, vector<8x256xbf16>
    %c0_7 = arith.constant 0 : index
    %c0_8 = arith.constant 0 : index
    %4 = vector.load %arg3[%c0_7, %c0_8] : memref<256x512xbf16, #tpu.memory_space<vmem>>, vector<256x512xbf16>
    %cst_9 = arith.constant dense<0.000000e+00> : vector<8x512xf32>
    %5 = tpu.matmul %3, %4, %cst_9 {dimension_numbers = #tpu.dot_dimension_numbers<[1], [0], [0], [1], [0, 0, 1, 1], [], []>} : vector<8x256xbf16>, vector<256x512xbf16>, vector<8x512xf32> -> vector<8x512xf32>
    %6 = vector.shape_cast %5 : vector<8x512xf32> to vector<1x8x512xf32>
    %7 = vector.broadcast %6 : vector<1x8x512xf32> to vector<16x8x512xf32>
    %8 = arith.addf %2, %7 : vector<16x8x512xf32>
    %cst_10 = arith.constant 0.000000e+00 : f32
    %9 = vector.broadcast %cst_10 : f32 to vector<16x8x512xf32>
    %10 = arith.cmpf ogt, %8, %9 : vector<16x8x512xf32>
    %cst_11 = arith.constant 3.300000e-01 : f32
    %11 = vector.broadcast %cst_11 : f32 to vector<16x8x512xf32>
    %12 = arith.mulf %11, %8 : vector<16x8x512xf32>
    %13 = arith.select %10, %8, %12 : vector<16x8x512xi1>, vector<16x8x512xf32>
    %14 = arith.truncf %13 : vector<16x8x512xf32> to vector<16x8x512xbf16>
    %c0_12 = arith.constant 0 : index
    %c0_13 = arith.constant 0 : index
    %c0_14 = arith.constant 0 : index
    %15 = vector.load %arg5[%c0_12, %c0_13, %c0_14] : memref<16x512x64xbf16, #tpu.memory_space<vmem>>, vector<16x512x64xbf16>
    %cst_15 = arith.constant dense<0.000000e+00> : vector<16x8x64xf32>
    %16 = tpu.matmul %14, %15, %cst_15 {dimension_numbers = #tpu.dot_dimension_numbers<[2], [1], [1], [2], [0, 0, 0, 1, 1, 2], [0], [0]>} : vector<16x8x512xbf16>, vector<16x512x64xbf16>, vector<16x8x64xf32> -> vector<16x8x64xf32>
    %c0_16 = arith.constant 0 : index
    %c0_17 = arith.constant 0 : index
    %17 = vector.load %arg6[%c0_16, %c0_17] : memref<1x64xf32, #tpu.memory_space<vmem>>, vector<1x64xf32>
    %18 = vector.shape_cast %17 : vector<1x64xf32> to vector<1x1x64xf32>
    %19 = vector.broadcast %18 : vector<1x1x64xf32> to vector<16x8x64xf32>
    %20 = arith.addf %16, %19 : vector<16x8x64xf32>
    %cst_18 = arith.constant 0.000000e+00 : f32
    %21 = vector.broadcast %cst_18 : f32 to vector<16x8x64xf32>
    %22 = arith.cmpf ogt, %20, %21 : vector<16x8x64xf32>
    %cst_19 = arith.constant 3.300000e-01 : f32
    %23 = vector.broadcast %cst_19 : f32 to vector<16x8x64xf32>
    %24 = arith.mulf %23, %20 : vector<16x8x64xf32>
    %25 = arith.select %22, %20, %24 : vector<16x8x64xi1>, vector<16x8x64xf32>
    %26 = arith.truncf %25 : vector<16x8x64xf32> to vector<16x8x64xbf16>
    %c0_20 = arith.constant 0 : index
    %c0_21 = arith.constant 0 : index
    %c0_22 = arith.constant 0 : index
    %27 = vector.load %arg7[%c0_20, %c0_21, %c0_22] : memref<16x64x128xbf16, #tpu.memory_space<vmem>>, vector<16x64x128xbf16>
    %cst_23 = arith.constant dense<0.000000e+00> : vector<16x8x128xf32>
    %28 = tpu.matmul %26, %27, %cst_23 {dimension_numbers = #tpu.dot_dimension_numbers<[2], [1], [1], [2], [0, 0, 0, 1, 1, 2], [0], [0]>} : vector<16x8x64xbf16>, vector<16x64x128xbf16>, vector<16x8x128xf32> -> vector<16x8x128xf32>
    %cst_24 = arith.constant dense<0.000000e+00> : vector<8x128xf32>
    %29 = vector.multi_reduction <add>, %28, %cst_24 [0] : vector<16x8x128xf32> to vector<8x128xf32>
    %c0_25 = arith.constant 0 : index
    %c0_26 = arith.constant 0 : index
    %30 = vector.load %arg8[%c0_25, %c0_26] : memref<1x128xf32, #tpu.memory_space<vmem>>, vector<1x128xf32>
    %31 = vector.broadcast %30 : vector<1x128xf32> to vector<8x128xf32>
    %32 = arith.addf %29, %31 : vector<8x128xf32>
    %cst_27 = arith.constant 0.000000e+00 : f32
    %33 = vector.broadcast %cst_27 : f32 to vector<8x128xf32>
    %34 = arith.cmpf ogt, %32, %33 : vector<8x128xf32>
    %cst_28 = arith.constant 3.300000e-01 : f32
    %35 = vector.broadcast %cst_28 : f32 to vector<8x128xf32>
    %36 = arith.mulf %35, %32 : vector<8x128xf32>
    %37 = arith.select %34, %32, %36 : vector<8x128xi1>, vector<8x128xf32>
    %38 = arith.truncf %37 : vector<8x128xf32> to vector<8x128xbf16>
    %c0_29 = arith.constant 0 : index
    %c0_30 = arith.constant 0 : index
    %39 = vector.load %arg9[%c0_29, %c0_30] : memref<128x256xbf16, #tpu.memory_space<vmem>>, vector<128x256xbf16>
    %cst_31 = arith.constant dense<0.000000e+00> : vector<8x256xf32>
    %40 = tpu.matmul %38, %39, %cst_31 {dimension_numbers = #tpu.dot_dimension_numbers<[1], [0], [0], [1], [0, 0, 1, 1], [], []>} : vector<8x128xbf16>, vector<128x256xbf16>, vector<8x256xf32> -> vector<8x256xf32>
    %c0_32 = arith.constant 0 : index
    %c0_33 = arith.constant 0 : index
    %41 = vector.load %arg10[%c0_32, %c0_33] : memref<1x256xf32, #tpu.memory_space<vmem>>, vector<1x256xf32>
    %42 = vector.broadcast %41 : vector<1x256xf32> to vector<8x256xf32>
    %43 = arith.addf %40, %42 : vector<8x256xf32>
    %cst_34 = arith.constant 0.000000e+00 : f32
    %44 = vector.broadcast %cst_34 : f32 to vector<8x256xf32>
    %45 = arith.cmpf ogt, %43, %44 : vector<8x256xf32>
    %cst_35 = arith.constant 3.300000e-01 : f32
    %46 = vector.broadcast %cst_35 : f32 to vector<8x256xf32>
    %47 = arith.mulf %46, %43 : vector<8x256xf32>
    %48 = arith.select %45, %43, %47 : vector<8x256xi1>, vector<8x256xf32>
    %c0_36 = arith.constant 0 : index
    %c0_37 = arith.constant 0 : index
    %49 = vector.load %arg14[%c0_36, %c0_37] : memref<8x256xf32, #tpu.memory_space<vmem>>, vector<8x256xf32>
    tpu.vector_store %arg14[%c0_36, %c0_37], %48 {strides = array<i32>} : memref<8x256xf32, #tpu.memory_space<vmem>>, vector<8x256xf32>,
    %c0_38 = arith.constant 0 : index
    %c0_39 = arith.constant 0 : index
    %50 = vector.load %arg11[%c0_38, %c0_39] : memref<1x256xf32, #tpu.memory_space<vmem>>, vector<1x256xf32>
    %51 = vector.broadcast %50 : vector<1x256xf32> to vector<8x256xf32>
    %52 = arith.mulf %48, %51 : vector<8x256xf32>
    %cst_40 = arith.constant dense<0.000000e+00> : vector<8xf32>
    %53 = vector.multi_reduction <add>, %52, %cst_40 [1] : vector<8x256xf32> to vector<8xf32>
    %54 = vector.shape_cast %53 : vector<8xf32> to vector<8x1xf32>
    %c0_41 = arith.constant 0 : index
    %c0_42 = arith.constant 0 : index
    %55 = vector.load %arg12[%c0_41, %c0_42] : memref<1x1xf32, #tpu.memory_space<vmem>>, vector<1x1xf32>
    %56 = vector.broadcast %55 : vector<1x1xf32> to vector<8x1xf32>
    %57 = arith.addf %54, %56 : vector<8x1xf32>
    %58 = arith.negf %57 : vector<8x1xf32>
    %59 = math.exp %58 : vector<8x1xf32>
    %cst_43 = arith.constant 1.000000e+00 : f32
    %60 = vector.broadcast %cst_43 : f32 to vector<8x1xf32>
    %61 = arith.addf %60, %59 : vector<8x1xf32>
    %62 = arith.divf %60, %61 : vector<8x1xf32>
    %c0_44 = arith.constant 0 : index
    %c0_45 = arith.constant 0 : index
    %63 = vector.load %arg13[%c0_44, %c0_45] : memref<8x1xf32, #tpu.memory_space<vmem>>, vector<8x1xf32>
    tpu.vector_store %arg13[%c0_44, %c0_45], %62 {strides = array<i32>} : memref<8x1xf32, #tpu.memory_space<vmem>>, vector<8x1xf32>,
    return
  }
  func.func @transform_0(%arg0: i32) -> (i32, i32) {
    %c0_i32 = arith.constant 0 : i32
    %c0_i32_0 = arith.constant 0 : i32
    return %arg0, %c0_i32 : i32, i32
  }
  func.func @transform_1(%arg0: i32) -> (i32, i32, i32) {
    %c0_i32 = arith.constant 0 : i32
    %c0_i32_0 = arith.constant 0 : i32
    %c0_i32_1 = arith.constant 0 : i32
    return %c0_i32, %arg0, %c0_i32_0 : i32, i32, i32
  }
  func.func @transform_2(%arg0: i32) -> (i32, i32) {
    %c0_i32 = arith.constant 0 : i32
    %c0_i32_0 = arith.constant 0 : i32
    %c0_i32_1 = arith.constant 0 : i32
    return %c0_i32, %c0_i32_0 : i32, i32
  }
  func.func @transform_3(%arg0: i32) -> (i32, i32, i32) {
    %c0_i32 = arith.constant 0 : i32
    %c0_i32_0 = arith.constant 0 : i32
    %c0_i32_1 = arith.constant 0 : i32
    %c0_i32_2 = arith.constant 0 : i32
    return %c0_i32, %c0_i32_0, %c0_i32_1 : i32, i32, i32
  }
  func.func @transform_4(%arg0: i32) -> (i32, i32, i32) {
    %c0_i32 = arith.constant 0 : i32
    %c0_i32_0 = arith.constant 0 : i32
    %c0_i32_1 = arith.constant 0 : i32
    %c0_i32_2 = arith.constant 0 : i32
    return %c0_i32, %c0_i32_0, %c0_i32_1 : i32, i32, i32
  }
  func.func @transform_5(%arg0: i32) -> (i32, i32) {
    %c0_i32 = arith.constant 0 : i32
    %c0_i32_0 = arith.constant 0 : i32
    %c0_i32_1 = arith.constant 0 : i32
    return %c0_i32, %c0_i32_0 : i32, i32
  }
  func.func @transform_6(%arg0: i32) -> (i32, i32, i32) {
    %c0_i32 = arith.constant 0 : i32
    %c0_i32_0 = arith.constant 0 : i32
    %c0_i32_1 = arith.constant 0 : i32
    %c0_i32_2 = arith.constant 0 : i32
    return %c0_i32, %c0_i32_0, %c0_i32_1 : i32, i32, i32
  }
  func.func @transform_7(%arg0: i32) -> (i32, i32) {
    %c0_i32 = arith.constant 0 : i32
    %c0_i32_0 = arith.constant 0 : i32
    %c0_i32_1 = arith.constant 0 : i32
    return %c0_i32, %c0_i32_0 : i32, i32
  }
  func.func @transform_8(%arg0: i32) -> (i32, i32) {
    %c0_i32 = arith.constant 0 : i32
    %c0_i32_0 = arith.constant 0 : i32
    %c0_i32_1 = arith.constant 0 : i32
    return %c0_i32, %c0_i32_0 : i32, i32
  }
  func.func @transform_9(%arg0: i32) -> (i32, i32) {
    %c0_i32 = arith.constant 0 : i32
    %c0_i32_0 = arith.constant 0 : i32
    %c0_i32_1 = arith.constant 0 : i32
    return %c0_i32, %c0_i32_0 : i32, i32
  }
  func.func @transform_10(%arg0: i32) -> (i32, i32) {
    %c0_i32 = arith.constant 0 : i32
    %c0_i32_0 = arith.constant 0 : i32
    %c0_i32_1 = arith.constant 0 : i32
    return %c0_i32, %c0_i32_0 : i32, i32
  }
  func.func @transform_11(%arg0: i32) -> (i32, i32) {
    %c0_i32 = arith.constant 0 : i32
    %c0_i32_0 = arith.constant 0 : i32
    %c0_i32_1 = arith.constant 0 : i32
    return %c0_i32, %c0_i32_0 : i32, i32
  }
  func.func @transform_12(%arg0: i32) -> (i32, i32) {
    %c0_i32 = arith.constant 0 : i32
    %c0_i32_0 = arith.constant 0 : i32
    return %arg0, %c0_i32 : i32, i32
  }
  func.func @transform_13(%arg0: i32) -> (i32, i32) {
    %c0_i32 = arith.constant 0 : i32
    %c0_i32_0 = arith.constant 0 : i32
    return %arg0, %c0_i32 : i32, i32
  }
}

</mosaic_0001>

<llo_original>
// kernel: brainnet_forward.1
$region0: #{brainnet_forward.1}
  #allocation0 [shape = 'u32[]', space=smem, size = 0x4, offset = 0x4, fixed_abs, tag = 'smem constant byte address 0x4 - core index']
  #allocation1 [shape = 'u32[144,128]{1,0:T(1,128)}', space=vmem, size = 0x12000, scoped, tag = 'internal scratch']
  #allocation2 [shape = 'f32[1,1]{1,0:T(1,128)S(1)}', space=vmem, size = 0x200, scoped, tag = 'scoped memory for brainnet_forward.1']
  %s0 = inlined_call_operand.vmem [shape: bf16[8,256], index: 0, kind: input, shape index: {}]
  %s1 = inlined_call_operand.vmem [shape: bf16[16,8,16], index: 1, kind: input, shape index: {}]
  %s2 = inlined_call_operand.vmem [shape: bf16[256,512], index: 2, kind: input, shape index: {}]
  %s3 = inlined_call_operand.vmem [shape: bf16[16,16,512], index: 3, kind: input, shape index: {}]
  %s4 = inlined_call_operand.vmem [shape: bf16[16,512,64], index: 4, kind: input, shape index: {}]
  %s5 = inlined_call_operand.vmem [shape: f32[1,64], index: 5, kind: input, shape index: {}]
  %s6 = inlined_call_operand.vmem [shape: bf16[16,64,128], index: 6, kind: input, shape index: {}]
  %s7 = inlined_call_operand.vmem [shape: f32[1,128], index: 7, kind: input, shape index: {}]
  %s8 = inlined_call_operand.vmem [shape: bf16[128,256], index: 8, kind: input, shape index: {}]
  %s9 = inlined_call_operand.vmem [shape: f32[1,256], index: 9, kind: input, shape index: {}]
  %s10 = inlined_call_operand.vmem [shape: f32[1,256], index: 10, kind: input, shape index: {}]
  %s11 = inlined_call_operand.<no memory space> [shape: f32[1,1], index: 11, kind: input, shape index: {}]
  %s12 = inlined_call_operand.vmem [shape: f32[8,1], index: 12, kind: output, shape index: {0}]
  %s13 = inlined_call_operand.vmem [shape: f32[8,256], index: 13, kind: output, shape index: {1}]
  %14 = xla_tuple %s12, %s13
  %s15 = sld [smem:[#allocation0]]
  $region66: #{brainnet_forward.1} parent=0
    _
  %s17 = ssub.s32 1, %s15
  %s18 = scalar_select 0, %s17, %s15
  %v19 = vstv %s11
  %20 = vst [vmem:[#allocation2] sm:$0x1] %v19
  // Predicated region
  $region2: #{brainnet_forward.1} parent=0 // pred_check
    _
  $region3: #{brainnet_forward.1} parent=0 // pred_check_branch
    %22 = sbr.rel (0) target = $region5
  $region4: #{brainnet_forward.1} parent=0 // pred_region
    _
  $region5: #{brainnet_forward.1} parent=0 // pred_fallthru
    _
  // Predicated region
  $region6: #{brainnet_forward.1} parent=0 // pred_check
    _
  $region7: #{brainnet_forward.1} parent=0 // pred_check_branch
    %24 = sbr.rel (0) target = $region9
  $region8: #{brainnet_forward.1} parent=0 // pred_region
    _
  $region9: #{brainnet_forward.1} parent=0 // pred_fallthru
    _
  // Predicated region
  $region10: #{brainnet_forward.1} parent=0 // pred_check
    _
  $region11: #{brainnet_forward.1} parent=0 // pred_check_branch
    %26 = sbr.rel (0) target = $region13
  $region12: #{brainnet_forward.1} parent=0 // pred_region
    _
  $region13: #{brainnet_forward.1} parent=0 // pred_fallthru
    _
  // Predicated region
  $region14: #{brainnet_forward.1} parent=0 // pred_check
    _
  $region15: #{brainnet_forward.1} parent=0 // pred_check_branch
    %28 = sbr.rel (0) target = $region17
  $region16: #{brainnet_forward.1} parent=0 // pred_region
    _
  $region17: #{brainnet_forward.1} parent=0 // pred_fallthru
    _
  // Predicated region
  $region18: #{brainnet_forward.1} parent=0 // pred_check
    _
  $region19: #{brainnet_forward.1} parent=0 // pred_check_branch
    %30 = sbr.rel (0) target = $region21
  $region20: #{brainnet_forward.1} parent=0 // pred_region
    _
  $region21: #{brainnet_forward.1} parent=0 // pred_fallthru
    _
  // Predicated region
  $region22: #{brainnet_forward.1} parent=0 // pred_check
    _
  $region23: #{brainnet_forward.1} parent=0 // pred_check_branch
    %32 = sbr.rel (0) target = $region25
  $region24: #{brainnet_forward.1} parent=0 // pred_region
    _
  $region25: #{brainnet_forward.1} parent=0 // pred_fallthru
    _
  // Predicated region
  $region26: #{brainnet_forward.1} parent=0 // pred_check
    _
  $region27: #{brainnet_forward.1} parent=0 // pred_check_branch
    %34 = sbr.rel (0) target = $region29
  $region28: #{brainnet_forward.1} parent=0 // pred_region
    _
  $region29: #{brainnet_forward.1} parent=0 // pred_fallthru
    _
  // Predicated region
  $region30: #{brainnet_forward.1} parent=0 // pred_check
    _
  $region31: #{brainnet_forward.1} parent=0 // pred_check_branch
    %36 = sbr.rel (0) target = $region33
  $region32: #{brainnet_forward.1} parent=0 // pred_region
    _
  $region33: #{brainnet_forward.1} parent=0 // pred_fallthru
    _
  // Predicated region
  $region34: #{brainnet_forward.1} parent=0 // pred_check
    _
  $region35: #{brainnet_forward.1} parent=0 // pred_check_branch
    %38 = sbr.rel (0) target = $region37
  $region36: #{brainnet_forward.1} parent=0 // pred_region
    _
  $region37: #{brainnet_forward.1} parent=0 // pred_fallthru
    _
  // Predicated region
  $region38: #{brainnet_forward.1} parent=0 // pred_check
    _
  $region39: #{brainnet_forward.1} parent=0 // pred_check_branch
    %40 = sbr.rel (0) target = $region41
  $region40: #{brainnet_forward.1} parent=0 // pred_region
    _
  $region41: #{brainnet_forward.1} parent=0 // pred_fallthru
    _
  // Predicated region
  $region42: #{brainnet_forward.1} parent=0 // pred_check
    _
  $region43: #{brainnet_forward.1} parent=0 // pred_check_branch
    %42 = sbr.rel (0) target = $region45
  $region44: #{brainnet_forward.1} parent=0 // pred_region
    _
  $region45: #{brainnet_forward.1} parent=0 // pred_fallthru
    _
  // Predicated region
  $region46: #{brainnet_forward.1} parent=0 // pred_check
    _
  $region47: #{brainnet_forward.1} parent=0 // pred_check_branch
    %44 = sbr.rel (0) target = $region49
  $region48: #{brainnet_forward.1} parent=0 // pred_region
    _
  $region49: #{brainnet_forward.1} parent=0 // pred_fallthru
    _
  %v46 = vld [vmem:[%s1] sm:$0xf]
  %v47 = vld [vmem:[%s1 + $0x4] sm:$0xf]
  %v48 = vld [vmem:[%s1 + $0x8] sm:$0xf]
  %v49 = vld [vmem:[%s1 + $0xc] sm:$0xf]
  %v50 = vld [vmem:[%s1 + $0x10] sm:$0xf]
  %v51 = vld [vmem:[%s1 + $0x14] sm:$0xf]
  %v52 = vld [vmem:[%s1 + $0x18] sm:$0xf]
  %v53 = vld [vmem:[%s1 + $0x1c] sm:$0xf]
  %v54 = vld [vmem:[%s1 + $0x20] sm:$0xf]
  %v55 = vld [vmem:[%s1 + $0x24] sm:$0xf]
  %v56 = vld [vmem:[%s1 + $0x28] sm:$0xf]
  %v57 = vld [vmem:[%s1 + $0x2c] sm:$0xf]
  %v58 = vld [vmem:[%s1 + $0x30] sm:$0xf]
  %v59 = vld [vmem:[%s1 + $0x34] sm:$0xf]
  %v60 = vld [vmem:[%s1 + $0x38] sm:$0xf]
  %v61 = vld [vmem:[%s1 + $0x3c] sm:$0xf]
  %v62 = vld [vmem:[%s3] sm:$0xff]
  %v63 = vld [vmem:[%s3 + $0x8] sm:$0xff]
  %v64 = vld [vmem:[%s3 + $0x10] sm:$0xff]
  %v65 = vld [vmem:[%s3 + $0x18] sm:$0xff]
  %v66 = vld [vmem:[%s3 + $0x20] sm:$0xff]
  %v67 = vld [vmem:[%s3 + $0x28] sm:$0xff]
  %v68 = vld [vmem:[%s3 + $0x30] sm:$0xff]
  %v69 = vld [vmem:[%s3 + $0x38] sm:$0xff]
  %v70 = vld [vmem:[%s3 + $0x40] sm:$0xff]
  %v71 = vld [vmem:[%s3 + $0x48] sm:$0xff]
  %v72 = vld [vmem:[%s3 + $0x50] sm:$0xff]
  %v73 = vld [vmem:[%s3 + $0x58] sm:$0xff]
  %v74 = vld [vmem:[%s3 + $0x60] sm:$0xff]
  %v75 = vld [vmem:[%s3 + $0x68] sm:$0xff]
  %v76 = vld [vmem:[%s3 + $0x70] sm:$0xff]
  %v77 = vld [vmem:[%s3 + $0x78] sm:$0xff]
  %v78 = vld [vmem:[%s3 + $0x80] sm:$0xff]
  %v79 = vld [vmem:[%s3 + $0x88] sm:$0xff]
  %v80 = vld [vmem:[%s3 + $0x90] sm:$0xff]
  %v81 = vld [vmem:[%s3 + $0x98] sm:$0xff]
  %v82 = vld [vmem:[%s3 + $0xa0] sm:$0xff]
  %v83 = vld [vmem:[%s3 + $0xa8] sm:$0xff]
  %v84 = vld [vmem:[%s3 + $0xb0] sm:$0xff]
  %v85 = vld [vmem:[%s3 + $0xb8] sm:$0xff]
  %v86 = vld [vmem:[%s3 + $0xc0] sm:$0xff]
  %v87 = vld [vmem:[%s3 + $0xc8] sm:$0xff]
  %v88 = vld [vmem:[%s3 + $0xd0] sm:$0xff]
  %v89 = vld [vmem:[%s3 + $0xd8] sm:$0xff]
  %v90 = vld [vmem:[%s3 + $0xe0] sm:$0xff]
  %v91 = vld [vmem:[%s3 + $0xe8] sm:$0xff]
  %v92 = vld [vmem:[%s3 + $0xf0] sm:$0xff]
  %v93 = vld [vmem:[%s3 + $0xf8] sm:$0xff]
  %v94 = vld [vmem:[%s3 + $0x100] sm:$0xff]
  %v95 = vld [vmem:[%s3 + $0x108] sm:$0xff]
  %v96 = vld [vmem:[%s3 + $0x110] sm:$0xff]
  %v97 = vld [vmem:[%s3 + $0x118] sm:$0xff]
  %v98 = vld [vmem:[%s3 + $0x120] sm:$0xff]
  %v99 = vld [vmem:[%s3 + $0x128] sm:$0xff]
  %v100 = vld [vmem:[%s3 + $0x130] sm:$0xff]
  %v101 = vld [vmem:[%s3 + $0x138] sm:$0xff]
  %v102 = vld [vmem:[%s3 + $0x140] sm:$0xff]
  %v103 = vld [vmem:[%s3 + $0x148] sm:$0xff]
  %v104 = vld [vmem:[%s3 + $0x150] sm:$0xff]
  %v105 = vld [vmem:[%s3 + $0x158] sm:$0xff]
  %v106 = vld [vmem:[%s3 + $0x160] sm:$0xff]
  %v107 = vld [vmem:[%s3 + $0x168] sm:$0xff]
  %v108 = vld [vmem:[%s3 + $0x170] sm:$0xff]
  %v109 = vld [vmem:[%s3 + $0x178] sm:$0xff]
  %v110 = vld [vmem:[%s3 + $0x180] sm:$0xff]
  %v111 = vld [vmem:[%s3 + $0x188] sm:$0xff]
  %v112 = vld [vmem:[%s3 + $0x190] sm:$0xff]
  %v113 = vld [vmem:[%s3 + $0x198] sm:$0xff]
  %v114 = vld [vmem:[%s3 + $0x1a0] sm:$0xff]
  %v115 = vld [vmem:[%s3 + $0x1a8] sm:$0xff]
  %v116 = vld [vmem:[%s3 + $0x1b0] sm:$0xff]
  %v117 = vld [vmem:[%s3 + $0x1b8] sm:$0xff]
  %v118 = vld [vmem:[%s3 + $0x1c0] sm:$0xff]
  %v119 = vld [vmem:[%s3 + $0x1c8] sm:$0xff]
  %v120 = vld [vmem:[%s3 + $0x1d0] sm:$0xff]
  %v121 = vld [vmem:[%s3 + $0x1d8] sm:$0xff]
  %v122 = vld [vmem:[%s3 + $0x1e0] sm:$0xff]
  %v123 = vld [vmem:[%s3 + $0x1e8] sm:$0xff]
  %v124 = vld [vmem:[%s3 + $0x1f0] sm:$0xff]
  %v125 = vld [vmem:[%s3 + $0x1f8] sm:$0xff]
  %v126 = vld [vmem:[%s0] sm:$0xff]
  %v127 = vld [vmem:[%s2] sm:$0xff]
  %v128 = vld [vmem:[%s2 + $0x8] sm:$0xff]
  %v129 = vld [vmem:[%s2 + $0x10] sm:$0xff]
  %v130 = vld [vmem:[%s2 + $0x18] sm:$0xff]
  %v131 = vld [vmem:[%s2 + $0x20] sm:$0xff]
  %v132 = vld [vmem:[%s2 + $0x28] sm:$0xff]
  %v133 = vld [vmem:[%s2 + $0x30] sm:$0xff]
  %v134 = vld [vmem:[%s2 + $0x38] sm:$0xff]
  %v135 = vld [vmem:[%s2 + $0x40] sm:$0xff]
  %v136 = vld [vmem:[%s2 + $0x48] sm:$0xff]
  %v137 = vld [vmem:[%s2 + $0x50] sm:$0xff]
  %v138 = vld [vmem:[%s2 + $0x58] sm:$0xff]
  %v139 = vld [vmem:[%s2 + $0x60] sm:$0xff]
  %v140 = vld [vmem:[%s2 + $0x68] sm:$0xff]
  %v141 = vld [vmem:[%s2 + $0x70] sm:$0xff]
  %v142 = vld [vmem:[%s2 + $0x78] sm:$0xff]
  %v143 = vld [vmem:[%s2 + $0x80] sm:$0xff]
  %v144 = vld [vmem:[%s2 + $0x88] sm:$0xff]
  %v145 = vld [vmem:[%s2 + $0x90] sm:$0xff]
  %v146 = vld [vmem:[%s2 + $0x98] sm:$0xff]
  %v147 = vld [vmem:[%s2 + $0xa0] sm:$0xff]
  %v148 = vld [vmem:[%s2 + $0xa8] sm:$0xff]
  %v149 = vld [vmem:[%s2 + $0xb0] sm:$0xff]
  %v150 = vld [vmem:[%s2 + $0xb8] sm:$0xff]
  %v151 = vld [vmem:[%s2 + $0xc0] sm:$0xff]
  %v152 = vld [vmem:[%s2 + $0xc8] sm:$0xff]
  %v153 = vld [vmem:[%s2 + $0xd0] sm:$0xff]
  %v154 = vld [vmem:[%s2 + $0xd8] sm:$0xff]
  %v155 = vld [vmem:[%s2 + $0xe0] sm:$0xff]
  %v156 = vld [vmem:[%s2 + $0xe8] sm:$0xff]
  %v157 = vld [vmem:[%s2 + $0xf0] sm:$0xff]
  %v158 = vld [vmem:[%s2 + $0xf8] sm:$0xff]
  %v159 = vld [vmem:[%s2 + $0x100] sm:$0xff]
  %v160 = vld [vmem:[%s2 + $0x108] sm:$0xff]
  %v161 = vld [vmem:[%s2 + $0x110] sm:$0xff]
  %v162 = vld [vmem:[%s2 + $0x118] sm:$0xff]
  %v163 = vld [vmem:[%s2 + $0x120] sm:$0xff]
  %v164 = vld [vmem:[%s2 + $0x128] sm:$0xff]
  %v165 = vld [vmem:[%s2 + $0x130] sm:$0xff]
  %v166 = vld [vmem:[%s2 + $0x138] sm:$0xff]
  %v167 = vld [vmem:[%s2 + $0x140] sm:$0xff]
  %v168 = vld [vmem:[%s2 + $0x148] sm:$0xff]
  %v169 = vld [vmem:[%s2 + $0x150] sm:$0xff]
  %v170 = vld [vmem:[%s2 + $0x158] sm:$0xff]
  %v171 = vld [vmem:[%s2 + $0x160] sm:$0xff]
  %v172 = vld [vmem:[%s2 + $0x168] sm:$0xff]
  %v173 = vld [vmem:[%s2 + $0x170] sm:$0xff]
  %v174 = vld [vmem:[%s2 + $0x178] sm:$0xff]
  %v175 = vld [vmem:[%s2 + $0x180] sm:$0xff]
  %v176 = vld [vmem:[%s2 + $0x188] sm:$0xff]
  %v177 = vld [vmem:[%s2 + $0x190] sm:$0xff]
  %v178 = vld [vmem:[%s2 + $0x198] sm:$0xff]
  %v179 = vld [vmem:[%s2 + $0x1a0] sm:$0xff]
  %v180 = vld [vmem:[%s2 + $0x1a8] sm:$0xff]
  %v181 = vld [vmem:[%s2 + $0x1b0] sm:$0xff]
  %v182 = vld [vmem:[%s2 + $0x1b8] sm:$0xff]
  %v183 = vld [vmem:[%s2 + $0x1c0] sm:$0xff]
  %v184 = vld [vmem:[%s2 + $0x1c8] sm:$0xff]
  %v185 = vld [vmem:[%s2 + $0x1d0] sm:$0xff]
  %v186 = vld [vmem:[%s2 + $0x1d8] sm:$0xff]
  %v187 = vld [vmem:[%s2 + $0x1e0] sm:$0xff]
  %v188 = vld [vmem:[%s2 + $0x1e8] sm:$0xff]
  %v189 = vld [vmem:[%s2 + $0x1f0] sm:$0xff]
  %v190 = vld [vmem:[%s2 + $0x1f8] sm:$0xff]
  %v192 = vunpack.c.l.b16 %v126
  %v193 = vunpack.c.h.b16 %v126
  %v194 = vpack.c.b16 %v192, %v192
  %v195 = vpack.c.b16 %v193, %v193
  %v262 = vunpack.c.l.b16 %v127
  %v263 = vunpack.c.h.b16 %v127
  %v264 = vunpack.c.l.b16 %v128
  %v265 = vunpack.c.h.b16 %v128
  %v266 = vunpack.c.l.b16 %v129
  %v267 = vunpack.c.h.b16 %v129
  %v268 = vunpack.c.l.b16 %v130
  %v269 = vunpack.c.h.b16 %v130
  %v270 = vunpack.c.l.b16 %v131
  %v271 = vunpack.c.h.b16 %v131
  %v272 = vunpack.c.l.b16 %v132
  %v273 = vunpack.c.h.b16 %v132
  %v274 = vunpack.c.l.b16 %v133
  %v275 = vunpack.c.h.b16 %v133
  %v276 = vunpack.c.l.b16 %v134
  %v277 = vunpack.c.h.b16 %v134
  %v278 = vunpack.c.l.b16 %v135
  %v279 = vunpack.c.h.b16 %v135
  %v280 = vunpack.c.l.b16 %v136
  %v281 = vunpack.c.h.b16 %v136
  %v282 = vunpack.c.l.b16 %v137
  %v283 = vunpack.c.h.b16 %v137
  %v284 = vunpack.c.l.b16 %v138
  %v285 = vunpack.c.h.b16 %v138
  %v286 = vunpack.c.l.b16 %v139
  %v287 = vunpack.c.h.b16 %v139
  %v288 = vunpack.c.l.b16 %v140
  %v289 = vunpack.c.h.b16 %v140
  %v290 = vunpack.c.l.b16 %v141
  %v291 = vunpack.c.h.b16 %v141
  %v292 = vunpack.c.l.b16 %v142
  %v293 = vunpack.c.h.b16 %v142
  %v294 = vunpack.c.l.b16 %v143
  %v295 = vunpack.c.h.b16 %v143
  %v296 = vunpack.c.l.b16 %v144
  %v297 = vunpack.c.h.b16 %v144
  %v298 = vunpack.c.l.b16 %v145
  %v299 = vunpack.c.h.b16 %v145
  %v300 = vunpack.c.l.b16 %v146
  %v301 = vunpack.c.h.b16 %v146
  %v302 = vunpack.c.l.b16 %v147
  %v303 = vunpack.c.h.b16 %v147
  %v304 = vunpack.c.l.b16 %v148
  %v305 = vunpack.c.h.b16 %v148
  %v306 = vunpack.c.l.b16 %v149
  %v307 = vunpack.c.h.b16 %v149
  %v308 = vunpack.c.l.b16 %v150
  %v309 = vunpack.c.h.b16 %v150
  %v310 = vunpack.c.l.b16 %v151
  %v311 = vunpack.c.h.b16 %v151
  %v312 = vunpack.c.l.b16 %v152
  %v313 = vunpack.c.h.b16 %v152
  %v314 = vunpack.c.l.b16 %v153
  %v315 = vunpack.c.h.b16 %v153
  %v316 = vunpack.c.l.b16 %v154
  %v317 = vunpack.c.h.b16 %v154
  %v318 = vunpack.c.l.b16 %v155
  %v319 = vunpack.c.h.b16 %v155
  %v320 = vunpack.c.l.b16 %v156
  %v321 = vunpack.c.h.b16 %v156
  %v322 = vunpack.c.l.b16 %v157
  %v323 = vunpack.c.h.b16 %v157
  %v324 = vunpack.c.l.b16 %v158
  %v325 = vunpack.c.h.b16 %v158
  %v326 = vunpack.c.l.b16 %v159
  %v327 = vunpack.c.h.b16 %v159
  %v328 = vunpack.c.l.b16 %v160
  %v329 = vunpack.c.h.b16 %v160
  %v330 = vunpack.c.l.b16 %v161
  %v331 = vunpack.c.h.b16 %v161
  %v332 = vunpack.c.l.b16 %v162
  %v333 = vunpack.c.h.b16 %v162
  %v334 = vunpack.c.l.b16 %v163
  %v335 = vunpack.c.h.b16 %v163
  %v336 = vunpack.c.l.b16 %v164
  %v337 = vunpack.c.h.b16 %v164
  %v338 = vunpack.c.l.b16 %v165
  %v339 = vunpack.c.h.b16 %v165
  %v340 = vunpack.c.l.b16 %v166
  %v341 = vunpack.c.h.b16 %v166
  %v342 = vunpack.c.l.b16 %v167
  %v343 = vunpack.c.h.b16 %v167
  %v344 = vunpack.c.l.b16 %v168
  %v345 = vunpack.c.h.b16 %v168
  %v346 = vunpack.c.l.b16 %v169
  %v347 = vunpack.c.h.b16 %v169
  %v348 = vunpack.c.l.b16 %v170
  %v349 = vunpack.c.h.b16 %v170
  %v350 = vunpack.c.l.b16 %v171
  %v351 = vunpack.c.h.b16 %v171
  %v352 = vunpack.c.l.b16 %v172
  %v353 = vunpack.c.h.b16 %v172
  %v354 = vunpack.c.l.b16 %v173
  %v355 = vunpack.c.h.b16 %v173
  %v356 = vunpack.c.l.b16 %v174
  %v357 = vunpack.c.h.b16 %v174
  %v358 = vunpack.c.l.b16 %v175
  %v359 = vunpack.c.h.b16 %v175
  %v360 = vunpack.c.l.b16 %v176
  %v361 = vunpack.c.h.b16 %v176
  %v362 = vunpack.c.l.b16 %v177
  %v363 = vunpack.c.h.b16 %v177
  %v364 = vunpack.c.l.b16 %v178
  %v365 = vunpack.c.h.b16 %v178
  %v366 = vunpack.c.l.b16 %v179
  %v367 = vunpack.c.h.b16 %v179
  %v368 = vunpack.c.l.b16 %v180
  %v369 = vunpack.c.h.b16 %v180
  %v370 = vunpack.c.l.b16 %v181
  %v371 = vunpack.c.h.b16 %v181
  %v372 = vunpack.c.l.b16 %v182
  %v373 = vunpack.c.h.b16 %v182
  %v374 = vunpack.c.l.b16 %v183
  %v375 = vunpack.c.h.b16 %v183
  %v376 = vunpack.c.l.b16 %v184
  %v377 = vunpack.c.h.b16 %v184
  %v378 = vunpack.c.l.b16 %v185
  %v379 = vunpack.c.h.b16 %v185
  %v380 = vunpack.c.l.b16 %v186
  %v381 = vunpack.c.h.b16 %v186
  %v382 = vunpack.c.l.b16 %v187
  %v383 = vunpack.c.h.b16 %v187
  %v384 = vunpack.c.l.b16 %v188
  %v385 = vunpack.c.h.b16 %v188
  %v386 = vunpack.c.l.b16 %v189
  %v387 = vunpack.c.h.b16 %v189
  %v388 = vunpack.c.l.b16 %v190
  %v389 = vunpack.c.h.b16 %v190
  %v390 = vpack.c.b16 %v266, %v262
  %v391 = vpack.c.b16 %v267, %v263
  %v392 = vpack.c.b16 %v268, %v264
  %v393 = vpack.c.b16 %v269, %v265
  %v394 = vpack.c.b16 %v274, %v270
  %v395 = vpack.c.b16 %v275, %v271
  %v396 = vpack.c.b16 %v276, %v272
  %v397 = vpack.c.b16 %v277, %v273
  %v398 = vpack.c.b16 %v282, %v278
  %v399 = vpack.c.b16 %v283, %v279
  %v400 = vpack.c.b16 %v284, %v280
  %v401 = vpack.c.b16 %v285, %v281
  %v402 = vpack.c.b16 %v290, %v286
  %v403 = vpack.c.b16 %v291, %v287
  %v404 = vpack.c.b16 %v292, %v288
  %v405 = vpack.c.b16 %v293, %v289
  %v406 = vpack.c.b16 %v298, %v294
  %v407 = vpack.c.b16 %v299, %v295
  %v408 = vpack.c.b16 %v300, %v296
  %v409 = vpack.c.b16 %v301, %v297
  %v410 = vpack.c.b16 %v306, %v302
  %v411 = vpack.c.b16 %v307, %v303
  %v412 = vpack.c.b16 %v308, %v304
  %v413 = vpack.c.b16 %v309, %v305
  %v414 = vpack.c.b16 %v314, %v310
  %v415 = vpack.c.b16 %v315, %v311
  %v416 = vpack.c.b16 %v316, %v312
  %v417 = vpack.c.b16 %v317, %v313
  %v418 = vpack.c.b16 %v322, %v318
  %v419 = vpack.c.b16 %v323, %v319
  %v420 = vpack.c.b16 %v324, %v320
  %v421 = vpack.c.b16 %v325, %v321
  %v422 = vpack.c.b16 %v330, %v326
  %v423 = vpack.c.b16 %v331, %v327
  %v424 = vpack.c.b16 %v332, %v328
  %v425 = vpack.c.b16 %v333, %v329
  %v426 = vpack.c.b16 %v338, %v334
  %v427 = vpack.c.b16 %v339, %v335
  %v428 = vpack.c.b16 %v340, %v336
  %v429 = vpack.c.b16 %v341, %v337
  %v430 = vpack.c.b16 %v346, %v342
  %v431 = vpack.c.b16 %v347, %v343
  %v432 = vpack.c.b16 %v348, %v344
  %v433 = vpack.c.b16 %v349, %v345
  %v434 = vpack.c.b16 %v354, %v350
  %v435 = vpack.c.b16 %v355, %v351
  %v436 = vpack.c.b16 %v356, %v352
  %v437 = vpack.c.b16 %v357, %v353
  %v438 = vpack.c.b16 %v362, %v358
  %v439 = vpack.c.b16 %v363, %v359
  %v440 = vpack.c.b16 %v364, %v360
  %v441 = vpack.c.b16 %v365, %v361
  %v442 = vpack.c.b16 %v370, %v366
  %v443 = vpack.c.b16 %v371, %v367
  %v444 = vpack.c.b16 %v372, %v368
  %v445 = vpack.c.b16 %v373, %v369
  %v446 = vpack.c.b16 %v378, %v374
  %v447 = vpack.c.b16 %v379, %v375
  %v448 = vpack.c.b16 %v380, %v376
  %v449 = vpack.c.b16 %v381, %v377
  %v450 = vpack.c.b16 %v386, %v382
  %v451 = vpack.c.b16 %v387, %v383
  %v452 = vpack.c.b16 %v388, %v384
  %v453 = vpack.c.b16 %v389, %v385
  %518 = vmatprep.subr.bf16.mxu0 %v391
  %519 = vmatpush1.bf16.msra.mxu0 %v390
  %520 = vmatprep.subr.bf16.mxu0 %v395
  %521 = vmatpush1.bf16.msra.mxu0 %v394
  %522 = vmatprep.subr.bf16.mxu0 %v399
  %523 = vmatpush1.bf16.msra.mxu0 %v398
  %524 = vmatprep.subr.bf16.mxu0 %v403
  %525 = vmatpush1.bf16.msra.mxu0 %v402
  %526 = vmatprep.subr.bf16.mxu0 %v407
  %527 = vmatpush1.bf16.msra.mxu0 %v406
  %528 = vmatprep.subr.bf16.mxu0 %v411
  %529 = vmatpush1.bf16.msra.mxu0 %v410
  %530 = vmatprep.subr.bf16.mxu0 %v415
  %531 = vmatpush1.bf16.msra.mxu0 %v414
  %532 = vmatprep.subr.bf16.mxu0 %v419
  %533 = vmatpush1.bf16.msra.mxu0 %v418
  %534 = vmatprep.subr.bf16.mxu0 %v423
  %535 = vmatpush1.bf16.msra.mxu0 %v422
  %536 = vmatprep.subr.bf16.mxu0 %v427
  %537 = vmatpush1.bf16.msra.mxu0 %v426
  %538 = vmatprep.subr.bf16.mxu0 %v431
  %539 = vmatpush1.bf16.msra.mxu0 %v430
  %540 = vmatprep.subr.bf16.mxu0 %v435
  %541 = vmatpush1.bf16.msra.mxu0 %v434
  %542 = vmatprep.subr.bf16.mxu0 %v439
  %543 = vmatpush1.bf16.msra.mxu0 %v438
  %544 = vmatprep.subr.bf16.mxu0 %v443
  %545 = vmatpush1.bf16.msra.mxu0 %v442
  %546 = vmatprep.subr.bf16.mxu0 %v447
  %547 = vmatpush1.bf16.msra.mxu0 %v446
  %548 = vmatprep.subr.bf16.mxu0 %v451
  %549 = vmatpush1.bf16.msra.mxu0 %v450
  %550 = vmatprep.mubr.bf16.mxu0 %v195
  %551 = vmatmul.mubr.bf16.gmra.mrb[0].mxu0 %v194
  %v552 = vpop.f32.mrb[0].mxu0
  %v553 = vadd.f32 0.0, %v552
  %v554 = vpop.f32.mrb[0].mxu0
  %v555 = vadd.f32 0.0, %v554
  %v556 = vpop.f32.mrb[0].mxu0
  %v557 = vpop.f32.mrb[0].mxu0
  %558 = vdwg.mxu0
  %559 = vmatprep.subr.bf16.mxu0 %v393
  %560 = vmatpush1.bf16.msra.mxu0 %v392
  %561 = vmatprep.subr.bf16.mxu0 %v397
  %562 = vmatpush1.bf16.msra.mxu0 %v396
  %563 = vmatprep.subr.bf16.mxu0 %v401
  %564 = vmatpush1.bf16.msra.mxu0 %v400
  %565 = vmatprep.subr.bf16.mxu0 %v405
  %566 = vmatpush1.bf16.msra.mxu0 %v404
  %567 = vmatprep.subr.bf16.mxu0 %v409
  %568 = vmatpush1.bf16.msra.mxu0 %v408
  %569 = vmatprep.subr.bf16.mxu0 %v413
  %570 = vmatpush1.bf16.msra.mxu0 %v412
  %571 = vmatprep.subr.bf16.mxu0 %v417
  %572 = vmatpush1.bf16.msra.mxu0 %v416
  %573 = vmatprep.subr.bf16.mxu0 %v421
  %574 = vmatpush1.bf16.msra.mxu0 %v420
  %575 = vmatprep.subr.bf16.mxu0 %v425
  %576 = vmatpush1.bf16.msra.mxu0 %v424
  %577 = vmatprep.subr.bf16.mxu0 %v429
  %578 = vmatpush1.bf16.msra.mxu0 %v428
  %579 = vmatprep.subr.bf16.mxu0 %v433
  %580 = vmatpush1.bf16.msra.mxu0 %v432
  %581 = vmatprep.subr.bf16.mxu0 %v437
  %582 = vmatpush1.bf16.msra.mxu0 %v436
  %583 = vmatprep.subr.bf16.mxu0 %v441
  %584 = vmatpush1.bf16.msra.mxu0 %v440
  %585 = vmatprep.subr.bf16.mxu0 %v445
  %586 = vmatpush1.bf16.msra.mxu0 %v444
  %587 = vmatprep.subr.bf16.mxu0 %v449
  %588 = vmatpush1.bf16.msra.mxu0 %v448
  %589 = vmatprep.subr.bf16.mxu0 %v453
  %590 = vmatpush1.bf16.msra.mxu0 %v452
  %591 = vmatprep.mubr.bf16.mxu0 %v195
  %592 = vmatmul.mubr.bf16.gmra.mrb[0].mxu0 %v194
  %v593 = vpop.f32.mrb[0].mxu0
  %v594 = vadd.f32 0.0, %v593
  %v595 = vpop.f32.mrb[0].mxu0
  %v596 = vadd.f32 0.0, %v595
  %v597 = vpop.f32.mrb[0].mxu0
  %v598 = vpop.f32.mrb[0].mxu0
  %599 = vdwg.mxu0
  %v604 = vunpack.c.l.b16 %v62
  %v605 = vunpack.c.h.b16 %v62
  %v606 = vunpack.c.l.b16 %v63
  %v607 = vunpack.c.h.b16 %v63
  %v608 = vunpack.c.l.b16 %v64
  %v609 = vunpack.c.h.b16 %v64
  %v610 = vunpack.c.l.b16 %v65
  %v611 = vunpack.c.h.b16 %v65
  %v612 = vpack.c.b16 %v608, %v604
  %v613 = vpack.c.b16 %v609, %v605
  %v614 = vpack.c.b16 %v610, %v606
  %v615 = vpack.c.b16 %v611, %v607
  %vm620 = vcmask 130048
  %v622 = vsel %vm620, %v46, 0
  %624 = vmatprep.subr.bf16.mxu0 %v613
  %625 = vmatpush1.bf16.msra.mxu0 %v612
  %626 = vmatprep.subr.bf16.mxu0 0
  %627 = vmatpush1.bf16.msra.mxu0 0
  %628 = vmatprep.subr.bf16.mxu0 0
  %629 = vmatpush1.bf16.msra.mxu0 0
  %630 = vmatprep.subr.bf16.mxu0 0
  %631 = vmatpush1.bf16.msra.mxu0 0
  %632 = vmatprep.subr.bf16.mxu0 0
  %633 = vmatpush1.bf16.msra.mxu0 0
  %634 = vmatprep.subr.bf16.mxu0 0
  %635 = vmatpush1.bf16.msra.mxu0 0
  %636 = vmatprep.subr.bf16.mxu0 0
  %637 = vmatpush1.bf16.msra.mxu0 0
  %638 = vmatprep.subr.bf16.mxu0 0
  %639 = vmatpush1.bf16.msra.mxu0 0
  %640 = vmatprep.subr.bf16.mxu0 0
  %641 = vmatpush1.bf16.msra.mxu0 0
  %642 = vmatprep.subr.bf16.mxu0 0
  %643 = vmatpush1.bf16.msra.mxu0 0
  %644 = vmatprep.subr.bf16.mxu0 0
  %645 = vmatpush1.bf16.msra.mxu0 0
  %646 = vmatprep.subr.bf16.mxu0 0
  %647 = vmatpush1.bf16.msra.mxu0 0
  %648 = vmatprep.subr.bf16.mxu0 0
  %649 = vmatpush1.bf16.msra.mxu0 0
  %650 = vmatprep.subr.bf16.mxu0 0
  %651 = vmatpush1.bf16.msra.mxu0 0
  %652 = vmatprep.subr.bf16.mxu0 0
  %653 = vmatpush1.bf16.msra.mxu0 0
  %654 = vmatprep.subr.bf16.mxu0 0
  %655 = vmatpush1.bf16.msra.mxu0 0
  %656 = vmatprep.mubr.bf16.mxu0 0
  %657 = vmatmul.mubr.bf16.gmra.mrb[0].mxu0 %v622
  %v658 = vpop.f32.mrb[0].mxu0
  %v659 = vadd.f32 %v553, %v658
  %v660 = vpop.f32.mrb[0].mxu0
  %v661 = vadd.f32 %v555, %v660
  %v662 = vpop.f32.mrb[0].mxu0
  %v663 = vpop.f32.mrb[0].mxu0
  %664 = vdwg.mxu0
  %665 = vmatprep.subr.bf16.mxu0 %v615
  %666 = vmatpush1.bf16.msra.mxu0 %v614
  %667 = vmatprep.subr.bf16.mxu0 0
  %668 = vmatpush1.bf16.msra.mxu0 0
  %669 = vmatprep.subr.bf16.mxu0 0
  %670 = vmatpush1.bf16.msra.mxu0 0
  %671 = vmatprep.subr.bf16.mxu0 0
  %672 = vmatpush1.bf16.msra.mxu0 0
  %673 = vmatprep.subr.bf16.mxu0 0
  %674 = vmatpush1.bf16.msra.mxu0 0
  %675 = vmatprep.subr.bf16.mxu0 0
  %676 = vmatpush1.bf16.msra.mxu0 0
  %677 = vmatprep.subr.bf16.mxu0 0
  %678 = vmatpush1.bf16.msra.mxu0 0
  %679 = vmatprep.subr.bf16.mxu0 0
  %680 = vmatpush1.bf16.msra.mxu0 0
  %681 = vmatprep.subr.bf16.mxu0 0
  %682 = vmatpush1.bf16.msra.mxu0 0
  %683 = vmatprep.subr.bf16.mxu0 0
  %684 = vmatpush1.bf16.msra.mxu0 0
  %685 = vmatprep.subr.bf16.mxu0 0
  %686 = vmatpush1.bf16.msra.mxu0 0
  %687 = vmatprep.subr.bf16.mxu0 0
  %688 = vmatpush1.bf16.msra.mxu0 0
  %689 = vmatprep.subr.bf16.mxu0 0
  %690 = vmatpush1.bf16.msra.mxu0 0
  %691 = vmatprep.subr.bf16.mxu0 0
  %692 = vmatpush1.bf16.msra.mxu0 0
  %693 = vmatprep.subr.bf16.mxu0 0
  %694 = vmatpush1.bf16.msra.mxu0 0
  %695 = vmatprep.subr.bf16.mxu0 0
  %696 = vmatpush1.bf16.msra.mxu0 0
  %697 = vmatprep.mubr.bf16.mxu0 0
  %698 = vmatmul.mubr.bf16.gmra.mrb[0].mxu0 %v622
  %v699 = vpop.f32.mrb[0].mxu0
  %v700 = vadd.f32 %v594, %v699
  %v701 = vpop.f32.mrb[0].mxu0
  %v702 = vadd.f32 %v596, %v701
  %v703 = vpop.f32.mrb[0].mxu0
  %v704 = vpop.f32.mrb[0].mxu0
  %705 = vdwg.mxu0
  %v710 = vunpack.c.l.b16 %v66
  %v711 = vunpack.c.h.b16 %v66
  %v712 = vunpack.c.l.b16 %v67
  %v713 = vunpack.c.h.b16 %v67
  %v714 = vunpack.c.l.b16 %v68
  %v715 = vunpack.c.h.b16 %v68
  %v716 = vunpack.c.l.b16 %v69
  %v717 = vunpack.c.h.b16 %v69
  %v718 = vpack.c.b16 %v714, %v710
  %v719 = vpack.c.b16 %v715, %v711
  %v720 = vpack.c.b16 %v716, %v712
  %v721 = vpack.c.b16 %v717, %v713
  %v727 = vsel %vm620, %v47, 0
  %729 = vmatprep.subr.bf16.mxu0 %v719
  %730 = vmatpush1.bf16.msra.mxu0 %v718
  %731 = vmatprep.subr.bf16.mxu0 0
  %732 = vmatpush1.bf16.msra.mxu0 0
  %733 = vmatprep.subr.bf16.mxu0 0
  %734 = vmatpush1.bf16.msra.mxu0 0
  %735 = vmatprep.subr.bf16.mxu0 0
  %736 = vmatpush1.bf16.msra.mxu0 0
  %737 = vmatprep.subr.bf16.mxu0 0
  %738 = vmatpush1.bf16.msra.mxu0 0
  %739 = vmatprep.subr.bf16.mxu0 0
  %740 = vmatpush1.bf16.msra.mxu0 0
  %741 = vmatprep.subr.bf16.mxu0 0
  %742 = vmatpush1.bf16.msra.mxu0 0
  %743 = vmatprep.subr.bf16.mxu0 0
  %744 = vmatpush1.bf16.msra.mxu0 0
  %745 = vmatprep.subr.bf16.mxu0 0
  %746 = vmatpush1.bf16.msra.mxu0 0
  %747 = vmatprep.subr.bf16.mxu0 0
  %748 = vmatpush1.bf16.msra.mxu0 0
  %749 = vmatprep.subr.bf16.mxu0 0
  %750 = vmatpush1.bf16.msra.mxu0 0
  %751 = vmatprep.subr.bf16.mxu0 0
  %752 = vmatpush1.bf16.msra.mxu0 0
  %753 = vmatprep.subr.bf16.mxu0 0
  %754 = vmatpush1.bf16.msra.mxu0 0
  %755 = vmatprep.subr.bf16.mxu0 0
  %756 = vmatpush1.bf16.msra.mxu0 0
  %757 = vmatprep.subr.bf16.mxu0 0
  %758 = vmatpush1.bf16.msra.mxu0 0
  %759 = vmatprep.subr.bf16.mxu0 0
  %760 = vmatpush1.bf16.msra.mxu0 0
  %761 = vmatprep.mubr.bf16.mxu0 0
  %762 = vmatmul.mubr.bf16.gmra.mrb[0].mxu0 %v727
  %v763 = vpop.f32.mrb[0].mxu0
  %v764 = vadd.f32 %v553, %v763
  %v765 = vpop.f32.mrb[0].mxu0
  %v766 = vadd.f32 %v555, %v765
  %v767 = vpop.f32.mrb[0].mxu0
  %v768 = vpop.f32.mrb[0].mxu0
  %769 = vdwg.mxu0
  %770 = vmatprep.subr.bf16.mxu0 %v721
  %771 = vmatpush1.bf16.msra.mxu0 %v720
  %772 = vmatprep.subr.bf16.mxu0 0
  %773 = vmatpush1.bf16.msra.mxu0 0
  %774 = vmatprep.subr.bf16.mxu0 0
  %775 = vmatpush1.bf16.msra.mxu0 0
  %776 = vmatprep.subr.bf16.mxu0 0
  %777 = vmatpush1.bf16.msra.mxu0 0
  %778 = vmatprep.subr.bf16.mxu0 0
  %779 = vmatpush1.bf16.msra.mxu0 0
  %780 = vmatprep.subr.bf16.mxu0 0
  %781 = vmatpush1.bf16.msra.mxu0 0
  %782 = vmatprep.subr.bf16.mxu0 0
  %783 = vmatpush1.bf16.msra.mxu0 0
  %784 = vmatprep.subr.bf16.mxu0 0
  %785 = vmatpush1.bf16.msra.mxu0 0
  %786 = vmatprep.subr.bf16.mxu0 0
  %787 = vmatpush1.bf16.msra.mxu0 0
  %788 = vmatprep.subr.bf16.mxu0 0
  %789 = vmatpush1.bf16.msra.mxu0 0
  %790 = vmatprep.subr.bf16.mxu0 0
  %791 = vmatpush1.bf16.msra.mxu0 0
  %792 = vmatprep.subr.bf16.mxu0 0
  %793 = vmatpush1.bf16.msra.mxu0 0
  %794 = vmatprep.subr.bf16.mxu0 0
  %795 = vmatpush1.bf16.msra.mxu0 0
  %796 = vmatprep.subr.bf16.mxu0 0
  %797 = vmatpush1.bf16.msra.mxu0 0
  %798 = vmatprep.subr.bf16.mxu0 0
  %799 = vmatpush1.bf16.msra.mxu0 0
  %800 = vmatprep.subr.bf16.mxu0 0
  %801 = vmatpush1.bf16.msra.mxu0 0
  %802 = vmatprep.mubr.bf16.mxu0 0
  %803 = vmatmul.mubr.bf16.gmra.mrb[0].mxu0 %v727
  %v804 = vpop.f32.mrb[0].mxu0
  %v805 = vadd.f32 %v594, %v804
  %v806 = vpop.f32.mrb[0].mxu0
  %v807 = vadd.f32 %v596, %v806
  %v808 = vpop.f32.mrb[0].mxu0
  %v809 = vpop.f32.mrb[0].mxu0
  %810 = vdwg.mxu0
  %v815 = vunpack.c.l.b16 %v70
  %v816 = vunpack.c.h.b16 %v70
  %v817 = vunpack.c.l.b16 %v71
  %v818 = vunpack.c.h.b16 %v71
  %v819 = vunpack.c.l.b16 %v72
  %v820 = vunpack.c.h.b16 %v72
  %v821 = vunpack.c.l.b16 %v73
  %v822 = vunpack.c.h.b16 %v73
  %v823 = vpack.c.b16 %v819, %v815
  %v824 = vpack.c.b16 %v820, %v816
  %v825 = vpack.c.b16 %v821, %v817
  %v826 = vpack.c.b16 %v822, %v818
  %v832 = vsel %vm620, %v48, 0
  %834 = vmatprep.subr.bf16.mxu0 %v824
  %835 = vmatpush1.bf16.msra.mxu0 %v823
  %836 = vmatprep.subr.bf16.mxu0 0
  %837 = vmatpush1.bf16.msra.mxu0 0
  %838 = vmatprep.subr.bf16.mxu0 0
  %839 = vmatpush1.bf16.msra.mxu0 0
  %840 = vmatprep.subr.bf16.mxu0 0
  %841 = vmatpush1.bf16.msra.mxu0 0
  %842 = vmatprep.subr.bf16.mxu0 0
  %843 = vmatpush1.bf16.msra.mxu0 0
  %844 = vmatprep.subr.bf16.mxu0 0
  %845 = vmatpush1.bf16.msra.mxu0 0
  %846 = vmatprep.subr.bf16.mxu0 0
  %847 = vmatpush1.bf16.msra.mxu0 0
  %848 = vmatprep.subr.bf16.mxu0 0
  %849 = vmatpush1.bf16.msra.mxu0 0
  %850 = vmatprep.subr.bf16.mxu0 0
  %851 = vmatpush1.bf16.msra.mxu0 0
  %852 = vmatprep.subr.bf16.mxu0 0
  %853 = vmatpush1.bf16.msra.mxu0 0
  %854 = vmatprep.subr.bf16.mxu0 0
  %855 = vmatpush1.bf16.msra.mxu0 0
  %856 = vmatprep.subr.bf16.mxu0 0
  %857 = vmatpush1.bf16.msra.mxu0 0
  %858 = vmatprep.subr.bf16.mxu0 0
  %859 = vmatpush1.bf16.msra.mxu0 0
  %860 = vmatprep.subr.bf16.mxu0 0
  %861 = vmatpush1.bf16.msra.mxu0 0
  %862 = vmatprep.subr.bf16.mxu0 0
  %863 = vmatpush1.bf16.msra.mxu0 0
  %864 = vmatprep.subr.bf16.mxu0 0
  %865 = vmatpush1.bf16.msra.mxu0 0
  %866 = vmatprep.mubr.bf16.mxu0 0
  %867 = vmatmul.mubr.bf16.gmra.mrb[0].mxu0 %v832
  %v868 = vpop.f32.mrb[0].mxu0
  %v869 = vadd.f32 %v553, %v868
  %v870 = vpop.f32.mrb[0].mxu0
  %v871 = vadd.f32 %v555, %v870
  %v872 = vpop.f32.mrb[0].mxu0
  %v873 = vpop.f32.mrb[0].mxu0
  %874 = vdwg.mxu0
  %875 = vmatprep.subr.bf16.mxu0 %v826
  %876 = vmatpush1.bf16.msra.mxu0 %v825
  %877 = vmatprep.subr.bf16.mxu0 0
  %878 = vmatpush1.bf16.msra.mxu0 0
  %879 = vmatprep.subr.bf16.mxu0 0
  %880 = vmatpush1.bf16.msra.mxu0 0
  %881 = vmatprep.subr.bf16.mxu0 0
  %882 = vmatpush1.bf16.msra.mxu0 0
  %883 = vmatprep.subr.bf16.mxu0 0
  %884 = vmatpush1.bf16.msra.mxu0 0
  %885 = vmatprep.subr.bf16.mxu0 0
  %886 = vmatpush1.bf16.msra.mxu0 0
  %887 = vmatprep.subr.bf16.mxu0 0
  %888 = vmatpush1.bf16.msra.mxu0 0
  %889 = vmatprep.subr.bf16.mxu0 0
  %890 = vmatpush1.bf16.msra.mxu0 0
  %891 = vmatprep.subr.bf16.mxu0 0
  %892 = vmatpush1.bf16.msra.mxu0 0
  %893 = vmatprep.subr.bf16.mxu0 0
  %894 = vmatpush1.bf16.msra.mxu0 0
  %895 = vmatprep.subr.bf16.mxu0 0
  %896 = vmatpush1.bf16.msra.mxu0 0
  %897 = vmatprep.subr.bf16.mxu0 0
  %898 = vmatpush1.bf16.msra.mxu0 0
  %899 = vmatprep.subr.bf16.mxu0 0
  %900 = vmatpush1.bf16.msra.mxu0 0
  %901 = vmatprep.subr.bf16.mxu0 0
  %902 = vmatpush1.bf16.msra.mxu0 0
  %903 = vmatprep.subr.bf16.mxu0 0
  %904 = vmatpush1.bf16.msra.mxu0 0
  %905 = vmatprep.subr.bf16.mxu0 0
  %906 = vmatpush1.bf16.msra.mxu0 0
  %907 = vmatprep.mubr.bf16.mxu0 0
  %908 = vmatmul.mubr.bf16.gmra.mrb[0].mxu0 %v832
  %v909 = vpop.f32.mrb[0].mxu0
  %v910 = vadd.f32 %v594, %v909
  %v911 = vpop.f32.mrb[0].mxu0
  %v912 = vadd.f32 %v596, %v911
  %v913 = vpop.f32.mrb[0].mxu0
  %v914 = vpop.f32.mrb[0].mxu0
  %915 = vdwg.mxu0
  %v920 = vunpack.c.l.b16 %v74
  %v921 = vunpack.c.h.b16 %v74
  %v922 = vunpack.c.l.b16 %v75
  %v923 = vunpack.c.h.b16 %v75
  %v924 = vunpack.c.l.b16 %v76
  %v925 = vunpack.c.h.b16 %v76
  %v926 = vunpack.c.l.b16 %v77
  %v927 = vunpack.c.h.b16 %v77
  %v928 = vpack.c.b16 %v924, %v920
  %v929 = vpack.c.b16 %v925, %v921
  %v930 = vpack.c.b16 %v926, %v922
  %v931 = vpack.c.b16 %v927, %v923
  %v937 = vsel %vm620, %v49, 0
  %939 = vmatprep.subr.bf16.mxu0 %v929
  %940 = vmatpush1.bf16.msra.mxu0 %v928
  %941 = vmatprep.subr.bf16.mxu0 0
  %942 = vmatpush1.bf16.msra.mxu0 0
  %943 = vmatprep.subr.bf16.mxu0 0
  %944 = vmatpush1.bf16.msra.mxu0 0
  %945 = vmatprep.subr.bf16.mxu0 0
  %946 = vmatpush1.bf16.msra.mxu0 0
  %947 = vmatprep.subr.bf16.mxu0 0
  %948 = vmatpush1.bf16.msra.mxu0 0
  %949 = vmatprep.subr.bf16.mxu0 0
  %950 = vmatpush1.bf16.msra.mxu0 0
  %951 = vmatprep.subr.bf16.mxu0 0
  %952 = vmatpush1.bf16.msra.mxu0 0
  %953 = vmatprep.subr.bf16.mxu0 0
  %954 = vmatpush1.bf16.msra.mxu0 0
  %955 = vmatprep.subr.bf16.mxu0 0
  %956 = vmatpush1.bf16.msra.mxu0 0
  %957 = vmatprep.subr.bf16.mxu0 0
  %958 = vmatpush1.bf16.msra.mxu0 0
  %959 = vmatprep.subr.bf16.mxu0 0
  %960 = vmatpush1.bf16.msra.mxu0 0
  %961 = vmatprep.subr.bf16.mxu0 0
  %962 = vmatpush1.bf16.msra.mxu0 0
  %963 = vmatprep.subr.bf16.mxu0 0
  %964 = vmatpush1.bf16.msra.mxu0 0
  %965 = vmatprep.subr.bf16.mxu0 0
  %966 = vmatpush1.bf16.msra.mxu0 0
  %967 = vmatprep.subr.bf16.mxu0 0
  %968 = vmatpush1.bf16.msra.mxu0 0
  %969 = vmatprep.subr.bf16.mxu0 0
  %970 = vmatpush1.bf16.msra.mxu0 0
  %971 = vmatprep.mubr.bf16.mxu0 0
  %972 = vmatmul.mubr.bf16.gmra.mrb[0].mxu0 %v937
  %v973 = vpop.f32.mrb[0].mxu0
  %v974 = vadd.f32 %v553, %v973
  %v975 = vpop.f32.mrb[0].mxu0
  %v976 = vadd.f32 %v555, %v975
  %v977 = vpop.f32.mrb[0].mxu0
  %v978 = vpop.f32.mrb[0].mxu0
  %979 = vdwg.mxu0
  %980 = vmatprep.subr.bf16.mxu0 %v931
  %981 = vmatpush1.bf16.msra.mxu0 %v930
  %982 = vmatprep.subr.bf16.mxu0 0
  %983 = vmatpush1.bf16.msra.mxu0 0
  %984 = vmatprep.subr.bf16.mxu0 0
  %985 = vmatpush1.bf16.msra.mxu0 0
  %986 = vmatprep.subr.bf16.mxu0 0
  %987 = vmatpush1.bf16.msra.mxu0 0
  %988 = vmatprep.subr.bf16.mxu0 0
  %989 = vmatpush1.bf16.msra.mxu0 0
  %990 = vmatprep.subr.bf16.mxu0 0
  %991 = vmatpush1.bf16.msra.mxu0 0
  %992 = vmatprep.subr.bf16.mxu0 0
  %993 = vmatpush1.bf16.msra.mxu0 0
  %994 = vmatprep.subr.bf16.mxu0 0
  %995 = vmatpush1.bf16.msra.mxu0 0
  %996 = vmatprep.subr.bf16.mxu0 0
  %997 = vmatpush1.bf16.msra.mxu0 0
  %998 = vmatprep.subr.bf16.mxu0 0
  %999 = vmatpush1.bf16.msra.mxu0 0
  %1000 = vmatprep.subr.bf16.mxu0 0
  %1001 = vmatpush1.bf16.msra.mxu0 0
  %1002 = vmatprep.subr.bf16.mxu0 0
  %1003 = vmatpush1.bf16.msra.mxu0 0
  %1004 = vmatprep.subr.bf16.mxu0 0
  %1005 = vmatpush1.bf16.msra.mxu0 0
  %1006 = vmatprep.subr.bf16.mxu0 0
  %1007 = vmatpush1.bf16.msra.mxu0 0
  %1008 = vmatprep.subr.bf16.mxu0 0
  %1009 = vmatpush1.bf16.msra.mxu0 0
  %1010 = vmatprep.subr.bf16.mxu0 0
  %1011 = vmatpush1.bf16.msra.mxu0 0
  %1012 = vmatprep.mubr.bf16.mxu0 0
  %1013 = vmatmul.mubr.bf16.gmra.mrb[0].mxu0 %v937
  %v1014 = vpop.f32.mrb[0].mxu0
  %v1015 = vadd.f32 %v594, %v1014
  %v1016 = vpop.f32.mrb[0].mxu0
  %v1017 = vadd.f32 %v596, %v1016
  %v1018 = vpop.f32.mrb[0].mxu0
  %v1019 = vpop.f32.mrb[0].mxu0
  %1020 = vdwg.mxu0
  %v1025 = vunpack.c.l.b16 %v78
  %v1026 = vunpack.c.h.b16 %v78
  %v1027 = vunpack.c.l.b16 %v79
  %v1028 = vunpack.c.h.b16 %v79
  %v1029 = vunpack.c.l.b16 %v80
  %v1030 = vunpack.c.h.b16 %v80
  %v1031 = vunpack.c.l.b16 %v81
  %v1032 = vunpack.c.h.b16 %v81
  %v1033 = vpack.c.b16 %v1029, %v1025
  %v1034 = vpack.c.b16 %v1030, %v1026
  %v1035 = vpack.c.b16 %v1031, %v1027
  %v1036 = vpack.c.b16 %v1032, %v1028
  %v1042 = vsel %vm620, %v50, 0
  %1044 = vmatprep.subr.bf16.mxu0 %v1034
  %1045 = vmatpush1.bf16.msra.mxu0 %v1033
  %1046 = vmatprep.subr.bf16.mxu0 0
  %1047 = vmatpush1.bf16.msra.mxu0 0
  %1048 = vmatprep.subr.bf16.mxu0 0
  %1049 = vmatpush1.bf16.msra.mxu0 0
  %1050 = vmatprep.subr.bf16.mxu0 0
  %1051 = vmatpush1.bf16.msra.mxu0 0
  %1052 = vmatprep.subr.bf16.mxu0 0
  %1053 = vmatpush1.bf16.msra.mxu0 0
  %1054 = vmatprep.subr.bf16.mxu0 0
  %1055 = vmatpush1.bf16.msra.mxu0 0
  %1056 = vmatprep.subr.bf16.mxu0 0
  %1057 = vmatpush1.bf16.msra.mxu0 0
  %1058 = vmatprep.subr.bf16.mxu0 0
  %1059 = vmatpush1.bf16.msra.mxu0 0
  %1060 = vmatprep.subr.bf16.mxu0 0
  %1061 = vmatpush1.bf16.msra.mxu0 0
  %1062 = vmatprep.subr.bf16.mxu0 0
  %1063 = vmatpush1.bf16.msra.mxu0 0
  %1064 = vmatprep.subr.bf16.mxu0 0
  %1065 = vmatpush1.bf16.msra.mxu0 0
  %1066 = vmatprep.subr.bf16.mxu0 0
  %1067 = vmatpush1.bf16.msra.mxu0 0
  %1068 = vmatprep.subr.bf16.mxu0 0
  %1069 = vmatpush1.bf16.msra.mxu0 0
  %1070 = vmatprep.subr.bf16.mxu0 0
  %1071 = vmatpush1.bf16.msra.mxu0 0
  %1072 = vmatprep.subr.bf16.mxu0 0
  %1073 = vmatpush1.bf16.msra.mxu0 0
  %1074 = vmatprep.subr.bf16.mxu0 0
  %1075 = vmatpush1.bf16.msra.mxu0 0
  %1076 = vmatprep.mubr.bf16.mxu0 0
  %1077 = vmatmul.mubr.bf16.gmra.mrb[0].mxu0 %v1042
  %v1078 = vpop.f32.mrb[0].mxu0
  %v1079 = vadd.f32 %v553, %v1078
  %v1080 = vpop.f32.mrb[0].mxu0
  %v1081 = vadd.f32 %v555, %v1080
  %v1082 = vpop.f32.mrb[0].mxu0
  %v1083 = vpop.f32.mrb[0].mxu0
  %1084 = vdwg.mxu0
  %1085 = vmatprep.subr.bf16.mxu0 %v1036
  %1086 = vmatpush1.bf16.msra.mxu0 %v1035
  %1087 = vmatprep.subr.bf16.mxu0 0
  %1088 = vmatpush1.bf16.msra.mxu0 0
  %1089 = vmatprep.subr.bf16.mxu0 0
  %1090 = vmatpush1.bf16.msra.mxu0 0
  %1091 = vmatprep.subr.bf16.mxu0 0
  %1092 = vmatpush1.bf16.msra.mxu0 0
  %1093 = vmatprep.subr.bf16.mxu0 0
  %1094 = vmatpush1.bf16.msra.mxu0 0
  %1095 = vmatprep.subr.bf16.mxu0 0
  %1096 = vmatpush1.bf16.msra.mxu0 0
  %1097 = vmatprep.subr.bf16.mxu0 0
  %1098 = vmatpush1.bf16.msra.mxu0 0
  %1099 = vmatprep.subr.bf16.mxu0 0
  %1100 = vmatpush1.bf16.msra.mxu0 0
  %1101 = vmatprep.subr.bf16.mxu0 0
  %1102 = vmatpush1.bf16.msra.mxu0 0
  %1103 = vmatprep.subr.bf16.mxu0 0
  %1104 = vmatpush1.bf16.msra.mxu0 0
  %1105 = vmatprep.subr.bf16.mxu0 0
  %1106 = vmatpush1.bf16.msra.mxu0 0
  %1107 = vmatprep.subr.bf16.mxu0 0
  %1108 = vmatpush1.bf16.msra.mxu0 0
  %1109 = vmatprep.subr.bf16.mxu0 0
  %1110 = vmatpush1.bf16.msra.mxu0 0
  %1111 = vmatprep.subr.bf16.mxu0 0
  %1112 = vmatpush1.bf16.msra.mxu0 0
  %1113 = vmatprep.subr.bf16.mxu0 0
  %1114 = vmatpush1.bf16.msra.mxu0 0
  %1115 = vmatprep.subr.bf16.mxu0 0
  %1116 = vmatpush1.bf16.msra.mxu0 0
  %1117 = vmatprep.mubr.bf16.mxu0 0
  %1118 = vmatmul.mubr.bf16.gmra.mrb[0].mxu0 %v1042
  %v1119 = vpop.f32.mrb[0].mxu0
  %v1120 = vadd.f32 %v594, %v1119
  %v1121 = vpop.f32.mrb[0].mxu0
  %v1122 = vadd.f32 %v596, %v1121
  %v1123 = vpop.f32.mrb[0].mxu0
  %v1124 = vpop.f32.mrb[0].mxu0
  %1125 = vdwg.mxu0
  %v1130 = vunpack.c.l.b16 %v82
  %v1131 = vunpack.c.h.b16 %v82
  %v1132 = vunpack.c.l.b16 %v83
  %v1133 = vunpack.c.h.b16 %v83
  %v1134 = vunpack.c.l.b16 %v84
  %v1135 = vunpack.c.h.b16 %v84
  %v1136 = vunpack.c.l.b16 %v85
  %v1137 = vunpack.c.h.b16 %v85
  %v1138 = vpack.c.b16 %v1134, %v1130
  %v1139 = vpack.c.b16 %v1135, %v1131
  %v1140 = vpack.c.b16 %v1136, %v1132
  %v1141 = vpack.c.b16 %v1137, %v1133
  %v1147 = vsel %vm620, %v51, 0
  %1149 = vmatprep.subr.bf16.mxu0 %v1139
  %1150 = vmatpush1.bf16.msra.mxu0 %v1138
  %1151 = vmatprep.subr.bf16.mxu0 0
  %1152 = vmatpush1.bf16.msra.mxu0 0
  %1153 = vmatprep.subr.bf16.mxu0 0
  %1154 = vmatpush1.bf16.msra.mxu0 0
  %1155 = vmatprep.subr.bf16.mxu0 0
  %1156 = vmatpush1.bf16.msra.mxu0 0
  %1157 = vmatprep.subr.bf16.mxu0 0
  %1158 = vmatpush1.bf16.msra.mxu0 0
  %1159 = vmatprep.subr.bf16.mxu0 0
  %1160 = vmatpush1.bf16.msra.mxu0 0
  %1161 = vmatprep.subr.bf16.mxu0 0
  %1162 = vmatpush1.bf16.msra.mxu0 0
  %1163 = vmatprep.subr.bf16.mxu0 0
  %1164 = vmatpush1.bf16.msra.mxu0 0
  %1165 = vmatprep.subr.bf16.mxu0 0
  %1166 = vmatpush1.bf16.msra.mxu0 0
  %1167 = vmatprep.subr.bf16.mxu0 0
  %1168 = vmatpush1.bf16.msra.mxu0 0
  %1169 = vmatprep.subr.bf16.mxu0 0
  %1170 = vmatpush1.bf16.msra.mxu0 0
  %1171 = vmatprep.subr.bf16.mxu0 0
  %1172 = vmatpush1.bf16.msra.mxu0 0
  %1173 = vmatprep.subr.bf16.mxu0 0
  %1174 = vmatpush1.bf16.msra.mxu0 0
  %1175 = vmatprep.subr.bf16.mxu0 0
  %1176 = vmatpush1.bf16.msra.mxu0 0
  %1177 = vmatprep.subr.bf16.mxu0 0
  %1178 = vmatpush1.bf16.msra.mxu0 0
  %1179 = vmatprep.subr.bf16.mxu0 0
  %1180 = vmatpush1.bf16.msra.mxu0 0
  %1181 = vmatprep.mubr.bf16.mxu0 0
  %1182 = vmatmul.mubr.bf16.gmra.mrb[0].mxu0 %v1147
  %v1183 = vpop.f32.mrb[0].mxu0
  %v1184 = vadd.f32 %v553, %v1183
  %v1185 = vpop.f32.mrb[0].mxu0
  %v1186 = vadd.f32 %v555, %v1185
  %v1187 = vpop.f32.mrb[0].mxu0
  %v1188 = vpop.f32.mrb[0].mxu0
  %1189 = vdwg.mxu0
  %1190 = vmatprep.subr.bf16.mxu0 %v1141
  %1191 = vmatpush1.bf16.msra.mxu0 %v1140
  %1192 = vmatprep.subr.bf16.mxu0 0
  %1193 = vmatpush1.bf16.msra.mxu0 0
  %1194 = vmatprep.subr.bf16.mxu0 0
  %1195 = vmatpush1.bf16.msra.mxu0 0
  %1196 = vmatprep.subr.bf16.mxu0 0
  %1197 = vmatpush1.bf16.msra.mxu0 0
  %1198 = vmatprep.subr.bf16.mxu0 0
  %1199 = vmatpush1.bf16.msra.mxu0 0
  %1200 = vmatprep.subr.bf16.mxu0 0
  %1201 = vmatpush1.bf16.msra.mxu0 0
  %1202 = vmatprep.subr.bf16.mxu0 0
  %1203 = vmatpush1.bf16.msra.mxu0 0
  %1204 = vmatprep.subr.bf16.mxu0 0
  %1205 = vmatpush1.bf16.msra.mxu0 0
  %1206 = vmatprep.subr.bf16.mxu0 0
  %1207 = vmatpush1.bf16.msra.mxu0 0
  %1208 = vmatprep.subr.bf16.mxu0 0
  %1209 = vmatpush1.bf16.msra.mxu0 0
  %1210 = vmatprep.subr.bf16.mxu0 0
  %1211 = vmatpush1.bf16.msra.mxu0 0
  %1212 = vmatprep.subr.bf16.mxu0 0
  %1213 = vmatpush1.bf16.msra.mxu0 0
  %1214 = vmatprep.subr.bf16.mxu0 0
  %1215 = vmatpush1.bf16.msra.mxu0 0
  %1216 = vmatprep.subr.bf16.mxu0 0
  %1217 = vmatpush1.bf16.msra.mxu0 0
  %1218 = vmatprep.subr.bf16.mxu0 0
  %1219 = vmatpush1.bf16.msra.mxu0 0
  %1220 = vmatprep.subr.bf16.mxu0 0
  %1221 = vmatpush1.bf16.msra.mxu0 0
  %1222 = vmatprep.mubr.bf16.mxu0 0
  %1223 = vmatmul.mubr.bf16.gmra.mrb[0].mxu0 %v1147
  %v1224 = vpop.f32.mrb[0].mxu0
  %v1225 = vadd.f32 %v594, %v1224
  %v1226 = vpop.f32.mrb[0].mxu0
  %v1227 = vadd.f32 %v596, %v1226
  %v1228 = vpop.f32.mrb[0].mxu0
  %v1229 = vpop.f32.mrb[0].mxu0
  %1230 = vdwg.mxu0
  %v1235 = vunpack.c.l.b16 %v86
  %v1236 = vunpack.c.h.b16 %v86
  %v1237 = vunpack.c.l.b16 %v87
  %v1238 = vunpack.c.h.b16 %v87
  %v1239 = vunpack.c.l.b16 %v88
  %v1240 = vunpack.c.h.b16 %v88
  %v1241 = vunpack.c.l.b16 %v89
  %v1242 = vunpack.c.h.b16 %v89
  %v1243 = vpack.c.b16 %v1239, %v1235
  %v1244 = vpack.c.b16 %v1240, %v1236
  %v1245 = vpack.c.b16 %v1241, %v1237
  %v1246 = vpack.c.b16 %v1242, %v1238
  %v1252 = vsel %vm620, %v52, 0
  %1254 = vmatprep.subr.bf16.mxu0 %v1244
  %1255 = vmatpush1.bf16.msra.mxu0 %v1243
  %1256 = vmatprep.subr.bf16.mxu0 0
  %1257 = vmatpush1.bf16.msra.mxu0 0
  %1258 = vmatprep.subr.bf16.mxu0 0
  %1259 = vmatpush1.bf16.msra.mxu0 0
  %1260 = vmatprep.subr.bf16.mxu0 0
  %1261 = vmatpush1.bf16.msra.mxu0 0
  %1262 = vmatprep.subr.bf16.mxu0 0
  %1263 = vmatpush1.bf16.msra.mxu0 0
  %1264 = vmatprep.subr.bf16.mxu0 0
  %1265 = vmatpush1.bf16.msra.mxu0 0
  %1266 = vmatprep.subr.bf16.mxu0 0
  %1267 = vmatpush1.bf16.msra.mxu0 0
  %1268 = vmatprep.subr.bf16.mxu0 0
  %1269 = vmatpush1.bf16.msra.mxu0 0
  %1270 = vmatprep.subr.bf16.mxu0 0
  %1271 = vmatpush1.bf16.msra.mxu0 0
  %1272 = vmatprep.subr.bf16.mxu0 0
  %1273 = vmatpush1.bf16.msra.mxu0 0
  %1274 = vmatprep.subr.bf16.mxu0 0
  %1275 = vmatpush1.bf16.msra.mxu0 0
  %1276 = vmatprep.subr.bf16.mxu0 0
  %1277 = vmatpush1.bf16.msra.mxu0 0
  %1278 = vmatprep.subr.bf16.mxu0 0
  %1279 = vmatpush1.bf16.msra.mxu0 0
  %1280 = vmatprep.subr.bf16.mxu0 0
  %1281 = vmatpush1.bf16.msra.mxu0 0
  %1282 = vmatprep.subr.bf16.mxu0 0
  %1283 = vmatpush1.bf16.msra.mxu0 0
  %1284 = vmatprep.subr.bf16.mxu0 0
  %1285 = vmatpush1.bf16.msra.mxu0 0
  %1286 = vmatprep.mubr.bf16.mxu0 0
  %1287 = vmatmul.mubr.bf16.gmra.mrb[0].mxu0 %v1252
  %v1288 = vpop.f32.mrb[0].mxu0
  %v1289 = vadd.f32 %v553, %v1288
  %v1290 = vpop.f32.mrb[0].mxu0
  %v1291 = vadd.f32 %v555, %v1290
  %v1292 = vpop.f32.mrb[0].mxu0
  %v1293 = vpop.f32.mrb[0].mxu0
  %1294 = vdwg.mxu0
  %1295 = vmatprep.subr.bf16.mxu0 %v1246
  %1296 = vmatpush1.bf16.msra.mxu0 %v1245
  %1297 = vmatprep.subr.bf16.mxu0 0
  %1298 = vmatpush1.bf16.msra.mxu0 0
  %1299 = vmatprep.subr.bf16.mxu0 0
  %1300 = vmatpush1.bf16.msra.mxu0 0
  %1301 = vmatprep.subr.bf16.mxu0 0
  %1302 = vmatpush1.bf16.msra.mxu0 0
  %1303 = vmatprep.subr.bf16.mxu0 0
  %1304 = vmatpush1.bf16.msra.mxu0 0
  %1305 = vmatprep.subr.bf16.mxu0 0
  %1306 = vmatpush1.bf16.msra.mxu0 0
  %1307 = vmatprep.subr.bf16.mxu0 0
  %1308 = vmatpush1.bf16.msra.mxu0 0
  %1309 = vmatprep.subr.bf16.mxu0 0
  %1310 = vmatpush1.bf16.msra.mxu0 0
  %1311 = vmatprep.subr.bf16.mxu0 0
  %1312 = vmatpush1.bf16.msra.mxu0 0
  %1313 = vmatprep.subr.bf16.mxu0 0
  %1314 = vmatpush1.bf16.msra.mxu0 0
  %1315 = vmatprep.subr.bf16.mxu0 0
  %1316 = vmatpush1.bf16.msra.mxu0 0
  %1317 = vmatprep.subr.bf16.mxu0 0
  %1318 = vmatpush1.bf16.msra.mxu0 0
  %1319 = vmatprep.subr.bf16.mxu0 0
  %1320 = vmatpush1.bf16.msra.mxu0 0
  %1321 = vmatprep.subr.bf16.mxu0 0
  %1322 = vmatpush1.bf16.msra.mxu0 0
  %1323 = vmatprep.subr.bf16.mxu0 0
  %1324 = vmatpush1.bf16.msra.mxu0 0
  %1325 = vmatprep.subr.bf16.mxu0 0
  %1326 = vmatpush1.bf16.msra.mxu0 0
  %1327 = vmatprep.mubr.bf16.mxu0 0
  %1328 = vmatmul.mubr.bf16.gmra.mrb[0].mxu0 %v1252
  %v1329 = vpop.f32.mrb[0].mxu0
  %v1330 = vadd.f32 %v594, %v1329
  %v1331 = vpop.f32.mrb[0].mxu0
  %v1332 = vadd.f32 %v596, %v1331
  %v1333 = vpop.f32.mrb[0].mxu0
  %v1334 = vpop.f32.mrb[0].mxu0
  %1335 = vdwg.mxu0
  %v1340 = vunpack.c.l.b16 %v90
  %v1341 = vunpack.c.h.b16 %v90
  %v1342 = vunpack.c.l.b16 %v91
  %v1343 = vunpack.c.h.b16 %v91
  %v1344 = vunpack.c.l.b16 %v92
  %v1345 = vunpack.c.h.b16 %v92
  %v1346 = vunpack.c.l.b16 %v93
  %v1347 = vunpack.c.h.b16 %v93
  %v1348 = vpack.c.b16 %v1344, %v1340
  %v1349 = vpack.c.b16 %v1345, %v1341
  %v1350 = vpack.c.b16 %v1346, %v1342
  %v1351 = vpack.c.b16 %v1347, %v1343
  %v1357 = vsel %vm620, %v53, 0
  %1359 = vmatprep.subr.bf16.mxu0 %v1349
  %1360 = vmatpush1.bf16.msra.mxu0 %v1348
  %1361 = vmatprep.subr.bf16.mxu0 0
  %1362 = vmatpush1.bf16.msra.mxu0 0
  %1363 = vmatprep.subr.bf16.mxu0 0
  %1364 = vmatpush1.bf16.msra.mxu0 0
  %1365 = vmatprep.subr.bf16.mxu0 0
  %1366 = vmatpush1.bf16.msra.mxu0 0
  %1367 = vmatprep.subr.bf16.mxu0 0
  %1368 = vmatpush1.bf16.msra.mxu0 0
  %1369 = vmatprep.subr.bf16.mxu0 0
  %1370 = vmatpush1.bf16.msra.mxu0 0
  %1371 = vmatprep.subr.bf16.mxu0 0
  %1372 = vmatpush1.bf16.msra.mxu0 0
  %1373 = vmatprep.subr.bf16.mxu0 0
  %1374 = vmatpush1.bf16.msra.mxu0 0
  %1375 = vmatprep.subr.bf16.mxu0 0
  %1376 = vmatpush1.bf16.msra.mxu0 0
  %1377 = vmatprep.subr.bf16.mxu0 0
  %1378 = vmatpush1.bf16.msra.mxu0 0
  %1379 = vmatprep.subr.bf16.mxu0 0
  %1380 = vmatpush1.bf16.msra.mxu0 0
  %1381 = vmatprep.subr.bf16.mxu0 0
  %1382 = vmatpush1.bf16.msra.mxu0 0
  %1383 = vmatprep.subr.bf16.mxu0 0
  %1384 = vmatpush1.bf16.msra.mxu0 0
  %1385 = vmatprep.subr.bf16.mxu0 0
  %1386 = vmatpush1.bf16.msra.mxu0 0
  %1387 = vmatprep.subr.bf16.mxu0 0
  %1388 = vmatpush1.bf16.msra.mxu0 0
  %1389 = vmatprep.subr.bf16.mxu0 0
  %1390 = vmatpush1.bf16.msra.mxu0 0
  %1391 = vmatprep.mubr.bf16.mxu0 0
  %1392 = vmatmul.mubr.bf16.gmra.mrb[0].mxu0 %v1357
  %v1393 = vpop.f32.mrb[0].mxu0
  %v1394 = vadd.f32 %v553, %v1393
  %v1395 = vpop.f32.mrb[0].mxu0
  %v1396 = vadd.f32 %v555, %v1395
  %v1397 = vpop.f32.mrb[0].mxu0
  %v1398 = vpop.f32.mrb[0].mxu0
  %1399 = vdwg.mxu0
  %1400 = vmatprep.subr.bf16.mxu0 %v1351
  %1401 = vmatpush1.bf16.msra.mxu0 %v1350
  %1402 = vmatprep.subr.bf16.mxu0 0
  %1403 = vmatpush1.bf16.msra.mxu0 0
  %1404 = vmatprep.subr.bf16.mxu0 0
  %1405 = vmatpush1.bf16.msra.mxu0 0
  %1406 = vmatprep.subr.bf16.mxu0 0
  %1407 = vmatpush1.bf16.msra.mxu0 0
  %1408 = vmatprep.subr.bf16.mxu0 0
  %1409 = vmatpush1.bf16.msra.mxu0 0
  %1410 = vmatprep.subr.bf16.mxu0 0
  %1411 = vmatpush1.bf16.msra.mxu0 0
  %1412 = vmatprep.subr.bf16.mxu0 0
  %1413 = vmatpush1.bf16.msra.mxu0 0
  %1414 = vmatprep.subr.bf16.mxu0 0
  %1415 = vmatpush1.bf16.msra.mxu0 0
  %1416 = vmatprep.subr.bf16.mxu0 0
  %1417 = vmatpush1.bf16.msra.mxu0 0
  %1418 = vmatprep.subr.bf16.mxu0 0
  %1419 = vmatpush1.bf16.msra.mxu0 0
  %1420 = vmatprep.subr.bf16.mxu0 0
  %1421 = vmatpush1.bf16.msra.mxu0 0
  %1422 = vmatprep.subr.bf16.mxu0 0
  %1423 = vmatpush1.bf16.msra.mxu0 0
  %1424 = vmatprep.subr.bf16.mxu0 0
  %1425 = vmatpush1.bf16.msra.mxu0 0
  %1426 = vmatprep.subr.bf16.mxu0 0
  %1427 = vmatpush1.bf16.msra.mxu0 0
  %1428 = vmatprep.subr.bf16.mxu0 0
  %1429 = vmatpush1.bf16.msra.mxu0 0
  %1430 = vmatprep.subr.bf16.mxu0 0
  %1431 = vmatpush1.bf16.msra.mxu0 0
  %1432 = vmatprep.mubr.bf16.mxu0 0
  %1433 = vmatmul.mubr.bf16.gmra.mrb[0].mxu0 %v1357
  %v1434 = vpop.f32.mrb[0].mxu0
  %v1435 = vadd.f32 %v594, %v1434
  %v1436 = vpop.f32.mrb[0].mxu0
  %v1437 = vadd.f32 %v596, %v1436
  %v1438 = vpop.f32.mrb[0].mxu0
  %v1439 = vpop.f32.mrb[0].mxu0
  %1440 = vdwg.mxu0
  %v1445 = vunpack.c.l.b16 %v94
  %v1446 = vunpack.c.h.b16 %v94
  %v1447 = vunpack.c.l.b16 %v95
  %v1448 = vunpack.c.h.b16 %v95
  %v1449 = vunpack.c.l.b16 %v96
  %v1450 = vunpack.c.h.b16 %v96
  %v1451 = vunpack.c.l.b16 %v97
  %v1452 = vunpack.c.h.b16 %v97
  %v1453 = vpack.c.b16 %v1449, %v1445
  %v1454 = vpack.c.b16 %v1450, %v1446
  %v1455 = vpack.c.b16 %v1451, %v1447
  %v1456 = vpack.c.b16 %v1452, %v1448
  %v1462 = vsel %vm620, %v54, 0
  %1464 = vmatprep.subr.bf16.mxu0 %v1454
  %1465 = vmatpush1.bf16.msra.mxu0 %v1453
  %1466 = vmatprep.subr.bf16.mxu0 0
  %1467 = vmatpush1.bf16.msra.mxu0 0
  %1468 = vmatprep.subr.bf16.mxu0 0
  %1469 = vmatpush1.bf16.msra.mxu0 0
  %1470 = vmatprep.subr.bf16.mxu0 0
  %1471 = vmatpush1.bf16.msra.mxu0 0
  %1472 = vmatprep.subr.bf16.mxu0 0
  %1473 = vmatpush1.bf16.msra.mxu0 0
  %1474 = vmatprep.subr.bf16.mxu0 0
  %1475 = vmatpush1.bf16.msra.mxu0 0
  %1476 = vmatprep.subr.bf16.mxu0 0
  %1477 = vmatpush1.bf16.msra.mxu0 0
  %1478 = vmatprep.subr.bf16.mxu0 0
  %1479 = vmatpush1.bf16.msra.mxu0 0
  %1480 = vmatprep.subr.bf16.mxu0 0
  %1481 = vmatpush1.bf16.msra.mxu0 0
  %1482 = vmatprep.subr.bf16.mxu0 0
  %1483 = vmatpush1.bf16.msra.mxu0 0
  %1484 = vmatprep.subr.bf16.mxu0 0
  %1485 = vmatpush1.bf16.msra.mxu0 0
  %1486 = vmatprep.subr.bf16.mxu0 0
  %1487 = vmatpush1.bf16.msra.mxu0 0
  %1488 = vmatprep.subr.bf16.mxu0 0
  %1489 = vmatpush1.bf16.msra.mxu0 0
  %1490 = vmatprep.subr.bf16.mxu0 0
  %1491 = vmatpush1.bf16.msra.mxu0 0
  %1492 = vmatprep.subr.bf16.mxu0 0
  %1493 = vmatpush1.bf16.msra.mxu0 0
  %1494 = vmatprep.subr.bf16.mxu0 0
  %1495 = vmatpush1.bf16.msra.mxu0 0
  %1496 = vmatprep.mubr.bf16.mxu0 0
  %1497 = vmatmul.mubr.bf16.gmra.mrb[0].mxu0 %v1462
  %v1498 = vpop.f32.mrb[0].mxu0
  %v1499 = vadd.f32 %v553, %v1498
  %v1500 = vpop.f32.mrb[0].mxu0
  %v1501 = vadd.f32 %v555, %v1500
  %v1502 = vpop.f32.mrb[0].mxu0
  %v1503 = vpop.f32.mrb[0].mxu0
  %1504 = vdwg.mxu0
  %1505 = vmatprep.subr.bf16.mxu0 %v1456
  %1506 = vmatpush1.bf16.msra.mxu0 %v1455
  %1507 = vmatprep.subr.bf16.mxu0 0
  %1508 = vmatpush1.bf16.msra.mxu0 0
  %1509 = vmatprep.subr.bf16.mxu0 0
  %1510 = vmatpush1.bf16.msra.mxu0 0
  %1511 = vmatprep.subr.bf16.mxu0 0
  %1512 = vmatpush1.bf16.msra.mxu0 0
  %1513 = vmatprep.subr.bf16.mxu0 0
  %1514 = vmatpush1.bf16.msra.mxu0 0
  %1515 = vmatprep.subr.bf16.mxu0 0
  %1516 = vmatpush1.bf16.msra.mxu0 0
  %1517 = vmatprep.subr.bf16.mxu0 0
  %1518 = vmatpush1.bf16.msra.mxu0 0
  %1519 = vmatprep.subr.bf16.mxu0 0
  %1520 = vmatpush1.bf16.msra.mxu0 0
  %1521 = vmatprep.subr.bf16.mxu0 0
  %1522 = vmatpush1.bf16.msra.mxu0 0
  %1523 = vmatprep.subr.bf16.mxu0 0
  %1524 = vmatpush1.bf16.msra.mxu0 0
  %1525 = vmatprep.subr.bf16.mxu0 0
  %1526 = vmatpush1.bf16.msra.mxu0 0
  %1527 = vmatprep.subr.bf16.mxu0 0
  %1528 = vmatpush1.bf16.msra.mxu0 0
  %1529 = vmatprep.subr.bf16.mxu0 0
  %1530 = vmatpush1.bf16.msra.mxu0 0
  %1531 = vmatprep.subr.bf16.mxu0 0
  %1532 = vmatpush1.bf16.msra.mxu0 0
  %1533 = vmatprep.subr.bf16.mxu0 0
  %1534 = vmatpush1.bf16.msra.mxu0 0
  %1535 = vmatprep.subr.bf16.mxu0 0
  %1536 = vmatpush1.bf16.msra.mxu0 0
  %1537 = vmatprep.mubr.bf16.mxu0 0
  %1538 = vmatmul.mubr.bf16.gmra.mrb[0].mxu0 %v1462
  %v1539 = vpop.f32.mrb[0].mxu0
  %v1540 = vadd.f32 %v594, %v1539
  %v1541 = vpop.f32.mrb[0].mxu0
  %v1542 = vadd.f32 %v596, %v1541
  %v1543 = vpop.f32.mrb[0].mxu0
  %v1544 = vpop.f32.mrb[0].mxu0
  %1545 = vdwg.mxu0
  %v1550 = vunpack.c.l.b16 %v98
  %v1551 = vunpack.c.h.b16 %v98
  %v1552 = vunpack.c.l.b16 %v99
  %v1553 = vunpack.c.h.b16 %v99
  %v1554 = vunpack.c.l.b16 %v100
  %v1555 = vunpack.c.h.b16 %v100
  %v1556 = vunpack.c.l.b16 %v101
  %v1557 = vunpack.c.h.b16 %v101
  %v1558 = vpack.c.b16 %v1554, %v1550
  %v1559 = vpack.c.b16 %v1555, %v1551
  %v1560 = vpack.c.b16 %v1556, %v1552
  %v1561 = vpack.c.b16 %v1557, %v1553
  %v1567 = vsel %vm620, %v55, 0
  %1569 = vmatprep.subr.bf16.mxu0 %v1559
  %1570 = vmatpush1.bf16.msra.mxu0 %v1558
  %1571 = vmatprep.subr.bf16.mxu0 0
  %1572 = vmatpush1.bf16.msra.mxu0 0
  %1573 = vmatprep.subr.bf16.mxu0 0
  %1574 = vmatpush1.bf16.msra.mxu0 0
  %1575 = vmatprep.subr.bf16.mxu0 0
  %1576 = vmatpush1.bf16.msra.mxu0 0
  %1577 = vmatprep.subr.bf16.mxu0 0
  %1578 = vmatpush1.bf16.msra.mxu0 0
  %1579 = vmatprep.subr.bf16.mxu0 0
  %1580 = vmatpush1.bf16.msra.mxu0 0
  %1581 = vmatprep.subr.bf16.mxu0 0
  %1582 = vmatpush1.bf16.msra.mxu0 0
  %1583 = vmatprep.subr.bf16.mxu0 0
  %1584 = vmatpush1.bf16.msra.mxu0 0
  %1585 = vmatprep.subr.bf16.mxu0 0
  %1586 = vmatpush1.bf16.msra.mxu0 0
  %1587 = vmatprep.subr.bf16.mxu0 0
  %1588 = vmatpush1.bf16.msra.mxu0 0
  %1589 = vmatprep.subr.bf16.mxu0 0
  %1590 = vmatpush1.bf16.msra.mxu0 0
  %1591 = vmatprep.subr.bf16.mxu0 0
  %1592 = vmatpush1.bf16.msra.mxu0 0
  %1593 = vmatprep.subr.bf16.mxu0 0
  %1594 = vmatpush1.bf16.msra.mxu0 0
  %1595 = vmatprep.subr.bf16.mxu0 0
  %1596 = vmatpush1.bf16.msra.mxu0 0
  %1597 = vmatprep.subr.bf16.mxu0 0
  %1598 = vmatpush1.bf16.msra.mxu0 0
  %1599 = vmatprep.subr.bf16.mxu0 0
  %1600 = vmatpush1.bf16.msra.mxu0 0
  %1601 = vmatprep.mubr.bf16.mxu0 0
  %1602 = vmatmul.mubr.bf16.gmra.mrb[0].mxu0 %v1567
  %v1603 = vpop.f32.mrb[0].mxu0
  %v1604 = vadd.f32 %v553, %v1603
  %v1605 = vpop.f32.mrb[0].mxu0
  %v1606 = vadd.f32 %v555, %v1605
  %v1607 = vpop.f32.mrb[0].mxu0
  %v1608 = vpop.f32.mrb[0].mxu0
  %1609 = vdwg.mxu0
  %1610 = vmatprep.subr.bf16.mxu0 %v1561
  %1611 = vmatpush1.bf16.msra.mxu0 %v1560
  %1612 = vmatprep.subr.bf16.mxu0 0
  %1613 = vmatpush1.bf16.msra.mxu0 0
  %1614 = vmatprep.subr.bf16.mxu0 0
  %1615 = vmatpush1.bf16.msra.mxu0 0
  %1616 = vmatprep.subr.bf16.mxu0 0
  %1617 = vmatpush1.bf16.msra.mxu0 0
  %1618 = vmatprep.subr.bf16.mxu0 0
  %1619 = vmatpush1.bf16.msra.mxu0 0
  %1620 = vmatprep.subr.bf16.mxu0 0
  %1621 = vmatpush1.bf16.msra.mxu0 0
  %1622 = vmatprep.subr.bf16.mxu0 0
  %1623 = vmatpush1.bf16.msra.mxu0 0
  %1624 = vmatprep.subr.bf16.mxu0 0
  %1625 = vmatpush1.bf16.msra.mxu0 0
  %1626 = vmatprep.subr.bf16.mxu0 0
  %1627 = vmatpush1.bf16.msra.mxu0 0
  %1628 = vmatprep.subr.bf16.mxu0 0
  %1629 = vmatpush1.bf16.msra.mxu0 0
  %1630 = vmatprep.subr.bf16.mxu0 0
  %1631 = vmatpush1.bf16.msra.mxu0 0
  %1632 = vmatprep.subr.bf16.mxu0 0
  %1633 = vmatpush1.bf16.msra.mxu0 0
  %1634 = vmatprep.subr.bf16.mxu0 0
  %1635 = vmatpush1.bf16.msra.mxu0 0
  %1636 = vmatprep.subr.bf16.mxu0 0
  %1637 = vmatpush1.bf16.msra.mxu0 0
  %1638 = vmatprep.subr.bf16.mxu0 0
  %1639 = vmatpush1.bf16.msra.mxu0 0
  %1640 = vmatprep.subr.bf16.mxu0 0
  %1641 = vmatpush1.bf16.msra.mxu0 0
  %1642 = vmatprep.mubr.bf16.mxu0 0
  %1643 = vmatmul.mubr.bf16.gmra.mrb[0].mxu0 %v1567
  %v1644 = vpop.f32.mrb[0].mxu0
  %v1645 = vadd.f32 %v594, %v1644
  %v1646 = vpop.f32.mrb[0].mxu0
  %v1647 = vadd.f32 %v596, %v1646
  %v1648 = vpop.f32.mrb[0].mxu0
  %v1649 = vpop.f32.mrb[0].mxu0
  %1650 = vdwg.mxu0
  %v1655 = vunpack.c.l.b16 %v102
  %v1656 = vunpack.c.h.b16 %v102
  %v1657 = vunpack.c.l.b16 %v103
  %v1658 = vunpack.c.h.b16 %v103
  %v1659 = vunpack.c.l.b16 %v104
  %v1660 = vunpack.c.h.b16 %v104
  %v1661 = vunpack.c.l.b16 %v105
  %v1662 = vunpack.c.h.b16 %v105
  %v1663 = vpack.c.b16 %v1659, %v1655
  %v1664 = vpack.c.b16 %v1660, %v1656
  %v1665 = vpack.c.b16 %v1661, %v1657
  %v1666 = vpack.c.b16 %v1662, %v1658
  %v1672 = vsel %vm620, %v56, 0
  %1674 = vmatprep.subr.bf16.mxu0 %v1664
  %1675 = vmatpush1.bf16.msra.mxu0 %v1663
  %1676 = vmatprep.subr.bf16.mxu0 0
  %1677 = vmatpush1.bf16.msra.mxu0 0
  %1678 = vmatprep.subr.bf16.mxu0 0
  %1679 = vmatpush1.bf16.msra.mxu0 0
  %1680 = vmatprep.subr.bf16.mxu0 0
  %1681 = vmatpush1.bf16.msra.mxu0 0
  %1682 = vmatprep.subr.bf16.mxu0 0
  %1683 = vmatpush1.bf16.msra.mxu0 0
  %1684 = vmatprep.subr.bf16.mxu0 0
  %1685 = vmatpush1.bf16.msra.mxu0 0
  %1686 = vmatprep.subr.bf16.mxu0 0
  %1687 = vmatpush1.bf16.msra.mxu0 0
  %1688 = vmatprep.subr.bf16.mxu0 0
  %1689 = vmatpush1.bf16.msra.mxu0 0
  %1690 = vmatprep.subr.bf16.mxu0 0
  %1691 = vmatpush1.bf16.msra.mxu0 0
  %1692 = vmatprep.subr.bf16.mxu0 0
  %1693 = vmatpush1.bf16.msra.mxu0 0
  %1694 = vmatprep.subr.bf16.mxu0 0
  %1695 = vmatpush1.bf16.msra.mxu0 0
  %1696 = vmatprep.subr.bf16.mxu0 0
  %1697 = vmatpush1.bf16.msra.mxu0 0
  %1698 = vmatprep.subr.bf16.mxu0 0
  %1699 = vmatpush1.bf16.msra.mxu0 0
  %1700 = vmatprep.subr.bf16.mxu0 0
  %1701 = vmatpush1.bf16.msra.mxu0 0
  %1702 = vmatprep.subr.bf16.mxu0 0
  %1703 = vmatpush1.bf16.msra.mxu0 0
  %1704 = vmatprep.subr.bf16.mxu0 0
  %1705 = vmatpush1.bf16.msra.mxu0 0
  %1706 = vmatprep.mubr.bf16.mxu0 0
  %1707 = vmatmul.mubr.bf16.gmra.mrb[0].mxu0 %v1672
  %v1708 = vpop.f32.mrb[0].mxu0
  %v1709 = vadd.f32 %v553, %v1708
  %v1710 = vpop.f32.mrb[0].mxu0
  %v1711 = vadd.f32 %v555, %v1710
  %v1712 = vpop.f32.mrb[0].mxu0
  %v1713 = vpop.f32.mrb[0].mxu0
  %1714 = vdwg.mxu0
  %1715 = vmatprep.subr.bf16.mxu0 %v1666
  %1716 = vmatpush1.bf16.msra.mxu0 %v1665
  %1717 = vmatprep.subr.bf16.mxu0 0
  %1718 = vmatpush1.bf16.msra.mxu0 0
  %1719 = vmatprep.subr.bf16.mxu0 0
  %1720 = vmatpush1.bf16.msra.mxu0 0
  %1721 = vmatprep.subr.bf16.mxu0 0
  %1722 = vmatpush1.bf16.msra.mxu0 0
  %1723 = vmatprep.subr.bf16.mxu0 0
  %1724 = vmatpush1.bf16.msra.mxu0 0
  %1725 = vmatprep.subr.bf16.mxu0 0
  %1726 = vmatpush1.bf16.msra.mxu0 0
  %1727 = vmatprep.subr.bf16.mxu0 0
  %1728 = vmatpush1.bf16.msra.mxu0 0
  %1729 = vmatprep.subr.bf16.mxu0 0
  %1730 = vmatpush1.bf16.msra.mxu0 0
  %1731 = vmatprep.subr.bf16.mxu0 0
  %1732 = vmatpush1.bf16.msra.mxu0 0
  %1733 = vmatprep.subr.bf16.mxu0 0
  %1734 = vmatpush1.bf16.msra.mxu0 0
  %1735 = vmatprep.subr.bf16.mxu0 0
  %1736 = vmatpush1.bf16.msra.mxu0 0
  %1737 = vmatprep.subr.bf16.mxu0 0
  %1738 = vmatpush1.bf16.msra.mxu0 0
  %1739 = vmatprep.subr.bf16.mxu0 0
  %1740 = vmatpush1.bf16.msra.mxu0 0
  %1741 = vmatprep.subr.bf16.mxu0 0
  %1742 = vmatpush1.bf16.msra.mxu0 0
  %1743 = vmatprep.subr.bf16.mxu0 0
  %1744 = vmatpush1.bf16.msra.mxu0 0
  %1745 = vmatprep.subr.bf16.mxu0 0
  %1746 = vmatpush1.bf16.msra.mxu0 0
  %1747 = vmatprep.mubr.bf16.mxu0 0
  %1748 = vmatmul.mubr.bf16.gmra.mrb[0].mxu0 %v1672
  %v1749 = vpop.f32.mrb[0].mxu0
  %v1750 = vadd.f32 %v594, %v1749
  %v1751 = vpop.f32.mrb[0].mxu0
  %v1752 = vadd.f32 %v596, %v1751
  %v1753 = vpop.f32.mrb[0].mxu0
  %v1754 = vpop.f32.mrb[0].mxu0
  %1755 = vdwg.mxu0
  %v1760 = vunpack.c.l.b16 %v106
  %v1761 = vunpack.c.h.b16 %v106
  %v1762 = vunpack.c.l.b16 %v107
  %v1763 = vunpack.c.h.b16 %v107
  %v1764 = vunpack.c.l.b16 %v108
  %v1765 = vunpack.c.h.b16 %v108
  %v1766 = vunpack.c.l.b16 %v109
  %v1767 = vunpack.c.h.b16 %v109
  %v1768 = vpack.c.b16 %v1764, %v1760
  %v1769 = vpack.c.b16 %v1765, %v1761
  %v1770 = vpack.c.b16 %v1766, %v1762
  %v1771 = vpack.c.b16 %v1767, %v1763
  %v1777 = vsel %vm620, %v57, 0
  %1779 = vmatprep.subr.bf16.mxu0 %v1769
  %1780 = vmatpush1.bf16.msra.mxu0 %v1768
  %1781 = vmatprep.subr.bf16.mxu0 0
  %1782 = vmatpush1.bf16.msra.mxu0 0
  %1783 = vmatprep.subr.bf16.mxu0 0
  %1784 = vmatpush1.bf16.msra.mxu0 0
  %1785 = vmatprep.subr.bf16.mxu0 0
  %1786 = vmatpush1.bf16.msra.mxu0 0
  %1787 = vmatprep.subr.bf16.mxu0 0
  %1788 = vmatpush1.bf16.msra.mxu0 0
  %1789 = vmatprep.subr.bf16.mxu0 0
  %1790 = vmatpush1.bf16.msra.mxu0 0
  %1791 = vmatprep.subr.bf16.mxu0 0
  %1792 = vmatpush1.bf16.msra.mxu0 0
  %1793 = vmatprep.subr.bf16.mxu0 0
  %1794 = vmatpush1.bf16.msra.mxu0 0
  %1795 = vmatprep.subr.bf16.mxu0 0
  %1796 = vmatpush1.bf16.msra.mxu0 0
  %1797 = vmatprep.subr.bf16.mxu0 0
  %1798 = vmatpush1.bf16.msra.mxu0 0
  %1799 = vmatprep.subr.bf16.mxu0 0
  %1800 = vmatpush1.bf16.msra.mxu0 0
  %1801 = vmatprep.subr.bf16.mxu0 0
  %1802 = vmatpush1.bf16.msra.mxu0 0
  %1803 = vmatprep.subr.bf16.mxu0 0
  %1804 = vmatpush1.bf16.msra.mxu0 0
  %1805 = vmatprep.subr.bf16.mxu0 0
  %1806 = vmatpush1.bf16.msra.mxu0 0
  %1807 = vmatprep.subr.bf16.mxu0 0
  %1808 = vmatpush1.bf16.msra.mxu0 0
  %1809 = vmatprep.subr.bf16.mxu0 0
  %1810 = vmatpush1.bf16.msra.mxu0 0
  %1811 = vmatprep.mubr.bf16.mxu0 0
  %1812 = vmatmul.mubr.bf16.gmra.mrb[0].mxu0 %v1777
  %v1813 = vpop.f32.mrb[0].mxu0
  %v1814 = vadd.f32 %v553, %v1813
  %v1815 = vpop.f32.mrb[0].mxu0
  %v1816 = vadd.f32 %v555, %v1815
  %v1817 = vpop.f32.mrb[0].mxu0
  %v1818 = vpop.f32.mrb[0].mxu0
  %1819 = vdwg.mxu0
  %1820 = vmatprep.subr.bf16.mxu0 %v1771
  %1821 = vmatpush1.bf16.msra.mxu0 %v1770
  %1822 = vmatprep.subr.bf16.mxu0 0
  %1823 = vmatpush1.bf16.msra.mxu0 0
  %1824 = vmatprep.subr.bf16.mxu0 0
  %1825 = vmatpush1.bf16.msra.mxu0 0
  %1826 = vmatprep.subr.bf16.mxu0 0
  %1827 = vmatpush1.bf16.msra.mxu0 0
  %1828 = vmatprep.subr.bf16.mxu0 0
  %1829 = vmatpush1.bf16.msra.mxu0 0
  %1830 = vmatprep.subr.bf16.mxu0 0
  %1831 = vmatpush1.bf16.msra.mxu0 0
  %1832 = vmatprep.subr.bf16.mxu0 0
  %1833 = vmatpush1.bf16.msra.mxu0 0
  %1834 = vmatprep.subr.bf16.mxu0 0
  %1835 = vmatpush1.bf16.msra.mxu0 0
  %1836 = vmatprep.subr.bf16.mxu0 0
  %1837 = vmatpush1.bf16.msra.mxu0 0
  %1838 = vmatprep.subr.bf16.mxu0 0
  %1839 = vmatpush1.bf16.msra.mxu0 0
  %1840 = vmatprep.subr.bf16.mxu0 0
  %1841 = vmatpush1.bf16.msra.mxu0 0
  %1842 = vmatprep.subr.bf16.mxu0 0
  %1843 = vmatpush1.bf16.msra.mxu0 0
  %1844 = vmatprep.subr.bf16.mxu0 0
  %1845 = vmatpush1.bf16.msra.mxu0 0
  %1846 = vmatprep.subr.bf16.mxu0 0
  %1847 = vmatpush1.bf16.msra.mxu0 0
  %1848 = vmatprep.subr.bf16.mxu0 0
  %1849 = vmatpush1.bf16.msra.mxu0 0
  %1850 = vmatprep.subr.bf16.mxu0 0
  %1851 = vmatpush1.bf16.msra.mxu0 0
  %1852 = vmatprep.mubr.bf16.mxu0 0
  %1853 = vmatmul.mubr.bf16.gmra.mrb[0].mxu0 %v1777
  %v1854 = vpop.f32.mrb[0].mxu0
  %v1855 = vadd.f32 %v594, %v1854
  %v1856 = vpop.f32.mrb[0].mxu0
  %v1857 = vadd.f32 %v596, %v1856
  %v1858 = vpop.f32.mrb[0].mxu0
  %v1859 = vpop.f32.mrb[0].mxu0
  %1860 = vdwg.mxu0
  %v1865 = vunpack.c.l.b16 %v110
  %v1866 = vunpack.c.h.b16 %v110
  %v1867 = vunpack.c.l.b16 %v111
  %v1868 = vunpack.c.h.b16 %v111
  %v1869 = vunpack.c.l.b16 %v112
  %v1870 = vunpack.c.h.b16 %v112
  %v1871 = vunpack.c.l.b16 %v113
  %v1872 = vunpack.c.h.b16 %v113
  %v1873 = vpack.c.b16 %v1869, %v1865
  %v1874 = vpack.c.b16 %v1870, %v1866
  %v1875 = vpack.c.b16 %v1871, %v1867
  %v1876 = vpack.c.b16 %v1872, %v1868
  %v1882 = vsel %vm620, %v58, 0
  %1884 = vmatprep.subr.bf16.mxu0 %v1874
  %1885 = vmatpush1.bf16.msra.mxu0 %v1873
  %1886 = vmatprep.subr.bf16.mxu0 0
  %1887 = vmatpush1.bf16.msra.mxu0 0
  %1888 = vmatprep.subr.bf16.mxu0 0
  %1889 = vmatpush1.bf16.msra.mxu0 0
  %1890 = vmatprep.subr.bf16.mxu0 0
  %1891 = vmatpush1.bf16.msra.mxu0 0
  %1892 = vmatprep.subr.bf16.mxu0 0
  %1893 = vmatpush1.bf16.msra.mxu0 0
  %1894 = vmatprep.subr.bf16.mxu0 0
  %1895 = vmatpush1.bf16.msra.mxu0 0
  %1896 = vmatprep.subr.bf16.mxu0 0
  %1897 = vmatpush1.bf16.msra.mxu0 0
  %1898 = vmatprep.subr.bf16.mxu0 0
  %1899 = vmatpush1.bf16.msra.mxu0 0
  %1900 = vmatprep.subr.bf16.mxu0 0
  %1901 = vmatpush1.bf16.msra.mxu0 0
  %1902 = vmatprep.subr.bf16.mxu0 0
  %1903 = vmatpush1.bf16.msra.mxu0 0
  %1904 = vmatprep.subr.bf16.mxu0 0
  %1905 = vmatpush1.bf16.msra.mxu0 0
  %1906 = vmatprep.subr.bf16.mxu0 0
  %1907 = vmatpush1.bf16.msra.mxu0 0
  %1908 = vmatprep.subr.bf16.mxu0 0
  %1909 = vmatpush1.bf16.msra.mxu0 0
  %1910 = vmatprep.subr.bf16.mxu0 0
  %1911 = vmatpush1.bf16.msra.mxu0 0
  %1912 = vmatprep.subr.bf16.mxu0 0
  %1913 = vmatpush1.bf16.msra.mxu0 0
  %1914 = vmatprep.subr.bf16.mxu0 0
  %1915 = vmatpush1.bf16.msra.mxu0 0
  %1916 = vmatprep.mubr.bf16.mxu0 0
  %1917 = vmatmul.mubr.bf16.gmra.mrb[0].mxu0 %v1882
  %v1918 = vpop.f32.mrb[0].mxu0
  %v1919 = vadd.f32 %v553, %v1918
  %v1920 = vpop.f32.mrb[0].mxu0
  %v1921 = vadd.f32 %v555, %v1920
  %v1922 = vpop.f32.mrb[0].mxu0
  %v1923 = vpop.f32.mrb[0].mxu0
  %1924 = vdwg.mxu0
  %1925 = vmatprep.subr.bf16.mxu0 %v1876
  %1926 = vmatpush1.bf16.msra.mxu0 %v1875
  %1927 = vmatprep.subr.bf16.mxu0 0
  %1928 = vmatpush1.bf16.msra.mxu0 0
  %1929 = vmatprep.subr.bf16.mxu0 0
  %1930 = vmatpush1.bf16.msra.mxu0 0
  %1931 = vmatprep.subr.bf16.mxu0 0
  %1932 = vmatpush1.bf16.msra.mxu0 0
  %1933 = vmatprep.subr.bf16.mxu0 0
  %1934 = vmatpush1.bf16.msra.mxu0 0
  %1935 = vmatprep.subr.bf16.mxu0 0
  %1936 = vmatpush1.bf16.msra.mxu0 0
  %1937 = vmatprep.subr.bf16.mxu0 0
  %1938 = vmatpush1.bf16.msra.mxu0 0
  %1939 = vmatprep.subr.bf16.mxu0 0
  %1940 = vmatpush1.bf16.msra.mxu0 0
  %1941 = vmatprep.subr.bf16.mxu0 0
  %1942 = vmatpush1.bf16.msra.mxu0 0
  %1943 = vmatprep.subr.bf16.mxu0 0
  %1944 = vmatpush1.bf16.msra.mxu0 0
  %1945 = vmatprep.subr.bf16.mxu0 0
  %1946 = vmatpush1.bf16.msra.mxu0 0
  %1947 = vmatprep.subr.bf16.mxu0 0
  %1948 = vmatpush1.bf16.msra.mxu0 0
  %1949 = vmatprep.subr.bf16.mxu0 0
  %1950 = vmatpush1.bf16.msra.mxu0 0
  %1951 = vmatprep.subr.bf16.mxu0 0
  %1952 = vmatpush1.bf16.msra.mxu0 0
  %1953 = vmatprep.subr.bf16.mxu0 0
  %1954 = vmatpush1.bf16.msra.mxu0 0
  %1955 = vmatprep.subr.bf16.mxu0 0
  %1956 = vmatpush1.bf16.msra.mxu0 0
  %1957 = vmatprep.mubr.bf16.mxu0 0
  %1958 = vmatmul.mubr.bf16.gmra.mrb[0].mxu0 %v1882
  %v1959 = vpop.f32.mrb[0].mxu0
  %v1960 = vadd.f32 %v594, %v1959
  %v1961 = vpop.f32.mrb[0].mxu0
  %v1962 = vadd.f32 %v596, %v1961
  %v1963 = vpop.f32.mrb[0].mxu0
  %v1964 = vpop.f32.mrb[0].mxu0
  %1965 = vdwg.mxu0
  %v1970 = vunpack.c.l.b16 %v114
  %v1971 = vunpack.c.h.b16 %v114
  %v1972 = vunpack.c.l.b16 %v115
  %v1973 = vunpack.c.h.b16 %v115
  %v1974 = vunpack.c.l.b16 %v116
  %v1975 = vunpack.c.h.b16 %v116
  %v1976 = vunpack.c.l.b16 %v117
  %v1977 = vunpack.c.h.b16 %v117
  %v1978 = vpack.c.b16 %v1974, %v1970
  %v1979 = vpack.c.b16 %v1975, %v1971
  %v1980 = vpack.c.b16 %v1976, %v1972
  %v1981 = vpack.c.b16 %v1977, %v1973
  %v1987 = vsel %vm620, %v59, 0
  %1989 = vmatprep.subr.bf16.mxu0 %v1979
  %1990 = vmatpush1.bf16.msra.mxu0 %v1978
  %1991 = vmatprep.subr.bf16.mxu0 0
  %1992 = vmatpush1.bf16.msra.mxu0 0
  %1993 = vmatprep.subr.bf16.mxu0 0
  %1994 = vmatpush1.bf16.msra.mxu0 0
  %1995 = vmatprep.subr.bf16.mxu0 0
  %1996 = vmatpush1.bf16.msra.mxu0 0
  %1997 = vmatprep.subr.bf16.mxu0 0
  %1998 = vmatpush1.bf16.msra.mxu0 0
  %1999 = vmatprep.subr.bf16.mxu0 0
  %2000 = vmatpush1.bf16.msra.mxu0 0
  %2001 = vmatprep.subr.bf16.mxu0 0
  %2002 = vmatpush1.bf16.msra.mxu0 0
  %2003 = vmatprep.subr.bf16.mxu0 0
  %2004 = vmatpush1.bf16.msra.mxu0 0
  %2005 = vmatprep.subr.bf16.mxu0 0
  %2006 = vmatpush1.bf16.msra.mxu0 0
  %2007 = vmatprep.subr.bf16.mxu0 0
  %2008 = vmatpush1.bf16.msra.mxu0 0
  %2009 = vmatprep.subr.bf16.mxu0 0
  %2010 = vmatpush1.bf16.msra.mxu0 0
  %2011 = vmatprep.subr.bf16.mxu0 0
  %2012 = vmatpush1.bf16.msra.mxu0 0
  %2013 = vmatprep.subr.bf16.mxu0 0
  %2014 = vmatpush1.bf16.msra.mxu0 0
  %2015 = vmatprep.subr.bf16.mxu0 0
  %2016 = vmatpush1.bf16.msra.mxu0 0
  %2017 = vmatprep.subr.bf16.mxu0 0
  %2018 = vmatpush1.bf16.msra.mxu0 0
  %2019 = vmatprep.subr.bf16.mxu0 0
  %2020 = vmatpush1.bf16.msra.mxu0 0
  %2021 = vmatprep.mubr.bf16.mxu0 0
  %2022 = vmatmul.mubr.bf16.gmra.mrb[0].mxu0 %v1987
  %v2023 = vpop.f32.mrb[0].mxu0
  %v2024 = vadd.f32 %v553, %v2023
  %v2025 = vpop.f32.mrb[0].mxu0
  %v2026 = vadd.f32 %v555, %v2025
  %v2027 = vpop.f32.mrb[0].mxu0
  %v2028 = vpop.f32.mrb[0].mxu0
  %2029 = vdwg.mxu0
  %2030 = vmatprep.subr.bf16.mxu0 %v1981
  %2031 = vmatpush1.bf16.msra.mxu0 %v1980
  %2032 = vmatprep.subr.bf16.mxu0 0
  %2033 = vmatpush1.bf16.msra.mxu0 0
  %2034 = vmatprep.subr.bf16.mxu0 0
  %2035 = vmatpush1.bf16.msra.mxu0 0
  %2036 = vmatprep.subr.bf16.mxu0 0
  %2037 = vmatpush1.bf16.msra.mxu0 0
  %2038 = vmatprep.subr.bf16.mxu0 0
  %2039 = vmatpush1.bf16.msra.mxu0 0
  %2040 = vmatprep.subr.bf16.mxu0 0
  %2041 = vmatpush1.bf16.msra.mxu0 0
  %2042 = vmatprep.subr.bf16.mxu0 0
  %2043 = vmatpush1.bf16.msra.mxu0 0
  %2044 = vmatprep.subr.bf16.mxu0 0
  %2045 = vmatpush1.bf16.msra.mxu0 0
  %2046 = vmatprep.subr.bf16.mxu0 0
  %2047 = vmatpush1.bf16.msra.mxu0 0
  %2048 = vmatprep.subr.bf16.mxu0 0
  %2049 = vmatpush1.bf16.msra.mxu0 0
  %2050 = vmatprep.subr.bf16.mxu0 0
  %2051 = vmatpush1.bf16.msra.mxu0 0
  %2052 = vmatprep.subr.bf16.mxu0 0
  %2053 = vmatpush1.bf16.msra.mxu0 0
  %2054 = vmatprep.subr.bf16.mxu0 0
  %2055 = vmatpush1.bf16.msra.mxu0 0
  %2056 = vmatprep.subr.bf16.mxu0 0
  %2057 = vmatpush1.bf16.msra.mxu0 0
  %2058 = vmatprep.subr.bf16.mxu0 0
  %2059 = vmatpush1.bf16.msra.mxu0 0
  %2060 = vmatprep.subr.bf16.mxu0 0
  %2061 = vmatpush1.bf16.msra.mxu0 0
  %2062 = vmatprep.mubr.bf16.mxu0 0
  %2063 = vmatmul.mubr.bf16.gmra.mrb[0].mxu0 %v1987
  %v2064 = vpop.f32.mrb[0].mxu0
  %v2065 = vadd.f32 %v594, %v2064
  %v2066 = vpop.f32.mrb[0].mxu0
  %v2067 = vadd.f32 %v596, %v2066
  %v2068 = vpop.f32.mrb[0].mxu0
  %v2069 = vpop.f32.mrb[0].mxu0
  %2070 = vdwg.mxu0
  %v2075 = vunpack.c.l.b16 %v118
  %v2076 = vunpack.c.h.b16 %v118
  %v2077 = vunpack.c.l.b16 %v119
  %v2078 = vunpack.c.h.b16 %v119
  %v2079 = vunpack.c.l.b16 %v120
  %v2080 = vunpack.c.h.b16 %v120
  %v2081 = vunpack.c.l.b16 %v121
  %v2082 = vunpack.c.h.b16 %v121
  %v2083 = vpack.c.b16 %v2079, %v2075
  %v2084 = vpack.c.b16 %v2080, %v2076
  %v2085 = vpack.c.b16 %v2081, %v2077
  %v2086 = vpack.c.b16 %v2082, %v2078
  %v2092 = vsel %vm620, %v60, 0
  %2094 = vmatprep.subr.bf16.mxu0 %v2084
  %2095 = vmatpush1.bf16.msra.mxu0 %v2083
  %2096 = vmatprep.subr.bf16.mxu0 0
  %2097 = vmatpush1.bf16.msra.mxu0 0
  %2098 = vmatprep.subr.bf16.mxu0 0
  %2099 = vmatpush1.bf16.msra.mxu0 0
  %2100 = vmatprep.subr.bf16.mxu0 0
  %2101 = vmatpush1.bf16.msra.mxu0 0
  %2102 = vmatprep.subr.bf16.mxu0 0
  %2103 = vmatpush1.bf16.msra.mxu0 0
  %2104 = vmatprep.subr.bf16.mxu0 0
  %2105 = vmatpush1.bf16.msra.mxu0 0
  %2106 = vmatprep.subr.bf16.mxu0 0
  %2107 = vmatpush1.bf16.msra.mxu0 0
  %2108 = vmatprep.subr.bf16.mxu0 0
  %2109 = vmatpush1.bf16.msra.mxu0 0
  %2110 = vmatprep.subr.bf16.mxu0 0
  %2111 = vmatpush1.bf16.msra.mxu0 0
  %2112 = vmatprep.subr.bf16.mxu0 0
  %2113 = vmatpush1.bf16.msra.mxu0 0
  %2114 = vmatprep.subr.bf16.mxu0 0
  %2115 = vmatpush1.bf16.msra.mxu0 0
  %2116 = vmatprep.subr.bf16.mxu0 0
  %2117 = vmatpush1.bf16.msra.mxu0 0
  %2118 = vmatprep.subr.bf16.mxu0 0
  %2119 = vmatpush1.bf16.msra.mxu0 0
  %2120 = vmatprep.subr.bf16.mxu0 0
  %2121 = vmatpush1.bf16.msra.mxu0 0
  %2122 = vmatprep.subr.bf16.mxu0 0
  %2123 = vmatpush1.bf16.msra.mxu0 0
  %2124 = vmatprep.subr.bf16.mxu0 0
  %2125 = vmatpush1.bf16.msra.mxu0 0
  %2126 = vmatprep.mubr.bf16.mxu0 0
  %2127 = vmatmul.mubr.bf16.gmra.mrb[0].mxu0 %v2092
  %v2128 = vpop.f32.mrb[0].mxu0
  %v2129 = vadd.f32 %v553, %v2128
  %v2130 = vpop.f32.mrb[0].mxu0
  %v2131 = vadd.f32 %v555, %v2130
  %v2132 = vpop.f32.mrb[0].mxu0
  %v2133 = vpop.f32.mrb[0].mxu0
  %2134 = vdwg.mxu0
  %2135 = vmatprep.subr.bf16.mxu0 %v2086
  %2136 = vmatpush1.bf16.msra.mxu0 %v2085
  %2137 = vmatprep.subr.bf16.mxu0 0
  %2138 = vmatpush1.bf16.msra.mxu0 0
  %2139 = vmatprep.subr.bf16.mxu0 0
  %2140 = vmatpush1.bf16.msra.mxu0 0
  %2141 = vmatprep.subr.bf16.mxu0 0
  %2142 = vmatpush1.bf16.msra.mxu0 0
  %2143 = vmatprep.subr.bf16.mxu0 0
  %2144 = vmatpush1.bf16.msra.mxu0 0
  %2145 = vmatprep.subr.bf16.mxu0 0
  %2146 = vmatpush1.bf16.msra.mxu0 0
  %2147 = vmatprep.subr.bf16.mxu0 0
  %2148 = vmatpush1.bf16.msra.mxu0 0
  %2149 = vmatprep.subr.bf16.mxu0 0
  %2150 = vmatpush1.bf16.msra.mxu0 0
  %2151 = vmatprep.subr.bf16.mxu0 0
  %2152 = vmatpush1.bf16.msra.mxu0 0
  %2153 = vmatprep.subr.bf16.mxu0 0
  %2154 = vmatpush1.bf16.msra.mxu0 0
  %2155 = vmatprep.subr.bf16.mxu0 0
  %2156 = vmatpush1.bf16.msra.mxu0 0
  %2157 = vmatprep.subr.bf16.mxu0 0
  %2158 = vmatpush1.bf16.msra.mxu0 0
  %2159 = vmatprep.subr.bf16.mxu0 0
  %2160 = vmatpush1.bf16.msra.mxu0 0
  %2161 = vmatprep.subr.bf16.mxu0 0
  %2162 = vmatpush1.bf16.msra.mxu0 0
  %2163 = vmatprep.subr.bf16.mxu0 0
  %2164 = vmatpush1.bf16.msra.mxu0 0
  %2165 = vmatprep.subr.bf16.mxu0 0
  %2166 = vmatpush1.bf16.msra.mxu0 0
  %2167 = vmatprep.mubr.bf16.mxu0 0
  %2168 = vmatmul.mubr.bf16.gmra.mrb[0].mxu0 %v2092
  %v2169 = vpop.f32.mrb[0].mxu0
  %v2170 = vadd.f32 %v594, %v2169
  %v2171 = vpop.f32.mrb[0].mxu0
  %v2172 = vadd.f32 %v596, %v2171
  %v2173 = vpop.f32.mrb[0].mxu0
  %v2174 = vpop.f32.mrb[0].mxu0
  %2175 = vdwg.mxu0
  %v2180 = vunpack.c.l.b16 %v122
  %v2181 = vunpack.c.h.b16 %v122
  %v2182 = vunpack.c.l.b16 %v123
  %v2183 = vunpack.c.h.b16 %v123
  %v2184 = vunpack.c.l.b16 %v124
  %v2185 = vunpack.c.h.b16 %v124
  %v2186 = vunpack.c.l.b16 %v125
  %v2187 = vunpack.c.h.b16 %v125
  %v2188 = vpack.c.b16 %v2184, %v2180
  %v2189 = vpack.c.b16 %v2185, %v2181
  %v2190 = vpack.c.b16 %v2186, %v2182
  %v2191 = vpack.c.b16 %v2187, %v2183
  %v2197 = vsel %vm620, %v61, 0
  %2199 = vmatprep.subr.bf16.mxu0 %v2189
  %2200 = vmatpush1.bf16.msra.mxu0 %v2188
  %2201 = vmatprep.subr.bf16.mxu0 0
  %2202 = vmatpush1.bf16.msra.mxu0 0
  %2203 = vmatprep.subr.bf16.mxu0 0
  %2204 = vmatpush1.bf16.msra.mxu0 0
  %2205 = vmatprep.subr.bf16.mxu0 0
  %2206 = vmatpush1.bf16.msra.mxu0 0
  %2207 = vmatprep.subr.bf16.mxu0 0
  %2208 = vmatpush1.bf16.msra.mxu0 0
  %2209 = vmatprep.subr.bf16.mxu0 0
  %2210 = vmatpush1.bf16.msra.mxu0 0
  %2211 = vmatprep.subr.bf16.mxu0 0
  %2212 = vmatpush1.bf16.msra.mxu0 0
  %2213 = vmatprep.subr.bf16.mxu0 0
  %2214 = vmatpush1.bf16.msra.mxu0 0
  %2215 = vmatprep.subr.bf16.mxu0 0
  %2216 = vmatpush1.bf16.msra.mxu0 0
  %2217 = vmatprep.subr.bf16.mxu0 0
  %2218 = vmatpush1.bf16.msra.mxu0 0
  %2219 = vmatprep.subr.bf16.mxu0 0
  %2220 = vmatpush1.bf16.msra.mxu0 0
  %2221 = vmatprep.subr.bf16.mxu0 0
  %2222 = vmatpush1.bf16.msra.mxu0 0
  %2223 = vmatprep.subr.bf16.mxu0 0
  %2224 = vmatpush1.bf16.msra.mxu0 0
  %2225 = vmatprep.subr.bf16.mxu0 0
  %2226 = vmatpush1.bf16.msra.mxu0 0
  %2227 = vmatprep.subr.bf16.mxu0 0
  %2228 = vmatpush1.bf16.msra.mxu0 0
  %2229 = vmatprep.subr.bf16.mxu0 0
  %2230 = vmatpush1.bf16.msra.mxu0 0
  %2231 = vmatprep.mubr.bf16.mxu0 0
  %2232 = vmatmul.mubr.bf16.gmra.mrb[0].mxu0 %v2197
  %v2233 = vpop.f32.mrb[0].mxu0
  %v2234 = vadd.f32 %v553, %v2233
  %v2235 = vpop.f32.mrb[0].mxu0
  %v2236 = vadd.f32 %v555, %v2235
  %v2237 = vpop.f32.mrb[0].mxu0
  %v2238 = vpop.f32.mrb[0].mxu0
  %2239 = vdwg.mxu0
  %2240 = vmatprep.subr.bf16.mxu0 %v2191
  %2241 = vmatpush1.bf16.msra.mxu0 %v2190
  %2242 = vmatprep.subr.bf16.mxu0 0
  %2243 = vmatpush1.bf16.msra.mxu0 0
  %2244 = vmatprep.subr.bf16.mxu0 0
  %2245 = vmatpush1.bf16.msra.mxu0 0
  %2246 = vmatprep.subr.bf16.mxu0 0
  %2247 = vmatpush1.bf16.msra.mxu0 0
  %2248 = vmatprep.subr.bf16.mxu0 0
  %2249 = vmatpush1.bf16.msra.mxu0 0
  %2250 = vmatprep.subr.bf16.mxu0 0
  %2251 = vmatpush1.bf16.msra.mxu0 0
  %2252 = vmatprep.subr.bf16.mxu0 0
  %2253 = vmatpush1.bf16.msra.mxu0 0
  %2254 = vmatprep.subr.bf16.mxu0 0
  %2255 = vmatpush1.bf16.msra.mxu0 0
  %2256 = vmatprep.subr.bf16.mxu0 0
  %2257 = vmatpush1.bf16.msra.mxu0 0
  %2258 = vmatprep.subr.bf16.mxu0 0
  %2259 = vmatpush1.bf16.msra.mxu0 0
  %2260 = vmatprep.subr.bf16.mxu0 0
  %2261 = vmatpush1.bf16.msra.mxu0 0
  %2262 = vmatprep.subr.bf16.mxu0 0
  %2263 = vmatpush1.bf16.msra.mxu0 0
  %2264 = vmatprep.subr.bf16.mxu0 0
  %2265 = vmatpush1.bf16.msra.mxu0 0
  %2266 = vmatprep.subr.bf16.mxu0 0
  %2267 = vmatpush1.bf16.msra.mxu0 0
  %2268 = vmatprep.subr.bf16.mxu0 0
  %2269 = vmatpush1.bf16.msra.mxu0 0
  %2270 = vmatprep.subr.bf16.mxu0 0
  %2271 = vmatpush1.bf16.msra.mxu0 0
  %2272 = vmatprep.mubr.bf16.mxu0 0
  %2273 = vmatmul.mubr.bf16.gmra.mrb[0].mxu0 %v2197
  %v2274 = vpop.f32.mrb[0].mxu0
  %v2275 = vadd.f32 %v594, %v2274
  %v2276 = vpop.f32.mrb[0].mxu0
  %v2277 = vadd.f32 %v596, %v2276
  %v2278 = vpop.f32.mrb[0].mxu0
  %v2279 = vpop.f32.mrb[0].mxu0
  %2280 = vdwg.mxu0
  %vm2281 = vcmp.gt.f32.partialorder %v659, 0.0
  %vm2282 = vcmp.gt.f32.partialorder %v661, 0.0
  %vm2283 = vcmp.gt.f32.partialorder %v700, 0.0
  %vm2284 = vcmp.gt.f32.partialorder %v702, 0.0
  %vm2285 = vcmp.gt.f32.partialorder %v764, 0.0
  %vm2286 = vcmp.gt.f32.partialorder %v766, 0.0
  %vm2287 = vcmp.gt.f32.partialorder %v805, 0.0
  %vm2288 = vcmp.gt.f32.partialorder %v807, 0.0
  %vm2289 = vcmp.gt.f32.partialorder %v869, 0.0
  %vm2290 = vcmp.gt.f32.partialorder %v871, 0.0
  %vm2291 = vcmp.gt.f32.partialorder %v910, 0.0
  %vm2292 = vcmp.gt.f32.partialorder %v912, 0.0
  %vm2293 = vcmp.gt.f32.partialorder %v974, 0.0
  %vm2294 = vcmp.gt.f32.partialorder %v976, 0.0
  %vm2295 = vcmp.gt.f32.partialorder %v1015, 0.0
  %vm2296 = vcmp.gt.f32.partialorder %v1017, 0.0
  %vm2297 = vcmp.gt.f32.partialorder %v1079, 0.0
  %vm2298 = vcmp.gt.f32.partialorder %v1081, 0.0
  %vm2299 = vcmp.gt.f32.partialorder %v1120, 0.0
  %vm2300 = vcmp.gt.f32.partialorder %v1122, 0.0
  %vm2301 = vcmp.gt.f32.partialorder %v1184, 0.0
  %vm2302 = vcmp.gt.f32.partialorder %v1186, 0.0
  %vm2303 = vcmp.gt.f32.partialorder %v1225, 0.0
  %vm2304 = vcmp.gt.f32.partialorder %v1227, 0.0
  %vm2305 = vcmp.gt.f32.partialorder %v1289, 0.0
  %vm2306 = vcmp.gt.f32.partialorder %v1291, 0.0
  %vm2307 = vcmp.gt.f32.partialorder %v1330, 0.0
  %vm2308 = vcmp.gt.f32.partialorder %v1332, 0.0
  %vm2309 = vcmp.gt.f32.partialorder %v1394, 0.0
  %vm2310 = vcmp.gt.f32.partialorder %v1396, 0.0
  %vm2311 = vcmp.gt.f32.partialorder %v1435, 0.0
  %vm2312 = vcmp.gt.f32.partialorder %v1437, 0.0
  %vm2313 = vcmp.gt.f32.partialorder %v1499, 0.0
  %vm2314 = vcmp.gt.f32.partialorder %v1501, 0.0
  %vm2315 = vcmp.gt.f32.partialorder %v1540, 0.0
  %vm2316 = vcmp.gt.f32.partialorder %v1542, 0.0
  %vm2317 = vcmp.gt.f32.partialorder %v1604, 0.0
  %vm2318 = vcmp.gt.f32.partialorder %v1606, 0.0
  %vm2319 = vcmp.gt.f32.partialorder %v1645, 0.0
  %vm2320 = vcmp.gt.f32.partialorder %v1647, 0.0
  %vm2321 = vcmp.gt.f32.partialorder %v1709, 0.0
  %vm2322 = vcmp.gt.f32.partialorder %v1711, 0.0
  %vm2323 = vcmp.gt.f32.partialorder %v1750, 0.0
  %vm2324 = vcmp.gt.f32.partialorder %v1752, 0.0
  %vm2325 = vcmp.gt.f32.partialorder %v1814, 0.0
  %vm2326 = vcmp.gt.f32.partialorder %v1816, 0.0
  %vm2327 = vcmp.gt.f32.partialorder %v1855, 0.0
  %vm2328 = vcmp.gt.f32.partialorder %v1857, 0.0
  %vm2329 = vcmp.gt.f32.partialorder %v1919, 0.0
  %vm2330 = vcmp.gt.f32.partialorder %v1921, 0.0
  %vm2331 = vcmp.gt.f32.partialorder %v1960, 0.0
  %vm2332 = vcmp.gt.f32.partialorder %v1962, 0.0
  %vm2333 = vcmp.gt.f32.partialorder %v2024, 0.0
  %vm2334 = vcmp.gt.f32.partialorder %v2026, 0.0
  %vm2335 = vcmp.gt.f32.partialorder %v2065, 0.0
  %vm2336 = vcmp.gt.f32.partialorder %v2067, 0.0
  %vm2337 = vcmp.gt.f32.partialorder %v2129, 0.0
  %vm2338 = vcmp.gt.f32.partialorder %v2131, 0.0
  %vm2339 = vcmp.gt.f32.partialorder %v2170, 0.0
  %vm2340 = vcmp.gt.f32.partialorder %v2172, 0.0
  %vm2341 = vcmp.gt.f32.partialorder %v2234, 0.0
  %vm2342 = vcmp.gt.f32.partialorder %v2236, 0.0
  %vm2343 = vcmp.gt.f32.partialorder %v2275, 0.0
  %vm2344 = vcmp.gt.f32.partialorder %v2277, 0.0
  %v2345 = vmul.f32 %v659, 0.33
  %v2346 = vmul.f32 %v661, 0.33
  %v2347 = vmul.f32 %v700, 0.33
  %v2348 = vmul.f32 %v702, 0.33
  %v2349 = vmul.f32 %v764, 0.33
  %v2350 = vmul.f32 %v766, 0.33
  %v2351 = vmul.f32 %v805, 0.33
  %v2352 = vmul.f32 %v807, 0.33
  %v2353 = vmul.f32 %v869, 0.33
  %v2354 = vmul.f32 %v871, 0.33
  %v2355 = vmul.f32 %v910, 0.33
  %v2356 = vmul.f32 %v912, 0.33
  %v2357 = vmul.f32 %v974, 0.33
  %v2358 = vmul.f32 %v976, 0.33
  %v2359 = vmul.f32 %v1015, 0.33
  %v2360 = vmul.f32 %v1017, 0.33
  %v2361 = vmul.f32 %v1079, 0.33
  %v2362 = vmul.f32 %v1081, 0.33
  %v2363 = vmul.f32 %v1120, 0.33
  %v2364 = vmul.f32 %v1122, 0.33
  %v2365 = vmul.f32 %v1184, 0.33
  %v2366 = vmul.f32 %v1186, 0.33
  %v2367 = vmul.f32 %v1225, 0.33
  %v2368 = vmul.f32 %v1227, 0.33
  %v2369 = vmul.f32 %v1289, 0.33
  %v2370 = vmul.f32 %v1291, 0.33
  %v2371 = vmul.f32 %v1330, 0.33
  %v2372 = vmul.f32 %v1332, 0.33
  %v2373 = vmul.f32 %v1394, 0.33
  %v2374 = vmul.f32 %v1396, 0.33
  %v2375 = vmul.f32 %v1435, 0.33
  %v2376 = vmul.f32 %v1437, 0.33
  %v2377 = vmul.f32 %v1499, 0.33
  %v2378 = vmul.f32 %v1501, 0.33
  %v2379 = vmul.f32 %v1540, 0.33
  %v2380 = vmul.f32 %v1542, 0.33
  %v2381 = vmul.f32 %v1604, 0.33
  %v2382 = vmul.f32 %v1606, 0.33
  %v2383 = vmul.f32 %v1645, 0.33
  %v2384 = vmul.f32 %v1647, 0.33
  %v2385 = vmul.f32 %v1709, 0.33
  %v2386 = vmul.f32 %v1711, 0.33
  %v2387 = vmul.f32 %v1750, 0.33
  %v2388 = vmul.f32 %v1752, 0.33
  %v2389 = vmul.f32 %v1814, 0.33
  %v2390 = vmul.f32 %v1816, 0.33
  %v2391 = vmul.f32 %v1855, 0.33
  %v2392 = vmul.f32 %v1857, 0.33
  %v2393 = vmul.f32 %v1919, 0.33
  %v2394 = vmul.f32 %v1921, 0.33
  %v2395 = vmul.f32 %v1960, 0.33
  %v2396 = vmul.f32 %v1962, 0.33
  %v2397 = vmul.f32 %v2024, 0.33
  %v2398 = vmul.f32 %v2026, 0.33
  %v2399 = vmul.f32 %v2065, 0.33
  %v2400 = vmul.f32 %v2067, 0.33
  %v2401 = vmul.f32 %v2129, 0.33
  %v2402 = vmul.f32 %v2131, 0.33
  %v2403 = vmul.f32 %v2170, 0.33
  %v2404 = vmul.f32 %v2172, 0.33
  %v2405 = vmul.f32 %v2234, 0.33
  %v2406 = vmul.f32 %v2236, 0.33
  %v2407 = vmul.f32 %v2275, 0.33
  %v2408 = vmul.f32 %v2277, 0.33
  %v2409 = vsel %vm2281, %v659, %v2345
  %v2410 = vsel %vm2282, %v661, %v2346
  %v2411 = vsel %vm2283, %v700, %v2347
  %v2412 = vsel %vm2284, %v702, %v2348
  %v2413 = vsel %vm2285, %v764, %v2349
  %v2414 = vsel %vm2286, %v766, %v2350
  %v2415 = vsel %vm2287, %v805, %v2351
  %v2416 = vsel %vm2288, %v807, %v2352
  %v2417 = vsel %vm2289, %v869, %v2353
  %v2418 = vsel %vm2290, %v871, %v2354
  %v2419 = vsel %vm2291, %v910, %v2355
  %v2420 = vsel %vm2292, %v912, %v2356
  %v2421 = vsel %vm2293, %v974, %v2357
  %v2422 = vsel %vm2294, %v976, %v2358
  %v2423 = vsel %vm2295, %v1015, %v2359
  %v2424 = vsel %vm2296, %v1017, %v2360
  %v2425 = vsel %vm2297, %v1079, %v2361
  %v2426 = vsel %vm2298, %v1081, %v2362
  %v2427 = vsel %vm2299, %v1120, %v2363
  %v2428 = vsel %vm2300, %v1122, %v2364
  %v2429 = vsel %vm2301, %v1184, %v2365
  %v2430 = vsel %vm2302, %v1186, %v2366
  %v2431 = vsel %vm2303, %v1225, %v2367
  %v2432 = vsel %vm2304, %v1227, %v2368
  %v2433 = vsel %vm2305, %v1289, %v2369
  %v2434 = vsel %vm2306, %v1291, %v2370
  %v2435 = vsel %vm2307, %v1330, %v2371
  %v2436 = vsel %vm2308, %v1332, %v2372
  %v2437 = vsel %vm2309, %v1394, %v2373
  %v2438 = vsel %vm2310, %v1396, %v2374
  %v2439 = vsel %vm2311, %v1435, %v2375
  %v2440 = vsel %vm2312, %v1437, %v2376
  %v2441 = vsel %vm2313, %v1499, %v2377
  %v2442 = vsel %vm2314, %v1501, %v2378
  %v2443 = vsel %vm2315, %v1540, %v2379
  %v2444 = vsel %vm2316, %v1542, %v2380
  %v2445 = vsel %vm2317, %v1604, %v2381
  %v2446 = vsel %vm2318, %v1606, %v2382
  %v2447 = vsel %vm2319, %v1645, %v2383
  %v2448 = vsel %vm2320, %v1647, %v2384
  %v2449 = vsel %vm2321, %v1709, %v2385
  %v2450 = vsel %vm2322, %v1711, %v2386
  %v2451 = vsel %vm2323, %v1750, %v2387
  %v2452 = vsel %vm2324, %v1752, %v2388
  %v2453 = vsel %vm2325, %v1814, %v2389
  %v2454 = vsel %vm2326, %v1816, %v2390
  %v2455 = vsel %vm2327, %v1855, %v2391
  %v2456 = vsel %vm2328, %v1857, %v2392
  %v2457 = vsel %vm2329, %v1919, %v2393
  %v2458 = vsel %vm2330, %v1921, %v2394
  %v2459 = vsel %vm2331, %v1960, %v2395
  %v2460 = vsel %vm2332, %v1962, %v2396
  %v2461 = vsel %vm2333, %v2024, %v2397
  %v2462 = vsel %vm2334, %v2026, %v2398
  %v2463 = vsel %vm2335, %v2065, %v2399
  %v2464 = vsel %vm2336, %v2067, %v2400
  %v2465 = vsel %vm2337, %v2129, %v2401
  %v2466 = vsel %vm2338, %v2131, %v2402
  %v2467 = vsel %vm2339, %v2170, %v2403
  %v2468 = vsel %vm2340, %v2172, %v2404
  %v2469 = vsel %vm2341, %v2234, %v2405
  %v2470 = vsel %vm2342, %v2236, %v2406
  %v2471 = vsel %vm2343, %v2275, %v2407
  %v2472 = vsel %vm2344, %v2277, %v2408
  %v2473 = vpack.c.bf16 %v2409, %v2409
  %v2474 = vpack.c.bf16 %v2410, %v2410
  %v2475 = vpack.c.bf16 %v2411, %v2411
  %v2476 = vpack.c.bf16 %v2412, %v2412
  %v2477 = vpack.c.bf16 %v2413, %v2413
  %v2478 = vpack.c.bf16 %v2414, %v2414
  %v2479 = vpack.c.bf16 %v2415, %v2415
  %v2480 = vpack.c.bf16 %v2416, %v2416
  %v2481 = vpack.c.bf16 %v2417, %v2417
  %v2482 = vpack.c.bf16 %v2418, %v2418
  %v2483 = vpack.c.bf16 %v2419, %v2419
  %v2484 = vpack.c.bf16 %v2420, %v2420
  %v2485 = vpack.c.bf16 %v2421, %v2421
  %v2486 = vpack.c.bf16 %v2422, %v2422
  %v2487 = vpack.c.bf16 %v2423, %v2423
  %v2488 = vpack.c.bf16 %v2424, %v2424
  %v2489 = vpack.c.bf16 %v2425, %v2425
  %v2490 = vpack.c.bf16 %v2426, %v2426
  %v2491 = vpack.c.bf16 %v2427, %v2427
  %v2492 = vpack.c.bf16 %v2428, %v2428
  %v2493 = vpack.c.bf16 %v2429, %v2429
  %v2494 = vpack.c.bf16 %v2430, %v2430
  %v2495 = vpack.c.bf16 %v2431, %v2431
  %v2496 = vpack.c.bf16 %v2432, %v2432
  %v2497 = vpack.c.bf16 %v2433, %v2433
  %v2498 = vpack.c.bf16 %v2434, %v2434
  %v2499 = vpack.c.bf16 %v2435, %v2435
  %v2500 = vpack.c.bf16 %v2436, %v2436
  %v2501 = vpack.c.bf16 %v2437, %v2437
  %v2502 = vpack.c.bf16 %v2438, %v2438
  %v2503 = vpack.c.bf16 %v2439, %v2439
  %v2504 = vpack.c.bf16 %v2440, %v2440
  %v2505 = vpack.c.bf16 %v2441, %v2441
  %v2506 = vpack.c.bf16 %v2442, %v2442
  %v2507 = vpack.c.bf16 %v2443, %v2443
  %v2508 = vpack.c.bf16 %v2444, %v2444
  %v2509 = vpack.c.bf16 %v2445, %v2445
  %v2510 = vpack.c.bf16 %v2446, %v2446
  %v2511 = vpack.c.bf16 %v2447, %v2447
  %v2512 = vpack.c.bf16 %v2448, %v2448
  %v2513 = vpack.c.bf16 %v2449, %v2449
  %v2514 = vpack.c.bf16 %v2450, %v2450
  %v2515 = vpack.c.bf16 %v2451, %v2451
  %v2516 = vpack.c.bf16 %v2452, %v2452
  %v2517 = vpack.c.bf16 %v2453, %v2453
  %v2518 = vpack.c.bf16 %v2454, %v2454
  %v2519 = vpack.c.bf16 %v2455, %v2455
  %v2520 = vpack.c.bf16 %v2456, %v2456
  %v2521 = vpack.c.bf16 %v2457, %v2457
  %v2522 = vpack.c.bf16 %v2458, %v2458
  %v2523 = vpack.c.bf16 %v2459, %v2459
  %v2524 = vpack.c.bf16 %v2460, %v2460
  %v2525 = vpack.c.bf16 %v2461, %v2461
  %v2526 = vpack.c.bf16 %v2462, %v2462
  %v2527 = vpack.c.bf16 %v2463, %v2463
  %v2528 = vpack.c.bf16 %v2464, %v2464
  %v2529 = vpack.c.bf16 %v2465, %v2465
  %v2530 = vpack.c.bf16 %v2466, %v2466
  %v2531 = vpack.c.bf16 %v2467, %v2467
  %v2532 = vpack.c.bf16 %v2468, %v2468
  %v2533 = vpack.c.bf16 %v2469, %v2469
  %v2534 = vpack.c.bf16 %v2470, %v2470
  %v2535 = vpack.c.bf16 %v2471, %v2471
  %v2536 = vpack.c.bf16 %v2472, %v2472
  %v2537 = vld [vmem:[%s4] sm:$0xf]
  %v2538 = vld [vmem:[%s4 + $0x4] sm:$0xf]
  %v2539 = vld [vmem:[%s4 + $0x8] sm:$0xf]
  %v2540 = vld [vmem:[%s4 + $0xc] sm:$0xf]
  %v2541 = vld [vmem:[%s4 + $0x10] sm:$0xf]
  %v2542 = vld [vmem:[%s4 + $0x14] sm:$0xf]
  %v2543 = vld [vmem:[%s4 + $0x18] sm:$0xf]
  %v2544 = vld [vmem:[%s4 + $0x1c] sm:$0xf]
  %v2545 = vld [vmem:[%s4 + $0x20] sm:$0xf]
  %v2546 = vld [vmem:[%s4 + $0x24] sm:$0xf]
  %v2547 = vld [vmem:[%s4 + $0x28] sm:$0xf]
  %v2548 = vld [vmem:[%s4 + $0x2c] sm:$0xf]
  %v2549 = vld [vmem:[%s4 + $0x30] sm:$0xf]
  %v2550 = vld [vmem:[%s4 + $0x34] sm:$0xf]
  %v2551 = vld [vmem:[%s4 + $0x38] sm:$0xf]
  %v2552 = vld [vmem:[%s4 + $0x3c] sm:$0xf]
  %v2553 = vld [vmem:[%s4 + $0x40] sm:$0xf]
  %v2554 = vld [vmem:[%s4 + $0x44] sm:$0xf]
  %v2555 = vld [vmem:[%s4 + $0x48] sm:$0xf]
  %v2556 = vld [vmem:[%s4 + $0x4c] sm:$0xf]
  %v2557 = vld [vmem:[%s4 + $0x50] sm:$0xf]
  %v2558 = vld [vmem:[%s4 + $0x54] sm:$0xf]
  %v2559 = vld [vmem:[%s4 + $0x58] sm:$0xf]
  %v2560 = vld [vmem:[%s4 + $0x5c] sm:$0xf]
  %v2561 = vld [vmem:[%s4 + $0x60] sm:$0xf]
  %v2562 = vld [vmem:[%s4 + $0x64] sm:$0xf]
  %v2563 = vld [vmem:[%s4 + $0x68] sm:$0xf]
  %v2564 = vld [vmem:[%s4 + $0x6c] sm:$0xf]
  %v2565 = vld [vmem:[%s4 + $0x70] sm:$0xf]
  %v2566 = vld [vmem:[%s4 + $0x74] sm:$0xf]
  %v2567 = vld [vmem:[%s4 + $0x78] sm:$0xf]
  %v2568 = vld [vmem:[%s4 + $0x7c] sm:$0xf]
  %v2569 = vld [vmem:[%s4 + $0x80] sm:$0xf]
  %v2570 = vld [vmem:[%s4 + $0x84] sm:$0xf]
  %v2571 = vld [vmem:[%s4 + $0x88] sm:$0xf]
  %v2572 = vld [vmem:[%s4 + $0x8c] sm:$0xf]
  %v2573 = vld [vmem:[%s4 + $0x90] sm:$0xf]
  %v2574 = vld [vmem:[%s4 + $0x94] sm:$0xf]
  %v2575 = vld [vmem:[%s4 + $0x98] sm:$0xf]
  %v2576 = vld [vmem:[%s4 + $0x9c] sm:$0xf]
  %v2577 = vld [vmem:[%s4 + $0xa0] sm:$0xf]
  %v2578 = vld [vmem:[%s4 + $0xa4] sm:$0xf]
  %v2579 = vld [vmem:[%s4 + $0xa8] sm:$0xf]
  %v2580 = vld [vmem:[%s4 + $0xac] sm:$0xf]
  %v2581 = vld [vmem:[%s4 + $0xb0] sm:$0xf]
  %v2582 = vld [vmem:[%s4 + $0xb4] sm:$0xf]
  %v2583 = vld [vmem:[%s4 + $0xb8] sm:$0xf]
  %v2584 = vld [vmem:[%s4 + $0xbc] sm:$0xf]
  %v2585 = vld [vmem:[%s4 + $0xc0] sm:$0xf]
  %v2586 = vld [vmem:[%s4 + $0xc4] sm:$0xf]
  %v2587 = vld [vmem:[%s4 + $0xc8] sm:$0xf]
  %v2588 = vld [vmem:[%s4 + $0xcc] sm:$0xf]
  %v2589 = vld [vmem:[%s4 + $0xd0] sm:$0xf]
  %v2590 = vld [vmem:[%s4 + $0xd4] sm:$0xf]
  %v2591 = vld [vmem:[%s4 + $0xd8] sm:$0xf]
  %v2592 = vld [vmem:[%s4 + $0xdc] sm:$0xf]
  %v2593 = vld [vmem:[%s4 + $0xe0] sm:$0xf]
  %v2594 = vld [vmem:[%s4 + $0xe4] sm:$0xf]
  %v2595 = vld [vmem:[%s4 + $0xe8] sm:$0xf]
  %v2596 = vld [vmem:[%s4 + $0xec] sm:$0xf]
  %v2597 = vld [vmem:[%s4 + $0xf0] sm:$0xf]
  %v2598 = vld [vmem:[%s4 + $0xf4] sm:$0xf]
  %v2599 = vld [vmem:[%s4 + $0xf8] sm:$0xf]
  %v2600 = vld [vmem:[%s4 + $0xfc] sm:$0xf]
  %v2601 = vld [vmem:[%s4 + $0x100] sm:$0xf]
  %v2602 = vld [vmem:[%s4 + $0x104] sm:$0xf]
  %v2603 = vld [vmem:[%s4 + $0x108] sm:$0xf]
  %v2604 = vld [vmem:[%s4 + $0x10c] sm:$0xf]
  %v2605 = vld [vmem:[%s4 + $0x110] sm:$0xf]
  %v2606 = vld [vmem:[%s4 + $0x114] sm:$0xf]
  %v2607 = vld [vmem:[%s4 + $0x118] sm:$0xf]
  %v2608 = vld [vmem:[%s4 + $0x11c] sm:$0xf]
  %v2609 = vld [vmem:[%s4 + $0x120] sm:$0xf]
  %v2610 = vld [vmem:[%s4 + $0x124] sm:$0xf]
  %v2611 = vld [vmem:[%s4 + $0x128] sm:$0xf]
  %v2612 = vld [vmem:[%s4 + $0x12c] sm:$0xf]
  %v2613 = vld [vmem:[%s4 + $0x130] sm:$0xf]
  %v2614 = vld [vmem:[%s4 + $0x134] sm:$0xf]
  %v2615 = vld [vmem:[%s4 + $0x138] sm:$0xf]
  %v2616 = vld [vmem:[%s4 + $0x13c] sm:$0xf]
  %v2617 = vld [vmem:[%s4 + $0x140] sm:$0xf]
  %v2618 = vld [vmem:[%s4 + $0x144] sm:$0xf]
  %v2619 = vld [vmem:[%s4 + $0x148] sm:$0xf]
  %v2620 = vld [vmem:[%s4 + $0x14c] sm:$0xf]
  %v2621 = vld [vmem:[%s4 + $0x150] sm:$0xf]
  %v2622 = vld [vmem:[%s4 + $0x154] sm:$0xf]
  %v2623 = vld [vmem:[%s4 + $0x158] sm:$0xf]
  %v2624 = vld [vmem:[%s4 + $0x15c] sm:$0xf]
  %v2625 = vld [vmem:[%s4 + $0x160] sm:$0xf]
  %v2626 = vld [vmem:[%s4 + $0x164] sm:$0xf]
  %v2627 = vld [vmem:[%s4 + $0x168] sm:$0xf]
  %v2628 = vld [vmem:[%s4 + $0x16c] sm:$0xf]
  %v2629 = vld [vmem:[%s4 + $0x170] sm:$0xf]
  %v2630 = vld [vmem:[%s4 + $0x174] sm:$0xf]
  %v2631 = vld [vmem:[%s4 + $0x178] sm:$0xf]
  %v2632 = vld [vmem:[%s4 + $0x17c] sm:$0xf]
  %v2633 = vld [vmem:[%s4 + $0x180] sm:$0xf]
  %v2634 = vld [vmem:[%s4 + $0x184] sm:$0xf]
  %v2635 = vld [vmem:[%s4 + $0x188] sm:$0xf]
  %v2636 = vld [vmem:[%s4 + $0x18c] sm:$0xf]
  %v2637 = vld [vmem:[%s4 + $0x190] sm:$0xf]
  %v2638 = vld [vmem:[%s4 + $0x194] sm:$0xf]
  %v2639 = vld [vmem:[%s4 + $0x198] sm:$0xf]
  %v2640 = vld [vmem:[%s4 + $0x19c] sm:$0xf]
  %v2641 = vld [vmem:[%s4 + $0x1a0] sm:$0xf]
  %v2642 = vld [vmem:[%s4 + $0x1a4] sm:$0xf]
  %v2643 = vld [vmem:[%s4 + $0x1a8] sm:$0xf]
  %v2644 = vld [vmem:[%s4 + $0x1ac] sm:$0xf]
  %v2645 = vld [vmem:[%s4 + $0x1b0] sm:$0xf]
  %v2646 = vld [vmem:[%s4 + $0x1b4] sm:$0xf]
  %v2647 = vld [vmem:[%s4 + $0x1b8] sm:$0xf]
  %v2648 = vld [vmem:[%s4 + $0x1bc] sm:$0xf]
  %v2649 = vld [vmem:[%s4 + $0x1c0] sm:$0xf]
  %v2650 = vld [vmem:[%s4 + $0x1c4] sm:$0xf]
  %v2651 = vld [vmem:[%s4 + $0x1c8] sm:$0xf]
  %v2652 = vld [vmem:[%s4 + $0x1cc] sm:$0xf]
  %v2653 = vld [vmem:[%s4 + $0x1d0] sm:$0xf]
  %v2654 = vld [vmem:[%s4 + $0x1d4] sm:$0xf]
  %v2655 = vld [vmem:[%s4 + $0x1d8] sm:$0xf]
  %v2656 = vld [vmem:[%s4 + $0x1dc] sm:$0xf]
  %v2657 = vld [vmem:[%s4 + $0x1e0] sm:$0xf]
  %v2658 = vld [vmem:[%s4 + $0x1e4] sm:$0xf]
  %v2659 = vld [vmem:[%s4 + $0x1e8] sm:$0xf]
  %v2660 = vld [vmem:[%s4 + $0x1ec] sm:$0xf]
  %v2661 = vld [vmem:[%s4 + $0x1f0] sm:$0xf]
  %v2662 = vld [vmem:[%s4 + $0x1f4] sm:$0xf]
  %v2663 = vld [vmem:[%s4 + $0x1f8] sm:$0xf]
  %v2664 = vld [vmem:[%s4 + $0x1fc] sm:$0xf]
  %v2665 = vld [vmem:[%s4 + $0x200] sm:$0xf]
  %v2666 = vld [vmem:[%s4 + $0x204] sm:$0xf]
  %v2667 = vld [vmem:[%s4 + $0x208] sm:$0xf]
  %v2668 = vld [vmem:[%s4 + $0x20c] sm:$0xf]
  %v2669 = vld [vmem:[%s4 + $0x210] sm:$0xf]
  %v2670 = vld [vmem:[%s4 + $0x214] sm:$0xf]
  %v2671 = vld [vmem:[%s4 + $0x218] sm:$0xf]
  %v2672 = vld [vmem:[%s4 + $0x21c] sm:$0xf]
  %v2673 = vld [vmem:[%s4 + $0x220] sm:$0xf]
  %v2674 = vld [vmem:[%s4 + $0x224] sm:$0xf]
  %v2675 = vld [vmem:[%s4 + $0x228] sm:$0xf]
  %v2676 = vld [vmem:[%s4 + $0x22c] sm:$0xf]
  %v2677 = vld [vmem:[%s4 + $0x230] sm:$0xf]
  %v2678 = vld [vmem:[%s4 + $0x234] sm:$0xf]
  %v2679 = vld [vmem:[%s4 + $0x238] sm:$0xf]
  %v2680 = vld [vmem:[%s4 + $0x23c] sm:$0xf]
  %v2681 = vld [vmem:[%s4 + $0x240] sm:$0xf]
  %v2682 = vld [vmem:[%s4 + $0x244] sm:$0xf]
  %v2683 = vld [vmem:[%s4 + $0x248] sm:$0xf]
  %v2684 = vld [vmem:[%s4 + $0x24c] sm:$0xf]
  %v2685 = vld [vmem:[%s4 + $0x250] sm:$0xf]
  %v2686 = vld [vmem:[%s4 + $0x254] sm:$0xf]
  %v2687 = vld [vmem:[%s4 + $0x258] sm:$0xf]
  %v2688 = vld [vmem:[%s4 + $0x25c] sm:$0xf]
  %v2689 = vld [vmem:[%s4 + $0x260] sm:$0xf]
  %v2690 = vld [vmem:[%s4 + $0x264] sm:$0xf]
  %v2691 = vld [vmem:[%s4 + $0x268] sm:$0xf]
  %v2692 = vld [vmem:[%s4 + $0x26c] sm:$0xf]
  %v2693 = vld [vmem:[%s4 + $0x270] sm:$0xf]
  %v2694 = vld [vmem:[%s4 + $0x274] sm:$0xf]
  %v2695 = vld [vmem:[%s4 + $0x278] sm:$0xf]
  %v2696 = vld [vmem:[%s4 + $0x27c] sm:$0xf]
  %v2697 = vld [vmem:[%s4 + $0x280] sm:$0xf]
  %v2698 = vld [vmem:[%s4 + $0x284] sm:$0xf]
  %v2699 = vld [vmem:[%s4 + $0x288] sm:$0xf]
  %v2700 = vld [vmem:[%s4 + $0x28c] sm:$0xf]
  %v2701 = vld [vmem:[%s4 + $0x290] sm:$0xf]
  %v2702 = vld [vmem:[%s4 + $0x294] sm:$0xf]
  %v2703 = vld [vmem:[%s4 + $0x298] sm:$0xf]
  %v2704 = vld [vmem:[%s4 + $0x29c] sm:$0xf]
  %v2705 = vld [vmem:[%s4 + $0x2a0] sm:$0xf]
  %v2706 = vld [vmem:[%s4 + $0x2a4] sm:$0xf]
  %v2707 = vld [vmem:[%s4 + $0x2a8] sm:$0xf]
  %v2708 = vld [vmem:[%s4 + $0x2ac] sm:$0xf]
  %v2709 = vld [vmem:[%s4 + $0x2b0] sm:$0xf]
  %v2710 = vld [vmem:[%s4 + $0x2b4] sm:$0xf]
  %v2711 = vld [vmem:[%s4 + $0x2b8] sm:$0xf]
  %v2712 = vld [vmem:[%s4 + $0x2bc] sm:$0xf]
  %v2713 = vld [vmem:[%s4 + $0x2c0] sm:$0xf]
  %v2714 = vld [vmem:[%s4 + $0x2c4] sm:$0xf]
  %v2715 = vld [vmem:[%s4 + $0x2c8] sm:$0xf]
  %v2716 = vld [vmem:[%s4 + $0x2cc] sm:$0xf]
  %v2717 = vld [vmem:[%s4 + $0x2d0] sm:$0xf]
  %v2718 = vld [vmem:[%s4 + $0x2d4] sm:$0xf]
  %v2719 = vld [vmem:[%s4 + $0x2d8] sm:$0xf]
  %v2720 = vld [vmem:[%s4 + $0x2dc] sm:$0xf]
  %v2721 = vld [vmem:[%s4 + $0x2e0] sm:$0xf]
  %v2722 = vld [vmem:[%s4 + $0x2e4] sm:$0xf]
  %v2723 = vld [vmem:[%s4 + $0x2e8] sm:$0xf]
  %v2724 = vld [vmem:[%s4 + $0x2ec] sm:$0xf]
  %v2725 = vld [vmem:[%s4 + $0x2f0] sm:$0xf]
  %v2726 = vld [vmem:[%s4 + $0x2f4] sm:$0xf]
  %v2727 = vld [vmem:[%s4 + $0x2f8] sm:$0xf]
  %v2728 = vld [vmem:[%s4 + $0x2fc] sm:$0xf]
  %v2729 = vld [vmem:[%s4 + $0x300] sm:$0xf]
  %v2730 = vld [vmem:[%s4 + $0x304] sm:$0xf]
  %v2731 = vld [vmem:[%s4 + $0x308] sm:$0xf]
  %v2732 = vld [vmem:[%s4 + $0x30c] sm:$0xf]
  %v2733 = vld [vmem:[%s4 + $0x310] sm:$0xf]
  %v2734 = vld [vmem:[%s4 + $0x314] sm:$0xf]
  %v2735 = vld [vmem:[%s4 + $0x318] sm:$0xf]
  %v2736 = vld [vmem:[%s4 + $0x31c] sm:$0xf]
  %v2737 = vld [vmem:[%s4 + $0x320] sm:$0xf]
  %v2738 = vld [vmem:[%s4 + $0x324] sm:$0xf]
  %v2739 = vld [vmem:[%s4 + $0x328] sm:$0xf]
  %v2740 = vld [vmem:[%s4 + $0x32c] sm:$0xf]
  %v2741 = vld [vmem:[%s4 + $0x330] sm:$0xf]
  %v2742 = vld [vmem:[%s4 + $0x334] sm:$0xf]
  %v2743 = vld [vmem:[%s4 + $0x338] sm:$0xf]
  %v2744 = vld [vmem:[%s4 + $0x33c] sm:$0xf]
  %v2745 = vld [vmem:[%s4 + $0x340] sm:$0xf]
  %v2746 = vld [vmem:[%s4 + $0x344] sm:$0xf]
  %v2747 = vld [vmem:[%s4 + $0x348] sm:$0xf]
  %v2748 = vld [vmem:[%s4 + $0x34c] sm:$0xf]
  %v2749 = vld [vmem:[%s4 + $0x350] sm:$0xf]
  %v2750 = vld [vmem:[%s4 + $0x354] sm:$0xf]
  %v2751 = vld [vmem:[%s4 + $0x358] sm:$0xf]
  %v2752 = vld [vmem:[%s4 + $0x35c] sm:$0xf]
  %v2753 = vld [vmem:[%s4 + $0x360] sm:$0xf]
  %v2754 = vld [vmem:[%s4 + $0x364] sm:$0xf]
  %v2755 = vld [vmem:[%s4 + $0x368] sm:$0xf]
  %v2756 = vld [vmem:[%s4 + $0x36c] sm:$0xf]
  %v2757 = vld [vmem:[%s4 + $0x370] sm:$0xf]
  %v2758 = vld [vmem:[%s4 + $0x374] sm:$0xf]
  %v2759 = vld [vmem:[%s4 + $0x378] sm:$0xf]
  %v2760 = vld [vmem:[%s4 + $0x37c] sm:$0xf]
  %v2761 = vld [vmem:[%s4 + $0x380] sm:$0xf]
  %v2762 = vld [vmem:[%s4 + $0x384] sm:$0xf]
  %v2763 = vld [vmem:[%s4 + $0x388] sm:$0xf]
  %v2764 = vld [vmem:[%s4 + $0x38c] sm:$0xf]
  %v2765 = vld [vmem:[%s4 + $0x390] sm:$0xf]
  %v2766 = vld [vmem:[%s4 + $0x394] sm:$0xf]
  %v2767 = vld [vmem:[%s4 + $0x398] sm:$0xf]
  %v2768 = vld [vmem:[%s4 + $0x39c] sm:$0xf]
  %v2769 = vld [vmem:[%s4 + $0x3a0] sm:$0xf]
  %v2770 = vld [vmem:[%s4 + $0x3a4] sm:$0xf]
  %v2771 = vld [vmem:[%s4 + $0x3a8] sm:$0xf]
  %v2772 = vld [vmem:[%s4 + $0x3ac] sm:$0xf]
  %v2773 = vld [vmem:[%s4 + $0x3b0] sm:$0xf]
  %v2774 = vld [vmem:[%s4 + $0x3b4] sm:$0xf]
  %v2775 = vld [vmem:[%s4 + $0x3b8] sm:$0xf]
  %v2776 = vld [vmem:[%s4 + $0x3bc] sm:$0xf]
  %v2777 = vld [vmem:[%s4 + $0x3c0] sm:$0xf]
  %v2778 = vld [vmem:[%s4 + $0x3c4] sm:$0xf]
  %v2779 = vld [vmem:[%s4 + $0x3c8] sm:$0xf]
  %v2780 = vld [vmem:[%s4 + $0x3cc] sm:$0xf]
  %v2781 = vld [vmem:[%s4 + $0x3d0] sm:$0xf]
  %v2782 = vld [vmem:[%s4 + $0x3d4] sm:$0xf]
  %v2783 = vld [vmem:[%s4 + $0x3d8] sm:$0xf]
  %v2784 = vld [vmem:[%s4 + $0x3dc] sm:$0xf]
  %v2785 = vld [vmem:[%s4 + $0x3e0] sm:$0xf]
  %v2786 = vld [vmem:[%s4 + $0x3e4] sm:$0xf]
  %v2787 = vld [vmem:[%s4 + $0x3e8] sm:$0xf]
  %v2788 = vld [vmem:[%s4 + $0x3ec] sm:$0xf]
  %v2789 = vld [vmem:[%s4 + $0x3f0] sm:$0xf]
  %v2790 = vld [vmem:[%s4 + $0x3f4] sm:$0xf]
  %v2791 = vld [vmem:[%s4 + $0x3f8] sm:$0xf]
  %v2792 = vld [vmem:[%s4 + $0x3fc] sm:$0xf]
  %v2793 = vld [vmem:[%s4 + $0x400] sm:$0xf]
  %v2794 = vld [vmem:[%s4 + $0x404] sm:$0xf]
  %v2795 = vld [vmem:[%s4 + $0x408] sm:$0xf]
  %v2796 = vld [vmem:[%s4 + $0x40c] sm:$0xf]
  %v2797 = vld [vmem:[%s4 + $0x410] sm:$0xf]
  %v2798 = vld [vmem:[%s4 + $0x414] sm:$0xf]
  %v2799 = vld [vmem:[%s4 + $0x418] sm:$0xf]
  %v2800 = vld [vmem:[%s4 + $0x41c] sm:$0xf]
  %v2801 = vld [vmem:[%s4 + $0x420] sm:$0xf]
  %v2802 = vld [vmem:[%s4 + $0x424] sm:$0xf]
  %v2803 = vld [vmem:[%s4 + $0x428] sm:$0xf]
  %v2804 = vld [vmem:[%s4 + $0x42c] sm:$0xf]
  %v2805 = vld [vmem:[%s4 + $0x430] sm:$0xf]
  %v2806 = vld [vmem:[%s4 + $0x434] sm:$0xf]
  %v2807 = vld [vmem:[%s4 + $0x438] sm:$0xf]
  %v2808 = vld [vmem:[%s4 + $0x43c] sm:$0xf]
  %v2809 = vld [vmem:[%s4 + $0x440] sm:$0xf]
  %v2810 = vld [vmem:[%s4 + $0x444] sm:$0xf]
  %v2811 = vld [vmem:[%s4 + $0x448] sm:$0xf]
  %v2812 = vld [vmem:[%s4 + $0x44c] sm:$0xf]
  %v2813 = vld [vmem:[%s4 + $0x450] sm:$0xf]
  %v2814 = vld [vmem:[%s4 + $0x454] sm:$0xf]
  %v2815 = vld [vmem:[%s4 + $0x458] sm:$0xf]
  %v2816 = vld [vmem:[%s4 + $0x45c] sm:$0xf]
  %v2817 = vld [vmem:[%s4 + $0x460] sm:$0xf]
  %v2818 = vld [vmem:[%s4 + $0x464] sm:$0xf]
  %v2819 = vld [vmem:[%s4 + $0x468] sm:$0xf]
  %v2820 = vld [vmem:[%s4 + $0x46c] sm:$0xf]
  %v2821 = vld [vmem:[%s4 + $0x470] sm:$0xf]
  %v2822 = vld [vmem:[%s4 + $0x474] sm:$0xf]
  %v2823 = vld [vmem:[%s4 + $0x478] sm:$0xf]
  %v2824 = vld [vmem:[%s4 + $0x47c] sm:$0xf]
  %v2825 = vld [vmem:[%s4 + $0x480] sm:$0xf]
  %v2826 = vld [vmem:[%s4 + $0x484] sm:$0xf]
  %v2827 = vld [vmem:[%s4 + $0x488] sm:$0xf]
  %v2828 = vld [vmem:[%s4 + $0x48c] sm:$0xf]
  %v2829 = vld [vmem:[%s4 + $0x490] sm:$0xf]
  %v2830 = vld [vmem:[%s4 + $0x494] sm:$0xf]
  %v2831 = vld [vmem:[%s4 + $0x498] sm:$0xf]
  %v2832 = vld [vmem:[%s4 + $0x49c] sm:$0xf]
  %v2833 = vld [vmem:[%s4 + $0x4a0] sm:$0xf]
  %v2834 = vld [vmem:[%s4 + $0x4a4] sm:$0xf]
  %v2835 = vld [vmem:[%s4 + $0x4a8] sm:$0xf]
  %v2836 = vld [vmem:[%s4 + $0x4ac] sm:$0xf]
  %v2837 = vld [vmem:[%s4 + $0x4b0] sm:$0xf]
  %v2838 = vld [vmem:[%s4 + $0x4b4] sm:$0xf]
  %v2839 = vld [vmem:[%s4 + $0x4b8] sm:$0xf]
  %v2840 = vld [vmem:[%s4 + $0x4bc] sm:$0xf]
  %v2841 = vld [vmem:[%s4 + $0x4c0] sm:$0xf]
  %v2842 = vld [vmem:[%s4 + $0x4c4] sm:$0xf]
  %v2843 = vld [vmem:[%s4 + $0x4c8] sm:$0xf]
  %v2844 = vld [vmem:[%s4 + $0x4cc] sm:$0xf]
  %v2845 = vld [vmem:[%s4 + $0x4d0] sm:$0xf]
  %v2846 = vld [vmem:[%s4 + $0x4d4] sm:$0xf]
  %v2847 = vld [vmem:[%s4 + $0x4d8] sm:$0xf]
  %v2848 = vld [vmem:[%s4 + $0x4dc] sm:$0xf]
  %v2849 = vld [vmem:[%s4 + $0x4e0] sm:$0xf]
  %v2850 = vld [vmem:[%s4 + $0x4e4] sm:$0xf]
  %v2851 = vld [vmem:[%s4 + $0x4e8] sm:$0xf]
  %v2852 = vld [vmem:[%s4 + $0x4ec] sm:$0xf]
  %v2853 = vld [vmem:[%s4 + $0x4f0] sm:$0xf]
  %v2854 = vld [vmem:[%s4 + $0x4f4] sm:$0xf]
  %v2855 = vld [vmem:[%s4 + $0x4f8] sm:$0xf]
  %v2856 = vld [vmem:[%s4 + $0x4fc] sm:$0xf]
  %v2857 = vld [vmem:[%s4 + $0x500] sm:$0xf]
  %v2858 = vld [vmem:[%s4 + $0x504] sm:$0xf]
  %v2859 = vld [vmem:[%s4 + $0x508] sm:$0xf]
  %v2860 = vld [vmem:[%s4 + $0x50c] sm:$0xf]
  %v2861 = vld [vmem:[%s4 + $0x510] sm:$0xf]
  %v2862 = vld [vmem:[%s4 + $0x514] sm:$0xf]
  %v2863 = vld [vmem:[%s4 + $0x518] sm:$0xf]
  %v2864 = vld [vmem:[%s4 + $0x51c] sm:$0xf]
  %v2865 = vld [vmem:[%s4 + $0x520] sm:$0xf]
  %v2866 = vld [vmem:[%s4 + $0x524] sm:$0xf]
  %v2867 = vld [vmem:[%s4 + $0x528] sm:$0xf]
  %v2868 = vld [vmem:[%s4 + $0x52c] sm:$0xf]
  %v2869 = vld [vmem:[%s4 + $0x530] sm:$0xf]
  %v2870 = vld [vmem:[%s4 + $0x534] sm:$0xf]
  %v2871 = vld [vmem:[%s4 + $0x538] sm:$0xf]
  %v2872 = vld [vmem:[%s4 + $0x53c] sm:$0xf]
  %v2873 = vld [vmem:[%s4 + $0x540] sm:$0xf]
  %v2874 = vld [vmem:[%s4 + $0x544] sm:$0xf]
  %v2875 = vld [vmem:[%s4 + $0x548] sm:$0xf]
  %v2876 = vld [vmem:[%s4 + $0x54c] sm:$0xf]
  %v2877 = vld [vmem:[%s4 + $0x550] sm:$0xf]
  %v2878 = vld [vmem:[%s4 + $0x554] sm:$0xf]
  %v2879 = vld [vmem:[%s4 + $0x558] sm:$0xf]
  %v2880 = vld [vmem:[%s4 + $0x55c] sm:$0xf]
  %v2881 = vld [vmem:[%s4 + $0x560] sm:$0xf]
  %v2882 = vld [vmem:[%s4 + $0x564] sm:$0xf]
  %v2883 = vld [vmem:[%s4 + $0x568] sm:$0xf]
  %v2884 = vld [vmem:[%s4 + $0x56c] sm:$0xf]
  %v2885 = vld [vmem:[%s4 + $0x570] sm:$0xf]
  %v2886 = vld [vmem:[%s4 + $0x574] sm:$0xf]
  %v2887 = vld [vmem:[%s4 + $0x578] sm:$0xf]
  %v2888 = vld [vmem:[%s4 + $0x57c] sm:$0xf]
  %v2889 = vld [vmem:[%s4 + $0x580] sm:$0xf]
  %v2890 = vld [vmem:[%s4 + $0x584] sm:$0xf]
  %v2891 = vld [vmem:[%s4 + $0x588] sm:$0xf]
  %v2892 = vld [vmem:[%s4 + $0x58c] sm:$0xf]
  %v2893 = vld [vmem:[%s4 + $0x590] sm:$0xf]
  %v2894 = vld [vmem:[%s4 + $0x594] sm:$0xf]
  %v2895 = vld [vmem:[%s4 + $0x598] sm:$0xf]
  %v2896 = vld [vmem:[%s4 + $0x59c] sm:$0xf]
  %v2897 = vld [vmem:[%s4 + $0x5a0] sm:$0xf]
  %v2898 = vld [vmem:[%s4 + $0x5a4] sm:$0xf]
  %v2899 = vld [vmem:[%s4 + $0x5a8] sm:$0xf]
  %v2900 = vld [vmem:[%s4 + $0x5ac] sm:$0xf]
  %v2901 = vld [vmem:[%s4 + $0x5b0] sm:$0xf]
  %v2902 = vld [vmem:[%s4 + $0x5b4] sm:$0xf]
  %v2903 = vld [vmem:[%s4 + $0x5b8] sm:$0xf]
  %v2904 = vld [vmem:[%s4 + $0x5bc] sm:$0xf]
  %v2905 = vld [vmem:[%s4 + $0x5c0] sm:$0xf]
  %v2906 = vld [vmem:[%s4 + $0x5c4] sm:$0xf]
  %v2907 = vld [vmem:[%s4 + $0x5c8] sm:$0xf]
  %v2908 = vld [vmem:[%s4 + $0x5cc] sm:$0xf]
  %v2909 = vld [vmem:[%s4 + $0x5d0] sm:$0xf]
  %v2910 = vld [vmem:[%s4 + $0x5d4] sm:$0xf]
  %v2911 = vld [vmem:[%s4 + $0x5d8] sm:$0xf]
  %v2912 = vld [vmem:[%s4 + $0x5dc] sm:$0xf]
  %v2913 = vld [vmem:[%s4 + $0x5e0] sm:$0xf]
  %v2914 = vld [vmem:[%s4 + $0x5e4] sm:$0xf]
  %v2915 = vld [vmem:[%s4 + $0x5e8] sm:$0xf]
  %v2916 = vld [vmem:[%s4 + $0x5ec] sm:$0xf]
  %v2917 = vld [vmem:[%s4 + $0x5f0] sm:$0xf]
  %v2918 = vld [vmem:[%s4 + $0x5f4] sm:$0xf]
  %v2919 = vld [vmem:[%s4 + $0x5f8] sm:$0xf]
  %v2920 = vld [vmem:[%s4 + $0x5fc] sm:$0xf]
  %v2921 = vld [vmem:[%s4 + $0x600] sm:$0xf]
  %v2922 = vld [vmem:[%s4 + $0x604] sm:$0xf]
  %v2923 = vld [vmem:[%s4 + $0x608] sm:$0xf]
  %v2924 = vld [vmem:[%s4 + $0x60c] sm:$0xf]
  %v2925 = vld [vmem:[%s4 + $0x610] sm:$0xf]
  %v2926 = vld [vmem:[%s4 + $0x614] sm:$0xf]
  %v2927 = vld [vmem:[%s4 + $0x618] sm:$0xf]
  %v2928 = vld [vmem:[%s4 + $0x61c] sm:$0xf]
  %v2929 = vld [vmem:[%s4 + $0x620] sm:$0xf]
  %v2930 = vld [vmem:[%s4 + $0x624] sm:$0xf]
  %v2931 = vld [vmem:[%s4 + $0x628] sm:$0xf]
  %v2932 = vld [vmem:[%s4 + $0x62c] sm:$0xf]
  %v2933 = vld [vmem:[%s4 + $0x630] sm:$0xf]
  %v2934 = vld [vmem:[%s4 + $0x634] sm:$0xf]
  %v2935 = vld [vmem:[%s4 + $0x638] sm:$0xf]
  %v2936 = vld [vmem:[%s4 + $0x63c] sm:$0xf]
  %v2937 = vld [vmem:[%s4 + $0x640] sm:$0xf]
  %v2938 = vld [vmem:[%s4 + $0x644] sm:$0xf]
  %v2939 = vld [vmem:[%s4 + $0x648] sm:$0xf]
  %v2940 = vld [vmem:[%s4 + $0x64c] sm:$0xf]
  %v2941 = vld [vmem:[%s4 + $0x650] sm:$0xf]
  %v2942 = vld [vmem:[%s4 + $0x654] sm:$0xf]
  %v2943 = vld [vmem:[%s4 + $0x658] sm:$0xf]
  %v2944 = vld [vmem:[%s4 + $0x65c] sm:$0xf]
  %v2945 = vld [vmem:[%s4 + $0x660] sm:$0xf]
  %v2946 = vld [vmem:[%s4 + $0x664] sm:$0xf]
  %v2947 = vld [vmem:[%s4 + $0x668] sm:$0xf]
  %v2948 = vld [vmem:[%s4 + $0x66c] sm:$0xf]
  %v2949 = vld [vmem:[%s4 + $0x670] sm:$0xf]
  %v2950 = vld [vmem:[%s4 + $0x674] sm:$0xf]
  %v2951 = vld [vmem:[%s4 + $0x678] sm:$0xf]
  %v2952 = vld [vmem:[%s4 + $0x67c] sm:$0xf]
  %v2953 = vld [vmem:[%s4 + $0x680] sm:$0xf]
  %v2954 = vld [vmem:[%s4 + $0x684] sm:$0xf]
  %v2955 = vld [vmem:[%s4 + $0x688] sm:$0xf]
  %v2956 = vld [vmem:[%s4 + $0x68c] sm:$0xf]
  %v2957 = vld [vmem:[%s4 + $0x690] sm:$0xf]
  %v2958 = vld [vmem:[%s4 + $0x694] sm:$0xf]
  %v2959 = vld [vmem:[%s4 + $0x698] sm:$0xf]
  %v2960 = vld [vmem:[%s4 + $0x69c] sm:$0xf]
  %v2961 = vld [vmem:[%s4 + $0x6a0] sm:$0xf]
  %v2962 = vld [vmem:[%s4 + $0x6a4] sm:$0xf]
  %v2963 = vld [vmem:[%s4 + $0x6a8] sm:$0xf]
  %v2964 = vld [vmem:[%s4 + $0x6ac] sm:$0xf]
  %v2965 = vld [vmem:[%s4 + $0x6b0] sm:$0xf]
  %v2966 = vld [vmem:[%s4 + $0x6b4] sm:$0xf]
  %v2967 = vld [vmem:[%s4 + $0x6b8] sm:$0xf]
  %v2968 = vld [vmem:[%s4 + $0x6bc] sm:$0xf]
  %v2969 = vld [vmem:[%s4 + $0x6c0] sm:$0xf]
  %v2970 = vld [vmem:[%s4 + $0x6c4] sm:$0xf]
  %v2971 = vld [vmem:[%s4 + $0x6c8] sm:$0xf]
  %v2972 = vld [vmem:[%s4 + $0x6cc] sm:$0xf]
  %v2973 = vld [vmem:[%s4 + $0x6d0] sm:$0xf]
  %v2974 = vld [vmem:[%s4 + $0x6d4] sm:$0xf]
  %v2975 = vld [vmem:[%s4 + $0x6d8] sm:$0xf]
  %v2976 = vld [vmem:[%s4 + $0x6dc] sm:$0xf]
  %v2977 = vld [vmem:[%s4 + $0x6e0] sm:$0xf]
  %v2978 = vld [vmem:[%s4 + $0x6e4] sm:$0xf]
  %v2979 = vld [vmem:[%s4 + $0x6e8] sm:$0xf]
  %v2980 = vld [vmem:[%s4 + $0x6ec] sm:$0xf]
  %v2981 = vld [vmem:[%s4 + $0x6f0] sm:$0xf]
  %v2982 = vld [vmem:[%s4 + $0x6f4] sm:$0xf]
  %v2983 = vld [vmem:[%s4 + $0x6f8] sm:$0xf]
  %v2984 = vld [vmem:[%s4 + $0x6fc] sm:$0xf]
  %v2985 = vld [vmem:[%s4 + $0x700] sm:$0xf]
  %v2986 = vld [vmem:[%s4 + $0x704] sm:$0xf]
  %v2987 = vld [vmem:[%s4 + $0x708] sm:$0xf]
  %v2988 = vld [vmem:[%s4 + $0x70c] sm:$0xf]
  %v2989 = vld [vmem:[%s4 + $0x710] sm:$0xf]
  %v2990 = vld [vmem:[%s4 + $0x714] sm:$0xf]
  %v2991 = vld [vmem:[%s4 + $0x718] sm:$0xf]
  %v2992 = vld [vmem:[%s4 + $0x71c] sm:$0xf]
  %v2993 = vld [vmem:[%s4 + $0x720] sm:$0xf]
  %v2994 = vld [vmem:[%s4 + $0x724] sm:$0xf]
  %v2995 = vld [vmem:[%s4 + $0x728] sm:$0xf]
  %v2996 = vld [vmem:[%s4 + $0x72c] sm:$0xf]
  %v2997 = vld [vmem:[%s4 + $0x730] sm:$0xf]
  %v2998 = vld [vmem:[%s4 + $0x734] sm:$0xf]
  %v2999 = vld [vmem:[%s4 + $0x738] sm:$0xf]
  %v3000 = vld [vmem:[%s4 + $0x73c] sm:$0xf]
  %v3001 = vld [vmem:[%s4 + $0x740] sm:$0xf]
  %v3002 = vld [vmem:[%s4 + $0x744] sm:$0xf]
  %v3003 = vld [vmem:[%s4 + $0x748] sm:$0xf]
  %v3004 = vld [vmem:[%s4 + $0x74c] sm:$0xf]
  %v3005 = vld [vmem:[%s4 + $0x750] sm:$0xf]
  %v3006 = vld [vmem:[%s4 + $0x754] sm:$0xf]
  %v3007 = vld [vmem:[%s4 + $0x758] sm:$0xf]
  %v3008 = vld [vmem:[%s4 + $0x75c] sm:$0xf]
  %v3009 = vld [vmem:[%s4 + $0x760] sm:$0xf]
  %v3010 = vld [vmem:[%s4 + $0x764] sm:$0xf]
  %v3011 = vld [vmem:[%s4 + $0x768] sm:$0xf]
  %v3012 = vld [vmem:[%s4 + $0x76c] sm:$0xf]
  %v3013 = vld [vmem:[%s4 + $0x770] sm:$0xf]
  %v3014 = vld [vmem:[%s4 + $0x774] sm:$0xf]
  %v3015 = vld [vmem:[%s4 + $0x778] sm:$0xf]
  %v3016 = vld [vmem:[%s4 + $0x77c] sm:$0xf]
  %v3017 = vld [vmem:[%s4 + $0x780] sm:$0xf]
  %v3018 = vld [vmem:[%s4 + $0x784] sm:$0xf]
  %v3019 = vld [vmem:[%s4 + $0x788] sm:$0xf]
  %v3020 = vld [vmem:[%s4 + $0x78c] sm:$0xf]
  %v3021 = vld [vmem:[%s4 + $0x790] sm:$0xf]
  %v3022 = vld [vmem:[%s4 + $0x794] sm:$0xf]
  %v3023 = vld [vmem:[%s4 + $0x798] sm:$0xf]
  %v3024 = vld [vmem:[%s4 + $0x79c] sm:$0xf]
  %v3025 = vld [vmem:[%s4 + $0x7a0] sm:$0xf]
  %v3026 = vld [vmem:[%s4 + $0x7a4] sm:$0xf]
  %v3027 = vld [vmem:[%s4 + $0x7a8] sm:$0xf]
  %v3028 = vld [vmem:[%s4 + $0x7ac] sm:$0xf]
  %v3029 = vld [vmem:[%s4 + $0x7b0] sm:$0xf]
  %v3030 = vld [vmem:[%s4 + $0x7b4] sm:$0xf]
  %v3031 = vld [vmem:[%s4 + $0x7b8] sm:$0xf]
  %v3032 = vld [vmem:[%s4 + $0x7bc] sm:$0xf]
  %v3033 = vld [vmem:[%s4 + $0x7c0] sm:$0xf]
  %v3034 = vld [vmem:[%s4 + $0x7c4] sm:$0xf]
  %v3035 = vld [vmem:[%s4 + $0x7c8] sm:$0xf]
  %v3036 = vld [vmem:[%s4 + $0x7cc] sm:$0xf]
  %v3037 = vld [vmem:[%s4 + $0x7d0] sm:$0xf]
  %v3038 = vld [vmem:[%s4 + $0x7d4] sm:$0xf]
  %v3039 = vld [vmem:[%s4 + $0x7d8] sm:$0xf]
  %v3040 = vld [vmem:[%s4 + $0x7dc] sm:$0xf]
  %v3041 = vld [vmem:[%s4 + $0x7e0] sm:$0xf]
  %v3042 = vld [vmem:[%s4 + $0x7e4] sm:$0xf]
  %v3043 = vld [vmem:[%s4 + $0x7e8] sm:$0xf]
  %v3044 = vld [vmem:[%s4 + $0x7ec] sm:$0xf]
  %v3045 = vld [vmem:[%s4 + $0x7f0] sm:$0xf]
  %v3046 = vld [vmem:[%s4 + $0x7f4] sm:$0xf]
  %v3047 = vld [vmem:[%s4 + $0x7f8] sm:$0xf]
  %v3048 = vld [vmem:[%s4 + $0x7fc] sm:$0xf]
  %v3049 = vld [vmem:[%s4 + $0x800] sm:$0xf]
  %v3050 = vld [vmem:[%s4 + $0x804] sm:$0xf]
  %v3051 = vld [vmem:[%s4 + $0x808] sm:$0xf]
  %v3052 = vld [vmem:[%s4 + $0x80c] sm:$0xf]
  %v3053 = vld [vmem:[%s4 + $0x810] sm:$0xf]
  %v3054 = vld [vmem:[%s4 + $0x814] sm:$0xf]
  %v3055 = vld [vmem:[%s4 + $0x818] sm:$0xf]
  %v3056 = vld [vmem:[%s4 + $0x81c] sm:$0xf]
  %v3057 = vld [vmem:[%s4 + $0x820] sm:$0xf]
  %v3058 = vld [vmem:[%s4 + $0x824] sm:$0xf]
  %v3059 = vld [vmem:[%s4 + $0x828] sm:$0xf]
  %v3060 = vld [vmem:[%s4 + $0x82c] sm:$0xf]
  %v3061 = vld [vmem:[%s4 + $0x830] sm:$0xf]
  %v3062 = vld [vmem:[%s4 + $0x834] sm:$0xf]
  %v3063 = vld [vmem:[%s4 + $0x838] sm:$0xf]
  %v3064 = vld [vmem:[%s4 + $0x83c] sm:$0xf]
  %v3065 = vld [vmem:[%s4 + $0x840] sm:$0xf]
  %v3066 = vld [vmem:[%s4 + $0x844] sm:$0xf]
  %v3067 = vld [vmem:[%s4 + $0x848] sm:$0xf]
  %v3068 = vld [vmem:[%s4 + $0x84c] sm:$0xf]
  %v3069 = vld [vmem:[%s4 + $0x850] sm:$0xf]
  %v3070 = vld [vmem:[%s4 + $0x854] sm:$0xf]
  %v3071 = vld [vmem:[%s4 + $0x858] sm:$0xf]
  %v3072 = vld [vmem:[%s4 + $0x85c] sm:$0xf]
  %v3073 = vld [vmem:[%s4 + $0x860] sm:$0xf]
  %v3074 = vld [vmem:[%s4 + $0x864] sm:$0xf]
  %v3075 = vld [vmem:[%s4 + $0x868] sm:$0xf]
  %v3076 = vld [vmem:[%s4 + $0x86c] sm:$0xf]
  %v3077 = vld [vmem:[%s4 + $0x870] sm:$0xf]
  %v3078 = vld [vmem:[%s4 + $0x874] sm:$0xf]
  %v3079 = vld [vmem:[%s4 + $0x878] sm:$0xf]
  %v3080 = vld [vmem:[%s4 + $0x87c] sm:$0xf]
  %v3081 = vld [vmem:[%s4 + $0x880] sm:$0xf]
  %v3082 = vld [vmem:[%s4 + $0x884] sm:$0xf]
  %v3083 = vld [vmem:[%s4 + $0x888] sm:$0xf]
  %v3084 = vld [vmem:[%s4 + $0x88c] sm:$0xf]
  %v3085 = vld [vmem:[%s4 + $0x890] sm:$0xf]
  %v3086 = vld [vmem:[%s4 + $0x894] sm:$0xf]
  %v3087 = vld [vmem:[%s4 + $0x898] sm:$0xf]
  %v3088 = vld [vmem:[%s4 + $0x89c] sm:$0xf]
  %v3089 = vld [vmem:[%s4 + $0x8a0] sm:$0xf]
  %v3090 = vld [vmem:[%s4 + $0x8a4] sm:$0xf]
  %v3091 = vld [vmem:[%s4 + $0x8a8] sm:$0xf]
  %v3092 = vld [vmem:[%s4 + $0x8ac] sm:$0xf]
  %v3093 = vld [vmem:[%s4 + $0x8b0] sm:$0xf]
  %v3094 = vld [vmem:[%s4 + $0x8b4] sm:$0xf]
  %v3095 = vld [vmem:[%s4 + $0x8b8] sm:$0xf]
  %v3096 = vld [vmem:[%s4 + $0x8bc] sm:$0xf]
  %v3097 = vld [vmem:[%s4 + $0x8c0] sm:$0xf]
  %v3098 = vld [vmem:[%s4 + $0x8c4] sm:$0xf]
  %v3099 = vld [vmem:[%s4 + $0x8c8] sm:$0xf]
  %v3100 = vld [vmem:[%s4 + $0x8cc] sm:$0xf]
  %v3101 = vld [vmem:[%s4 + $0x8d0] sm:$0xf]
  %v3102 = vld [vmem:[%s4 + $0x8d4] sm:$0xf]
  %v3103 = vld [vmem:[%s4 + $0x8d8] sm:$0xf]
  %v3104 = vld [vmem:[%s4 + $0x8dc] sm:$0xf]
  %v3105 = vld [vmem:[%s4 + $0x8e0] sm:$0xf]
  %v3106 = vld [vmem:[%s4 + $0x8e4] sm:$0xf]
  %v3107 = vld [vmem:[%s4 + $0x8e8] sm:$0xf]
  %v3108 = vld [vmem:[%s4 + $0x8ec] sm:$0xf]
  %v3109 = vld [vmem:[%s4 + $0x8f0] sm:$0xf]
  %v3110 = vld [vmem:[%s4 + $0x8f4] sm:$0xf]
  %v3111 = vld [vmem:[%s4 + $0x8f8] sm:$0xf]
  %v3112 = vld [vmem:[%s4 + $0x8fc] sm:$0xf]
  %v3113 = vld [vmem:[%s4 + $0x900] sm:$0xf]
  %v3114 = vld [vmem:[%s4 + $0x904] sm:$0xf]
  %v3115 = vld [vmem:[%s4 + $0x908] sm:$0xf]
  %v3116 = vld [vmem:[%s4 + $0x90c] sm:$0xf]
  %v3117 = vld [vmem:[%s4 + $0x910] sm:$0xf]
  %v3118 = vld [vmem:[%s4 + $0x914] sm:$0xf]
  %v3119 = vld [vmem:[%s4 + $0x918] sm:$0xf]
  %v3120 = vld [vmem:[%s4 + $0x91c] sm:$0xf]
  %v3121 = vld [vmem:[%s4 + $0x920] sm:$0xf]
  %v3122 = vld [vmem:[%s4 + $0x924] sm:$0xf]
  %v3123 = vld [vmem:[%s4 + $0x928] sm:$0xf]
  %v3124 = vld [vmem:[%s4 + $0x92c] sm:$0xf]
  %v3125 = vld [vmem:[%s4 + $0x930] sm:$0xf]
  %v3126 = vld [vmem:[%s4 + $0x934] sm:$0xf]
  %v3127 = vld [vmem:[%s4 + $0x938] sm:$0xf]
  %v3128 = vld [vmem:[%s4 + $0x93c] sm:$0xf]
  %v3129 = vld [vmem:[%s4 + $0x940] sm:$0xf]
  %v3130 = vld [vmem:[%s4 + $0x944] sm:$0xf]
  %v3131 = vld [vmem:[%s4 + $0x948] sm:$0xf]
  %v3132 = vld [vmem:[%s4 + $0x94c] sm:$0xf]
  %v3133 = vld [vmem:[%s4 + $0x950] sm:$0xf]
  %v3134 = vld [vmem:[%s4 + $0x954] sm:$0xf]
  %v3135 = vld [vmem:[%s4 + $0x958] sm:$0xf]
  %v3136 = vld [vmem:[%s4 + $0x95c] sm:$0xf]
  %v3137 = vld [vmem:[%s4 + $0x960] sm:$0xf]
  %v3138 = vld [vmem:[%s4 + $0x964] sm:$0xf]
  %v3139 = vld [vmem:[%s4 + $0x968] sm:$0xf]
  %v3140 = vld [vmem:[%s4 + $0x96c] sm:$0xf]
  %v3141 = vld [vmem:[%s4 + $0x970] sm:$0xf]
  %v3142 = vld [vmem:[%s4 + $0x974] sm:$0xf]
  %v3143 = vld [vmem:[%s4 + $0x978] sm:$0xf]
  %v3144 = vld [vmem:[%s4 + $0x97c] sm:$0xf]
  %v3145 = vld [vmem:[%s4 + $0x980] sm:$0xf]
  %v3146 = vld [vmem:[%s4 + $0x984] sm:$0xf]
  %v3147 = vld [vmem:[%s4 + $0x988] sm:$0xf]
  %v3148 = vld [vmem:[%s4 + $0x98c] sm:$0xf]
  %v3149 = vld [vmem:[%s4 + $0x990] sm:$0xf]
  %v3150 = vld [vmem:[%s4 + $0x994] sm:$0xf]
  %v3151 = vld [vmem:[%s4 + $0x998] sm:$0xf]
  %v3152 = vld [vmem:[%s4 + $0x99c] sm:$0xf]
  %v3153 = vld [vmem:[%s4 + $0x9a0] sm:$0xf]
  %v3154 = vld [vmem:[%s4 + $0x9a4] sm:$0xf]
  %v3155 = vld [vmem:[%s4 + $0x9a8] sm:$0xf]
  %v3156 = vld [vmem:[%s4 + $0x9ac] sm:$0xf]
  %v3157 = vld [vmem:[%s4 + $0x9b0] sm:$0xf]
  %v3158 = vld [vmem:[%s4 + $0x9b4] sm:$0xf]
  %v3159 = vld [vmem:[%s4 + $0x9b8] sm:$0xf]
  %v3160 = vld [vmem:[%s4 + $0x9bc] sm:$0xf]
  %v3161 = vld [vmem:[%s4 + $0x9c0] sm:$0xf]
  %v3162 = vld [vmem:[%s4 + $0x9c4] sm:$0xf]
  %v3163 = vld [vmem:[%s4 + $0x9c8] sm:$0xf]
  %v3164 = vld [vmem:[%s4 + $0x9cc] sm:$0xf]
  %v3165 = vld [vmem:[%s4 + $0x9d0] sm:$0xf]
  %v3166 = vld [vmem:[%s4 + $0x9d4] sm:$0xf]
  %v3167 = vld [vmem:[%s4 + $0x9d8] sm:$0xf]
  %v3168 = vld [vmem:[%s4 + $0x9dc] sm:$0xf]
  %v3169 = vld [vmem:[%s4 + $0x9e0] sm:$0xf]
  %v3170 = vld [vmem:[%s4 + $0x9e4] sm:$0xf]
  %v3171 = vld [vmem:[%s4 + $0x9e8] sm:$0xf]
  %v3172 = vld [vmem:[%s4 + $0x9ec] sm:$0xf]
  %v3173 = vld [vmem:[%s4 + $0x9f0] sm:$0xf]
  %v3174 = vld [vmem:[%s4 + $0x9f4] sm:$0xf]
  %v3175 = vld [vmem:[%s4 + $0x9f8] sm:$0xf]
  %v3176 = vld [vmem:[%s4 + $0x9fc] sm:$0xf]
  %v3177 = vld [vmem:[%s4 + $0xa00] sm:$0xf]
  %v3178 = vld [vmem:[%s4 + $0xa04] sm:$0xf]
  %v3179 = vld [vmem:[%s4 + $0xa08] sm:$0xf]
  %v3180 = vld [vmem:[%s4 + $0xa0c] sm:$0xf]
  %v3181 = vld [vmem:[%s4 + $0xa10] sm:$0xf]
  %v3182 = vld [vmem:[%s4 + $0xa14] sm:$0xf]
  %v3183 = vld [vmem:[%s4 + $0xa18] sm:$0xf]
  %v3184 = vld [vmem:[%s4 + $0xa1c] sm:$0xf]
  %v3185 = vld [vmem:[%s4 + $0xa20] sm:$0xf]
  %v3186 = vld [vmem:[%s4 + $0xa24] sm:$0xf]
  %v3187 = vld [vmem:[%s4 + $0xa28] sm:$0xf]
  %v3188 = vld [vmem:[%s4 + $0xa2c] sm:$0xf]
  %v3189 = vld [vmem:[%s4 + $0xa30] sm:$0xf]
  %v3190 = vld [vmem:[%s4 + $0xa34] sm:$0xf]
  %v3191 = vld [vmem:[%s4 + $0xa38] sm:$0xf]
  %v3192 = vld [vmem:[%s4 + $0xa3c] sm:$0xf]
  %v3193 = vld [vmem:[%s4 + $0xa40] sm:$0xf]
  %v3194 = vld [vmem:[%s4 + $0xa44] sm:$0xf]
  %v3195 = vld [vmem:[%s4 + $0xa48] sm:$0xf]
  %v3196 = vld [vmem:[%s4 + $0xa4c] sm:$0xf]
  %v3197 = vld [vmem:[%s4 + $0xa50] sm:$0xf]
  %v3198 = vld [vmem:[%s4 + $0xa54] sm:$0xf]
  %v3199 = vld [vmem:[%s4 + $0xa58] sm:$0xf]
  %v3200 = vld [vmem:[%s4 + $0xa5c] sm:$0xf]
  %v3201 = vld [vmem:[%s4 + $0xa60] sm:$0xf]
  %v3202 = vld [vmem:[%s4 + $0xa64] sm:$0xf]
  %v3203 = vld [vmem:[%s4 + $0xa68] sm:$0xf]
  %v3204 = vld [vmem:[%s4 + $0xa6c] sm:$0xf]
  %v3205 = vld [vmem:[%s4 + $0xa70] sm:$0xf]
  %v3206 = vld [vmem:[%s4 + $0xa74] sm:$0xf]
  %v3207 = vld [vmem:[%s4 + $0xa78] sm:$0xf]
  %v3208 = vld [vmem:[%s4 + $0xa7c] sm:$0xf]
  %v3209 = vld [vmem:[%s4 + $0xa80] sm:$0xf]
  %v3210 = vld [vmem:[%s4 + $0xa84] sm:$0xf]
  %v3211 = vld [vmem:[%s4 + $0xa88] sm:$0xf]
  %v3212 = vld [vmem:[%s4 + $0xa8c] sm:$0xf]
  %v3213 = vld [vmem:[%s4 + $0xa90] sm:$0xf]
  %v3214 = vld [vmem:[%s4 + $0xa94] sm:$0xf]
  %v3215 = vld [vmem:[%s4 + $0xa98] sm:$0xf]
  %v3216 = vld [vmem:[%s4 + $0xa9c] sm:$0xf]
  %v3217 = vld [vmem:[%s4 + $0xaa0] sm:$0xf]
  %v3218 = vld [vmem:[%s4 + $0xaa4] sm:$0xf]
  %v3219 = vld [vmem:[%s4 + $0xaa8] sm:$0xf]
  %v3220 = vld [vmem:[%s4 + $0xaac] sm:$0xf]
  %v3221 = vld [vmem:[%s4 + $0xab0] sm:$0xf]
  %v3222 = vld [vmem:[%s4 + $0xab4] sm:$0xf]
  %v3223 = vld [vmem:[%s4 + $0xab8] sm:$0xf]
  %v3224 = vld [vmem:[%s4 + $0xabc] sm:$0xf]
  %v3225 = vld [vmem:[%s4 + $0xac0] sm:$0xf]
  %v3226 = vld [vmem:[%s4 + $0xac4] sm:$0xf]
  %v3227 = vld [vmem:[%s4 + $0xac8] sm:$0xf]
  %v3228 = vld [vmem:[%s4 + $0xacc] sm:$0xf]
  %v3229 = vld [vmem:[%s4 + $0xad0] sm:$0xf]
  %v3230 = vld [vmem:[%s4 + $0xad4] sm:$0xf]
  %v3231 = vld [vmem:[%s4 + $0xad8] sm:$0xf]
  %v3232 = vld [vmem:[%s4 + $0xadc] sm:$0xf]
  %v3233 = vld [vmem:[%s4 + $0xae0] sm:$0xf]
  %v3234 = vld [vmem:[%s4 + $0xae4] sm:$0xf]
  %v3235 = vld [vmem:[%s4 + $0xae8] sm:$0xf]
  %v3236 = vld [vmem:[%s4 + $0xaec] sm:$0xf]
  %v3237 = vld [vmem:[%s4 + $0xaf0] sm:$0xf]
  %v3238 = vld [vmem:[%s4 + $0xaf4] sm:$0xf]
  %v3239 = vld [vmem:[%s4 + $0xaf8] sm:$0xf]
  %v3240 = vld [vmem:[%s4 + $0xafc] sm:$0xf]
  %v3241 = vld [vmem:[%s4 + $0xb00] sm:$0xf]
  %v3242 = vld [vmem:[%s4 + $0xb04] sm:$0xf]
  %v3243 = vld [vmem:[%s4 + $0xb08] sm:$0xf]
  %v3244 = vld [vmem:[%s4 + $0xb0c] sm:$0xf]
  %v3245 = vld [vmem:[%s4 + $0xb10] sm:$0xf]
  %v3246 = vld [vmem:[%s4 + $0xb14] sm:$0xf]
  %v3247 = vld [vmem:[%s4 + $0xb18] sm:$0xf]
  %v3248 = vld [vmem:[%s4 + $0xb1c] sm:$0xf]
  %v3249 = vld [vmem:[%s4 + $0xb20] sm:$0xf]
  %v3250 = vld [vmem:[%s4 + $0xb24] sm:$0xf]
  %v3251 = vld [vmem:[%s4 + $0xb28] sm:$0xf]
  %v3252 = vld [vmem:[%s4 + $0xb2c] sm:$0xf]
  %v3253 = vld [vmem:[%s4 + $0xb30] sm:$0xf]
  %v3254 = vld [vmem:[%s4 + $0xb34] sm:$0xf]
  %v3255 = vld [vmem:[%s4 + $0xb38] sm:$0xf]
  %v3256 = vld [vmem:[%s4 + $0xb3c] sm:$0xf]
  %v3257 = vld [vmem:[%s4 + $0xb40] sm:$0xf]
  %v3258 = vld [vmem:[%s4 + $0xb44] sm:$0xf]
  %v3259 = vld [vmem:[%s4 + $0xb48] sm:$0xf]
  %v3260 = vld [vmem:[%s4 + $0xb4c] sm:$0xf]
  %v3261 = vld [vmem:[%s4 + $0xb50] sm:$0xf]
  %v3262 = vld [vmem:[%s4 + $0xb54] sm:$0xf]
  %v3263 = vld [vmem:[%s4 + $0xb58] sm:$0xf]
  %v3264 = vld [vmem:[%s4 + $0xb5c] sm:$0xf]
  %v3265 = vld [vmem:[%s4 + $0xb60] sm:$0xf]
  %v3266 = vld [vmem:[%s4 + $0xb64] sm:$0xf]
  %v3267 = vld [vmem:[%s4 + $0xb68] sm:$0xf]
  %v3268 = vld [vmem:[%s4 + $0xb6c] sm:$0xf]
  %v3269 = vld [vmem:[%s4 + $0xb70] sm:$0xf]
  %v3270 = vld [vmem:[%s4 + $0xb74] sm:$0xf]
  %v3271 = vld [vmem:[%s4 + $0xb78] sm:$0xf]
  %v3272 = vld [vmem:[%s4 + $0xb7c] sm:$0xf]
  %v3273 = vld [vmem:[%s4 + $0xb80] sm:$0xf]
  %v3274 = vld [vmem:[%s4 + $0xb84] sm:$0xf]
  %v3275 = vld [vmem:[%s4 + $0xb88] sm:$0xf]
  %v3276 = vld [vmem:[%s4 + $0xb8c] sm:$0xf]
  %v3277 = vld [vmem:[%s4 + $0xb90] sm:$0xf]
  %v3278 = vld [vmem:[%s4 + $0xb94] sm:$0xf]
  %v3279 = vld [vmem:[%s4 + $0xb98] sm:$0xf]
  %v3280 = vld [vmem:[%s4 + $0xb9c] sm:$0xf]
  %v3281 = vld [vmem:[%s4 + $0xba0] sm:$0xf]
  %v3282 = vld [vmem:[%s4 + $0xba4] sm:$0xf]
  %v3283 = vld [vmem:[%s4 + $0xba8] sm:$0xf]
  %v3284 = vld [vmem:[%s4 + $0xbac] sm:$0xf]
  %v3285 = vld [vmem:[%s4 + $0xbb0] sm:$0xf]
  %v3286 = vld [vmem:[%s4 + $0xbb4] sm:$0xf]
  %v3287 = vld [vmem:[%s4 + $0xbb8] sm:$0xf]
  %v3288 = vld [vmem:[%s4 + $0xbbc] sm:$0xf]
  %v3289 = vld [vmem:[%s4 + $0xbc0] sm:$0xf]
  %v3290 = vld [vmem:[%s4 + $0xbc4] sm:$0xf]
  %v3291 = vld [vmem:[%s4 + $0xbc8] sm:$0xf]
  %v3292 = vld [vmem:[%s4 + $0xbcc] sm:$0xf]
  %v3293 = vld [vmem:[%s4 + $0xbd0] sm:$0xf]
  %v3294 = vld [vmem:[%s4 + $0xbd4] sm:$0xf]
  %v3295 = vld [vmem:[%s4 + $0xbd8] sm:$0xf]
  %v3296 = vld [vmem:[%s4 + $0xbdc] sm:$0xf]
  %v3297 = vld [vmem:[%s4 + $0xbe0] sm:$0xf]
  %v3298 = vld [vmem:[%s4 + $0xbe4] sm:$0xf]
  %v3299 = vld [vmem:[%s4 + $0xbe8] sm:$0xf]
  %v3300 = vld [vmem:[%s4 + $0xbec] sm:$0xf]
  %v3301 = vld [vmem:[%s4 + $0xbf0] sm:$0xf]
  %v3302 = vld [vmem:[%s4 + $0xbf4] sm:$0xf]
  %v3303 = vld [vmem:[%s4 + $0xbf8] sm:$0xf]
  %v3304 = vld [vmem:[%s4 + $0xbfc] sm:$0xf]
  %v3305 = vld [vmem:[%s4 + $0xc00] sm:$0xf]
  %v3306 = vld [vmem:[%s4 + $0xc04] sm:$0xf]
  %v3307 = vld [vmem:[%s4 + $0xc08] sm:$0xf]
  %v3308 = vld [vmem:[%s4 + $0xc0c] sm:$0xf]
  %v3309 = vld [vmem:[%s4 + $0xc10] sm:$0xf]
  %v3310 = vld [vmem:[%s4 + $0xc14] sm:$0xf]
  %v3311 = vld [vmem:[%s4 + $0xc18] sm:$0xf]
  %v3312 = vld [vmem:[%s4 + $0xc1c] sm:$0xf]
  %v3313 = vld [vmem:[%s4 + $0xc20] sm:$0xf]
  %v3314 = vld [vmem:[%s4 + $0xc24] sm:$0xf]
  %v3315 = vld [vmem:[%s4 + $0xc28] sm:$0xf]
  %v3316 = vld [vmem:[%s4 + $0xc2c] sm:$0xf]
  %v3317 = vld [vmem:[%s4 + $0xc30] sm:$0xf]
  %v3318 = vld [vmem:[%s4 + $0xc34] sm:$0xf]
  %v3319 = vld [vmem:[%s4 + $0xc38] sm:$0xf]
  %v3320 = vld [vmem:[%s4 + $0xc3c] sm:$0xf]
  %v3321 = vld [vmem:[%s4 + $0xc40] sm:$0xf]
  %v3322 = vld [vmem:[%s4 + $0xc44] sm:$0xf]
  %v3323 = vld [vmem:[%s4 + $0xc48] sm:$0xf]
  %v3324 = vld [vmem:[%s4 + $0xc4c] sm:$0xf]
  %v3325 = vld [vmem:[%s4 + $0xc50] sm:$0xf]
  %v3326 = vld [vmem:[%s4 + $0xc54] sm:$0xf]
  %v3327 = vld [vmem:[%s4 + $0xc58] sm:$0xf]
  %v3328 = vld [vmem:[%s4 + $0xc5c] sm:$0xf]
  %v3329 = vld [vmem:[%s4 + $0xc60] sm:$0xf]
  %v3330 = vld [vmem:[%s4 + $0xc64] sm:$0xf]
  %v3331 = vld [vmem:[%s4 + $0xc68] sm:$0xf]
  %v3332 = vld [vmem:[%s4 + $0xc6c] sm:$0xf]
  %v3333 = vld [vmem:[%s4 + $0xc70] sm:$0xf]
  %v3334 = vld [vmem:[%s4 + $0xc74] sm:$0xf]
  %v3335 = vld [vmem:[%s4 + $0xc78] sm:$0xf]
  %v3336 = vld [vmem:[%s4 + $0xc7c] sm:$0xf]
  %v3337 = vld [vmem:[%s4 + $0xc80] sm:$0xf]
  %v3338 = vld [vmem:[%s4 + $0xc84] sm:$0xf]
  %v3339 = vld [vmem:[%s4 + $0xc88] sm:$0xf]
  %v3340 = vld [vmem:[%s4 + $0xc8c] sm:$0xf]
  %v3341 = vld [vmem:[%s4 + $0xc90] sm:$0xf]
  %v3342 = vld [vmem:[%s4 + $0xc94] sm:$0xf]
  %v3343 = vld [vmem:[%s4 + $0xc98] sm:$0xf]
  %v3344 = vld [vmem:[%s4 + $0xc9c] sm:$0xf]
  %v3345 = vld [vmem:[%s4 + $0xca0] sm:$0xf]
  %v3346 = vld [vmem:[%s4 + $0xca4] sm:$0xf]
  %v3347 = vld [vmem:[%s4 + $0xca8] sm:$0xf]
  %v3348 = vld [vmem:[%s4 + $0xcac] sm:$0xf]
  %v3349 = vld [vmem:[%s4 + $0xcb0] sm:$0xf]
  %v3350 = vld [vmem:[%s4 + $0xcb4] sm:$0xf]
  %v3351 = vld [vmem:[%s4 + $0xcb8] sm:$0xf]
  %v3352 = vld [vmem:[%s4 + $0xcbc] sm:$0xf]
  %v3353 = vld [vmem:[%s4 + $0xcc0] sm:$0xf]
  %v3354 = vld [vmem:[%s4 + $0xcc4] sm:$0xf]
  %v3355 = vld [vmem:[%s4 + $0xcc8] sm:$0xf]
  %v3356 = vld [vmem:[%s4 + $0xccc] sm:$0xf]
  %v3357 = vld [vmem:[%s4 + $0xcd0] sm:$0xf]
  %v3358 = vld [vmem:[%s4 + $0xcd4] sm:$0xf]
  %v3359 = vld [vmem:[%s4 + $0xcd8] sm:$0xf]
  %v3360 = vld [vmem:[%s4 + $0xcdc] sm:$0xf]
  %v3361 = vld [vmem:[%s4 + $0xce0] sm:$0xf]
  %v3362 = vld [vmem:[%s4 + $0xce4] sm:$0xf]
  %v3363 = vld [vmem:[%s4 + $0xce8] sm:$0xf]
  %v3364 = vld [vmem:[%s4 + $0xcec] sm:$0xf]
  %v3365 = vld [vmem:[%s4 + $0xcf0] sm:$0xf]
  %v3366 = vld [vmem:[%s4 + $0xcf4] sm:$0xf]
  %v3367 = vld [vmem:[%s4 + $0xcf8] sm:$0xf]
  %v3368 = vld [vmem:[%s4 + $0xcfc] sm:$0xf]
  %v3369 = vld [vmem:[%s4 + $0xd00] sm:$0xf]
  %v3370 = vld [vmem:[%s4 + $0xd04] sm:$0xf]
  %v3371 = vld [vmem:[%s4 + $0xd08] sm:$0xf]
  %v3372 = vld [vmem:[%s4 + $0xd0c] sm:$0xf]
  %v3373 = vld [vmem:[%s4 + $0xd10] sm:$0xf]
  %v3374 = vld [vmem:[%s4 + $0xd14] sm:$0xf]
  %v3375 = vld [vmem:[%s4 + $0xd18] sm:$0xf]
  %v3376 = vld [vmem:[%s4 + $0xd1c] sm:$0xf]
  %v3377 = vld [vmem:[%s4 + $0xd20] sm:$0xf]
  %v3378 = vld [vmem:[%s4 + $0xd24] sm:$0xf]
  %v3379 = vld [vmem:[%s4 + $0xd28] sm:$0xf]
  %v3380 = vld [vmem:[%s4 + $0xd2c] sm:$0xf]
  %v3381 = vld [vmem:[%s4 + $0xd30] sm:$0xf]
  %v3382 = vld [vmem:[%s4 + $0xd34] sm:$0xf]
  %v3383 = vld [vmem:[%s4 + $0xd38] sm:$0xf]
  %v3384 = vld [vmem:[%s4 + $0xd3c] sm:$0xf]
  %v3385 = vld [vmem:[%s4 + $0xd40] sm:$0xf]
  %v3386 = vld [vmem:[%s4 + $0xd44] sm:$0xf]
  %v3387 = vld [vmem:[%s4 + $0xd48] sm:$0xf]
  %v3388 = vld [vmem:[%s4 + $0xd4c] sm:$0xf]
  %v3389 = vld [vmem:[%s4 + $0xd50] sm:$0xf]
  %v3390 = vld [vmem:[%s4 + $0xd54] sm:$0xf]
  %v3391 = vld [vmem:[%s4 + $0xd58] sm:$0xf]
  %v3392 = vld [vmem:[%s4 + $0xd5c] sm:$0xf]
  %v3393 = vld [vmem:[%s4 + $0xd60] sm:$0xf]
  %v3394 = vld [vmem:[%s4 + $0xd64] sm:$0xf]
  %v3395 = vld [vmem:[%s4 + $0xd68] sm:$0xf]
  %v3396 = vld [vmem:[%s4 + $0xd6c] sm:$0xf]
  %v3397 = vld [vmem:[%s4 + $0xd70] sm:$0xf]
  %v3398 = vld [vmem:[%s4 + $0xd74] sm:$0xf]
  %v3399 = vld [vmem:[%s4 + $0xd78] sm:$0xf]
  %v3400 = vld [vmem:[%s4 + $0xd7c] sm:$0xf]
  %v3401 = vld [vmem:[%s4 + $0xd80] sm:$0xf]
  %v3402 = vld [vmem:[%s4 + $0xd84] sm:$0xf]
  %v3403 = vld [vmem:[%s4 + $0xd88] sm:$0xf]
  %v3404 = vld [vmem:[%s4 + $0xd8c] sm:$0xf]
  %v3405 = vld [vmem:[%s4 + $0xd90] sm:$0xf]
  %v3406 = vld [vmem:[%s4 + $0xd94] sm:$0xf]
  %v3407 = vld [vmem:[%s4 + $0xd98] sm:$0xf]
  %v3408 = vld [vmem:[%s4 + $0xd9c] sm:$0xf]
  %v3409 = vld [vmem:[%s4 + $0xda0] sm:$0xf]
  %v3410 = vld [vmem:[%s4 + $0xda4] sm:$0xf]
  %v3411 = vld [vmem:[%s4 + $0xda8] sm:$0xf]
  %v3412 = vld [vmem:[%s4 + $0xdac] sm:$0xf]
  %v3413 = vld [vmem:[%s4 + $0xdb0] sm:$0xf]
  %v3414 = vld [vmem:[%s4 + $0xdb4] sm:$0xf]
  %v3415 = vld [vmem:[%s4 + $0xdb8] sm:$0xf]
  %v3416 = vld [vmem:[%s4 + $0xdbc] sm:$0xf]
  %v3417 = vld [vmem:[%s4 + $0xdc0] sm:$0xf]
  %v3418 = vld [vmem:[%s4 + $0xdc4] sm:$0xf]
  %v3419 = vld [vmem:[%s4 + $0xdc8] sm:$0xf]
  %v3420 = vld [vmem:[%s4 + $0xdcc] sm:$0xf]
  %v3421 = vld [vmem:[%s4 + $0xdd0] sm:$0xf]
  %v3422 = vld [vmem:[%s4 + $0xdd4] sm:$0xf]
  %v3423 = vld [vmem:[%s4 + $0xdd8] sm:$0xf]
  %v3424 = vld [vmem:[%s4 + $0xddc] sm:$0xf]
  %v3425 = vld [vmem:[%s4 + $0xde0] sm:$0xf]
  %v3426 = vld [vmem:[%s4 + $0xde4] sm:$0xf]
  %v3427 = vld [vmem:[%s4 + $0xde8] sm:$0xf]
  %v3428 = vld [vmem:[%s4 + $0xdec] sm:$0xf]
  %v3429 = vld [vmem:[%s4 + $0xdf0] sm:$0xf]
  %v3430 = vld [vmem:[%s4 + $0xdf4] sm:$0xf]
  %v3431 = vld [vmem:[%s4 + $0xdf8] sm:$0xf]
  %v3432 = vld [vmem:[%s4 + $0xdfc] sm:$0xf]
  %v3433 = vld [vmem:[%s4 + $0xe00] sm:$0xf]
  %v3434 = vld [vmem:[%s4 + $0xe04] sm:$0xf]
  %v3435 = vld [vmem:[%s4 + $0xe08] sm:$0xf]
  %v3436 = vld [vmem:[%s4 + $0xe0c] sm:$0xf]
  %v3437 = vld [vmem:[%s4 + $0xe10] sm:$0xf]
  %v3438 = vld [vmem:[%s4 + $0xe14] sm:$0xf]
  %v3439 = vld [vmem:[%s4 + $0xe18] sm:$0xf]
  %v3440 = vld [vmem:[%s4 + $0xe1c] sm:$0xf]
  %v3441 = vld [vmem:[%s4 + $0xe20] sm:$0xf]
  %v3442 = vld [vmem:[%s4 + $0xe24] sm:$0xf]
  %v3443 = vld [vmem:[%s4 + $0xe28] sm:$0xf]
  %v3444 = vld [vmem:[%s4 + $0xe2c] sm:$0xf]
  %v3445 = vld [vmem:[%s4 + $0xe30] sm:$0xf]
  %v3446 = vld [vmem:[%s4 + $0xe34] sm:$0xf]
  %v3447 = vld [vmem:[%s4 + $0xe38] sm:$0xf]
  %v3448 = vld [vmem:[%s4 + $0xe3c] sm:$0xf]
  %v3449 = vld [vmem:[%s4 + $0xe40] sm:$0xf]
  %v3450 = vld [vmem:[%s4 + $0xe44] sm:$0xf]
  %v3451 = vld [vmem:[%s4 + $0xe48] sm:$0xf]
  %v3452 = vld [vmem:[%s4 + $0xe4c] sm:$0xf]
  %v3453 = vld [vmem:[%s4 + $0xe50] sm:$0xf]
  %v3454 = vld [vmem:[%s4 + $0xe54] sm:$0xf]
  %v3455 = vld [vmem:[%s4 + $0xe58] sm:$0xf]
  %v3456 = vld [vmem:[%s4 + $0xe5c] sm:$0xf]
  %v3457 = vld [vmem:[%s4 + $0xe60] sm:$0xf]
  %v3458 = vld [vmem:[%s4 + $0xe64] sm:$0xf]
  %v3459 = vld [vmem:[%s4 + $0xe68] sm:$0xf]
  %v3460 = vld [vmem:[%s4 + $0xe6c] sm:$0xf]
  %v3461 = vld [vmem:[%s4 + $0xe70] sm:$0xf]
  %v3462 = vld [vmem:[%s4 + $0xe74] sm:$0xf]
  %v3463 = vld [vmem:[%s4 + $0xe78] sm:$0xf]
  %v3464 = vld [vmem:[%s4 + $0xe7c] sm:$0xf]
  %v3465 = vld [vmem:[%s4 + $0xe80] sm:$0xf]
  %v3466 = vld [vmem:[%s4 + $0xe84] sm:$0xf]
  %v3467 = vld [vmem:[%s4 + $0xe88] sm:$0xf]
  %v3468 = vld [vmem:[%s4 + $0xe8c] sm:$0xf]
  %v3469 = vld [vmem:[%s4 + $0xe90] sm:$0xf]
  %v3470 = vld [vmem:[%s4 + $0xe94] sm:$0xf]
  %v3471 = vld [vmem:[%s4 + $0xe98] sm:$0xf]
  %v3472 = vld [vmem:[%s4 + $0xe9c] sm:$0xf]
  %v3473 = vld [vmem:[%s4 + $0xea0] sm:$0xf]
  %v3474 = vld [vmem:[%s4 + $0xea4] sm:$0xf]
  %v3475 = vld [vmem:[%s4 + $0xea8] sm:$0xf]
  %v3476 = vld [vmem:[%s4 + $0xeac] sm:$0xf]
  %v3477 = vld [vmem:[%s4 + $0xeb0] sm:$0xf]
  %v3478 = vld [vmem:[%s4 + $0xeb4] sm:$0xf]
  %v3479 = vld [vmem:[%s4 + $0xeb8] sm:$0xf]
  %v3480 = vld [vmem:[%s4 + $0xebc] sm:$0xf]
  %v3481 = vld [vmem:[%s4 + $0xec0] sm:$0xf]
  %v3482 = vld [vmem:[%s4 + $0xec4] sm:$0xf]
  %v3483 = vld [vmem:[%s4 + $0xec8] sm:$0xf]
  %v3484 = vld [vmem:[%s4 + $0xecc] sm:$0xf]
  %v3485 = vld [vmem:[%s4 + $0xed0] sm:$0xf]
  %v3486 = vld [vmem:[%s4 + $0xed4] sm:$0xf]
  %v3487 = vld [vmem:[%s4 + $0xed8] sm:$0xf]
  %v3488 = vld [vmem:[%s4 + $0xedc] sm:$0xf]
  %v3489 = vld [vmem:[%s4 + $0xee0] sm:$0xf]
  %v3490 = vld [vmem:[%s4 + $0xee4] sm:$0xf]
  %v3491 = vld [vmem:[%s4 + $0xee8] sm:$0xf]
  %v3492 = vld [vmem:[%s4 + $0xeec] sm:$0xf]
  %v3493 = vld [vmem:[%s4 + $0xef0] sm:$0xf]
  %v3494 = vld [vmem:[%s4 + $0xef4] sm:$0xf]
  %v3495 = vld [vmem:[%s4 + $0xef8] sm:$0xf]
  %v3496 = vld [vmem:[%s4 + $0xefc] sm:$0xf]
  %v3497 = vld [vmem:[%s4 + $0xf00] sm:$0xf]
  %v3498 = vld [vmem:[%s4 + $0xf04] sm:$0xf]
  %v3499 = vld [vmem:[%s4 + $0xf08] sm:$0xf]
  %v3500 = vld [vmem:[%s4 + $0xf0c] sm:$0xf]
  %v3501 = vld [vmem:[%s4 + $0xf10] sm:$0xf]
  %v3502 = vld [vmem:[%s4 + $0xf14] sm:$0xf]
  %v3503 = vld [vmem:[%s4 + $0xf18] sm:$0xf]
  %v3504 = vld [vmem:[%s4 + $0xf1c] sm:$0xf]
  %v3505 = vld [vmem:[%s4 + $0xf20] sm:$0xf]
  %v3506 = vld [vmem:[%s4 + $0xf24] sm:$0xf]
  %v3507 = vld [vmem:[%s4 + $0xf28] sm:$0xf]
  %v3508 = vld [vmem:[%s4 + $0xf2c] sm:$0xf]
  %v3509 = vld [vmem:[%s4 + $0xf30] sm:$0xf]
  %v3510 = vld [vmem:[%s4 + $0xf34] sm:$0xf]
  %v3511 = vld [vmem:[%s4 + $0xf38] sm:$0xf]
  %v3512 = vld [vmem:[%s4 + $0xf3c] sm:$0xf]
  %v3513 = vld [vmem:[%s4 + $0xf40] sm:$0xf]
  %v3514 = vld [vmem:[%s4 + $0xf44] sm:$0xf]
  %v3515 = vld [vmem:[%s4 + $0xf48] sm:$0xf]
  %v3516 = vld [vmem:[%s4 + $0xf4c] sm:$0xf]
  %v3517 = vld [vmem:[%s4 + $0xf50] sm:$0xf]
  %v3518 = vld [vmem:[%s4 + $0xf54] sm:$0xf]
  %v3519 = vld [vmem:[%s4 + $0xf58] sm:$0xf]
  %v3520 = vld [vmem:[%s4 + $0xf5c] sm:$0xf]
  %v3521 = vld [vmem:[%s4 + $0xf60] sm:$0xf]
  %v3522 = vld [vmem:[%s4 + $0xf64] sm:$0xf]
  %v3523 = vld [vmem:[%s4 + $0xf68] sm:$0xf]
  %v3524 = vld [vmem:[%s4 + $0xf6c] sm:$0xf]
  %v3525 = vld [vmem:[%s4 + $0xf70] sm:$0xf]
  %v3526 = vld [vmem:[%s4 + $0xf74] sm:$0xf]
  %v3527 = vld [vmem:[%s4 + $0xf78] sm:$0xf]
  %v3528 = vld [vmem:[%s4 + $0xf7c] sm:$0xf]
  %v3529 = vld [vmem:[%s4 + $0xf80] sm:$0xf]
  %v3530 = vld [vmem:[%s4 + $0xf84] sm:$0xf]
  %v3531 = vld [vmem:[%s4 + $0xf88] sm:$0xf]
  %v3532 = vld [vmem:[%s4 + $0xf8c] sm:$0xf]
  %v3533 = vld [vmem:[%s4 + $0xf90] sm:$0xf]
  %v3534 = vld [vmem:[%s4 + $0xf94] sm:$0xf]
  %v3535 = vld [vmem:[%s4 + $0xf98] sm:$0xf]
  %v3536 = vld [vmem:[%s4 + $0xf9c] sm:$0xf]
  %v3537 = vld [vmem:[%s4 + $0xfa0] sm:$0xf]
  %v3538 = vld [vmem:[%s4 + $0xfa4] sm:$0xf]
  %v3539 = vld [vmem:[%s4 + $0xfa8] sm:$0xf]
  %v3540 = vld [vmem:[%s4 + $0xfac] sm:$0xf]
  %v3541 = vld [vmem:[%s4 + $0xfb0] sm:$0xf]
  %v3542 = vld [vmem:[%s4 + $0xfb4] sm:$0xf]
  %v3543 = vld [vmem:[%s4 + $0xfb8] sm:$0xf]
  %v3544 = vld [vmem:[%s4 + $0xfbc] sm:$0xf]
  %v3545 = vld [vmem:[%s4 + $0xfc0] sm:$0xf]
  %v3546 = vld [vmem:[%s4 + $0xfc4] sm:$0xf]
  %v3547 = vld [vmem:[%s4 + $0xfc8] sm:$0xf]
  %v3548 = vld [vmem:[%s4 + $0xfcc] sm:$0xf]
  %v3549 = vld [vmem:[%s4 + $0xfd0] sm:$0xf]
  %v3550 = vld [vmem:[%s4 + $0xfd4] sm:$0xf]
  %v3551 = vld [vmem:[%s4 + $0xfd8] sm:$0xf]
  %v3552 = vld [vmem:[%s4 + $0xfdc] sm:$0xf]
  %v3553 = vld [vmem:[%s4 + $0xfe0] sm:$0xf]
  %v3554 = vld [vmem:[%s4 + $0xfe4] sm:$0xf]
  %v3555 = vld [vmem:[%s4 + $0xfe8] sm:$0xf]
  %v3556 = vld [vmem:[%s4 + $0xfec] sm:$0xf]
  %v3557 = vld [vmem:[%s4 + $0xff0] sm:$0xf]
  %v3558 = vld [vmem:[%s4 + $0xff4] sm:$0xf]
  %v3559 = vld [vmem:[%s4 + $0xff8] sm:$0xf]
  %v3560 = vld [vmem:[%s4 + $0xffc] sm:$0xf]
  %v3561 = vld [vmem:[%s5] sm:$0x1]
  %v3563 = vlaneseq
  %v3564 = vshrl.u32 %v3563, 7
  %v3565 = vsub.s32 0, %v3564
  %v3566 = vrot.slane %v3561, %v3565
  %v3632 = vunpack.c.l.b16 %v2537
  %v3633 = vunpack.c.l.b16 %v2538
  %v3634 = vunpack.c.l.b16 %v2539
  %v3635 = vunpack.c.l.b16 %v2540
  %v3636 = vunpack.c.l.b16 %v2541
  %v3637 = vunpack.c.l.b16 %v2542
  %v3638 = vunpack.c.l.b16 %v2543
  %v3639 = vunpack.c.l.b16 %v2544
  %v3640 = vunpack.c.l.b16 %v2545
  %v3641 = vunpack.c.l.b16 %v2546
  %v3642 = vunpack.c.l.b16 %v2547
  %v3643 = vunpack.c.l.b16 %v2548
  %v3644 = vunpack.c.l.b16 %v2549
  %v3645 = vunpack.c.l.b16 %v2550
  %v3646 = vunpack.c.l.b16 %v2551
  %v3647 = vunpack.c.l.b16 %v2552
  %v3648 = vunpack.c.l.b16 %v2553
  %v3649 = vunpack.c.l.b16 %v2554
  %v3650 = vunpack.c.l.b16 %v2555
  %v3651 = vunpack.c.l.b16 %v2556
  %v3652 = vunpack.c.l.b16 %v2557
  %v3653 = vunpack.c.l.b16 %v2558
  %v3654 = vunpack.c.l.b16 %v2559
  %v3655 = vunpack.c.l.b16 %v2560
  %v3656 = vunpack.c.l.b16 %v2561
  %v3657 = vunpack.c.l.b16 %v2562
  %v3658 = vunpack.c.l.b16 %v2563
  %v3659 = vunpack.c.l.b16 %v2564
  %v3660 = vunpack.c.l.b16 %v2565
  %v3661 = vunpack.c.l.b16 %v2566
  %v3662 = vunpack.c.l.b16 %v2567
  %v3663 = vunpack.c.l.b16 %v2568
  %v3664 = vunpack.c.l.b16 %v2569
  %v3665 = vunpack.c.l.b16 %v2570
  %v3666 = vunpack.c.l.b16 %v2571
  %v3667 = vunpack.c.l.b16 %v2572
  %v3668 = vunpack.c.l.b16 %v2573
  %v3669 = vunpack.c.l.b16 %v2574
  %v3670 = vunpack.c.l.b16 %v2575
  %v3671 = vunpack.c.l.b16 %v2576
  %v3672 = vunpack.c.l.b16 %v2577
  %v3673 = vunpack.c.l.b16 %v2578
  %v3674 = vunpack.c.l.b16 %v2579
  %v3675 = vunpack.c.l.b16 %v2580
  %v3676 = vunpack.c.l.b16 %v2581
  %v3677 = vunpack.c.l.b16 %v2582
  %v3678 = vunpack.c.l.b16 %v2583
  %v3679 = vunpack.c.l.b16 %v2584
  %v3680 = vunpack.c.l.b16 %v2585
  %v3681 = vunpack.c.l.b16 %v2586
  %v3682 = vunpack.c.l.b16 %v2587
  %v3683 = vunpack.c.l.b16 %v2588
  %v3684 = vunpack.c.l.b16 %v2589
  %v3685 = vunpack.c.l.b16 %v2590
  %v3686 = vunpack.c.l.b16 %v2591
  %v3687 = vunpack.c.l.b16 %v2592
  %v3688 = vunpack.c.l.b16 %v2593
  %v3689 = vunpack.c.l.b16 %v2594
  %v3690 = vunpack.c.l.b16 %v2595
  %v3691 = vunpack.c.l.b16 %v2596
  %v3692 = vunpack.c.l.b16 %v2597
  %v3693 = vunpack.c.l.b16 %v2598
  %v3694 = vunpack.c.l.b16 %v2599
  %v3695 = vunpack.c.l.b16 %v2600
  %v3696 = vpack.c.b16 %v3633, %v3632
  %v3697 = vpack.c.b16 %v3635, %v3634
  %v3698 = vpack.c.b16 %v3637, %v3636
  %v3699 = vpack.c.b16 %v3639, %v3638
  %v3700 = vpack.c.b16 %v3641, %v3640
  %v3701 = vpack.c.b16 %v3643, %v3642
  %v3702 = vpack.c.b16 %v3645, %v3644
  %v3703 = vpack.c.b16 %v3647, %v3646
  %v3704 = vpack.c.b16 %v3649, %v3648
  %v3705 = vpack.c.b16 %v3651, %v3650
  %v3706 = vpack.c.b16 %v3653, %v3652
  %v3707 = vpack.c.b16 %v3655, %v3654
  %v3708 = vpack.c.b16 %v3657, %v3656
  %v3709 = vpack.c.b16 %v3659, %v3658
  %v3710 = vpack.c.b16 %v3661, %v3660
  %v3711 = vpack.c.b16 %v3663, %v3662
  %v3712 = vpack.c.b16 %v3665, %v3664
  %v3713 = vpack.c.b16 %v3667, %v3666
  %v3714 = vpack.c.b16 %v3669, %v3668
  %v3715 = vpack.c.b16 %v3671, %v3670
  %v3716 = vpack.c.b16 %v3673, %v3672
  %v3717 = vpack.c.b16 %v3675, %v3674
  %v3718 = vpack.c.b16 %v3677, %v3676
  %v3719 = vpack.c.b16 %v3679, %v3678
  %v3720 = vpack.c.b16 %v3681, %v3680
  %v3721 = vpack.c.b16 %v3683, %v3682
  %v3722 = vpack.c.b16 %v3685, %v3684
  %v3723 = vpack.c.b16 %v3687, %v3686
  %v3724 = vpack.c.b16 %v3689, %v3688
  %v3725 = vpack.c.b16 %v3691, %v3690
  %v3726 = vpack.c.b16 %v3693, %v3692
  %v3727 = vpack.c.b16 %v3695, %v3694
  %3760 = vmatprep.subr.bf16.mxu0 0
  %3761 = vmatpush1.bf16.msra.mxu0 %v3696
  %3762 = vmatprep.subr.bf16.mxu0 0
  %3763 = vmatpush1.bf16.msra.mxu0 %v3697
  %3764 = vmatprep.subr.bf16.mxu0 0
  %3765 = vmatpush1.bf16.msra.mxu0 %v3698
  %3766 = vmatprep.subr.bf16.mxu0 0
  %3767 = vmatpush1.bf16.msra.mxu0 %v3699
  %3768 = vmatprep.subr.bf16.mxu0 0
  %3769 = vmatpush1.bf16.msra.mxu0 %v3700
  %3770 = vmatprep.subr.bf16.mxu0 0
  %3771 = vmatpush1.bf16.msra.mxu0 %v3701
  %3772 = vmatprep.subr.bf16.mxu0 0
  %3773 = vmatpush1.bf16.msra.mxu0 %v3702
  %3774 = vmatprep.subr.bf16.mxu0 0
  %3775 = vmatpush1.bf16.msra.mxu0 %v3703
  %3776 = vmatprep.subr.bf16.mxu0 0
  %3777 = vmatpush1.bf16.msra.mxu0 %v3704
  %3778 = vmatprep.subr.bf16.mxu0 0
  %3779 = vmatpush1.bf16.msra.mxu0 %v3705
  %3780 = vmatprep.subr.bf16.mxu0 0
  %3781 = vmatpush1.bf16.msra.mxu0 %v3706
  %3782 = vmatprep.subr.bf16.mxu0 0
  %3783 = vmatpush1.bf16.msra.mxu0 %v3707
  %3784 = vmatprep.subr.bf16.mxu0 0
  %3785 = vmatpush1.bf16.msra.mxu0 %v3708
  %3786 = vmatprep.subr.bf16.mxu0 0
  %3787 = vmatpush1.bf16.msra.mxu0 %v3709
  %3788 = vmatprep.subr.bf16.mxu0 0
  %3789 = vmatpush1.bf16.msra.mxu0 %v3710
  %3790 = vmatprep.subr.bf16.mxu0 0
  %3791 = vmatpush1.bf16.msra.mxu0 %v3711
  %3792 = vmatprep.mubr.bf16.mxu0 %v2474
  %3793 = vmatmul.mubr.bf16.gmra.mrb[0].mxu0 %v2473
  %v3794 = vpop.f32.mrb[0].mxu0
  %v3795 = vadd.f32 %v3566, %v3794
  %v3796 = vpop.f32.mrb[0].mxu0
  %v3797 = vpop.f32.mrb[0].mxu0
  %v3798 = vpop.f32.mrb[0].mxu0
  %3799 = vdwg.mxu0
  %3800 = vmatprep.subr.bf16.mxu0 0
  %3801 = vmatpush1.bf16.msra.mxu0 %v3712
  %3802 = vmatprep.subr.bf16.mxu0 0
  %3803 = vmatpush1.bf16.msra.mxu0 %v3713
  %3804 = vmatprep.subr.bf16.mxu0 0
  %3805 = vmatpush1.bf16.msra.mxu0 %v3714
  %3806 = vmatprep.subr.bf16.mxu0 0
  %3807 = vmatpush1.bf16.msra.mxu0 %v3715
  %3808 = vmatprep.subr.bf16.mxu0 0
  %3809 = vmatpush1.bf16.msra.mxu0 %v3716
  %3810 = vmatprep.subr.bf16.mxu0 0
  %3811 = vmatpush1.bf16.msra.mxu0 %v3717
  %3812 = vmatprep.subr.bf16.mxu0 0
  %3813 = vmatpush1.bf16.msra.mxu0 %v3718
  %3814 = vmatprep.subr.bf16.mxu0 0
  %3815 = vmatpush1.bf16.msra.mxu0 %v3719
  %3816 = vmatprep.subr.bf16.mxu0 0
  %3817 = vmatpush1.bf16.msra.mxu0 %v3720
  %3818 = vmatprep.subr.bf16.mxu0 0
  %3819 = vmatpush1.bf16.msra.mxu0 %v3721
  %3820 = vmatprep.subr.bf16.mxu0 0
  %3821 = vmatpush1.bf16.msra.mxu0 %v3722
  %3822 = vmatprep.subr.bf16.mxu0 0
  %3823 = vmatpush1.bf16.msra.mxu0 %v3723
  %3824 = vmatprep.subr.bf16.mxu0 0
  %3825 = vmatpush1.bf16.msra.mxu0 %v3724
  %3826 = vmatprep.subr.bf16.mxu0 0
  %3827 = vmatpush1.bf16.msra.mxu0 %v3725
  %3828 = vmatprep.subr.bf16.mxu0 0
  %3829 = vmatpush1.bf16.msra.mxu0 %v3726
  %3830 = vmatprep.subr.bf16.mxu0 0
  %3831 = vmatpush1.bf16.msra.mxu0 %v3727
  %3832 = vmatprep.mubr.bf16.mxu0 %v2476
  %3833 = vmatmul.mubr.bf16.gmra.mrb[0].mxu0 %v2475
  %v3834 = vpop.f32.mrb[0].mxu0
  %v3835 = vadd.f32 %v3795, %v3834
  %v3836 = vpop.f32.mrb[0].mxu0
  %v3837 = vpop.f32.mrb[0].mxu0
  %v3838 = vpop.f32.mrb[0].mxu0
  %3839 = vdwg.mxu0
  %v3904 = vunpack.c.l.b16 %v2601
  %v3905 = vunpack.c.l.b16 %v2602
  %v3906 = vunpack.c.l.b16 %v2603
  %v3907 = vunpack.c.l.b16 %v2604
  %v3908 = vunpack.c.l.b16 %v2605
  %v3909 = vunpack.c.l.b16 %v2606
  %v3910 = vunpack.c.l.b16 %v2607
  %v3911 = vunpack.c.l.b16 %v2608
  %v3912 = vunpack.c.l.b16 %v2609
  %v3913 = vunpack.c.l.b16 %v2610
  %v3914 = vunpack.c.l.b16 %v2611
  %v3915 = vunpack.c.l.b16 %v2612
  %v3916 = vunpack.c.l.b16 %v2613
  %v3917 = vunpack.c.l.b16 %v2614
  %v3918 = vunpack.c.l.b16 %v2615
  %v3919 = vunpack.c.l.b16 %v2616
  %v3920 = vunpack.c.l.b16 %v2617
  %v3921 = vunpack.c.l.b16 %v2618
  %v3922 = vunpack.c.l.b16 %v2619
  %v3923 = vunpack.c.l.b16 %v2620
  %v3924 = vunpack.c.l.b16 %v2621
  %v3925 = vunpack.c.l.b16 %v2622
  %v3926 = vunpack.c.l.b16 %v2623
  %v3927 = vunpack.c.l.b16 %v2624
  %v3928 = vunpack.c.l.b16 %v2625
  %v3929 = vunpack.c.l.b16 %v2626
  %v3930 = vunpack.c.l.b16 %v2627
  %v3931 = vunpack.c.l.b16 %v2628
  %v3932 = vunpack.c.l.b16 %v2629
  %v3933 = vunpack.c.l.b16 %v2630
  %v3934 = vunpack.c.l.b16 %v2631
  %v3935 = vunpack.c.l.b16 %v2632
  %v3936 = vunpack.c.l.b16 %v2633
  %v3937 = vunpack.c.l.b16 %v2634
  %v3938 = vunpack.c.l.b16 %v2635
  %v3939 = vunpack.c.l.b16 %v2636
  %v3940 = vunpack.c.l.b16 %v2637
  %v3941 = vunpack.c.l.b16 %v2638
  %v3942 = vunpack.c.l.b16 %v2639
  %v3943 = vunpack.c.l.b16 %v2640
  %v3944 = vunpack.c.l.b16 %v2641
  %v3945 = vunpack.c.l.b16 %v2642
  %v3946 = vunpack.c.l.b16 %v2643
  %v3947 = vunpack.c.l.b16 %v2644
  %v3948 = vunpack.c.l.b16 %v2645
  %v3949 = vunpack.c.l.b16 %v2646
  %v3950 = vunpack.c.l.b16 %v2647
  %v3951 = vunpack.c.l.b16 %v2648
  %v3952 = vunpack.c.l.b16 %v2649
  %v3953 = vunpack.c.l.b16 %v2650
  %v3954 = vunpack.c.l.b16 %v2651
  %v3955 = vunpack.c.l.b16 %v2652
  %v3956 = vunpack.c.l.b16 %v2653
  %v3957 = vunpack.c.l.b16 %v2654
  %v3958 = vunpack.c.l.b16 %v2655
  %v3959 = vunpack.c.l.b16 %v2656
  %v3960 = vunpack.c.l.b16 %v2657
  %v3961 = vunpack.c.l.b16 %v2658
  %v3962 = vunpack.c.l.b16 %v2659
  %v3963 = vunpack.c.l.b16 %v2660
  %v3964 = vunpack.c.l.b16 %v2661
  %v3965 = vunpack.c.l.b16 %v2662
  %v3966 = vunpack.c.l.b16 %v2663
  %v3967 = vunpack.c.l.b16 %v2664
  %v3968 = vpack.c.b16 %v3905, %v3904
  %v3969 = vpack.c.b16 %v3907, %v3906
  %v3970 = vpack.c.b16 %v3909, %v3908
  %v3971 = vpack.c.b16 %v3911, %v3910
  %v3972 = vpack.c.b16 %v3913, %v3912
  %v3973 = vpack.c.b16 %v3915, %v3914
  %v3974 = vpack.c.b16 %v3917, %v3916
  %v3975 = vpack.c.b16 %v3919, %v3918
  %v3976 = vpack.c.b16 %v3921, %v3920
  %v3977 = vpack.c.b16 %v3923, %v3922
  %v3978 = vpack.c.b16 %v3925, %v3924
  %v3979 = vpack.c.b16 %v3927, %v3926
  %v3980 = vpack.c.b16 %v3929, %v3928
  %v3981 = vpack.c.b16 %v3931, %v3930
  %v3982 = vpack.c.b16 %v3933, %v3932
  %v3983 = vpack.c.b16 %v3935, %v3934
  %v3984 = vpack.c.b16 %v3937, %v3936
  %v3985 = vpack.c.b16 %v3939, %v3938
  %v3986 = vpack.c.b16 %v3941, %v3940
  %v3987 = vpack.c.b16 %v3943, %v3942
  %v3988 = vpack.c.b16 %v3945, %v3944
  %v3989 = vpack.c.b16 %v3947, %v3946
  %v3990 = vpack.c.b16 %v3949, %v3948
  %v3991 = vpack.c.b16 %v3951, %v3950
  %v3992 = vpack.c.b16 %v3953, %v3952
  %v3993 = vpack.c.b16 %v3955, %v3954
  %v3994 = vpack.c.b16 %v3957, %v3956
  %v3995 = vpack.c.b16 %v3959, %v3958
  %v3996 = vpack.c.b16 %v3961, %v3960
  %v3997 = vpack.c.b16 %v3963, %v3962
  %v3998 = vpack.c.b16 %v3965, %v3964
  %v3999 = vpack.c.b16 %v3967, %v3966
  %4032 = vmatprep.subr.bf16.mxu0 0
  %4033 = vmatpush1.bf16.msra.mxu0 %v3968
  %4034 = vmatprep.subr.bf16.mxu0 0
  %4035 = vmatpush1.bf16.msra.mxu0 %v3969
  %4036 = vmatprep.subr.bf16.mxu0 0
  %4037 = vmatpush1.bf16.msra.mxu0 %v3970
  %4038 = vmatprep.subr.bf16.mxu0 0
  %4039 = vmatpush1.bf16.msra.mxu0 %v3971
  %4040 = vmatprep.subr.bf16.mxu0 0
  %4041 = vmatpush1.bf16.msra.mxu0 %v3972
  %4042 = vmatprep.subr.bf16.mxu0 0
  %4043 = vmatpush1.bf16.msra.mxu0 %v3973
  %4044 = vmatprep.subr.bf16.mxu0 0
  %4045 = vmatpush1.bf16.msra.mxu0 %v3974
  %4046 = vmatprep.subr.bf16.mxu0 0
  %4047 = vmatpush1.bf16.msra.mxu0 %v3975
  %4048 = vmatprep.subr.bf16.mxu0 0
  %4049 = vmatpush1.bf16.msra.mxu0 %v3976
  %4050 = vmatprep.subr.bf16.mxu0 0
  %4051 = vmatpush1.bf16.msra.mxu0 %v3977
  %4052 = vmatprep.subr.bf16.mxu0 0
  %4053 = vmatpush1.bf16.msra.mxu0 %v3978
  %4054 = vmatprep.subr.bf16.mxu0 0
  %4055 = vmatpush1.bf16.msra.mxu0 %v3979
  %4056 = vmatprep.subr.bf16.mxu0 0
  %4057 = vmatpush1.bf16.msra.mxu0 %v3980
  %4058 = vmatprep.subr.bf16.mxu0 0
  %4059 = vmatpush1.bf16.msra.mxu0 %v3981
  %4060 = vmatprep.subr.bf16.mxu0 0
  %4061 = vmatpush1.bf16.msra.mxu0 %v3982
  %4062 = vmatprep.subr.bf16.mxu0 0
  %4063 = vmatpush1.bf16.msra.mxu0 %v3983
  %4064 = vmatprep.mubr.bf16.mxu0 %v2478
  %4065 = vmatmul.mubr.bf16.gmra.mrb[0].mxu0 %v2477
  %v4066 = vpop.f32.mrb[0].mxu0
  %v4067 = vadd.f32 %v3566, %v4066
  %v4068 = vpop.f32.mrb[0].mxu0
  %v4069 = vpop.f32.mrb[0].mxu0
  %v4070 = vpop.f32.mrb[0].mxu0
  %4071 = vdwg.mxu0
  %4072 = vmatprep.subr.bf16.mxu0 0
  %4073 = vmatpush1.bf16.msra.mxu0 %v3984
  %4074 = vmatprep.subr.bf16.mxu0 0
  %4075 = vmatpush1.bf16.msra.mxu0 %v3985
  %4076 = vmatprep.subr.bf16.mxu0 0
  %4077 = vmatpush1.bf16.msra.mxu0 %v3986
  %4078 = vmatprep.subr.bf16.mxu0 0
  %4079 = vmatpush1.bf16.msra.mxu0 %v3987
  %4080 = vmatprep.subr.bf16.mxu0 0
  %4081 = vmatpush1.bf16.msra.mxu0 %v3988
  %4082 = vmatprep.subr.bf16.mxu0 0
  %4083 = vmatpush1.bf16.msra.mxu0 %v3989
  %4084 = vmatprep.subr.bf16.mxu0 0
  %4085 = vmatpush1.bf16.msra.mxu0 %v3990
  %4086 = vmatprep.subr.bf16.mxu0 0
  %4087 = vmatpush1.bf16.msra.mxu0 %v3991
  %4088 = vmatprep.subr.bf16.mxu0 0
  %4089 = vmatpush1.bf16.msra.mxu0 %v3992
  %4090 = vmatprep.subr.bf16.mxu0 0
  %4091 = vmatpush1.bf16.msra.mxu0 %v3993
  %4092 = vmatprep.subr.bf16.mxu0 0
  %4093 = vmatpush1.bf16.msra.mxu0 %v3994
  %4094 = vmatprep.subr.bf16.mxu0 0
  %4095 = vmatpush1.bf16.msra.mxu0 %v3995
  %4096 = vmatprep.subr.bf16.mxu0 0
  %4097 = vmatpush1.bf16.msra.mxu0 %v3996
  %4098 = vmatprep.subr.bf16.mxu0 0
  %4099 = vmatpush1.bf16.msra.mxu0 %v3997
  %4100 = vmatprep.subr.bf16.mxu0 0
  %4101 = vmatpush1.bf16.msra.mxu0 %v3998
  %4102 = vmatprep.subr.bf16.mxu0 0
  %4103 = vmatpush1.bf16.msra.mxu0 %v3999
  %4104 = vmatprep.mubr.bf16.mxu0 %v2480
  %4105 = vmatmul.mubr.bf16.gmra.mrb[0].mxu0 %v2479
  %v4106 = vpop.f32.mrb[0].mxu0
  %v4107 = vadd.f32 %v4067, %v4106
  %v4108 = vpop.f32.mrb[0].mxu0
  %v4109 = vpop.f32.mrb[0].mxu0
  %v4110 = vpop.f32.mrb[0].mxu0
  %4111 = vdwg.mxu0
  %v4176 = vunpack.c.l.b16 %v2665
  %v4177 = vunpack.c.l.b16 %v2666
  %v4178 = vunpack.c.l.b16 %v2667
  %v4179 = vunpack.c.l.b16 %v2668
  %v4180 = vunpack.c.l.b16 %v2669
  %v4181 = vunpack.c.l.b16 %v2670
  %v4182 = vunpack.c.l.b16 %v2671
  %v4183 = vunpack.c.l.b16 %v2672
  %v4184 = vunpack.c.l.b16 %v2673
  %v4185 = vunpack.c.l.b16 %v2674
  %v4186 = vunpack.c.l.b16 %v2675
  %v4187 = vunpack.c.l.b16 %v2676
  %v4188 = vunpack.c.l.b16 %v2677
  %v4189 = vunpack.c.l.b16 %v2678
  %v4190 = vunpack.c.l.b16 %v2679
  %v4191 = vunpack.c.l.b16 %v2680
  %v4192 = vunpack.c.l.b16 %v2681
  %v4193 = vunpack.c.l.b16 %v2682
  %v4194 = vunpack.c.l.b16 %v2683
  %v4195 = vunpack.c.l.b16 %v2684
  %v4196 = vunpack.c.l.b16 %v2685
  %v4197 = vunpack.c.l.b16 %v2686
  %v4198 = vunpack.c.l.b16 %v2687
  %v4199 = vunpack.c.l.b16 %v2688
  %v4200 = vunpack.c.l.b16 %v2689
  %v4201 = vunpack.c.l.b16 %v2690
  %v4202 = vunpack.c.l.b16 %v2691
  %v4203 = vunpack.c.l.b16 %v2692
  %v4204 = vunpack.c.l.b16 %v2693
  %v4205 = vunpack.c.l.b16 %v2694
  %v4206 = vunpack.c.l.b16 %v2695
  %v4207 = vunpack.c.l.b16 %v2696
  %v4208 = vunpack.c.l.b16 %v2697
  %v4209 = vunpack.c.l.b16 %v2698
  %v4210 = vunpack.c.l.b16 %v2699
  %v4211 = vunpack.c.l.b16 %v2700
  %v4212 = vunpack.c.l.b16 %v2701
  %v4213 = vunpack.c.l.b16 %v2702
  %v4214 = vunpack.c.l.b16 %v2703
  %v4215 = vunpack.c.l.b16 %v2704
  %v4216 = vunpack.c.l.b16 %v2705
  %v4217 = vunpack.c.l.b16 %v2706
  %v4218 = vunpack.c.l.b16 %v2707
  %v4219 = vunpack.c.l.b16 %v2708
  %v4220 = vunpack.c.l.b16 %v2709
  %v4221 = vunpack.c.l.b16 %v2710
  %v4222 = vunpack.c.l.b16 %v2711
  %v4223 = vunpack.c.l.b16 %v2712
  %v4224 = vunpack.c.l.b16 %v2713
  %v4225 = vunpack.c.l.b16 %v2714
  %v4226 = vunpack.c.l.b16 %v2715
  %v4227 = vunpack.c.l.b16 %v2716
  %v4228 = vunpack.c.l.b16 %v2717
  %v4229 = vunpack.c.l.b16 %v2718
  %v4230 = vunpack.c.l.b16 %v2719
  %v4231 = vunpack.c.l.b16 %v2720
  %v4232 = vunpack.c.l.b16 %v2721
  %v4233 = vunpack.c.l.b16 %v2722
  %v4234 = vunpack.c.l.b16 %v2723
  %v4235 = vunpack.c.l.b16 %v2724
  %v4236 = vunpack.c.l.b16 %v2725
  %v4237 = vunpack.c.l.b16 %v2726
  %v4238 = vunpack.c.l.b16 %v2727
  %v4239 = vunpack.c.l.b16 %v2728
  %v4240 = vpack.c.b16 %v4177, %v4176
  %v4241 = vpack.c.b16 %v4179, %v4178
  %v4242 = vpack.c.b16 %v4181, %v4180
  %v4243 = vpack.c.b16 %v4183, %v4182
  %v4244 = vpack.c.b16 %v4185, %v4184
  %v4245 = vpack.c.b16 %v4187, %v4186
  %v4246 = vpack.c.b16 %v4189, %v4188
  %v4247 = vpack.c.b16 %v4191, %v4190
  %v4248 = vpack.c.b16 %v4193, %v4192
  %v4249 = vpack.c.b16 %v4195, %v4194
  %v4250 = vpack.c.b16 %v4197, %v4196
  %v4251 = vpack.c.b16 %v4199, %v4198
  %v4252 = vpack.c.b16 %v4201, %v4200
  %v4253 = vpack.c.b16 %v4203, %v4202
  %v4254 = vpack.c.b16 %v4205, %v4204
  %v4255 = vpack.c.b16 %v4207, %v4206
  %v4256 = vpack.c.b16 %v4209, %v4208
  %v4257 = vpack.c.b16 %v4211, %v4210
  %v4258 = vpack.c.b16 %v4213, %v4212
  %v4259 = vpack.c.b16 %v4215, %v4214
  %v4260 = vpack.c.b16 %v4217, %v4216
  %v4261 = vpack.c.b16 %v4219, %v4218
  %v4262 = vpack.c.b16 %v4221, %v4220
  %v4263 = vpack.c.b16 %v4223, %v4222
  %v4264 = vpack.c.b16 %v4225, %v4224
  %v4265 = vpack.c.b16 %v4227, %v4226
  %v4266 = vpack.c.b16 %v4229, %v4228
  %v4267 = vpack.c.b16 %v4231, %v4230
  %v4268 = vpack.c.b16 %v4233, %v4232
  %v4269 = vpack.c.b16 %v4235, %v4234
  %v4270 = vpack.c.b16 %v4237, %v4236
  %v4271 = vpack.c.b16 %v4239, %v4238
  %4304 = vmatprep.subr.bf16.mxu0 0
  %4305 = vmatpush1.bf16.msra.mxu0 %v4240
  %4306 = vmatprep.subr.bf16.mxu0 0
  %4307 = vmatpush1.bf16.msra.mxu0 %v4241
  %4308 = vmatprep.subr.bf16.mxu0 0
  %4309 = vmatpush1.bf16.msra.mxu0 %v4242
  %4310 = vmatprep.subr.bf16.mxu0 0
  %4311 = vmatpush1.bf16.msra.mxu0 %v4243
  %4312 = vmatprep.subr.bf16.mxu0 0
  %4313 = vmatpush1.bf16.msra.mxu0 %v4244
  %4314 = vmatprep.subr.bf16.mxu0 0
  %4315 = vmatpush1.bf16.msra.mxu0 %v4245
  %4316 = vmatprep.subr.bf16.mxu0 0
  %4317 = vmatpush1.bf16.msra.mxu0 %v4246
  %4318 = vmatprep.subr.bf16.mxu0 0
  %4319 = vmatpush1.bf16.msra.mxu0 %v4247
  %4320 = vmatprep.subr.bf16.mxu0 0
  %4321 = vmatpush1.bf16.msra.mxu0 %v4248
  %4322 = vmatprep.subr.bf16.mxu0 0
  %4323 = vmatpush1.bf16.msra.mxu0 %v4249
  %4324 = vmatprep.subr.bf16.mxu0 0
  %4325 = vmatpush1.bf16.msra.mxu0 %v4250
  %4326 = vmatprep.subr.bf16.mxu0 0
  %4327 = vmatpush1.bf16.msra.mxu0 %v4251
  %4328 = vmatprep.subr.bf16.mxu0 0
  %4329 = vmatpush1.bf16.msra.mxu0 %v4252
  %4330 = vmatprep.subr.bf16.mxu0 0
  %4331 = vmatpush1.bf16.msra.mxu0 %v4253
  %4332 = vmatprep.subr.bf16.mxu0 0
  %4333 = vmatpush1.bf16.msra.mxu0 %v4254
  %4334 = vmatprep.subr.bf16.mxu0 0
  %4335 = vmatpush1.bf16.msra.mxu0 %v4255
  %4336 = vmatprep.mubr.bf16.mxu0 %v2482
  %4337 = vmatmul.mubr.bf16.gmra.mrb[0].mxu0 %v2481
  %v4338 = vpop.f32.mrb[0].mxu0
  %v4339 = vadd.f32 %v3566, %v4338
  %v4340 = vpop.f32.mrb[0].mxu0
  %v4341 = vpop.f32.mrb[0].mxu0
  %v4342 = vpop.f32.mrb[0].mxu0
  %4343 = vdwg.mxu0
  %4344 = vmatprep.subr.bf16.mxu0 0
  %4345 = vmatpush1.bf16.msra.mxu0 %v4256
  %4346 = vmatprep.subr.bf16.mxu0 0
  %4347 = vmatpush1.bf16.msra.mxu0 %v4257
  %4348 = vmatprep.subr.bf16.mxu0 0
  %4349 = vmatpush1.bf16.msra.mxu0 %v4258
  %4350 = vmatprep.subr.bf16.mxu0 0
  %4351 = vmatpush1.bf16.msra.mxu0 %v4259
  %4352 = vmatprep.subr.bf16.mxu0 0
  %4353 = vmatpush1.bf16.msra.mxu0 %v4260
  %4354 = vmatprep.subr.bf16.mxu0 0
  %4355 = vmatpush1.bf16.msra.mxu0 %v4261
  %4356 = vmatprep.subr.bf16.mxu0 0
  %4357 = vmatpush1.bf16.msra.mxu0 %v4262
  %4358 = vmatprep.subr.bf16.mxu0 0
  %4359 = vmatpush1.bf16.msra.mxu0 %v4263
  %4360 = vmatprep.subr.bf16.mxu0 0
  %4361 = vmatpush1.bf16.msra.mxu0 %v4264
  %4362 = vmatprep.subr.bf16.mxu0 0
  %4363 = vmatpush1.bf16.msra.mxu0 %v4265
  %4364 = vmatprep.subr.bf16.mxu0 0
  %4365 = vmatpush1.bf16.msra.mxu0 %v4266
  %4366 = vmatprep.subr.bf16.mxu0 0
  %4367 = vmatpush1.bf16.msra.mxu0 %v4267
  %4368 = vmatprep.subr.bf16.mxu0 0
  %4369 = vmatpush1.bf16.msra.mxu0 %v4268
  %4370 = vmatprep.subr.bf16.mxu0 0
  %4371 = vmatpush1.bf16.msra.mxu0 %v4269
  %4372 = vmatprep.subr.bf16.mxu0 0
  %4373 = vmatpush1.bf16.msra.mxu0 %v4270
  %4374 = vmatprep.subr.bf16.mxu0 0
  %4375 = vmatpush1.bf16.msra.mxu0 %v4271
  %4376 = vmatprep.mubr.bf16.mxu0 %v2484
  %4377 = vmatmul.mubr.bf16.gmra.mrb[0].mxu0 %v2483
  %v4378 = vpop.f32.mrb[0].mxu0
  %v4379 = vadd.f32 %v4339, %v4378
  %v4380 = vpop.f32.mrb[0].mxu0
  %v4381 = vpop.f32.mrb[0].mxu0
  %v4382 = vpop.f32.mrb[0].mxu0
  %4383 = vdwg.mxu0
  %v4448 = vunpack.c.l.b16 %v2729
  %v4449 = vunpack.c.l.b16 %v2730
  %v4450 = vunpack.c.l.b16 %v2731
  %v4451 = vunpack.c.l.b16 %v2732
  %v4452 = vunpack.c.l.b16 %v2733
  %v4453 = vunpack.c.l.b16 %v2734
  %v4454 = vunpack.c.l.b16 %v2735
  %v4455 = vunpack.c.l.b16 %v2736
  %v4456 = vunpack.c.l.b16 %v2737
  %v4457 = vunpack.c.l.b16 %v2738
  %v4458 = vunpack.c.l.b16 %v2739
  %v4459 = vunpack.c.l.b16 %v2740
  %v4460 = vunpack.c.l.b16 %v2741
  %v4461 = vunpack.c.l.b16 %v2742
  %v4462 = vunpack.c.l.b16 %v2743
  %v4463 = vunpack.c.l.b16 %v2744
  %v4464 = vunpack.c.l.b16 %v2745
  %v4465 = vunpack.c.l.b16 %v2746
  %v4466 = vunpack.c.l.b16 %v2747
  %v4467 = vunpack.c.l.b16 %v2748
  %v4468 = vunpack.c.l.b16 %v2749
  %v4469 = vunpack.c.l.b16 %v2750
  %v4470 = vunpack.c.l.b16 %v2751
  %v4471 = vunpack.c.l.b16 %v2752
  %v4472 = vunpack.c.l.b16 %v2753
  %v4473 = vunpack.c.l.b16 %v2754
  %v4474 = vunpack.c.l.b16 %v2755
  %v4475 = vunpack.c.l.b16 %v2756
  %v4476 = vunpack.c.l.b16 %v2757
  %v4477 = vunpack.c.l.b16 %v2758
  %v4478 = vunpack.c.l.b16 %v2759
  %v4479 = vunpack.c.l.b16 %v2760
  %v4480 = vunpack.c.l.b16 %v2761
  %v4481 = vunpack.c.l.b16 %v2762
  %v4482 = vunpack.c.l.b16 %v2763
  %v4483 = vunpack.c.l.b16 %v2764
  %v4484 = vunpack.c.l.b16 %v2765
  %v4485 = vunpack.c.l.b16 %v2766
  %v4486 = vunpack.c.l.b16 %v2767
  %v4487 = vunpack.c.l.b16 %v2768
  %v4488 = vunpack.c.l.b16 %v2769
  %v4489 = vunpack.c.l.b16 %v2770
  %v4490 = vunpack.c.l.b16 %v2771
  %v4491 = vunpack.c.l.b16 %v2772
  %v4492 = vunpack.c.l.b16 %v2773
  %v4493 = vunpack.c.l.b16 %v2774
  %v4494 = vunpack.c.l.b16 %v2775
  %v4495 = vunpack.c.l.b16 %v2776
  %v4496 = vunpack.c.l.b16 %v2777
  %v4497 = vunpack.c.l.b16 %v2778
  %v4498 = vunpack.c.l.b16 %v2779
  %v4499 = vunpack.c.l.b16 %v2780
  %v4500 = vunpack.c.l.b16 %v2781
  %v4501 = vunpack.c.l.b16 %v2782
  %v4502 = vunpack.c.l.b16 %v2783
  %v4503 = vunpack.c.l.b16 %v2784
  %v4504 = vunpack.c.l.b16 %v2785
  %v4505 = vunpack.c.l.b16 %v2786
  %v4506 = vunpack.c.l.b16 %v2787
  %v4507 = vunpack.c.l.b16 %v2788
  %v4508 = vunpack.c.l.b16 %v2789
  %v4509 = vunpack.c.l.b16 %v2790
  %v4510 = vunpack.c.l.b16 %v2791
  %v4511 = vunpack.c.l.b16 %v2792
  %v4512 = vpack.c.b16 %v4449, %v4448
  %v4513 = vpack.c.b16 %v4451, %v4450
  %v4514 = vpack.c.b16 %v4453, %v4452
  %v4515 = vpack.c.b16 %v4455, %v4454
  %v4516 = vpack.c.b16 %v4457, %v4456
  %v4517 = vpack.c.b16 %v4459, %v4458
  %v4518 = vpack.c.b16 %v4461, %v4460
  %v4519 = vpack.c.b16 %v4463, %v4462
  %v4520 = vpack.c.b16 %v4465, %v4464
  %v4521 = vpack.c.b16 %v4467, %v4466
  %v4522 = vpack.c.b16 %v4469, %v4468
  %v4523 = vpack.c.b16 %v4471, %v4470
  %v4524 = vpack.c.b16 %v4473, %v4472
  %v4525 = vpack.c.b16 %v4475, %v4474
  %v4526 = vpack.c.b16 %v4477, %v4476
  %v4527 = vpack.c.b16 %v4479, %v4478
  %v4528 = vpack.c.b16 %v4481, %v4480
  %v4529 = vpack.c.b16 %v4483, %v4482
  %v4530 = vpack.c.b16 %v4485, %v4484
  %v4531 = vpack.c.b16 %v4487, %v4486
  %v4532 = vpack.c.b16 %v4489, %v4488
  %v4533 = vpack.c.b16 %v4491, %v4490
  %v4534 = vpack.c.b16 %v4493, %v4492
  %v4535 = vpack.c.b16 %v4495, %v4494
  %v4536 = vpack.c.b16 %v4497, %v4496
  %v4537 = vpack.c.b16 %v4499, %v4498
  %v4538 = vpack.c.b16 %v4501, %v4500
  %v4539 = vpack.c.b16 %v4503, %v4502
  %v4540 = vpack.c.b16 %v4505, %v4504
  %v4541 = vpack.c.b16 %v4507, %v4506
  %v4542 = vpack.c.b16 %v4509, %v4508
  %v4543 = vpack.c.b16 %v4511, %v4510
  %4576 = vmatprep.subr.bf16.mxu0 0
  %4577 = vmatpush1.bf16.msra.mxu0 %v4512
  %4578 = vmatprep.subr.bf16.mxu0 0
  %4579 = vmatpush1.bf16.msra.mxu0 %v4513
  %4580 = vmatprep.subr.bf16.mxu0 0
  %4581 = vmatpush1.bf16.msra.mxu0 %v4514
  %4582 = vmatprep.subr.bf16.mxu0 0
  %4583 = vmatpush1.bf16.msra.mxu0 %v4515
  %4584 = vmatprep.subr.bf16.mxu0 0
  %4585 = vmatpush1.bf16.msra.mxu0 %v4516
  %4586 = vmatprep.subr.bf16.mxu0 0
  %4587 = vmatpush1.bf16.msra.mxu0 %v4517
  %4588 = vmatprep.subr.bf16.mxu0 0
  %4589 = vmatpush1.bf16.msra.mxu0 %v4518
  %4590 = vmatprep.subr.bf16.mxu0 0
  %4591 = vmatpush1.bf16.msra.mxu0 %v4519
  %4592 = vmatprep.subr.bf16.mxu0 0
  %4593 = vmatpush1.bf16.msra.mxu0 %v4520
  %4594 = vmatprep.subr.bf16.mxu0 0
  %4595 = vmatpush1.bf16.msra.mxu0 %v4521
  %4596 = vmatprep.subr.bf16.mxu0 0
  %4597 = vmatpush1.bf16.msra.mxu0 %v4522
  %4598 = vmatprep.subr.bf16.mxu0 0
  %4599 = vmatpush1.bf16.msra.mxu0 %v4523
  %4600 = vmatprep.subr.bf16.mxu0 0
  %4601 = vmatpush1.bf16.msra.mxu0 %v4524
  %4602 = vmatprep.subr.bf16.mxu0 0
  %4603 = vmatpush1.bf16.msra.mxu0 %v4525
  %4604 = vmatprep.subr.bf16.mxu0 0
  %4605 = vmatpush1.bf16.msra.mxu0 %v4526
  %4606 = vmatprep.subr.bf16.mxu0 0
  %4607 = vmatpush1.bf16.msra.mxu0 %v4527
  %4608 = vmatprep.mubr.bf16.mxu0 %v2486
  %4609 = vmatmul.mubr.bf16.gmra.mrb[0].mxu0 %v2485
  %v4610 = vpop.f32.mrb[0].mxu0
  %v4611 = vadd.f32 %v3566, %v4610
  %v4612 = vpop.f32.mrb[0].mxu0
  %v4613 = vpop.f32.mrb[0].mxu0
  %v4614 = vpop.f32.mrb[0].mxu0
  %4615 = vdwg.mxu0
  %4616 = vmatprep.subr.bf16.mxu0 0
  %4617 = vmatpush1.bf16.msra.mxu0 %v4528
  %4618 = vmatprep.subr.bf16.mxu0 0
  %4619 = vmatpush1.bf16.msra.mxu0 %v4529
  %4620 = vmatprep.subr.bf16.mxu0 0
  %4621 = vmatpush1.bf16.msra.mxu0 %v4530
  %4622 = vmatprep.subr.bf16.mxu0 0
  %4623 = vmatpush1.bf16.msra.mxu0 %v4531
  %4624 = vmatprep.subr.bf16.mxu0 0
  %4625 = vmatpush1.bf16.msra.mxu0 %v4532
  %4626 = vmatprep.subr.bf16.mxu0 0
  %4627 = vmatpush1.bf16.msra.mxu0 %v4533
  %4628 = vmatprep.subr.bf16.mxu0 0
  %4629 = vmatpush1.bf16.msra.mxu0 %v4534
  %4630 = vmatprep.subr.bf16.mxu0 0
  %4631 = vmatpush1.bf16.msra.mxu0 %v4535
  %4632 = vmatprep.subr.bf16.mxu0 0
  %4633 = vmatpush1.bf16.msra.mxu0 %v4536
  %4634 = vmatprep.subr.bf16.mxu0 0
  %4635 = vmatpush1.bf16.msra.mxu0 %v4537
  %4636 = vmatprep.subr.bf16.mxu0 0
  %4637 = vmatpush1.bf16.msra.mxu0 %v4538
  %4638 = vmatprep.subr.bf16.mxu0 0
  %4639 = vmatpush1.bf16.msra.mxu0 %v4539
  %4640 = vmatprep.subr.bf16.mxu0 0
  %4641 = vmatpush1.bf16.msra.mxu0 %v4540
  %4642 = vmatprep.subr.bf16.mxu0 0
  %4643 = vmatpush1.bf16.msra.mxu0 %v4541
  %4644 = vmatprep.subr.bf16.mxu0 0
  %4645 = vmatpush1.bf16.msra.mxu0 %v4542
  %4646 = vmatprep.subr.bf16.mxu0 0
  %4647 = vmatpush1.bf16.msra.mxu0 %v4543
  %4648 = vmatprep.mubr.bf16.mxu0 %v2488
  %4649 = vmatmul.mubr.bf16.gmra.mrb[0].mxu0 %v2487
  %v4650 = vpop.f32.mrb[0].mxu0
  %v4651 = vadd.f32 %v4611, %v4650
  %v4652 = vpop.f32.mrb[0].mxu0
  %v4653 = vpop.f32.mrb[0].mxu0
  %v4654 = vpop.f32.mrb[0].mxu0
  %4655 = vdwg.mxu0
  %v4720 = vunpack.c.l.b16 %v2793
  %v4721 = vunpack.c.l.b16 %v2794
  %v4722 = vunpack.c.l.b16 %v2795
  %v4723 = vunpack.c.l.b16 %v2796
  %v4724 = vunpack.c.l.b16 %v2797
  %v4725 = vunpack.c.l.b16 %v2798
  %v4726 = vunpack.c.l.b16 %v2799
  %v4727 = vunpack.c.l.b16 %v2800
  %v4728 = vunpack.c.l.b16 %v2801
  %v4729 = vunpack.c.l.b16 %v2802
  %v4730 = vunpack.c.l.b16 %v2803
  %v4731 = vunpack.c.l.b16 %v2804
  %v4732 = vunpack.c.l.b16 %v2805
  %v4733 = vunpack.c.l.b16 %v2806
  %v4734 = vunpack.c.l.b16 %v2807
  %v4735 = vunpack.c.l.b16 %v2808
  %v4736 = vunpack.c.l.b16 %v2809
  %v4737 = vunpack.c.l.b16 %v2810
  %v4738 = vunpack.c.l.b16 %v2811
  %v4739 = vunpack.c.l.b16 %v2812
  %v4740 = vunpack.c.l.b16 %v2813
  %v4741 = vunpack.c.l.b16 %v2814
  %v4742 = vunpack.c.l.b16 %v2815
  %v4743 = vunpack.c.l.b16 %v2816
  %v4744 = vunpack.c.l.b16 %v2817
  %v4745 = vunpack.c.l.b16 %v2818
  %v4746 = vunpack.c.l.b16 %v2819
  %v4747 = vunpack.c.l.b16 %v2820
  %v4748 = vunpack.c.l.b16 %v2821
  %v4749 = vunpack.c.l.b16 %v2822
  %v4750 = vunpack.c.l.b16 %v2823
  %v4751 = vunpack.c.l.b16 %v2824
  %v4752 = vunpack.c.l.b16 %v2825
  %v4753 = vunpack.c.l.b16 %v2826
  %v4754 = vunpack.c.l.b16 %v2827
  %v4755 = vunpack.c.l.b16 %v2828
  %v4756 = vunpack.c.l.b16 %v2829
  %v4757 = vunpack.c.l.b16 %v2830
  %v4758 = vunpack.c.l.b16 %v2831
  %v4759 = vunpack.c.l.b16 %v2832
  %v4760 = vunpack.c.l.b16 %v2833
  %v4761 = vunpack.c.l.b16 %v2834
  %v4762 = vunpack.c.l.b16 %v2835
  %v4763 = vunpack.c.l.b16 %v2836
  %v4764 = vunpack.c.l.b16 %v2837
  %v4765 = vunpack.c.l.b16 %v2838
  %v4766 = vunpack.c.l.b16 %v2839
  %v4767 = vunpack.c.l.b16 %v2840
  %v4768 = vunpack.c.l.b16 %v2841
  %v4769 = vunpack.c.l.b16 %v2842
  %v4770 = vunpack.c.l.b16 %v2843
  %v4771 = vunpack.c.l.b16 %v2844
  %v4772 = vunpack.c.l.b16 %v2845
  %v4773 = vunpack.c.l.b16 %v2846
  %v4774 = vunpack.c.l.b16 %v2847
  %v4775 = vunpack.c.l.b16 %v2848
  %v4776 = vunpack.c.l.b16 %v2849
  %v4777 = vunpack.c.l.b16 %v2850
  %v4778 = vunpack.c.l.b16 %v2851
  %v4779 = vunpack.c.l.b16 %v2852
  %v4780 = vunpack.c.l.b16 %v2853
  %v4781 = vunpack.c.l.b16 %v2854
  %v4782 = vunpack.c.l.b16 %v2855
  %v4783 = vunpack.c.l.b16 %v2856
  %v4784 = vpack.c.b16 %v4721, %v4720
  %v4785 = vpack.c.b16 %v4723, %v4722
  %v4786 = vpack.c.b16 %v4725, %v4724
  %v4787 = vpack.c.b16 %v4727, %v4726
  %v4788 = vpack.c.b16 %v4729, %v4728
  %v4789 = vpack.c.b16 %v4731, %v4730
  %v4790 = vpack.c.b16 %v4733, %v4732
  %v4791 = vpack.c.b16 %v4735, %v4734
  %v4792 = vpack.c.b16 %v4737, %v4736
  %v4793 = vpack.c.b16 %v4739, %v4738
  %v4794 = vpack.c.b16 %v4741, %v4740
  %v4795 = vpack.c.b16 %v4743, %v4742
  %v4796 = vpack.c.b16 %v4745, %v4744
  %v4797 = vpack.c.b16 %v4747, %v4746
  %v4798 = vpack.c.b16 %v4749, %v4748
  %v4799 = vpack.c.b16 %v4751, %v4750
  %v4800 = vpack.c.b16 %v4753, %v4752
  %v4801 = vpack.c.b16 %v4755, %v4754
  %v4802 = vpack.c.b16 %v4757, %v4756
  %v4803 = vpack.c.b16 %v4759, %v4758
  %v4804 = vpack.c.b16 %v4761, %v4760
  %v4805 = vpack.c.b16 %v4763, %v4762
  %v4806 = vpack.c.b16 %v4765, %v4764
  %v4807 = vpack.c.b16 %v4767, %v4766
  %v4808 = vpack.c.b16 %v4769, %v4768
  %v4809 = vpack.c.b16 %v4771, %v4770
  %v4810 = vpack.c.b16 %v4773, %v4772
  %v4811 = vpack.c.b16 %v4775, %v4774
  %v4812 = vpack.c.b16 %v4777, %v4776
  %v4813 = vpack.c.b16 %v4779, %v4778
  %v4814 = vpack.c.b16 %v4781, %v4780
  %v4815 = vpack.c.b16 %v4783, %v4782
  %4848 = vmatprep.subr.bf16.mxu0 0
  %4849 = vmatpush1.bf16.msra.mxu0 %v4784
  %4850 = vmatprep.subr.bf16.mxu0 0
  %4851 = vmatpush1.bf16.msra.mxu0 %v4785
  %4852 = vmatprep.subr.bf16.mxu0 0
  %4853 = vmatpush1.bf16.msra.mxu0 %v4786
  %4854 = vmatprep.subr.bf16.mxu0 0
  %4855 = vmatpush1.bf16.msra.mxu0 %v4787
  %4856 = vmatprep.subr.bf16.mxu0 0
  %4857 = vmatpush1.bf16.msra.mxu0 %v4788
  %4858 = vmatprep.subr.bf16.mxu0 0
  %4859 = vmatpush1.bf16.msra.mxu0 %v4789
  %4860 = vmatprep.subr.bf16.mxu0 0
  %4861 = vmatpush1.bf16.msra.mxu0 %v4790
  %4862 = vmatprep.subr.bf16.mxu0 0
  %4863 = vmatpush1.bf16.msra.mxu0 %v4791
  %4864 = vmatprep.subr.bf16.mxu0 0
  %4865 = vmatpush1.bf16.msra.mxu0 %v4792
  %4866 = vmatprep.subr.bf16.mxu0 0
  %4867 = vmatpush1.bf16.msra.mxu0 %v4793
  %4868 = vmatprep.subr.bf16.mxu0 0
  %4869 = vmatpush1.bf16.msra.mxu0 %v4794
  %4870 = vmatprep.subr.bf16.mxu0 0
  %4871 = vmatpush1.bf16.msra.mxu0 %v4795
  %4872 = vmatprep.subr.bf16.mxu0 0
  %4873 = vmatpush1.bf16.msra.mxu0 %v4796
  %4874 = vmatprep.subr.bf16.mxu0 0
  %4875 = vmatpush1.bf16.msra.mxu0 %v4797
  %4876 = vmatprep.subr.bf16.mxu0 0
  %4877 = vmatpush1.bf16.msra.mxu0 %v4798
  %4878 = vmatprep.subr.bf16.mxu0 0
  %4879 = vmatpush1.bf16.msra.mxu0 %v4799
  %4880 = vmatprep.mubr.bf16.mxu0 %v2490
  %4881 = vmatmul.mubr.bf16.gmra.mrb[0].mxu0 %v2489
  %v4882 = vpop.f32.mrb[0].mxu0
  %v4883 = vadd.f32 %v3566, %v4882
  %v4884 = vpop.f32.mrb[0].mxu0
  %v4885 = vpop.f32.mrb[0].mxu0
  %v4886 = vpop.f32.mrb[0].mxu0
  %4887 = vdwg.mxu0
  %4888 = vmatprep.subr.bf16.mxu0 0
  %4889 = vmatpush1.bf16.msra.mxu0 %v4800
  %4890 = vmatprep.subr.bf16.mxu0 0
  %4891 = vmatpush1.bf16.msra.mxu0 %v4801
  %4892 = vmatprep.subr.bf16.mxu0 0
  %4893 = vmatpush1.bf16.msra.mxu0 %v4802
  %4894 = vmatprep.subr.bf16.mxu0 0
  %4895 = vmatpush1.bf16.msra.mxu0 %v4803
  %4896 = vmatprep.subr.bf16.mxu0 0
  %4897 = vmatpush1.bf16.msra.mxu0 %v4804
  %4898 = vmatprep.subr.bf16.mxu0 0
  %4899 = vmatpush1.bf16.msra.mxu0 %v4805
  %4900 = vmatprep.subr.bf16.mxu0 0
  %4901 = vmatpush1.bf16.msra.mxu0 %v4806
  %4902 = vmatprep.subr.bf16.mxu0 0
  %4903 = vmatpush1.bf16.msra.mxu0 %v4807
  %4904 = vmatprep.subr.bf16.mxu0 0
  %4905 = vmatpush1.bf16.msra.mxu0 %v4808
  %4906 = vmatprep.subr.bf16.mxu0 0
  %4907 = vmatpush1.bf16.msra.mxu0 %v4809
  %4908 = vmatprep.subr.bf16.mxu0 0
  %4909 = vmatpush1.bf16.msra.mxu0 %v4810
  %4910 = vmatprep.subr.bf16.mxu0 0
  %4911 = vmatpush1.bf16.msra.mxu0 %v4811
  %4912 = vmatprep.subr.bf16.mxu0 0
  %4913 = vmatpush1.bf16.msra.mxu0 %v4812
  %4914 = vmatprep.subr.bf16.mxu0 0
  %4915 = vmatpush1.bf16.msra.mxu0 %v4813
  %4916 = vmatprep.subr.bf16.mxu0 0
  %4917 = vmatpush1.bf16.msra.mxu0 %v4814
  %4918 = vmatprep.subr.bf16.mxu0 0
  %4919 = vmatpush1.bf16.msra.mxu0 %v4815
  %4920 = vmatprep.mubr.bf16.mxu0 %v2492
  %4921 = vmatmul.mubr.bf16.gmra.mrb[0].mxu0 %v2491
  %v4922 = vpop.f32.mrb[0].mxu0
  %v4923 = vadd.f32 %v4883, %v4922
  %v4924 = vpop.f32.mrb[0].mxu0
  %v4925 = vpop.f32.mrb[0].mxu0
  %v4926 = vpop.f32.mrb[0].mxu0
  %4927 = vdwg.mxu0
  %v4992 = vunpack.c.l.b16 %v2857
  %v4993 = vunpack.c.l.b16 %v2858
  %v4994 = vunpack.c.l.b16 %v2859
  %v4995 = vunpack.c.l.b16 %v2860
  %v4996 = vunpack.c.l.b16 %v2861
  %v4997 = vunpack.c.l.b16 %v2862
  %v4998 = vunpack.c.l.b16 %v2863
  %v4999 = vunpack.c.l.b16 %v2864
  %v5000 = vunpack.c.l.b16 %v2865
  %v5001 = vunpack.c.l.b16 %v2866
  %v5002 = vunpack.c.l.b16 %v2867
  %v5003 = vunpack.c.l.b16 %v2868
  %v5004 = vunpack.c.l.b16 %v2869
  %v5005 = vunpack.c.l.b16 %v2870
  %v5006 = vunpack.c.l.b16 %v2871
  %v5007 = vunpack.c.l.b16 %v2872
  %v5008 = vunpack.c.l.b16 %v2873
  %v5009 = vunpack.c.l.b16 %v2874
  %v5010 = vunpack.c.l.b16 %v2875
  %v5011 = vunpack.c.l.b16 %v2876
  %v5012 = vunpack.c.l.b16 %v2877
  %v5013 = vunpack.c.l.b16 %v2878
  %v5014 = vunpack.c.l.b16 %v2879
  %v5015 = vunpack.c.l.b16 %v2880
  %v5016 = vunpack.c.l.b16 %v2881
  %v5017 = vunpack.c.l.b16 %v2882
  %v5018 = vunpack.c.l.b16 %v2883
  %v5019 = vunpack.c.l.b16 %v2884
  %v5020 = vunpack.c.l.b16 %v2885
  %v5021 = vunpack.c.l.b16 %v2886
  %v5022 = vunpack.c.l.b16 %v2887
  %v5023 = vunpack.c.l.b16 %v2888
  %v5024 = vunpack.c.l.b16 %v2889
  %v5025 = vunpack.c.l.b16 %v2890
  %v5026 = vunpack.c.l.b16 %v2891
  %v5027 = vunpack.c.l.b16 %v2892
  %v5028 = vunpack.c.l.b16 %v2893
  %v5029 = vunpack.c.l.b16 %v2894
  %v5030 = vunpack.c.l.b16 %v2895
  %v5031 = vunpack.c.l.b16 %v2896
  %v5032 = vunpack.c.l.b16 %v2897
  %v5033 = vunpack.c.l.b16 %v2898
  %v5034 = vunpack.c.l.b16 %v2899
  %v5035 = vunpack.c.l.b16 %v2900
  %v5036 = vunpack.c.l.b16 %v2901
  %v5037 = vunpack.c.l.b16 %v2902
  %v5038 = vunpack.c.l.b16 %v2903
  %v5039 = vunpack.c.l.b16 %v2904
  %v5040 = vunpack.c.l.b16 %v2905
  %v5041 = vunpack.c.l.b16 %v2906
  %v5042 = vunpack.c.l.b16 %v2907
  %v5043 = vunpack.c.l.b16 %v2908
  %v5044 = vunpack.c.l.b16 %v2909
  %v5045 = vunpack.c.l.b16 %v2910
  %v5046 = vunpack.c.l.b16 %v2911
  %v5047 = vunpack.c.l.b16 %v2912
  %v5048 = vunpack.c.l.b16 %v2913
  %v5049 = vunpack.c.l.b16 %v2914
  %v5050 = vunpack.c.l.b16 %v2915
  %v5051 = vunpack.c.l.b16 %v2916
  %v5052 = vunpack.c.l.b16 %v2917
  %v5053 = vunpack.c.l.b16 %v2918
  %v5054 = vunpack.c.l.b16 %v2919
  %v5055 = vunpack.c.l.b16 %v2920
  %v5056 = vpack.c.b16 %v4993, %v4992
  %v5057 = vpack.c.b16 %v4995, %v4994
  %v5058 = vpack.c.b16 %v4997, %v4996
  %v5059 = vpack.c.b16 %v4999, %v4998
  %v5060 = vpack.c.b16 %v5001, %v5000
  %v5061 = vpack.c.b16 %v5003, %v5002
  %v5062 = vpack.c.b16 %v5005, %v5004
  %v5063 = vpack.c.b16 %v5007, %v5006
  %v5064 = vpack.c.b16 %v5009, %v5008
  %v5065 = vpack.c.b16 %v5011, %v5010
  %v5066 = vpack.c.b16 %v5013, %v5012
  %v5067 = vpack.c.b16 %v5015, %v5014
  %v5068 = vpack.c.b16 %v5017, %v5016
  %v5069 = vpack.c.b16 %v5019, %v5018
  %v5070 = vpack.c.b16 %v5021, %v5020
  %v5071 = vpack.c.b16 %v5023, %v5022
  %v5072 = vpack.c.b16 %v5025, %v5024
  %v5073 = vpack.c.b16 %v5027, %v5026
  %v5074 = vpack.c.b16 %v5029, %v5028
  %v5075 = vpack.c.b16 %v5031, %v5030
  %v5076 = vpack.c.b16 %v5033, %v5032
  %v5077 = vpack.c.b16 %v5035, %v5034
  %v5078 = vpack.c.b16 %v5037, %v5036
  %v5079 = vpack.c.b16 %v5039, %v5038
  %v5080 = vpack.c.b16 %v5041, %v5040
  %v5081 = vpack.c.b16 %v5043, %v5042
  %v5082 = vpack.c.b16 %v5045, %v5044
  %v5083 = vpack.c.b16 %v5047, %v5046
  %v5084 = vpack.c.b16 %v5049, %v5048
  %v5085 = vpack.c.b16 %v5051, %v5050
  %v5086 = vpack.c.b16 %v5053, %v5052
  %v5087 = vpack.c.b16 %v5055, %v5054
  %5120 = vmatprep.subr.bf16.mxu0 0
  %5121 = vmatpush1.bf16.msra.mxu0 %v5056
  %5122 = vmatprep.subr.bf16.mxu0 0
  %5123 = vmatpush1.bf16.msra.mxu0 %v5057
  %5124 = vmatprep.subr.bf16.mxu0 0
  %5125 = vmatpush1.bf16.msra.mxu0 %v5058
  %5126 = vmatprep.subr.bf16.mxu0 0
  %5127 = vmatpush1.bf16.msra.mxu0 %v5059
  %5128 = vmatprep.subr.bf16.mxu0 0
  %5129 = vmatpush1.bf16.msra.mxu0 %v5060
  %5130 = vmatprep.subr.bf16.mxu0 0
  %5131 = vmatpush1.bf16.msra.mxu0 %v5061
  %5132 = vmatprep.subr.bf16.mxu0 0
  %5133 = vmatpush1.bf16.msra.mxu0 %v5062
  %5134 = vmatprep.subr.bf16.mxu0 0
  %5135 = vmatpush1.bf16.msra.mxu0 %v5063
  %5136 = vmatprep.subr.bf16.mxu0 0
  %5137 = vmatpush1.bf16.msra.mxu0 %v5064
  %5138 = vmatprep.subr.bf16.mxu0 0
  %5139 = vmatpush1.bf16.msra.mxu0 %v5065
  %5140 = vmatprep.subr.bf16.mxu0 0
  %5141 = vmatpush1.bf16.msra.mxu0 %v5066
  %5142 = vmatprep.subr.bf16.mxu0 0
  %5143 = vmatpush1.bf16.msra.mxu0 %v5067
  %5144 = vmatprep.subr.bf16.mxu0 0
  %5145 = vmatpush1.bf16.msra.mxu0 %v5068
  %5146 = vmatprep.subr.bf16.mxu0 0
  %5147 = vmatpush1.bf16.msra.mxu0 %v5069
  %5148 = vmatprep.subr.bf16.mxu0 0
  %5149 = vmatpush1.bf16.msra.mxu0 %v5070
  %5150 = vmatprep.subr.bf16.mxu0 0
  %5151 = vmatpush1.bf16.msra.mxu0 %v5071
  %5152 = vmatprep.mubr.bf16.mxu0 %v2494
  %5153 = vmatmul.mubr.bf16.gmra.mrb[0].mxu0 %v2493
  %v5154 = vpop.f32.mrb[0].mxu0
  %v5155 = vadd.f32 %v3566, %v5154
  %v5156 = vpop.f32.mrb[0].mxu0
  %v5157 = vpop.f32.mrb[0].mxu0
  %v5158 = vpop.f32.mrb[0].mxu0
  %5159 = vdwg.mxu0
  %5160 = vmatprep.subr.bf16.mxu0 0
  %5161 = vmatpush1.bf16.msra.mxu0 %v5072
  %5162 = vmatprep.subr.bf16.mxu0 0
  %5163 = vmatpush1.bf16.msra.mxu0 %v5073
  %5164 = vmatprep.subr.bf16.mxu0 0
  %5165 = vmatpush1.bf16.msra.mxu0 %v5074
  %5166 = vmatprep.subr.bf16.mxu0 0
  %5167 = vmatpush1.bf16.msra.mxu0 %v5075
  %5168 = vmatprep.subr.bf16.mxu0 0
  %5169 = vmatpush1.bf16.msra.mxu0 %v5076
  %5170 = vmatprep.subr.bf16.mxu0 0
  %5171 = vmatpush1.bf16.msra.mxu0 %v5077
  %5172 = vmatprep.subr.bf16.mxu0 0
  %5173 = vmatpush1.bf16.msra.mxu0 %v5078
  %5174 = vmatprep.subr.bf16.mxu0 0
  %5175 = vmatpush1.bf16.msra.mxu0 %v5079
  %5176 = vmatprep.subr.bf16.mxu0 0
  %5177 = vmatpush1.bf16.msra.mxu0 %v5080
  %5178 = vmatprep.subr.bf16.mxu0 0
  %5179 = vmatpush1.bf16.msra.mxu0 %v5081
  %5180 = vmatprep.subr.bf16.mxu0 0
  %5181 = vmatpush1.bf16.msra.mxu0 %v5082
  %5182 = vmatprep.subr.bf16.mxu0 0
  %5183 = vmatpush1.bf16.msra.mxu0 %v5083
  %5184 = vmatprep.subr.bf16.mxu0 0
  %5185 = vmatpush1.bf16.msra.mxu0 %v5084
  %5186 = vmatprep.subr.bf16.mxu0 0
  %5187 = vmatpush1.bf16.msra.mxu0 %v5085
  %5188 = vmatprep.subr.bf16.mxu0 0
  %5189 = vmatpush1.bf16.msra.mxu0 %v5086
  %5190 = vmatprep.subr.bf16.mxu0 0
  %5191 = vmatpush1.bf16.msra.mxu0 %v5087
  %5192 = vmatprep.mubr.bf16.mxu0 %v2496
  %5193 = vmatmul.mubr.bf16.gmra.mrb[0].mxu0 %v2495
  %v5194 = vpop.f32.mrb[0].mxu0
  %v5195 = vadd.f32 %v5155, %v5194
  %v5196 = vpop.f32.mrb[0].mxu0
  %v5197 = vpop.f32.mrb[0].mxu0
  %v5198 = vpop.f32.mrb[0].mxu0
  %5199 = vdwg.mxu0
  %v5264 = vunpack.c.l.b16 %v2921
  %v5265 = vunpack.c.l.b16 %v2922
  %v5266 = vunpack.c.l.b16 %v2923
  %v5267 = vunpack.c.l.b16 %v2924
  %v5268 = vunpack.c.l.b16 %v2925
  %v5269 = vunpack.c.l.b16 %v2926
  %v5270 = vunpack.c.l.b16 %v2927
  %v5271 = vunpack.c.l.b16 %v2928
  %v5272 = vunpack.c.l.b16 %v2929
  %v5273 = vunpack.c.l.b16 %v2930
  %v5274 = vunpack.c.l.b16 %v2931
  %v5275 = vunpack.c.l.b16 %v2932
  %v5276 = vunpack.c.l.b16 %v2933
  %v5277 = vunpack.c.l.b16 %v2934
  %v5278 = vunpack.c.l.b16 %v2935
  %v5279 = vunpack.c.l.b16 %v2936
  %v5280 = vunpack.c.l.b16 %v2937
  %v5281 = vunpack.c.l.b16 %v2938
  %v5282 = vunpack.c.l.b16 %v2939
  %v5283 = vunpack.c.l.b16 %v2940
  %v5284 = vunpack.c.l.b16 %v2941
  %v5285 = vunpack.c.l.b16 %v2942
  %v5286 = vunpack.c.l.b16 %v2943
  %v5287 = vunpack.c.l.b16 %v2944
  %v5288 = vunpack.c.l.b16 %v2945
  %v5289 = vunpack.c.l.b16 %v2946
  %v5290 = vunpack.c.l.b16 %v2947
  %v5291 = vunpack.c.l.b16 %v2948
  %v5292 = vunpack.c.l.b16 %v2949
  %v5293 = vunpack.c.l.b16 %v2950
  %v5294 = vunpack.c.l.b16 %v2951
  %v5295 = vunpack.c.l.b16 %v2952
  %v5296 = vunpack.c.l.b16 %v2953
  %v5297 = vunpack.c.l.b16 %v2954
  %v5298 = vunpack.c.l.b16 %v2955
  %v5299 = vunpack.c.l.b16 %v2956
  %v5300 = vunpack.c.l.b16 %v2957
  %v5301 = vunpack.c.l.b16 %v2958
  %v5302 = vunpack.c.l.b16 %v2959
  %v5303 = vunpack.c.l.b16 %v2960
  %v5304 = vunpack.c.l.b16 %v2961
  %v5305 = vunpack.c.l.b16 %v2962
  %v5306 = vunpack.c.l.b16 %v2963
  %v5307 = vunpack.c.l.b16 %v2964
  %v5308 = vunpack.c.l.b16 %v2965
  %v5309 = vunpack.c.l.b16 %v2966
  %v5310 = vunpack.c.l.b16 %v2967
  %v5311 = vunpack.c.l.b16 %v2968
  %v5312 = vunpack.c.l.b16 %v2969
  %v5313 = vunpack.c.l.b16 %v2970
  %v5314 = vunpack.c.l.b16 %v2971
  %v5315 = vunpack.c.l.b16 %v2972
  %v5316 = vunpack.c.l.b16 %v2973
  %v5317 = vunpack.c.l.b16 %v2974
  %v5318 = vunpack.c.l.b16 %v2975
  %v5319 = vunpack.c.l.b16 %v2976
  %v5320 = vunpack.c.l.b16 %v2977
  %v5321 = vunpack.c.l.b16 %v2978
  %v5322 = vunpack.c.l.b16 %v2979
  %v5323 = vunpack.c.l.b16 %v2980
  %v5324 = vunpack.c.l.b16 %v2981
  %v5325 = vunpack.c.l.b16 %v2982
  %v5326 = vunpack.c.l.b16 %v2983
  %v5327 = vunpack.c.l.b16 %v2984
  %v5328 = vpack.c.b16 %v5265, %v5264
  %v5329 = vpack.c.b16 %v5267, %v5266
  %v5330 = vpack.c.b16 %v5269, %v5268
  %v5331 = vpack.c.b16 %v5271, %v5270
  %v5332 = vpack.c.b16 %v5273, %v5272
  %v5333 = vpack.c.b16 %v5275, %v5274
  %v5334 = vpack.c.b16 %v5277, %v5276
  %v5335 = vpack.c.b16 %v5279, %v5278
  %v5336 = vpack.c.b16 %v5281, %v5280
  %v5337 = vpack.c.b16 %v5283, %v5282
  %v5338 = vpack.c.b16 %v5285, %v5284
  %v5339 = vpack.c.b16 %v5287, %v5286
  %v5340 = vpack.c.b16 %v5289, %v5288
  %v5341 = vpack.c.b16 %v5291, %v5290
  %v5342 = vpack.c.b16 %v5293, %v5292
  %v5343 = vpack.c.b16 %v5295, %v5294
  %v5344 = vpack.c.b16 %v5297, %v5296
  %v5345 = vpack.c.b16 %v5299, %v5298
  %v5346 = vpack.c.b16 %v5301, %v5300
  %v5347 = vpack.c.b16 %v5303, %v5302
  %v5348 = vpack.c.b16 %v5305, %v5304
  %v5349 = vpack.c.b16 %v5307, %v5306
  %v5350 = vpack.c.b16 %v5309, %v5308
  %v5351 = vpack.c.b16 %v5311, %v5310
  %v5352 = vpack.c.b16 %v5313, %v5312
  %v5353 = vpack.c.b16 %v5315, %v5314
  %v5354 = vpack.c.b16 %v5317, %v5316
  %v5355 = vpack.c.b16 %v5319, %v5318
  %v5356 = vpack.c.b16 %v5321, %v5320
  %v5357 = vpack.c.b16 %v5323, %v5322
  %v5358 = vpack.c.b16 %v5325, %v5324
  %v5359 = vpack.c.b16 %v5327, %v5326
  %5392 = vmatprep.subr.bf16.mxu0 0
  %5393 = vmatpush1.bf16.msra.mxu0 %v5328
  %5394 = vmatprep.subr.bf16.mxu0 0
  %5395 = vmatpush1.bf16.msra.mxu0 %v5329
  %5396 = vmatprep.subr.bf16.mxu0 0
  %5397 = vmatpush1.bf16.msra.mxu0 %v5330
  %5398 = vmatprep.subr.bf16.mxu0 0
  %5399 = vmatpush1.bf16.msra.mxu0 %v5331
  %5400 = vmatprep.subr.bf16.mxu0 0
  %5401 = vmatpush1.bf16.msra.mxu0 %v5332
  %5402 = vmatprep.subr.bf16.mxu0 0
  %5403 = vmatpush1.bf16.msra.mxu0 %v5333
  %5404 = vmatprep.subr.bf16.mxu0 0
  %5405 = vmatpush1.bf16.msra.mxu0 %v5334
  %5406 = vmatprep.subr.bf16.mxu0 0
  %5407 = vmatpush1.bf16.msra.mxu0 %v5335
  %5408 = vmatprep.subr.bf16.mxu0 0
  %5409 = vmatpush1.bf16.msra.mxu0 %v5336
  %5410 = vmatprep.subr.bf16.mxu0 0
  %5411 = vmatpush1.bf16.msra.mxu0 %v5337
  %5412 = vmatprep.subr.bf16.mxu0 0
  %5413 = vmatpush1.bf16.msra.mxu0 %v5338
  %5414 = vmatprep.subr.bf16.mxu0 0
  %5415 = vmatpush1.bf16.msra.mxu0 %v5339
  %5416 = vmatprep.subr.bf16.mxu0 0
  %5417 = vmatpush1.bf16.msra.mxu0 %v5340
  %5418 = vmatprep.subr.bf16.mxu0 0
  %5419 = vmatpush1.bf16.msra.mxu0 %v5341
  %5420 = vmatprep.subr.bf16.mxu0 0
  %5421 = vmatpush1.bf16.msra.mxu0 %v5342
  %5422 = vmatprep.subr.bf16.mxu0 0
  %5423 = vmatpush1.bf16.msra.mxu0 %v5343
  %5424 = vmatprep.mubr.bf16.mxu0 %v2498
  %5425 = vmatmul.mubr.bf16.gmra.mrb[0].mxu0 %v2497
  %v5426 = vpop.f32.mrb[0].mxu0
  %v5427 = vadd.f32 %v3566, %v5426
  %v5428 = vpop.f32.mrb[0].mxu0
  %v5429 = vpop.f32.mrb[0].mxu0
  %v5430 = vpop.f32.mrb[0].mxu0
  %5431 = vdwg.mxu0
  %5432 = vmatprep.subr.bf16.mxu0 0
  %5433 = vmatpush1.bf16.msra.mxu0 %v5344
  %5434 = vmatprep.subr.bf16.mxu0 0
  %5435 = vmatpush1.bf16.msra.mxu0 %v5345
  %5436 = vmatprep.subr.bf16.mxu0 0
  %5437 = vmatpush1.bf16.msra.mxu0 %v5346
  %5438 = vmatprep.subr.bf16.mxu0 0
  %5439 = vmatpush1.bf16.msra.mxu0 %v5347
  %5440 = vmatprep.subr.bf16.mxu0 0
  %5441 = vmatpush1.bf16.msra.mxu0 %v5348
  %5442 = vmatprep.subr.bf16.mxu0 0
  %5443 = vmatpush1.bf16.msra.mxu0 %v5349
  %5444 = vmatprep.subr.bf16.mxu0 0
  %5445 = vmatpush1.bf16.msra.mxu0 %v5350
  %5446 = vmatprep.subr.bf16.mxu0 0
  %5447 = vmatpush1.bf16.msra.mxu0 %v5351
  %5448 = vmatprep.subr.bf16.mxu0 0
  %5449 = vmatpush1.bf16.msra.mxu0 %v5352
  %5450 = vmatprep.subr.bf16.mxu0 0
  %5451 = vmatpush1.bf16.msra.mxu0 %v5353
  %5452 = vmatprep.subr.bf16.mxu0 0
  %5453 = vmatpush1.bf16.msra.mxu0 %v5354
  %5454 = vmatprep.subr.bf16.mxu0 0
  %5455 = vmatpush1.bf16.msra.mxu0 %v5355
  %5456 = vmatprep.subr.bf16.mxu0 0
  %5457 = vmatpush1.bf16.msra.mxu0 %v5356
  %5458 = vmatprep.subr.bf16.mxu0 0
  %5459 = vmatpush1.bf16.msra.mxu0 %v5357
  %5460 = vmatprep.subr.bf16.mxu0 0
  %5461 = vmatpush1.bf16.msra.mxu0 %v5358
  %5462 = vmatprep.subr.bf16.mxu0 0
  %5463 = vmatpush1.bf16.msra.mxu0 %v5359
  %5464 = vmatprep.mubr.bf16.mxu0 %v2500
  %5465 = vmatmul.mubr.bf16.gmra.mrb[0].mxu0 %v2499
  %v5466 = vpop.f32.mrb[0].mxu0
  %v5467 = vadd.f32 %v5427, %v5466
  %v5468 = vpop.f32.mrb[0].mxu0
  %v5469 = vpop.f32.mrb[0].mxu0
  %v5470 = vpop.f32.mrb[0].mxu0
  %5471 = vdwg.mxu0
  %v5536 = vunpack.c.l.b16 %v2985
  %v5537 = vunpack.c.l.b16 %v2986
  %v5538 = vunpack.c.l.b16 %v2987
  %v5539 = vunpack.c.l.b16 %v2988
  %v5540 = vunpack.c.l.b16 %v2989
  %v5541 = vunpack.c.l.b16 %v2990
  %v5542 = vunpack.c.l.b16 %v2991
  %v5543 = vunpack.c.l.b16 %v2992
  %v5544 = vunpack.c.l.b16 %v2993
  %v5545 = vunpack.c.l.b16 %v2994
  %v5546 = vunpack.c.l.b16 %v2995
  %v5547 = vunpack.c.l.b16 %v2996
  %v5548 = vunpack.c.l.b16 %v2997
  %v5549 = vunpack.c.l.b16 %v2998
  %v5550 = vunpack.c.l.b16 %v2999
  %v5551 = vunpack.c.l.b16 %v3000
  %v5552 = vunpack.c.l.b16 %v3001
  %v5553 = vunpack.c.l.b16 %v3002
  %v5554 = vunpack.c.l.b16 %v3003
  %v5555 = vunpack.c.l.b16 %v3004
  %v5556 = vunpack.c.l.b16 %v3005
  %v5557 = vunpack.c.l.b16 %v3006
  %v5558 = vunpack.c.l.b16 %v3007
  %v5559 = vunpack.c.l.b16 %v3008
  %v5560 = vunpack.c.l.b16 %v3009
  %v5561 = vunpack.c.l.b16 %v3010
  %v5562 = vunpack.c.l.b16 %v3011
  %v5563 = vunpack.c.l.b16 %v3012
  %v5564 = vunpack.c.l.b16 %v3013
  %v5565 = vunpack.c.l.b16 %v3014
  %v5566 = vunpack.c.l.b16 %v3015
  %v5567 = vunpack.c.l.b16 %v3016
  %v5568 = vunpack.c.l.b16 %v3017
  %v5569 = vunpack.c.l.b16 %v3018
  %v5570 = vunpack.c.l.b16 %v3019
  %v5571 = vunpack.c.l.b16 %v3020
  %v5572 = vunpack.c.l.b16 %v3021
  %v5573 = vunpack.c.l.b16 %v3022
  %v5574 = vunpack.c.l.b16 %v3023
  %v5575 = vunpack.c.l.b16 %v3024
  %v5576 = vunpack.c.l.b16 %v3025
  %v5577 = vunpack.c.l.b16 %v3026
  %v5578 = vunpack.c.l.b16 %v3027
  %v5579 = vunpack.c.l.b16 %v3028
  %v5580 = vunpack.c.l.b16 %v3029
  %v5581 = vunpack.c.l.b16 %v3030
  %v5582 = vunpack.c.l.b16 %v3031
  %v5583 = vunpack.c.l.b16 %v3032
  %v5584 = vunpack.c.l.b16 %v3033
  %v5585 = vunpack.c.l.b16 %v3034
  %v5586 = vunpack.c.l.b16 %v3035
  %v5587 = vunpack.c.l.b16 %v3036
  %v5588 = vunpack.c.l.b16 %v3037
  %v5589 = vunpack.c.l.b16 %v3038
  %v5590 = vunpack.c.l.b16 %v3039
  %v5591 = vunpack.c.l.b16 %v3040
  %v5592 = vunpack.c.l.b16 %v3041
  %v5593 = vunpack.c.l.b16 %v3042
  %v5594 = vunpack.c.l.b16 %v3043
  %v5595 = vunpack.c.l.b16 %v3044
  %v5596 = vunpack.c.l.b16 %v3045
  %v5597 = vunpack.c.l.b16 %v3046
  %v5598 = vunpack.c.l.b16 %v3047
  %v5599 = vunpack.c.l.b16 %v3048
  %v5600 = vpack.c.b16 %v5537, %v5536
  %v5601 = vpack.c.b16 %v5539, %v5538
  %v5602 = vpack.c.b16 %v5541, %v5540
  %v5603 = vpack.c.b16 %v5543, %v5542
  %v5604 = vpack.c.b16 %v5545, %v5544
  %v5605 = vpack.c.b16 %v5547, %v5546
  %v5606 = vpack.c.b16 %v5549, %v5548
  %v5607 = vpack.c.b16 %v5551, %v5550
  %v5608 = vpack.c.b16 %v5553, %v5552
  %v5609 = vpack.c.b16 %v5555, %v5554
  %v5610 = vpack.c.b16 %v5557, %v5556
  %v5611 = vpack.c.b16 %v5559, %v5558
  %v5612 = vpack.c.b16 %v5561, %v5560
  %v5613 = vpack.c.b16 %v5563, %v5562
  %v5614 = vpack.c.b16 %v5565, %v5564
  %v5615 = vpack.c.b16 %v5567, %v5566
  %v5616 = vpack.c.b16 %v5569, %v5568
  %v5617 = vpack.c.b16 %v5571, %v5570
  %v5618 = vpack.c.b16 %v5573, %v5572
  %v5619 = vpack.c.b16 %v5575, %v5574
  %v5620 = vpack.c.b16 %v5577, %v5576
  %v5621 = vpack.c.b16 %v5579, %v5578
  %v5622 = vpack.c.b16 %v5581, %v5580
  %v5623 = vpack.c.b16 %v5583, %v5582
  %v5624 = vpack.c.b16 %v5585, %v5584
  %v5625 = vpack.c.b16 %v5587, %v5586
  %v5626 = vpack.c.b16 %v5589, %v5588
  %v5627 = vpack.c.b16 %v5591, %v5590
  %v5628 = vpack.c.b16 %v5593, %v5592
  %v5629 = vpack.c.b16 %v5595, %v5594
  %v5630 = vpack.c.b16 %v5597, %v5596
  %v5631 = vpack.c.b16 %v5599, %v5598
  %5664 = vmatprep.subr.bf16.mxu0 0
  %5665 = vmatpush1.bf16.msra.mxu0 %v5600
  %5666 = vmatprep.subr.bf16.mxu0 0
  %5667 = vmatpush1.bf16.msra.mxu0 %v5601
  %5668 = vmatprep.subr.bf16.mxu0 0
  %5669 = vmatpush1.bf16.msra.mxu0 %v5602
  %5670 = vmatprep.subr.bf16.mxu0 0
  %5671 = vmatpush1.bf16.msra.mxu0 %v5603
  %5672 = vmatprep.subr.bf16.mxu0 0
  %5673 = vmatpush1.bf16.msra.mxu0 %v5604
  %5674 = vmatprep.subr.bf16.mxu0 0
  %5675 = vmatpush1.bf16.msra.mxu0 %v5605
  %5676 = vmatprep.subr.bf16.mxu0 0
  %5677 = vmatpush1.bf16.msra.mxu0 %v5606
  %5678 = vmatprep.subr.bf16.mxu0 0
  %5679 = vmatpush1.bf16.msra.mxu0 %v5607
  %5680 = vmatprep.subr.bf16.mxu0 0
  %5681 = vmatpush1.bf16.msra.mxu0 %v5608
  %5682 = vmatprep.subr.bf16.mxu0 0
  %5683 = vmatpush1.bf16.msra.mxu0 %v5609
  %5684 = vmatprep.subr.bf16.mxu0 0
  %5685 = vmatpush1.bf16.msra.mxu0 %v5610
  %5686 = vmatprep.subr.bf16.mxu0 0
  %5687 = vmatpush1.bf16.msra.mxu0 %v5611
  %5688 = vmatprep.subr.bf16.mxu0 0
  %5689 = vmatpush1.bf16.msra.mxu0 %v5612
  %5690 = vmatprep.subr.bf16.mxu0 0
  %5691 = vmatpush1.bf16.msra.mxu0 %v5613
  %5692 = vmatprep.subr.bf16.mxu0 0
  %5693 = vmatpush1.bf16.msra.mxu0 %v5614
  %5694 = vmatprep.subr.bf16.mxu0 0
  %5695 = vmatpush1.bf16.msra.mxu0 %v5615
  %5696 = vmatprep.mubr.bf16.mxu0 %v2502
  %5697 = vmatmul.mubr.bf16.gmra.mrb[0].mxu0 %v2501
  %v5698 = vpop.f32.mrb[0].mxu0
  %v5699 = vadd.f32 %v3566, %v5698
  %v5700 = vpop.f32.mrb[0].mxu0
  %v5701 = vpop.f32.mrb[0].mxu0
  %v5702 = vpop.f32.mrb[0].mxu0
  %5703 = vdwg.mxu0
  %5704 = vmatprep.subr.bf16.mxu0 0
  %5705 = vmatpush1.bf16.msra.mxu0 %v5616
  %5706 = vmatprep.subr.bf16.mxu0 0
  %5707 = vmatpush1.bf16.msra.mxu0 %v5617
  %5708 = vmatprep.subr.bf16.mxu0 0
  %5709 = vmatpush1.bf16.msra.mxu0 %v5618
  %5710 = vmatprep.subr.bf16.mxu0 0
  %5711 = vmatpush1.bf16.msra.mxu0 %v5619
  %5712 = vmatprep.subr.bf16.mxu0 0
  %5713 = vmatpush1.bf16.msra.mxu0 %v5620
  %5714 = vmatprep.subr.bf16.mxu0 0
  %5715 = vmatpush1.bf16.msra.mxu0 %v5621
  %5716 = vmatprep.subr.bf16.mxu0 0
  %5717 = vmatpush1.bf16.msra.mxu0 %v5622
  %5718 = vmatprep.subr.bf16.mxu0 0
  %5719 = vmatpush1.bf16.msra.mxu0 %v5623
  %5720 = vmatprep.subr.bf16.mxu0 0
  %5721 = vmatpush1.bf16.msra.mxu0 %v5624
  %5722 = vmatprep.subr.bf16.mxu0 0
  %5723 = vmatpush1.bf16.msra.mxu0 %v5625
  %5724 = vmatprep.subr.bf16.mxu0 0
  %5725 = vmatpush1.bf16.msra.mxu0 %v5626
  %5726 = vmatprep.subr.bf16.mxu0 0
  %5727 = vmatpush1.bf16.msra.mxu0 %v5627
  %5728 = vmatprep.subr.bf16.mxu0 0
  %5729 = vmatpush1.bf16.msra.mxu0 %v5628
  %5730 = vmatprep.subr.bf16.mxu0 0
  %5731 = vmatpush1.bf16.msra.mxu0 %v5629
  %5732 = vmatprep.subr.bf16.mxu0 0
  %5733 = vmatpush1.bf16.msra.mxu0 %v5630
  %5734 = vmatprep.subr.bf16.mxu0 0
  %5735 = vmatpush1.bf16.msra.mxu0 %v5631
  %5736 = vmatprep.mubr.bf16.mxu0 %v2504
  %5737 = vmatmul.mubr.bf16.gmra.mrb[0].mxu0 %v2503
  %v5738 = vpop.f32.mrb[0].mxu0
  %v5739 = vadd.f32 %v5699, %v5738
  %v5740 = vpop.f32.mrb[0].mxu0
  %v5741 = vpop.f32.mrb[0].mxu0
  %v5742 = vpop.f32.mrb[0].mxu0
  %5743 = vdwg.mxu0
  %v5808 = vunpack.c.l.b16 %v3049
  %v5809 = vunpack.c.l.b16 %v3050
  %v5810 = vunpack.c.l.b16 %v3051
  %v5811 = vunpack.c.l.b16 %v3052
  %v5812 = vunpack.c.l.b16 %v3053
  %v5813 = vunpack.c.l.b16 %v3054
  %v5814 = vunpack.c.l.b16 %v3055
  %v5815 = vunpack.c.l.b16 %v3056
  %v5816 = vunpack.c.l.b16 %v3057
  %v5817 = vunpack.c.l.b16 %v3058
  %v5818 = vunpack.c.l.b16 %v3059
  %v5819 = vunpack.c.l.b16 %v3060
  %v5820 = vunpack.c.l.b16 %v3061
  %v5821 = vunpack.c.l.b16 %v3062
  %v5822 = vunpack.c.l.b16 %v3063
  %v5823 = vunpack.c.l.b16 %v3064
  %v5824 = vunpack.c.l.b16 %v3065
  %v5825 = vunpack.c.l.b16 %v3066
  %v5826 = vunpack.c.l.b16 %v3067
  %v5827 = vunpack.c.l.b16 %v3068
  %v5828 = vunpack.c.l.b16 %v3069
  %v5829 = vunpack.c.l.b16 %v3070
  %v5830 = vunpack.c.l.b16 %v3071
  %v5831 = vunpack.c.l.b16 %v3072
  %v5832 = vunpack.c.l.b16 %v3073
  %v5833 = vunpack.c.l.b16 %v3074
  %v5834 = vunpack.c.l.b16 %v3075
  %v5835 = vunpack.c.l.b16 %v3076
  %v5836 = vunpack.c.l.b16 %v3077
  %v5837 = vunpack.c.l.b16 %v3078
  %v5838 = vunpack.c.l.b16 %v3079
  %v5839 = vunpack.c.l.b16 %v3080
  %v5840 = vunpack.c.l.b16 %v3081
  %v5841 = vunpack.c.l.b16 %v3082
  %v5842 = vunpack.c.l.b16 %v3083
  %v5843 = vunpack.c.l.b16 %v3084
  %v5844 = vunpack.c.l.b16 %v3085
  %v5845 = vunpack.c.l.b16 %v3086
  %v5846 = vunpack.c.l.b16 %v3087
  %v5847 = vunpack.c.l.b16 %v3088
  %v5848 = vunpack.c.l.b16 %v3089
  %v5849 = vunpack.c.l.b16 %v3090
  %v5850 = vunpack.c.l.b16 %v3091
  %v5851 = vunpack.c.l.b16 %v3092
  %v5852 = vunpack.c.l.b16 %v3093
  %v5853 = vunpack.c.l.b16 %v3094
  %v5854 = vunpack.c.l.b16 %v3095
  %v5855 = vunpack.c.l.b16 %v3096
  %v5856 = vunpack.c.l.b16 %v3097
  %v5857 = vunpack.c.l.b16 %v3098
  %v5858 = vunpack.c.l.b16 %v3099
  %v5859 = vunpack.c.l.b16 %v3100
  %v5860 = vunpack.c.l.b16 %v3101
  %v5861 = vunpack.c.l.b16 %v3102
  %v5862 = vunpack.c.l.b16 %v3103
  %v5863 = vunpack.c.l.b16 %v3104
  %v5864 = vunpack.c.l.b16 %v3105
  %v5865 = vunpack.c.l.b16 %v3106
  %v5866 = vunpack.c.l.b16 %v3107
  %v5867 = vunpack.c.l.b16 %v3108
  %v5868 = vunpack.c.l.b16 %v3109
  %v5869 = vunpack.c.l.b16 %v3110
  %v5870 = vunpack.c.l.b16 %v3111
  %v5871 = vunpack.c.l.b16 %v3112
  %v5872 = vpack.c.b16 %v5809, %v5808
  %v5873 = vpack.c.b16 %v5811, %v5810
  %v5874 = vpack.c.b16 %v5813, %v5812
  %v5875 = vpack.c.b16 %v5815, %v5814
  %v5876 = vpack.c.b16 %v5817, %v5816
  %v5877 = vpack.c.b16 %v5819, %v5818
  %v5878 = vpack.c.b16 %v5821, %v5820
  %v5879 = vpack.c.b16 %v5823, %v5822
  %v5880 = vpack.c.b16 %v5825, %v5824
  %v5881 = vpack.c.b16 %v5827, %v5826
  %v5882 = vpack.c.b16 %v5829, %v5828
  %v5883 = vpack.c.b16 %v5831, %v5830
  %v5884 = vpack.c.b16 %v5833, %v5832
  %v5885 = vpack.c.b16 %v5835, %v5834
  %v5886 = vpack.c.b16 %v5837, %v5836
  %v5887 = vpack.c.b16 %v5839, %v5838
  %v5888 = vpack.c.b16 %v5841, %v5840
  %v5889 = vpack.c.b16 %v5843, %v5842
  %v5890 = vpack.c.b16 %v5845, %v5844
  %v5891 = vpack.c.b16 %v5847, %v5846
  %v5892 = vpack.c.b16 %v5849, %v5848
  %v5893 = vpack.c.b16 %v5851, %v5850
  %v5894 = vpack.c.b16 %v5853, %v5852
  %v5895 = vpack.c.b16 %v5855, %v5854
  %v5896 = vpack.c.b16 %v5857, %v5856
  %v5897 = vpack.c.b16 %v5859, %v5858
  %v5898 = vpack.c.b16 %v5861, %v5860
  %v5899 = vpack.c.b16 %v5863, %v5862
  %v5900 = vpack.c.b16 %v5865, %v5864
  %v5901 = vpack.c.b16 %v5867, %v5866
  %v5902 = vpack.c.b16 %v5869, %v5868
  %v5903 = vpack.c.b16 %v5871, %v5870
  %5936 = vmatprep.subr.bf16.mxu0 0
  %5937 = vmatpush1.bf16.msra.mxu0 %v5872
  %5938 = vmatprep.subr.bf16.mxu0 0
  %5939 = vmatpush1.bf16.msra.mxu0 %v5873
  %5940 = vmatprep.subr.bf16.mxu0 0
  %5941 = vmatpush1.bf16.msra.mxu0 %v5874
  %5942 = vmatprep.subr.bf16.mxu0 0
  %5943 = vmatpush1.bf16.msra.mxu0 %v5875
  %5944 = vmatprep.subr.bf16.mxu0 0
  %5945 = vmatpush1.bf16.msra.mxu0 %v5876
  %5946 = vmatprep.subr.bf16.mxu0 0
  %5947 = vmatpush1.bf16.msra.mxu0 %v5877
  %5948 = vmatprep.subr.bf16.mxu0 0
  %5949 = vmatpush1.bf16.msra.mxu0 %v5878
  %5950 = vmatprep.subr.bf16.mxu0 0
  %5951 = vmatpush1.bf16.msra.mxu0 %v5879
  %5952 = vmatprep.subr.bf16.mxu0 0
  %5953 = vmatpush1.bf16.msra.mxu0 %v5880
  %5954 = vmatprep.subr.bf16.mxu0 0
  %5955 = vmatpush1.bf16.msra.mxu0 %v5881
  %5956 = vmatprep.subr.bf16.mxu0 0
  %5957 = vmatpush1.bf16.msra.mxu0 %v5882
  %5958 = vmatprep.subr.bf16.mxu0 0
  %5959 = vmatpush1.bf16.msra.mxu0 %v5883
  %5960 = vmatprep.subr.bf16.mxu0 0
  %5961 = vmatpush1.bf16.msra.mxu0 %v5884
  %5962 = vmatprep.subr.bf16.mxu0 0
  %5963 = vmatpush1.bf16.msra.mxu0 %v5885
  %5964 = vmatprep.subr.bf16.mxu0 0
  %5965 = vmatpush1.bf16.msra.mxu0 %v5886
  %5966 = vmatprep.subr.bf16.mxu0 0
  %5967 = vmatpush1.bf16.msra.mxu0 %v5887
  %5968 = vmatprep.mubr.bf16.mxu0 %v2506
  %5969 = vmatmul.mubr.bf16.gmra.mrb[0].mxu0 %v2505
  %v5970 = vpop.f32.mrb[0].mxu0
  %v5971 = vadd.f32 %v3566, %v5970
  %v5972 = vpop.f32.mrb[0].mxu0
  %v5973 = vpop.f32.mrb[0].mxu0
  %v5974 = vpop.f32.mrb[0].mxu0
  %5975 = vdwg.mxu0
  %5976 = vmatprep.subr.bf16.mxu0 0
  %5977 = vmatpush1.bf16.msra.mxu0 %v5888
  %5978 = vmatprep.subr.bf16.mxu0 0
  %5979 = vmatpush1.bf16.msra.mxu0 %v5889
  %5980 = vmatprep.subr.bf16.mxu0 0
  %5981 = vmatpush1.bf16.msra.mxu0 %v5890
  %5982 = vmatprep.subr.bf16.mxu0 0
  %5983 = vmatpush1.bf16.msra.mxu0 %v5891
  %5984 = vmatprep.subr.bf16.mxu0 0
  %5985 = vmatpush1.bf16.msra.mxu0 %v5892
  %5986 = vmatprep.subr.bf16.mxu0 0
  %5987 = vmatpush1.bf16.msra.mxu0 %v5893
  %5988 = vmatprep.subr.bf16.mxu0 0
  %5989 = vmatpush1.bf16.msra.mxu0 %v5894
  %5990 = vmatprep.subr.bf16.mxu0 0
  %5991 = vmatpush1.bf16.msra.mxu0 %v5895
  %5992 = vmatprep.subr.bf16.mxu0 0
  %5993 = vmatpush1.bf16.msra.mxu0 %v5896
  %5994 = vmatprep.subr.bf16.mxu0 0
  %5995 = vmatpush1.bf16.msra.mxu0 %v5897
  %5996 = vmatprep.subr.bf16.mxu0 0
  %5997 = vmatpush1.bf16.msra.mxu0 %v5898
  %5998 = vmatprep.subr.bf16.mxu0 0
  %5999 = vmatpush1.bf16.msra.mxu0 %v5899
  %6000 = vmatprep.subr.bf16.mxu0 0
  %6001 = vmatpush1.bf16.msra.mxu0 %v5900
  %6002 = vmatprep.subr.bf16.mxu0 0
  %6003 = vmatpush1.bf16.msra.mxu0 %v5901
  %6004 = vmatprep.subr.bf16.mxu0 0
  %6005 = vmatpush1.bf16.msra.mxu0 %v5902
  %6006 = vmatprep.subr.bf16.mxu0 0
  %6007 = vmatpush1.bf16.msra.mxu0 %v5903
  %6008 = vmatprep.mubr.bf16.mxu0 %v2508
  %6009 = vmatmul.mubr.bf16.gmra.mrb[0].mxu0 %v2507
  %v6010 = vpop.f32.mrb[0].mxu0
  %v6011 = vadd.f32 %v5971, %v6010
  %v6012 = vpop.f32.mrb[0].mxu0
  %v6013 = vpop.f32.mrb[0].mxu0
  %v6014 = vpop.f32.mrb[0].mxu0
  %6015 = vdwg.mxu0
  %v6080 = vunpack.c.l.b16 %v3113
  %v6081 = vunpack.c.l.b16 %v3114
  %v6082 = vunpack.c.l.b16 %v3115
  %v6083 = vunpack.c.l.b16 %v3116
  %v6084 = vunpack.c.l.b16 %v3117
  %v6085 = vunpack.c.l.b16 %v3118
  %v6086 = vunpack.c.l.b16 %v3119
  %v6087 = vunpack.c.l.b16 %v3120
  %v6088 = vunpack.c.l.b16 %v3121
  %v6089 = vunpack.c.l.b16 %v3122
  %v6090 = vunpack.c.l.b16 %v3123
  %v6091 = vunpack.c.l.b16 %v3124
  %v6092 = vunpack.c.l.b16 %v3125
  %v6093 = vunpack.c.l.b16 %v3126
  %v6094 = vunpack.c.l.b16 %v3127
  %v6095 = vunpack.c.l.b16 %v3128
  %v6096 = vunpack.c.l.b16 %v3129
  %v6097 = vunpack.c.l.b16 %v3130
  %v6098 = vunpack.c.l.b16 %v3131
  %v6099 = vunpack.c.l.b16 %v3132
  %v6100 = vunpack.c.l.b16 %v3133
  %v6101 = vunpack.c.l.b16 %v3134
  %v6102 = vunpack.c.l.b16 %v3135
  %v6103 = vunpack.c.l.b16 %v3136
  %v6104 = vunpack.c.l.b16 %v3137
  %v6105 = vunpack.c.l.b16 %v3138
  %v6106 = vunpack.c.l.b16 %v3139
  %v6107 = vunpack.c.l.b16 %v3140
  %v6108 = vunpack.c.l.b16 %v3141
  %v6109 = vunpack.c.l.b16 %v3142
  %v6110 = vunpack.c.l.b16 %v3143
  %v6111 = vunpack.c.l.b16 %v3144
  %v6112 = vunpack.c.l.b16 %v3145
  %v6113 = vunpack.c.l.b16 %v3146
  %v6114 = vunpack.c.l.b16 %v3147
  %v6115 = vunpack.c.l.b16 %v3148
  %v6116 = vunpack.c.l.b16 %v3149
  %v6117 = vunpack.c.l.b16 %v3150
  %v6118 = vunpack.c.l.b16 %v3151
  %v6119 = vunpack.c.l.b16 %v3152
  %v6120 = vunpack.c.l.b16 %v3153
  %v6121 = vunpack.c.l.b16 %v3154
  %v6122 = vunpack.c.l.b16 %v3155
  %v6123 = vunpack.c.l.b16 %v3156
  %v6124 = vunpack.c.l.b16 %v3157
  %v6125 = vunpack.c.l.b16 %v3158
  %v6126 = vunpack.c.l.b16 %v3159
  %v6127 = vunpack.c.l.b16 %v3160
  %v6128 = vunpack.c.l.b16 %v3161
  %v6129 = vunpack.c.l.b16 %v3162
  %v6130 = vunpack.c.l.b16 %v3163
  %v6131 = vunpack.c.l.b16 %v3164
  %v6132 = vunpack.c.l.b16 %v3165
  %v6133 = vunpack.c.l.b16 %v3166
  %v6134 = vunpack.c.l.b16 %v3167
  %v6135 = vunpack.c.l.b16 %v3168
  %v6136 = vunpack.c.l.b16 %v3169
  %v6137 = vunpack.c.l.b16 %v3170
  %v6138 = vunpack.c.l.b16 %v3171
  %v6139 = vunpack.c.l.b16 %v3172
  %v6140 = vunpack.c.l.b16 %v3173
  %v6141 = vunpack.c.l.b16 %v3174
  %v6142 = vunpack.c.l.b16 %v3175
  %v6143 = vunpack.c.l.b16 %v3176
  %v6144 = vpack.c.b16 %v6081, %v6080
  %v6145 = vpack.c.b16 %v6083, %v6082
  %v6146 = vpack.c.b16 %v6085, %v6084
  %v6147 = vpack.c.b16 %v6087, %v6086
  %v6148 = vpack.c.b16 %v6089, %v6088
  %v6149 = vpack.c.b16 %v6091, %v6090
  %v6150 = vpack.c.b16 %v6093, %v6092
  %v6151 = vpack.c.b16 %v6095, %v6094
  %v6152 = vpack.c.b16 %v6097, %v6096
  %v6153 = vpack.c.b16 %v6099, %v6098
  %v6154 = vpack.c.b16 %v6101, %v6100
  %v6155 = vpack.c.b16 %v6103, %v6102
  %v6156 = vpack.c.b16 %v6105, %v6104
  %v6157 = vpack.c.b16 %v6107, %v6106
  %v6158 = vpack.c.b16 %v6109, %v6108
  %v6159 = vpack.c.b16 %v6111, %v6110
  %v6160 = vpack.c.b16 %v6113, %v6112
  %v6161 = vpack.c.b16 %v6115, %v6114
  %v6162 = vpack.c.b16 %v6117, %v6116
  %v6163 = vpack.c.b16 %v6119, %v6118
  %v6164 = vpack.c.b16 %v6121, %v6120
  %v6165 = vpack.c.b16 %v6123, %v6122
  %v6166 = vpack.c.b16 %v6125, %v6124
  %v6167 = vpack.c.b16 %v6127, %v6126
  %v6168 = vpack.c.b16 %v6129, %v6128
  %v6169 = vpack.c.b16 %v6131, %v6130
  %v6170 = vpack.c.b16 %v6133, %v6132
  %v6171 = vpack.c.b16 %v6135, %v6134
  %v6172 = vpack.c.b16 %v6137, %v6136
  %v6173 = vpack.c.b16 %v6139, %v6138
  %v6174 = vpack.c.b16 %v6141, %v6140
  %v6175 = vpack.c.b16 %v6143, %v6142
  %6208 = vmatprep.subr.bf16.mxu0 0
  %6209 = vmatpush1.bf16.msra.mxu0 %v6144
  %6210 = vmatprep.subr.bf16.mxu0 0
  %6211 = vmatpush1.bf16.msra.mxu0 %v6145
  %6212 = vmatprep.subr.bf16.mxu0 0
  %6213 = vmatpush1.bf16.msra.mxu0 %v6146
  %6214 = vmatprep.subr.bf16.mxu0 0
  %6215 = vmatpush1.bf16.msra.mxu0 %v6147
  %6216 = vmatprep.subr.bf16.mxu0 0
  %6217 = vmatpush1.bf16.msra.mxu0 %v6148
  %6218 = vmatprep.subr.bf16.mxu0 0
  %6219 = vmatpush1.bf16.msra.mxu0 %v6149
  %6220 = vmatprep.subr.bf16.mxu0 0
  %6221 = vmatpush1.bf16.msra.mxu0 %v6150
  %6222 = vmatprep.subr.bf16.mxu0 0
  %6223 = vmatpush1.bf16.msra.mxu0 %v6151
  %6224 = vmatprep.subr.bf16.mxu0 0
  %6225 = vmatpush1.bf16.msra.mxu0 %v6152
  %6226 = vmatprep.subr.bf16.mxu0 0
  %6227 = vmatpush1.bf16.msra.mxu0 %v6153
  %6228 = vmatprep.subr.bf16.mxu0 0
  %6229 = vmatpush1.bf16.msra.mxu0 %v6154
  %6230 = vmatprep.subr.bf16.mxu0 0
  %6231 = vmatpush1.bf16.msra.mxu0 %v6155
  %6232 = vmatprep.subr.bf16.mxu0 0
  %6233 = vmatpush1.bf16.msra.mxu0 %v6156
  %6234 = vmatprep.subr.bf16.mxu0 0
  %6235 = vmatpush1.bf16.msra.mxu0 %v6157
  %6236 = vmatprep.subr.bf16.mxu0 0
  %6237 = vmatpush1.bf16.msra.mxu0 %v6158
  %6238 = vmatprep.subr.bf16.mxu0 0
  %6239 = vmatpush1.bf16.msra.mxu0 %v6159
  %6240 = vmatprep.mubr.bf16.mxu0 %v2510
  %6241 = vmatmul.mubr.bf16.gmra.mrb[0].mxu0 %v2509
  %v6242 = vpop.f32.mrb[0].mxu0
  %v6243 = vadd.f32 %v3566, %v6242
  %v6244 = vpop.f32.mrb[0].mxu0
  %v6245 = vpop.f32.mrb[0].mxu0
  %v6246 = vpop.f32.mrb[0].mxu0
  %6247 = vdwg.mxu0
  %6248 = vmatprep.subr.bf16.mxu0 0
  %6249 = vmatpush1.bf16.msra.mxu0 %v6160
  %6250 = vmatprep.subr.bf16.mxu0 0
  %6251 = vmatpush1.bf16.msra.mxu0 %v6161
  %6252 = vmatprep.subr.bf16.mxu0 0
  %6253 = vmatpush1.bf16.msra.mxu0 %v6162
  %6254 = vmatprep.subr.bf16.mxu0 0
  %6255 = vmatpush1.bf16.msra.mxu0 %v6163
  %6256 = vmatprep.subr.bf16.mxu0 0
  %6257 = vmatpush1.bf16.msra.mxu0 %v6164
  %6258 = vmatprep.subr.bf16.mxu0 0
  %6259 = vmatpush1.bf16.msra.mxu0 %v6165
  %6260 = vmatprep.subr.bf16.mxu0 0
  %6261 = vmatpush1.bf16.msra.mxu0 %v6166
  %6262 = vmatprep.subr.bf16.mxu0 0
  %6263 = vmatpush1.bf16.msra.mxu0 %v6167
  %6264 = vmatprep.subr.bf16.mxu0 0
  %6265 = vmatpush1.bf16.msra.mxu0 %v6168
  %6266 = vmatprep.subr.bf16.mxu0 0
  %6267 = vmatpush1.bf16.msra.mxu0 %v6169
  %6268 = vmatprep.subr.bf16.mxu0 0
  %6269 = vmatpush1.bf16.msra.mxu0 %v6170
  %6270 = vmatprep.subr.bf16.mxu0 0
  %6271 = vmatpush1.bf16.msra.mxu0 %v6171
  %6272 = vmatprep.subr.bf16.mxu0 0
  %6273 = vmatpush1.bf16.msra.mxu0 %v6172
  %6274 = vmatprep.subr.bf16.mxu0 0
  %6275 = vmatpush1.bf16.msra.mxu0 %v6173
  %6276 = vmatprep.subr.bf16.mxu0 0
  %6277 = vmatpush1.bf16.msra.mxu0 %v6174
  %6278 = vmatprep.subr.bf16.mxu0 0
  %6279 = vmatpush1.bf16.msra.mxu0 %v6175
  %6280 = vmatprep.mubr.bf16.mxu0 %v2512
  %6281 = vmatmul.mubr.bf16.gmra.mrb[0].mxu0 %v2511
  %v6282 = vpop.f32.mrb[0].mxu0
  %v6283 = vadd.f32 %v6243, %v6282
  %v6284 = vpop.f32.mrb[0].mxu0
  %v6285 = vpop.f32.mrb[0].mxu0
  %v6286 = vpop.f32.mrb[0].mxu0
  %6287 = vdwg.mxu0
  %v6352 = vunpack.c.l.b16 %v3177
  %v6353 = vunpack.c.l.b16 %v3178
  %v6354 = vunpack.c.l.b16 %v3179
  %v6355 = vunpack.c.l.b16 %v3180
  %v6356 = vunpack.c.l.b16 %v3181
  %v6357 = vunpack.c.l.b16 %v3182
  %v6358 = vunpack.c.l.b16 %v3183
  %v6359 = vunpack.c.l.b16 %v3184
  %v6360 = vunpack.c.l.b16 %v3185
  %v6361 = vunpack.c.l.b16 %v3186
  %v6362 = vunpack.c.l.b16 %v3187
  %v6363 = vunpack.c.l.b16 %v3188
  %v6364 = vunpack.c.l.b16 %v3189
  %v6365 = vunpack.c.l.b16 %v3190
  %v6366 = vunpack.c.l.b16 %v3191
  %v6367 = vunpack.c.l.b16 %v3192
  %v6368 = vunpack.c.l.b16 %v3193
  %v6369 = vunpack.c.l.b16 %v3194
  %v6370 = vunpack.c.l.b16 %v3195
  %v6371 = vunpack.c.l.b16 %v3196
  %v6372 = vunpack.c.l.b16 %v3197
  %v6373 = vunpack.c.l.b16 %v3198
  %v6374 = vunpack.c.l.b16 %v3199
  %v6375 = vunpack.c.l.b16 %v3200
  %v6376 = vunpack.c.l.b16 %v3201
  %v6377 = vunpack.c.l.b16 %v3202
  %v6378 = vunpack.c.l.b16 %v3203
  %v6379 = vunpack.c.l.b16 %v3204
  %v6380 = vunpack.c.l.b16 %v3205
  %v6381 = vunpack.c.l.b16 %v3206
  %v6382 = vunpack.c.l.b16 %v3207
  %v6383 = vunpack.c.l.b16 %v3208
  %v6384 = vunpack.c.l.b16 %v3209
  %v6385 = vunpack.c.l.b16 %v3210
  %v6386 = vunpack.c.l.b16 %v3211
  %v6387 = vunpack.c.l.b16 %v3212
  %v6388 = vunpack.c.l.b16 %v3213
  %v6389 = vunpack.c.l.b16 %v3214
  %v6390 = vunpack.c.l.b16 %v3215
  %v6391 = vunpack.c.l.b16 %v3216
  %v6392 = vunpack.c.l.b16 %v3217
  %v6393 = vunpack.c.l.b16 %v3218
  %v6394 = vunpack.c.l.b16 %v3219
  %v6395 = vunpack.c.l.b16 %v3220
  %v6396 = vunpack.c.l.b16 %v3221
  %v6397 = vunpack.c.l.b16 %v3222
  %v6398 = vunpack.c.l.b16 %v3223
  %v6399 = vunpack.c.l.b16 %v3224
  %v6400 = vunpack.c.l.b16 %v3225
  %v6401 = vunpack.c.l.b16 %v3226
  %v6402 = vunpack.c.l.b16 %v3227
  %v6403 = vunpack.c.l.b16 %v3228
  %v6404 = vunpack.c.l.b16 %v3229
  %v6405 = vunpack.c.l.b16 %v3230
  %v6406 = vunpack.c.l.b16 %v3231
  %v6407 = vunpack.c.l.b16 %v3232
  %v6408 = vunpack.c.l.b16 %v3233
  %v6409 = vunpack.c.l.b16 %v3234
  %v6410 = vunpack.c.l.b16 %v3235
  %v6411 = vunpack.c.l.b16 %v3236
  %v6412 = vunpack.c.l.b16 %v3237
  %v6413 = vunpack.c.l.b16 %v3238
  %v6414 = vunpack.c.l.b16 %v3239
  %v6415 = vunpack.c.l.b16 %v3240
  %v6416 = vpack.c.b16 %v6353, %v6352
  %v6417 = vpack.c.b16 %v6355, %v6354
  %v6418 = vpack.c.b16 %v6357, %v6356
  %v6419 = vpack.c.b16 %v6359, %v6358
  %v6420 = vpack.c.b16 %v6361, %v6360
  %v6421 = vpack.c.b16 %v6363, %v6362
  %v6422 = vpack.c.b16 %v6365, %v6364
  %v6423 = vpack.c.b16 %v6367, %v6366
  %v6424 = vpack.c.b16 %v6369, %v6368
  %v6425 = vpack.c.b16 %v6371, %v6370
  %v6426 = vpack.c.b16 %v6373, %v6372
  %v6427 = vpack.c.b16 %v6375, %v6374
  %v6428 = vpack.c.b16 %v6377, %v6376
  %v6429 = vpack.c.b16 %v6379, %v6378
  %v6430 = vpack.c.b16 %v6381, %v6380
  %v6431 = vpack.c.b16 %v6383, %v6382
  %v6432 = vpack.c.b16 %v6385, %v6384
  %v6433 = vpack.c.b16 %v6387, %v6386
  %v6434 = vpack.c.b16 %v6389, %v6388
  %v6435 = vpack.c.b16 %v6391, %v6390
  %v6436 = vpack.c.b16 %v6393, %v6392
  %v6437 = vpack.c.b16 %v6395, %v6394
  %v6438 = vpack.c.b16 %v6397, %v6396
  %v6439 = vpack.c.b16 %v6399, %v6398
  %v6440 = vpack.c.b16 %v6401, %v6400
  %v6441 = vpack.c.b16 %v6403, %v6402
  %v6442 = vpack.c.b16 %v6405, %v6404
  %v6443 = vpack.c.b16 %v6407, %v6406
  %v6444 = vpack.c.b16 %v6409, %v6408
  %v6445 = vpack.c.b16 %v6411, %v6410
  %v6446 = vpack.c.b16 %v6413, %v6412
  %v6447 = vpack.c.b16 %v6415, %v6414
  %6480 = vmatprep.subr.bf16.mxu0 0
  %6481 = vmatpush1.bf16.msra.mxu0 %v6416
  %6482 = vmatprep.subr.bf16.mxu0 0
  %6483 = vmatpush1.bf16.msra.mxu0 %v6417
  %6484 = vmatprep.subr.bf16.mxu0 0
  %6485 = vmatpush1.bf16.msra.mxu0 %v6418
  %6486 = vmatprep.subr.bf16.mxu0 0
  %6487 = vmatpush1.bf16.msra.mxu0 %v6419
  %6488 = vmatprep.subr.bf16.mxu0 0
  %6489 = vmatpush1.bf16.msra.mxu0 %v6420
  %6490 = vmatprep.subr.bf16.mxu0 0
  %6491 = vmatpush1.bf16.msra.mxu0 %v6421
  %6492 = vmatprep.subr.bf16.mxu0 0
  %6493 = vmatpush1.bf16.msra.mxu0 %v6422
  %6494 = vmatprep.subr.bf16.mxu0 0
  %6495 = vmatpush1.bf16.msra.mxu0 %v6423
  %6496 = vmatprep.subr.bf16.mxu0 0
  %6497 = vmatpush1.bf16.msra.mxu0 %v6424
  %6498 = vmatprep.subr.bf16.mxu0 0
  %6499 = vmatpush1.bf16.msra.mxu0 %v6425
  %6500 = vmatprep.subr.bf16.mxu0 0
  %6501 = vmatpush1.bf16.msra.mxu0 %v6426
  %6502 = vmatprep.subr.bf16.mxu0 0
  %6503 = vmatpush1.bf16.msra.mxu0 %v6427
  %6504 = vmatprep.subr.bf16.mxu0 0
  %6505 = vmatpush1.bf16.msra.mxu0 %v6428
  %6506 = vmatprep.subr.bf16.mxu0 0
  %6507 = vmatpush1.bf16.msra.mxu0 %v6429
  %6508 = vmatprep.subr.bf16.mxu0 0
  %6509 = vmatpush1.bf16.msra.mxu0 %v6430
  %6510 = vmatprep.subr.bf16.mxu0 0
  %6511 = vmatpush1.bf16.msra.mxu0 %v6431
  %6512 = vmatprep.mubr.bf16.mxu0 %v2514
  %6513 = vmatmul.mubr.bf16.gmra.mrb[0].mxu0 %v2513
  %v6514 = vpop.f32.mrb[0].mxu0
  %v6515 = vadd.f32 %v3566, %v6514
  %v6516 = vpop.f32.mrb[0].mxu0
  %v6517 = vpop.f32.mrb[0].mxu0
  %v6518 = vpop.f32.mrb[0].mxu0
  %6519 = vdwg.mxu0
  %6520 = vmatprep.subr.bf16.mxu0 0
  %6521 = vmatpush1.bf16.msra.mxu0 %v6432
  %6522 = vmatprep.subr.bf16.mxu0 0
  %6523 = vmatpush1.bf16.msra.mxu0 %v6433
  %6524 = vmatprep.subr.bf16.mxu0 0
  %6525 = vmatpush1.bf16.msra.mxu0 %v6434
  %6526 = vmatprep.subr.bf16.mxu0 0
  %6527 = vmatpush1.bf16.msra.mxu0 %v6435
  %6528 = vmatprep.subr.bf16.mxu0 0
  %6529 = vmatpush1.bf16.msra.mxu0 %v6436
  %6530 = vmatprep.subr.bf16.mxu0 0
  %6531 = vmatpush1.bf16.msra.mxu0 %v6437
  %6532 = vmatprep.subr.bf16.mxu0 0
  %6533 = vmatpush1.bf16.msra.mxu0 %v6438
  %6534 = vmatprep.subr.bf16.mxu0 0
  %6535 = vmatpush1.bf16.msra.mxu0 %v6439
  %6536 = vmatprep.subr.bf16.mxu0 0
  %6537 = vmatpush1.bf16.msra.mxu0 %v6440
  %6538 = vmatprep.subr.bf16.mxu0 0
  %6539 = vmatpush1.bf16.msra.mxu0 %v6441
  %6540 = vmatprep.subr.bf16.mxu0 0
  %6541 = vmatpush1.bf16.msra.mxu0 %v6442
  %6542 = vmatprep.subr.bf16.mxu0 0
  %6543 = vmatpush1.bf16.msra.mxu0 %v6443
  %6544 = vmatprep.subr.bf16.mxu0 0
  %6545 = vmatpush1.bf16.msra.mxu0 %v6444
  %6546 = vmatprep.subr.bf16.mxu0 0
  %6547 = vmatpush1.bf16.msra.mxu0 %v6445
  %6548 = vmatprep.subr.bf16.mxu0 0
  %6549 = vmatpush1.bf16.msra.mxu0 %v6446
  %6550 = vmatprep.subr.bf16.mxu0 0
  %6551 = vmatpush1.bf16.msra.mxu0 %v6447
  %6552 = vmatprep.mubr.bf16.mxu0 %v2516
  %6553 = vmatmul.mubr.bf16.gmra.mrb[0].mxu0 %v2515
  %v6554 = vpop.f32.mrb[0].mxu0
  %v6555 = vadd.f32 %v6515, %v6554
  %v6556 = vpop.f32.mrb[0].mxu0
  %v6557 = vpop.f32.mrb[0].mxu0
  %v6558 = vpop.f32.mrb[0].mxu0
  %6559 = vdwg.mxu0
  %v6624 = vunpack.c.l.b16 %v3241
  %v6625 = vunpack.c.l.b16 %v3242
  %v6626 = vunpack.c.l.b16 %v3243
  %v6627 = vunpack.c.l.b16 %v3244
  %v6628 = vunpack.c.l.b16 %v3245
  %v6629 = vunpack.c.l.b16 %v3246
  %v6630 = vunpack.c.l.b16 %v3247
  %v6631 = vunpack.c.l.b16 %v3248
  %v6632 = vunpack.c.l.b16 %v3249
  %v6633 = vunpack.c.l.b16 %v3250
  %v6634 = vunpack.c.l.b16 %v3251
  %v6635 = vunpack.c.l.b16 %v3252
  %v6636 = vunpack.c.l.b16 %v3253
  %v6637 = vunpack.c.l.b16 %v3254
  %v6638 = vunpack.c.l.b16 %v3255
  %v6639 = vunpack.c.l.b16 %v3256
  %v6640 = vunpack.c.l.b16 %v3257
  %v6641 = vunpack.c.l.b16 %v3258
  %v6642 = vunpack.c.l.b16 %v3259
  %v6643 = vunpack.c.l.b16 %v3260
  %v6644 = vunpack.c.l.b16 %v3261
  %v6645 = vunpack.c.l.b16 %v3262
  %v6646 = vunpack.c.l.b16 %v3263
  %v6647 = vunpack.c.l.b16 %v3264
  %v6648 = vunpack.c.l.b16 %v3265
  %v6649 = vunpack.c.l.b16 %v3266
  %v6650 = vunpack.c.l.b16 %v3267
  %v6651 = vunpack.c.l.b16 %v3268
  %v6652 = vunpack.c.l.b16 %v3269
  %v6653 = vunpack.c.l.b16 %v3270
  %v6654 = vunpack.c.l.b16 %v3271
  %v6655 = vunpack.c.l.b16 %v3272
  %v6656 = vunpack.c.l.b16 %v3273
  %v6657 = vunpack.c.l.b16 %v3274
  %v6658 = vunpack.c.l.b16 %v3275
  %v6659 = vunpack.c.l.b16 %v3276
  %v6660 = vunpack.c.l.b16 %v3277
  %v6661 = vunpack.c.l.b16 %v3278
  %v6662 = vunpack.c.l.b16 %v3279
  %v6663 = vunpack.c.l.b16 %v3280
  %v6664 = vunpack.c.l.b16 %v3281
  %v6665 = vunpack.c.l.b16 %v3282
  %v6666 = vunpack.c.l.b16 %v3283
  %v6667 = vunpack.c.l.b16 %v3284
  %v6668 = vunpack.c.l.b16 %v3285
  %v6669 = vunpack.c.l.b16 %v3286
  %v6670 = vunpack.c.l.b16 %v3287
  %v6671 = vunpack.c.l.b16 %v3288
  %v6672 = vunpack.c.l.b16 %v3289
  %v6673 = vunpack.c.l.b16 %v3290
  %v6674 = vunpack.c.l.b16 %v3291
  %v6675 = vunpack.c.l.b16 %v3292
  %v6676 = vunpack.c.l.b16 %v3293
  %v6677 = vunpack.c.l.b16 %v3294
  %v6678 = vunpack.c.l.b16 %v3295
  %v6679 = vunpack.c.l.b16 %v3296
  %v6680 = vunpack.c.l.b16 %v3297
  %v6681 = vunpack.c.l.b16 %v3298
  %v6682 = vunpack.c.l.b16 %v3299
  %v6683 = vunpack.c.l.b16 %v3300
  %v6684 = vunpack.c.l.b16 %v3301
  %v6685 = vunpack.c.l.b16 %v3302
  %v6686 = vunpack.c.l.b16 %v3303
  %v6687 = vunpack.c.l.b16 %v3304
  %v6688 = vpack.c.b16 %v6625, %v6624
  %v6689 = vpack.c.b16 %v6627, %v6626
  %v6690 = vpack.c.b16 %v6629, %v6628
  %v6691 = vpack.c.b16 %v6631, %v6630
  %v6692 = vpack.c.b16 %v6633, %v6632
  %v6693 = vpack.c.b16 %v6635, %v6634
  %v6694 = vpack.c.b16 %v6637, %v6636
  %v6695 = vpack.c.b16 %v6639, %v6638
  %v6696 = vpack.c.b16 %v6641, %v6640
  %v6697 = vpack.c.b16 %v6643, %v6642
  %v6698 = vpack.c.b16 %v6645, %v6644
  %v6699 = vpack.c.b16 %v6647, %v6646
  %v6700 = vpack.c.b16 %v6649, %v6648
  %v6701 = vpack.c.b16 %v6651, %v6650
  %v6702 = vpack.c.b16 %v6653, %v6652
  %v6703 = vpack.c.b16 %v6655, %v6654
  %v6704 = vpack.c.b16 %v6657, %v6656
  %v6705 = vpack.c.b16 %v6659, %v6658
  %v6706 = vpack.c.b16 %v6661, %v6660
  %v6707 = vpack.c.b16 %v6663, %v6662
  %v6708 = vpack.c.b16 %v6665, %v6664
  %v6709 = vpack.c.b16 %v6667, %v6666
  %v6710 = vpack.c.b16 %v6669, %v6668
  %v6711 = vpack.c.b16 %v6671, %v6670
  %v6712 = vpack.c.b16 %v6673, %v6672
  %v6713 = vpack.c.b16 %v6675, %v6674
  %v6714 = vpack.c.b16 %v6677, %v6676
  %v6715 = vpack.c.b16 %v6679, %v6678
  %v6716 = vpack.c.b16 %v6681, %v6680
  %v6717 = vpack.c.b16 %v6683, %v6682
  %v6718 = vpack.c.b16 %v6685, %v6684
  %v6719 = vpack.c.b16 %v6687, %v6686
  %6752 = vmatprep.subr.bf16.mxu0 0
  %6753 = vmatpush1.bf16.msra.mxu0 %v6688
  %6754 = vmatprep.subr.bf16.mxu0 0
  %6755 = vmatpush1.bf16.msra.mxu0 %v6689
  %6756 = vmatprep.subr.bf16.mxu0 0
  %6757 = vmatpush1.bf16.msra.mxu0 %v6690
  %6758 = vmatprep.subr.bf16.mxu0 0
  %6759 = vmatpush1.bf16.msra.mxu0 %v6691
  %6760 = vmatprep.subr.bf16.mxu0 0
  %6761 = vmatpush1.bf16.msra.mxu0 %v6692
  %6762 = vmatprep.subr.bf16.mxu0 0
  %6763 = vmatpush1.bf16.msra.mxu0 %v6693
  %6764 = vmatprep.subr.bf16.mxu0 0
  %6765 = vmatpush1.bf16.msra.mxu0 %v6694
  %6766 = vmatprep.subr.bf16.mxu0 0
  %6767 = vmatpush1.bf16.msra.mxu0 %v6695
  %6768 = vmatprep.subr.bf16.mxu0 0
  %6769 = vmatpush1.bf16.msra.mxu0 %v6696
  %6770 = vmatprep.subr.bf16.mxu0 0
  %6771 = vmatpush1.bf16.msra.mxu0 %v6697
  %6772 = vmatprep.subr.bf16.mxu0 0
  %6773 = vmatpush1.bf16.msra.mxu0 %v6698
  %6774 = vmatprep.subr.bf16.mxu0 0
  %6775 = vmatpush1.bf16.msra.mxu0 %v6699
  %6776 = vmatprep.subr.bf16.mxu0 0
  %6777 = vmatpush1.bf16.msra.mxu0 %v6700
  %6778 = vmatprep.subr.bf16.mxu0 0
  %6779 = vmatpush1.bf16.msra.mxu0 %v6701
  %6780 = vmatprep.subr.bf16.mxu0 0
  %6781 = vmatpush1.bf16.msra.mxu0 %v6702
  %6782 = vmatprep.subr.bf16.mxu0 0
  %6783 = vmatpush1.bf16.msra.mxu0 %v6703
  %6784 = vmatprep.mubr.bf16.mxu0 %v2518
  %6785 = vmatmul.mubr.bf16.gmra.mrb[0].mxu0 %v2517
  %v6786 = vpop.f32.mrb[0].mxu0
  %v6787 = vadd.f32 %v3566, %v6786
  %v6788 = vpop.f32.mrb[0].mxu0
  %v6789 = vpop.f32.mrb[0].mxu0
  %v6790 = vpop.f32.mrb[0].mxu0
  %6791 = vdwg.mxu0
  %6792 = vmatprep.subr.bf16.mxu0 0
  %6793 = vmatpush1.bf16.msra.mxu0 %v6704
  %6794 = vmatprep.subr.bf16.mxu0 0
  %6795 = vmatpush1.bf16.msra.mxu0 %v6705
  %6796 = vmatprep.subr.bf16.mxu0 0
  %6797 = vmatpush1.bf16.msra.mxu0 %v6706
  %6798 = vmatprep.subr.bf16.mxu0 0
  %6799 = vmatpush1.bf16.msra.mxu0 %v6707
  %6800 = vmatprep.subr.bf16.mxu0 0
  %6801 = vmatpush1.bf16.msra.mxu0 %v6708
  %6802 = vmatprep.subr.bf16.mxu0 0
  %6803 = vmatpush1.bf16.msra.mxu0 %v6709
  %6804 = vmatprep.subr.bf16.mxu0 0
  %6805 = vmatpush1.bf16.msra.mxu0 %v6710
  %6806 = vmatprep.subr.bf16.mxu0 0
  %6807 = vmatpush1.bf16.msra.mxu0 %v6711
  %6808 = vmatprep.subr.bf16.mxu0 0
  %6809 = vmatpush1.bf16.msra.mxu0 %v6712
  %6810 = vmatprep.subr.bf16.mxu0 0
  %6811 = vmatpush1.bf16.msra.mxu0 %v6713
  %6812 = vmatprep.subr.bf16.mxu0 0
  %6813 = vmatpush1.bf16.msra.mxu0 %v6714
  %6814 = vmatprep.subr.bf16.mxu0 0
  %6815 = vmatpush1.bf16.msra.mxu0 %v6715
  %6816 = vmatprep.subr.bf16.mxu0 0
  %6817 = vmatpush1.bf16.msra.mxu0 %v6716
  %6818 = vmatprep.subr.bf16.mxu0 0
  %6819 = vmatpush1.bf16.msra.mxu0 %v6717
  %6820 = vmatprep.subr.bf16.mxu0 0
  %6821 = vmatpush1.bf16.msra.mxu0 %v6718
  %6822 = vmatprep.subr.bf16.mxu0 0
  %6823 = vmatpush1.bf16.msra.mxu0 %v6719
  %6824 = vmatprep.mubr.bf16.mxu0 %v2520
  %6825 = vmatmul.mubr.bf16.gmra.mrb[0].mxu0 %v2519
  %v6826 = vpop.f32.mrb[0].mxu0
  %v6827 = vadd.f32 %v6787, %v6826
  %v6828 = vpop.f32.mrb[0].mxu0
  %v6829 = vpop.f32.mrb[0].mxu0
  %v6830 = vpop.f32.mrb[0].mxu0
  %6831 = vdwg.mxu0
  %v6896 = vunpack.c.l.b16 %v3305
  %v6897 = vunpack.c.l.b16 %v3306
  %v6898 = vunpack.c.l.b16 %v3307
  %v6899 = vunpack.c.l.b16 %v3308
  %v6900 = vunpack.c.l.b16 %v3309
  %v6901 = vunpack.c.l.b16 %v3310
  %v6902 = vunpack.c.l.b16 %v3311
  %v6903 = vunpack.c.l.b16 %v3312
  %v6904 = vunpack.c.l.b16 %v3313
  %v6905 = vunpack.c.l.b16 %v3314
  %v6906 = vunpack.c.l.b16 %v3315
  %v6907 = vunpack.c.l.b16 %v3316
  %v6908 = vunpack.c.l.b16 %v3317
  %v6909 = vunpack.c.l.b16 %v3318
  %v6910 = vunpack.c.l.b16 %v3319
  %v6911 = vunpack.c.l.b16 %v3320
  %v6912 = vunpack.c.l.b16 %v3321
  %v6913 = vunpack.c.l.b16 %v3322
  %v6914 = vunpack.c.l.b16 %v3323
  %v6915 = vunpack.c.l.b16 %v3324
  %v6916 = vunpack.c.l.b16 %v3325
  %v6917 = vunpack.c.l.b16 %v3326
  %v6918 = vunpack.c.l.b16 %v3327
  %v6919 = vunpack.c.l.b16 %v3328
  %v6920 = vunpack.c.l.b16 %v3329
  %v6921 = vunpack.c.l.b16 %v3330
  %v6922 = vunpack.c.l.b16 %v3331
  %v6923 = vunpack.c.l.b16 %v3332
  %v6924 = vunpack.c.l.b16 %v3333
  %v6925 = vunpack.c.l.b16 %v3334
  %v6926 = vunpack.c.l.b16 %v3335
  %v6927 = vunpack.c.l.b16 %v3336
  %v6928 = vunpack.c.l.b16 %v3337
  %v6929 = vunpack.c.l.b16 %v3338
  %v6930 = vunpack.c.l.b16 %v3339
  %v6931 = vunpack.c.l.b16 %v3340
  %v6932 = vunpack.c.l.b16 %v3341
  %v6933 = vunpack.c.l.b16 %v3342
  %v6934 = vunpack.c.l.b16 %v3343
  %v6935 = vunpack.c.l.b16 %v3344
  %v6936 = vunpack.c.l.b16 %v3345
  %v6937 = vunpack.c.l.b16 %v3346
  %v6938 = vunpack.c.l.b16 %v3347
  %v6939 = vunpack.c.l.b16 %v3348
  %v6940 = vunpack.c.l.b16 %v3349
  %v6941 = vunpack.c.l.b16 %v3350
  %v6942 = vunpack.c.l.b16 %v3351
  %v6943 = vunpack.c.l.b16 %v3352
  %v6944 = vunpack.c.l.b16 %v3353
  %v6945 = vunpack.c.l.b16 %v3354
  %v6946 = vunpack.c.l.b16 %v3355
  %v6947 = vunpack.c.l.b16 %v3356
  %v6948 = vunpack.c.l.b16 %v3357
  %v6949 = vunpack.c.l.b16 %v3358
  %v6950 = vunpack.c.l.b16 %v3359
  %v6951 = vunpack.c.l.b16 %v3360
  %v6952 = vunpack.c.l.b16 %v3361
  %v6953 = vunpack.c.l.b16 %v3362
  %v6954 = vunpack.c.l.b16 %v3363
  %v6955 = vunpack.c.l.b16 %v3364
  %v6956 = vunpack.c.l.b16 %v3365
  %v6957 = vunpack.c.l.b16 %v3366
  %v6958 = vunpack.c.l.b16 %v3367
  %v6959 = vunpack.c.l.b16 %v3368
  %v6960 = vpack.c.b16 %v6897, %v6896
  %v6961 = vpack.c.b16 %v6899, %v6898
  %v6962 = vpack.c.b16 %v6901, %v6900
  %v6963 = vpack.c.b16 %v6903, %v6902
  %v6964 = vpack.c.b16 %v6905, %v6904
  %v6965 = vpack.c.b16 %v6907, %v6906
  %v6966 = vpack.c.b16 %v6909, %v6908
  %v6967 = vpack.c.b16 %v6911, %v6910
  %v6968 = vpack.c.b16 %v6913, %v6912
  %v6969 = vpack.c.b16 %v6915, %v6914
  %v6970 = vpack.c.b16 %v6917, %v6916
  %v6971 = vpack.c.b16 %v6919, %v6918
  %v6972 = vpack.c.b16 %v6921, %v6920
  %v6973 = vpack.c.b16 %v6923, %v6922
  %v6974 = vpack.c.b16 %v6925, %v6924
  %v6975 = vpack.c.b16 %v6927, %v6926
  %v6976 = vpack.c.b16 %v6929, %v6928
  %v6977 = vpack.c.b16 %v6931, %v6930
  %v6978 = vpack.c.b16 %v6933, %v6932
  %v6979 = vpack.c.b16 %v6935, %v6934
  %v6980 = vpack.c.b16 %v6937, %v6936
  %v6981 = vpack.c.b16 %v6939, %v6938
  %v6982 = vpack.c.b16 %v6941, %v6940
  %v6983 = vpack.c.b16 %v6943, %v6942
  %v6984 = vpack.c.b16 %v6945, %v6944
  %v6985 = vpack.c.b16 %v6947, %v6946
  %v6986 = vpack.c.b16 %v6949, %v6948
  %v6987 = vpack.c.b16 %v6951, %v6950
  %v6988 = vpack.c.b16 %v6953, %v6952
  %v6989 = vpack.c.b16 %v6955, %v6954
  %v6990 = vpack.c.b16 %v6957, %v6956
  %v6991 = vpack.c.b16 %v6959, %v6958
  %7024 = vmatprep.subr.bf16.mxu0 0
  %7025 = vmatpush1.bf16.msra.mxu0 %v6960
  %7026 = vmatprep.subr.bf16.mxu0 0
  %7027 = vmatpush1.bf16.msra.mxu0 %v6961
  %7028 = vmatprep.subr.bf16.mxu0 0
  %7029 = vmatpush1.bf16.msra.mxu0 %v6962
  %7030 = vmatprep.subr.bf16.mxu0 0
  %7031 = vmatpush1.bf16.msra.mxu0 %v6963
  %7032 = vmatprep.subr.bf16.mxu0 0
  %7033 = vmatpush1.bf16.msra.mxu0 %v6964
  %7034 = vmatprep.subr.bf16.mxu0 0
  %7035 = vmatpush1.bf16.msra.mxu0 %v6965
  %7036 = vmatprep.subr.bf16.mxu0 0
  %7037 = vmatpush1.bf16.msra.mxu0 %v6966
  %7038 = vmatprep.subr.bf16.mxu0 0
  %7039 = vmatpush1.bf16.msra.mxu0 %v6967
  %7040 = vmatprep.subr.bf16.mxu0 0
  %7041 = vmatpush1.bf16.msra.mxu0 %v6968
  %7042 = vmatprep.subr.bf16.mxu0 0
  %7043 = vmatpush1.bf16.msra.mxu0 %v6969
  %7044 = vmatprep.subr.bf16.mxu0 0
  %7045 = vmatpush1.bf16.msra.mxu0 %v6970
  %7046 = vmatprep.subr.bf16.mxu0 0
  %7047 = vmatpush1.bf16.msra.mxu0 %v6971
  %7048 = vmatprep.subr.bf16.mxu0 0
  %7049 = vmatpush1.bf16.msra.mxu0 %v6972
  %7050 = vmatprep.subr.bf16.mxu0 0
  %7051 = vmatpush1.bf16.msra.mxu0 %v6973
  %7052 = vmatprep.subr.bf16.mxu0 0
  %7053 = vmatpush1.bf16.msra.mxu0 %v6974
  %7054 = vmatprep.subr.bf16.mxu0 0
  %7055 = vmatpush1.bf16.msra.mxu0 %v6975
  %7056 = vmatprep.mubr.bf16.mxu0 %v2522
  %7057 = vmatmul.mubr.bf16.gmra.mrb[0].mxu0 %v2521
  %v7058 = vpop.f32.mrb[0].mxu0
  %v7059 = vadd.f32 %v3566, %v7058
  %v7060 = vpop.f32.mrb[0].mxu0
  %v7061 = vpop.f32.mrb[0].mxu0
  %v7062 = vpop.f32.mrb[0].mxu0
  %7063 = vdwg.mxu0
  %7064 = vmatprep.subr.bf16.mxu0 0
  %7065 = vmatpush1.bf16.msra.mxu0 %v6976
  %7066 = vmatprep.subr.bf16.mxu0 0
  %7067 = vmatpush1.bf16.msra.mxu0 %v6977
  %7068 = vmatprep.subr.bf16.mxu0 0
  %7069 = vmatpush1.bf16.msra.mxu0 %v6978
  %7070 = vmatprep.subr.bf16.mxu0 0
  %7071 = vmatpush1.bf16.msra.mxu0 %v6979
  %7072 = vmatprep.subr.bf16.mxu0 0
  %7073 = vmatpush1.bf16.msra.mxu0 %v6980
  %7074 = vmatprep.subr.bf16.mxu0 0
  %7075 = vmatpush1.bf16.msra.mxu0 %v6981
  %7076 = vmatprep.subr.bf16.mxu0 0
  %7077 = vmatpush1.bf16.msra.mxu0 %v6982
  %7078 = vmatprep.subr.bf16.mxu0 0
  %7079 = vmatpush1.bf16.msra.mxu0 %v6983
  %7080 = vmatprep.subr.bf16.mxu0 0
  %7081 = vmatpush1.bf16.msra.mxu0 %v6984
  %7082 = vmatprep.subr.bf16.mxu0 0
  %7083 = vmatpush1.bf16.msra.mxu0 %v6985
  %7084 = vmatprep.subr.bf16.mxu0 0
  %7085 = vmatpush1.bf16.msra.mxu0 %v6986
  %7086 = vmatprep.subr.bf16.mxu0 0
  %7087 = vmatpush1.bf16.msra.mxu0 %v6987
  %7088 = vmatprep.subr.bf16.mxu0 0
  %7089 = vmatpush1.bf16.msra.mxu0 %v6988
  %7090 = vmatprep.subr.bf16.mxu0 0
  %7091 = vmatpush1.bf16.msra.mxu0 %v6989
  %7092 = vmatprep.subr.bf16.mxu0 0
  %7093 = vmatpush1.bf16.msra.mxu0 %v6990
  %7094 = vmatprep.subr.bf16.mxu0 0
  %7095 = vmatpush1.bf16.msra.mxu0 %v6991
  %7096 = vmatprep.mubr.bf16.mxu0 %v2524
  %7097 = vmatmul.mubr.bf16.gmra.mrb[0].mxu0 %v2523
  %v7098 = vpop.f32.mrb[0].mxu0
  %v7099 = vadd.f32 %v7059, %v7098
  %v7100 = vpop.f32.mrb[0].mxu0
  %v7101 = vpop.f32.mrb[0].mxu0
  %v7102 = vpop.f32.mrb[0].mxu0
  %7103 = vdwg.mxu0
  %v7168 = vunpack.c.l.b16 %v3369
  %v7169 = vunpack.c.l.b16 %v3370
  %v7170 = vunpack.c.l.b16 %v3371
  %v7171 = vunpack.c.l.b16 %v3372
  %v7172 = vunpack.c.l.b16 %v3373
  %v7173 = vunpack.c.l.b16 %v3374
  %v7174 = vunpack.c.l.b16 %v3375
  %v7175 = vunpack.c.l.b16 %v3376
  %v7176 = vunpack.c.l.b16 %v3377
  %v7177 = vunpack.c.l.b16 %v3378
  %v7178 = vunpack.c.l.b16 %v3379
  %v7179 = vunpack.c.l.b16 %v3380
  %v7180 = vunpack.c.l.b16 %v3381
  %v7181 = vunpack.c.l.b16 %v3382
  %v7182 = vunpack.c.l.b16 %v3383
  %v7183 = vunpack.c.l.b16 %v3384
  %v7184 = vunpack.c.l.b16 %v3385
  %v7185 = vunpack.c.l.b16 %v3386
  %v7186 = vunpack.c.l.b16 %v3387
  %v7187 = vunpack.c.l.b16 %v3388
  %v7188 = vunpack.c.l.b16 %v3389
  %v7189 = vunpack.c.l.b16 %v3390
  %v7190 = vunpack.c.l.b16 %v3391
  %v7191 = vunpack.c.l.b16 %v3392
  %v7192 = vunpack.c.l.b16 %v3393
  %v7193 = vunpack.c.l.b16 %v3394
  %v7194 = vunpack.c.l.b16 %v3395
  %v7195 = vunpack.c.l.b16 %v3396
  %v7196 = vunpack.c.l.b16 %v3397
  %v7197 = vunpack.c.l.b16 %v3398
  %v7198 = vunpack.c.l.b16 %v3399
  %v7199 = vunpack.c.l.b16 %v3400
  %v7200 = vunpack.c.l.b16 %v3401
  %v7201 = vunpack.c.l.b16 %v3402
  %v7202 = vunpack.c.l.b16 %v3403
  %v7203 = vunpack.c.l.b16 %v3404
  %v7204 = vunpack.c.l.b16 %v3405
  %v7205 = vunpack.c.l.b16 %v3406
  %v7206 = vunpack.c.l.b16 %v3407
  %v7207 = vunpack.c.l.b16 %v3408
  %v7208 = vunpack.c.l.b16 %v3409
  %v7209 = vunpack.c.l.b16 %v3410
  %v7210 = vunpack.c.l.b16 %v3411
  %v7211 = vunpack.c.l.b16 %v3412
  %v7212 = vunpack.c.l.b16 %v3413
  %v7213 = vunpack.c.l.b16 %v3414
  %v7214 = vunpack.c.l.b16 %v3415
  %v7215 = vunpack.c.l.b16 %v3416
  %v7216 = vunpack.c.l.b16 %v3417
  %v7217 = vunpack.c.l.b16 %v3418
  %v7218 = vunpack.c.l.b16 %v3419
  %v7219 = vunpack.c.l.b16 %v3420
  %v7220 = vunpack.c.l.b16 %v3421
  %v7221 = vunpack.c.l.b16 %v3422
  %v7222 = vunpack.c.l.b16 %v3423
  %v7223 = vunpack.c.l.b16 %v3424
  %v7224 = vunpack.c.l.b16 %v3425
  %v7225 = vunpack.c.l.b16 %v3426
  %v7226 = vunpack.c.l.b16 %v3427
  %v7227 = vunpack.c.l.b16 %v3428
  %v7228 = vunpack.c.l.b16 %v3429
  %v7229 = vunpack.c.l.b16 %v3430
  %v7230 = vunpack.c.l.b16 %v3431
  %v7231 = vunpack.c.l.b16 %v3432
  %v7232 = vpack.c.b16 %v7169, %v7168
  %v7233 = vpack.c.b16 %v7171, %v7170
  %v7234 = vpack.c.b16 %v7173, %v7172
  %v7235 = vpack.c.b16 %v7175, %v7174
  %v7236 = vpack.c.b16 %v7177, %v7176
  %v7237 = vpack.c.b16 %v7179, %v7178
  %v7238 = vpack.c.b16 %v7181, %v7180
  %v7239 = vpack.c.b16 %v7183, %v7182
  %v7240 = vpack.c.b16 %v7185, %v7184
  %v7241 = vpack.c.b16 %v7187, %v7186
  %v7242 = vpack.c.b16 %v7189, %v7188
  %v7243 = vpack.c.b16 %v7191, %v7190
  %v7244 = vpack.c.b16 %v7193, %v7192
  %v7245 = vpack.c.b16 %v7195, %v7194
  %v7246 = vpack.c.b16 %v7197, %v7196
  %v7247 = vpack.c.b16 %v7199, %v7198
  %v7248 = vpack.c.b16 %v7201, %v7200
  %v7249 = vpack.c.b16 %v7203, %v7202
  %v7250 = vpack.c.b16 %v7205, %v7204
  %v7251 = vpack.c.b16 %v7207, %v7206
  %v7252 = vpack.c.b16 %v7209, %v7208
  %v7253 = vpack.c.b16 %v7211, %v7210
  %v7254 = vpack.c.b16 %v7213, %v7212
  %v7255 = vpack.c.b16 %v7215, %v7214
  %v7256 = vpack.c.b16 %v7217, %v7216
  %v7257 = vpack.c.b16 %v7219, %v7218
  %v7258 = vpack.c.b16 %v7221, %v7220
  %v7259 = vpack.c.b16 %v7223, %v7222
  %v7260 = vpack.c.b16 %v7225, %v7224
  %v7261 = vpack.c.b16 %v7227, %v7226
  %v7262 = vpack.c.b16 %v7229, %v7228
  %v7263 = vpack.c.b16 %v7231, %v7230
  %7296 = vmatprep.subr.bf16.mxu0 0
  %7297 = vmatpush1.bf16.msra.mxu0 %v7232
  %7298 = vmatprep.subr.bf16.mxu0 0
  %7299 = vmatpush1.bf16.msra.mxu0 %v7233
  %7300 = vmatprep.subr.bf16.mxu0 0
  %7301 = vmatpush1.bf16.msra.mxu0 %v7234
  %7302 = vmatprep.subr.bf16.mxu0 0
  %7303 = vmatpush1.bf16.msra.mxu0 %v7235
  %7304 = vmatprep.subr.bf16.mxu0 0
  %7305 = vmatpush1.bf16.msra.mxu0 %v7236
  %7306 = vmatprep.subr.bf16.mxu0 0
  %7307 = vmatpush1.bf16.msra.mxu0 %v7237
  %7308 = vmatprep.subr.bf16.mxu0 0
  %7309 = vmatpush1.bf16.msra.mxu0 %v7238
  %7310 = vmatprep.subr.bf16.mxu0 0
  %7311 = vmatpush1.bf16.msra.mxu0 %v7239
  %7312 = vmatprep.subr.bf16.mxu0 0
  %7313 = vmatpush1.bf16.msra.mxu0 %v7240
  %7314 = vmatprep.subr.bf16.mxu0 0
  %7315 = vmatpush1.bf16.msra.mxu0 %v7241
  %7316 = vmatprep.subr.bf16.mxu0 0
  %7317 = vmatpush1.bf16.msra.mxu0 %v7242
  %7318 = vmatprep.subr.bf16.mxu0 0
  %7319 = vmatpush1.bf16.msra.mxu0 %v7243
  %7320 = vmatprep.subr.bf16.mxu0 0
  %7321 = vmatpush1.bf16.msra.mxu0 %v7244
  %7322 = vmatprep.subr.bf16.mxu0 0
  %7323 = vmatpush1.bf16.msra.mxu0 %v7245
  %7324 = vmatprep.subr.bf16.mxu0 0
  %7325 = vmatpush1.bf16.msra.mxu0 %v7246
  %7326 = vmatprep.subr.bf16.mxu0 0
  %7327 = vmatpush1.bf16.msra.mxu0 %v7247
  %7328 = vmatprep.mubr.bf16.mxu0 %v2526
  %7329 = vmatmul.mubr.bf16.gmra.mrb[0].mxu0 %v2525
  %v7330 = vpop.f32.mrb[0].mxu0
  %v7331 = vadd.f32 %v3566, %v7330
  %v7332 = vpop.f32.mrb[0].mxu0
  %v7333 = vpop.f32.mrb[0].mxu0
  %v7334 = vpop.f32.mrb[0].mxu0
  %7335 = vdwg.mxu0
  %7336 = vmatprep.subr.bf16.mxu0 0
  %7337 = vmatpush1.bf16.msra.mxu0 %v7248
  %7338 = vmatprep.subr.bf16.mxu0 0
  %7339 = vmatpush1.bf16.msra.mxu0 %v7249
  %7340 = vmatprep.subr.bf16.mxu0 0
  %7341 = vmatpush1.bf16.msra.mxu0 %v7250
  %7342 = vmatprep.subr.bf16.mxu0 0
  %7343 = vmatpush1.bf16.msra.mxu0 %v7251
  %7344 = vmatprep.subr.bf16.mxu0 0
  %7345 = vmatpush1.bf16.msra.mxu0 %v7252
  %7346 = vmatprep.subr.bf16.mxu0 0
  %7347 = vmatpush1.bf16.msra.mxu0 %v7253
  %7348 = vmatprep.subr.bf16.mxu0 0
  %7349 = vmatpush1.bf16.msra.mxu0 %v7254
  %7350 = vmatprep.subr.bf16.mxu0 0
  %7351 = vmatpush1.bf16.msra.mxu0 %v7255
  %7352 = vmatprep.subr.bf16.mxu0 0
  %7353 = vmatpush1.bf16.msra.mxu0 %v7256
  %7354 = vmatprep.subr.bf16.mxu0 0
  %7355 = vmatpush1.bf16.msra.mxu0 %v7257
  %7356 = vmatprep.subr.bf16.mxu0 0
  %7357 = vmatpush1.bf16.msra.mxu0 %v7258
  %7358 = vmatprep.subr.bf16.mxu0 0
  %7359 = vmatpush1.bf16.msra.mxu0 %v7259
  %7360 = vmatprep.subr.bf16.mxu0 0
  %7361 = vmatpush1.bf16.msra.mxu0 %v7260
  %7362 = vmatprep.subr.bf16.mxu0 0
  %7363 = vmatpush1.bf16.msra.mxu0 %v7261
  %7364 = vmatprep.subr.bf16.mxu0 0
  %7365 = vmatpush1.bf16.msra.mxu0 %v7262
  %7366 = vmatprep.subr.bf16.mxu0 0
  %7367 = vmatpush1.bf16.msra.mxu0 %v7263
  %7368 = vmatprep.mubr.bf16.mxu0 %v2528
  %7369 = vmatmul.mubr.bf16.gmra.mrb[0].mxu0 %v2527
  %v7370 = vpop.f32.mrb[0].mxu0
  %v7371 = vadd.f32 %v7331, %v7370
  %v7372 = vpop.f32.mrb[0].mxu0
  %v7373 = vpop.f32.mrb[0].mxu0
  %v7374 = vpop.f32.mrb[0].mxu0
  %7375 = vdwg.mxu0
  %v7440 = vunpack.c.l.b16 %v3433
  %v7441 = vunpack.c.l.b16 %v3434
  %v7442 = vunpack.c.l.b16 %v3435
  %v7443 = vunpack.c.l.b16 %v3436
  %v7444 = vunpack.c.l.b16 %v3437
  %v7445 = vunpack.c.l.b16 %v3438
  %v7446 = vunpack.c.l.b16 %v3439
  %v7447 = vunpack.c.l.b16 %v3440
  %v7448 = vunpack.c.l.b16 %v3441
  %v7449 = vunpack.c.l.b16 %v3442
  %v7450 = vunpack.c.l.b16 %v3443
  %v7451 = vunpack.c.l.b16 %v3444
  %v7452 = vunpack.c.l.b16 %v3445
  %v7453 = vunpack.c.l.b16 %v3446
  %v7454 = vunpack.c.l.b16 %v3447
  %v7455 = vunpack.c.l.b16 %v3448
  %v7456 = vunpack.c.l.b16 %v3449
  %v7457 = vunpack.c.l.b16 %v3450
  %v7458 = vunpack.c.l.b16 %v3451
  %v7459 = vunpack.c.l.b16 %v3452
  %v7460 = vunpack.c.l.b16 %v3453
  %v7461 = vunpack.c.l.b16 %v3454
  %v7462 = vunpack.c.l.b16 %v3455
  %v7463 = vunpack.c.l.b16 %v3456
  %v7464 = vunpack.c.l.b16 %v3457
  %v7465 = vunpack.c.l.b16 %v3458
  %v7466 = vunpack.c.l.b16 %v3459
  %v7467 = vunpack.c.l.b16 %v3460
  %v7468 = vunpack.c.l.b16 %v3461
  %v7469 = vunpack.c.l.b16 %v3462
  %v7470 = vunpack.c.l.b16 %v3463
  %v7471 = vunpack.c.l.b16 %v3464
  %v7472 = vunpack.c.l.b16 %v3465
  %v7473 = vunpack.c.l.b16 %v3466
  %v7474 = vunpack.c.l.b16 %v3467
  %v7475 = vunpack.c.l.b16 %v3468
  %v7476 = vunpack.c.l.b16 %v3469
  %v7477 = vunpack.c.l.b16 %v3470
  %v7478 = vunpack.c.l.b16 %v3471
  %v7479 = vunpack.c.l.b16 %v3472
  %v7480 = vunpack.c.l.b16 %v3473
  %v7481 = vunpack.c.l.b16 %v3474
  %v7482 = vunpack.c.l.b16 %v3475
  %v7483 = vunpack.c.l.b16 %v3476
  %v7484 = vunpack.c.l.b16 %v3477
  %v7485 = vunpack.c.l.b16 %v3478
  %v7486 = vunpack.c.l.b16 %v3479
  %v7487 = vunpack.c.l.b16 %v3480
  %v7488 = vunpack.c.l.b16 %v3481
  %v7489 = vunpack.c.l.b16 %v3482
  %v7490 = vunpack.c.l.b16 %v3483
  %v7491 = vunpack.c.l.b16 %v3484
  %v7492 = vunpack.c.l.b16 %v3485
  %v7493 = vunpack.c.l.b16 %v3486
  %v7494 = vunpack.c.l.b16 %v3487
  %v7495 = vunpack.c.l.b16 %v3488
  %v7496 = vunpack.c.l.b16 %v3489
  %v7497 = vunpack.c.l.b16 %v3490
  %v7498 = vunpack.c.l.b16 %v3491
  %v7499 = vunpack.c.l.b16 %v3492
  %v7500 = vunpack.c.l.b16 %v3493
  %v7501 = vunpack.c.l.b16 %v3494
  %v7502 = vunpack.c.l.b16 %v3495
  %v7503 = vunpack.c.l.b16 %v3496
  %v7504 = vpack.c.b16 %v7441, %v7440
  %v7505 = vpack.c.b16 %v7443, %v7442
  %v7506 = vpack.c.b16 %v7445, %v7444
  %v7507 = vpack.c.b16 %v7447, %v7446
  %v7508 = vpack.c.b16 %v7449, %v7448
  %v7509 = vpack.c.b16 %v7451, %v7450
  %v7510 = vpack.c.b16 %v7453, %v7452
  %v7511 = vpack.c.b16 %v7455, %v7454
  %v7512 = vpack.c.b16 %v7457, %v7456
  %v7513 = vpack.c.b16 %v7459, %v7458
  %v7514 = vpack.c.b16 %v7461, %v7460
  %v7515 = vpack.c.b16 %v7463, %v7462
  %v7516 = vpack.c.b16 %v7465, %v7464
  %v7517 = vpack.c.b16 %v7467, %v7466
  %v7518 = vpack.c.b16 %v7469, %v7468
  %v7519 = vpack.c.b16 %v7471, %v7470
  %v7520 = vpack.c.b16 %v7473, %v7472
  %v7521 = vpack.c.b16 %v7475, %v7474
  %v7522 = vpack.c.b16 %v7477, %v7476
  %v7523 = vpack.c.b16 %v7479, %v7478
  %v7524 = vpack.c.b16 %v7481, %v7480
  %v7525 = vpack.c.b16 %v7483, %v7482
  %v7526 = vpack.c.b16 %v7485, %v7484
  %v7527 = vpack.c.b16 %v7487, %v7486
  %v7528 = vpack.c.b16 %v7489, %v7488
  %v7529 = vpack.c.b16 %v7491, %v7490
  %v7530 = vpack.c.b16 %v7493, %v7492
  %v7531 = vpack.c.b16 %v7495, %v7494
  %v7532 = vpack.c.b16 %v7497, %v7496
  %v7533 = vpack.c.b16 %v7499, %v7498
  %v7534 = vpack.c.b16 %v7501, %v7500
  %v7535 = vpack.c.b16 %v7503, %v7502
  %7568 = vmatprep.subr.bf16.mxu0 0
  %7569 = vmatpush1.bf16.msra.mxu0 %v7504
  %7570 = vmatprep.subr.bf16.mxu0 0
  %7571 = vmatpush1.bf16.msra.mxu0 %v7505
  %7572 = vmatprep.subr.bf16.mxu0 0
  %7573 = vmatpush1.bf16.msra.mxu0 %v7506
  %7574 = vmatprep.subr.bf16.mxu0 0
  %7575 = vmatpush1.bf16.msra.mxu0 %v7507
  %7576 = vmatprep.subr.bf16.mxu0 0
  %7577 = vmatpush1.bf16.msra.mxu0 %v7508
  %7578 = vmatprep.subr.bf16.mxu0 0
  %7579 = vmatpush1.bf16.msra.mxu0 %v7509
  %7580 = vmatprep.subr.bf16.mxu0 0
  %7581 = vmatpush1.bf16.msra.mxu0 %v7510
  %7582 = vmatprep.subr.bf16.mxu0 0
  %7583 = vmatpush1.bf16.msra.mxu0 %v7511
  %7584 = vmatprep.subr.bf16.mxu0 0
  %7585 = vmatpush1.bf16.msra.mxu0 %v7512
  %7586 = vmatprep.subr.bf16.mxu0 0
  %7587 = vmatpush1.bf16.msra.mxu0 %v7513
  %7588 = vmatprep.subr.bf16.mxu0 0
  %7589 = vmatpush1.bf16.msra.mxu0 %v7514
  %7590 = vmatprep.subr.bf16.mxu0 0
  %7591 = vmatpush1.bf16.msra.mxu0 %v7515
  %7592 = vmatprep.subr.bf16.mxu0 0
  %7593 = vmatpush1.bf16.msra.mxu0 %v7516
  %7594 = vmatprep.subr.bf16.mxu0 0
  %7595 = vmatpush1.bf16.msra.mxu0 %v7517
  %7596 = vmatprep.subr.bf16.mxu0 0
  %7597 = vmatpush1.bf16.msra.mxu0 %v7518
  %7598 = vmatprep.subr.bf16.mxu0 0
  %7599 = vmatpush1.bf16.msra.mxu0 %v7519
  %7600 = vmatprep.mubr.bf16.mxu0 %v2530
  %7601 = vmatmul.mubr.bf16.gmra.mrb[0].mxu0 %v2529
  %v7602 = vpop.f32.mrb[0].mxu0
  %v7603 = vadd.f32 %v3566, %v7602
  %v7604 = vpop.f32.mrb[0].mxu0
  %v7605 = vpop.f32.mrb[0].mxu0
  %v7606 = vpop.f32.mrb[0].mxu0
  %7607 = vdwg.mxu0
  %7608 = vmatprep.subr.bf16.mxu0 0
  %7609 = vmatpush1.bf16.msra.mxu0 %v7520
  %7610 = vmatprep.subr.bf16.mxu0 0
  %7611 = vmatpush1.bf16.msra.mxu0 %v7521
  %7612 = vmatprep.subr.bf16.mxu0 0
  %7613 = vmatpush1.bf16.msra.mxu0 %v7522
  %7614 = vmatprep.subr.bf16.mxu0 0
  %7615 = vmatpush1.bf16.msra.mxu0 %v7523
  %7616 = vmatprep.subr.bf16.mxu0 0
  %7617 = vmatpush1.bf16.msra.mxu0 %v7524
  %7618 = vmatprep.subr.bf16.mxu0 0
  %7619 = vmatpush1.bf16.msra.mxu0 %v7525
  %7620 = vmatprep.subr.bf16.mxu0 0
  %7621 = vmatpush1.bf16.msra.mxu0 %v7526
  %7622 = vmatprep.subr.bf16.mxu0 0
  %7623 = vmatpush1.bf16.msra.mxu0 %v7527
  %7624 = vmatprep.subr.bf16.mxu0 0
  %7625 = vmatpush1.bf16.msra.mxu0 %v7528
  %7626 = vmatprep.subr.bf16.mxu0 0
  %7627 = vmatpush1.bf16.msra.mxu0 %v7529
  %7628 = vmatprep.subr.bf16.mxu0 0
  %7629 = vmatpush1.bf16.msra.mxu0 %v7530
  %7630 = vmatprep.subr.bf16.mxu0 0
  %7631 = vmatpush1.bf16.msra.mxu0 %v7531
  %7632 = vmatprep.subr.bf16.mxu0 0
  %7633 = vmatpush1.bf16.msra.mxu0 %v7532
  %7634 = vmatprep.subr.bf16.mxu0 0
  %7635 = vmatpush1.bf16.msra.mxu0 %v7533
  %7636 = vmatprep.subr.bf16.mxu0 0
  %7637 = vmatpush1.bf16.msra.mxu0 %v7534
  %7638 = vmatprep.subr.bf16.mxu0 0
  %7639 = vmatpush1.bf16.msra.mxu0 %v7535
  %7640 = vmatprep.mubr.bf16.mxu0 %v2532
  %7641 = vmatmul.mubr.bf16.gmra.mrb[0].mxu0 %v2531
  %v7642 = vpop.f32.mrb[0].mxu0
  %v7643 = vadd.f32 %v7603, %v7642
  %v7644 = vpop.f32.mrb[0].mxu0
  %v7645 = vpop.f32.mrb[0].mxu0
  %v7646 = vpop.f32.mrb[0].mxu0
  %7647 = vdwg.mxu0
  %v7712 = vunpack.c.l.b16 %v3497
  %v7713 = vunpack.c.l.b16 %v3498
  %v7714 = vunpack.c.l.b16 %v3499
  %v7715 = vunpack.c.l.b16 %v3500
  %v7716 = vunpack.c.l.b16 %v3501
  %v7717 = vunpack.c.l.b16 %v3502
  %v7718 = vunpack.c.l.b16 %v3503
  %v7719 = vunpack.c.l.b16 %v3504
  %v7720 = vunpack.c.l.b16 %v3505
  %v7721 = vunpack.c.l.b16 %v3506
  %v7722 = vunpack.c.l.b16 %v3507
  %v7723 = vunpack.c.l.b16 %v3508
  %v7724 = vunpack.c.l.b16 %v3509
  %v7725 = vunpack.c.l.b16 %v3510
  %v7726 = vunpack.c.l.b16 %v3511
  %v7727 = vunpack.c.l.b16 %v3512
  %v7728 = vunpack.c.l.b16 %v3513
  %v7729 = vunpack.c.l.b16 %v3514
  %v7730 = vunpack.c.l.b16 %v3515
  %v7731 = vunpack.c.l.b16 %v3516
  %v7732 = vunpack.c.l.b16 %v3517
  %v7733 = vunpack.c.l.b16 %v3518
  %v7734 = vunpack.c.l.b16 %v3519
  %v7735 = vunpack.c.l.b16 %v3520
  %v7736 = vunpack.c.l.b16 %v3521
  %v7737 = vunpack.c.l.b16 %v3522
  %v7738 = vunpack.c.l.b16 %v3523
  %v7739 = vunpack.c.l.b16 %v3524
  %v7740 = vunpack.c.l.b16 %v3525
  %v7741 = vunpack.c.l.b16 %v3526
  %v7742 = vunpack.c.l.b16 %v3527
  %v7743 = vunpack.c.l.b16 %v3528
  %v7744 = vunpack.c.l.b16 %v3529
  %v7745 = vunpack.c.l.b16 %v3530
  %v7746 = vunpack.c.l.b16 %v3531
  %v7747 = vunpack.c.l.b16 %v3532
  %v7748 = vunpack.c.l.b16 %v3533
  %v7749 = vunpack.c.l.b16 %v3534
  %v7750 = vunpack.c.l.b16 %v3535
  %v7751 = vunpack.c.l.b16 %v3536
  %v7752 = vunpack.c.l.b16 %v3537
  %v7753 = vunpack.c.l.b16 %v3538
  %v7754 = vunpack.c.l.b16 %v3539
  %v7755 = vunpack.c.l.b16 %v3540
  %v7756 = vunpack.c.l.b16 %v3541
  %v7757 = vunpack.c.l.b16 %v3542
  %v7758 = vunpack.c.l.b16 %v3543
  %v7759 = vunpack.c.l.b16 %v3544
  %v7760 = vunpack.c.l.b16 %v3545
  %v7761 = vunpack.c.l.b16 %v3546
  %v7762 = vunpack.c.l.b16 %v3547
  %v7763 = vunpack.c.l.b16 %v3548
  %v7764 = vunpack.c.l.b16 %v3549
  %v7765 = vunpack.c.l.b16 %v3550
  %v7766 = vunpack.c.l.b16 %v3551
  %v7767 = vunpack.c.l.b16 %v3552
  %v7768 = vunpack.c.l.b16 %v3553
  %v7769 = vunpack.c.l.b16 %v3554
  %v7770 = vunpack.c.l.b16 %v3555
  %v7771 = vunpack.c.l.b16 %v3556
  %v7772 = vunpack.c.l.b16 %v3557
  %v7773 = vunpack.c.l.b16 %v3558
  %v7774 = vunpack.c.l.b16 %v3559
  %v7775 = vunpack.c.l.b16 %v3560
  %v7776 = vpack.c.b16 %v7713, %v7712
  %v7777 = vpack.c.b16 %v7715, %v7714
  %v7778 = vpack.c.b16 %v7717, %v7716
  %v7779 = vpack.c.b16 %v7719, %v7718
  %v7780 = vpack.c.b16 %v7721, %v7720
  %v7781 = vpack.c.b16 %v7723, %v7722
  %v7782 = vpack.c.b16 %v7725, %v7724
  %v7783 = vpack.c.b16 %v7727, %v7726
  %v7784 = vpack.c.b16 %v7729, %v7728
  %v7785 = vpack.c.b16 %v7731, %v7730
  %v7786 = vpack.c.b16 %v7733, %v7732
  %v7787 = vpack.c.b16 %v7735, %v7734
  %v7788 = vpack.c.b16 %v7737, %v7736
  %v7789 = vpack.c.b16 %v7739, %v7738
  %v7790 = vpack.c.b16 %v7741, %v7740
  %v7791 = vpack.c.b16 %v7743, %v7742
  %v7792 = vpack.c.b16 %v7745, %v7744
  %v7793 = vpack.c.b16 %v7747, %v7746
  %v7794 = vpack.c.b16 %v7749, %v7748
  %v7795 = vpack.c.b16 %v7751, %v7750
  %v7796 = vpack.c.b16 %v7753, %v7752
  %v7797 = vpack.c.b16 %v7755, %v7754
  %v7798 = vpack.c.b16 %v7757, %v7756
  %v7799 = vpack.c.b16 %v7759, %v7758
  %v7800 = vpack.c.b16 %v7761, %v7760
  %v7801 = vpack.c.b16 %v7763, %v7762
  %v7802 = vpack.c.b16 %v7765, %v7764
  %v7803 = vpack.c.b16 %v7767, %v7766
  %v7804 = vpack.c.b16 %v7769, %v7768
  %v7805 = vpack.c.b16 %v7771, %v7770
  %v7806 = vpack.c.b16 %v7773, %v7772
  %v7807 = vpack.c.b16 %v7775, %v7774
  %7840 = vmatprep.subr.bf16.mxu0 0
  %7841 = vmatpush1.bf16.msra.mxu0 %v7776
  %7842 = vmatprep.subr.bf16.mxu0 0
  %7843 = vmatpush1.bf16.msra.mxu0 %v7777
  %7844 = vmatprep.subr.bf16.mxu0 0
  %7845 = vmatpush1.bf16.msra.mxu0 %v7778
  %7846 = vmatprep.subr.bf16.mxu0 0
  %7847 = vmatpush1.bf16.msra.mxu0 %v7779
  %7848 = vmatprep.subr.bf16.mxu0 0
  %7849 = vmatpush1.bf16.msra.mxu0 %v7780
  %7850 = vmatprep.subr.bf16.mxu0 0
  %7851 = vmatpush1.bf16.msra.mxu0 %v7781
  %7852 = vmatprep.subr.bf16.mxu0 0
  %7853 = vmatpush1.bf16.msra.mxu0 %v7782
  %7854 = vmatprep.subr.bf16.mxu0 0
  %7855 = vmatpush1.bf16.msra.mxu0 %v7783
  %7856 = vmatprep.subr.bf16.mxu0 0
  %7857 = vmatpush1.bf16.msra.mxu0 %v7784
  %7858 = vmatprep.subr.bf16.mxu0 0
  %7859 = vmatpush1.bf16.msra.mxu0 %v7785
  %7860 = vmatprep.subr.bf16.mxu0 0
  %7861 = vmatpush1.bf16.msra.mxu0 %v7786
  %7862 = vmatprep.subr.bf16.mxu0 0
  %7863 = vmatpush1.bf16.msra.mxu0 %v7787
  %7864 = vmatprep.subr.bf16.mxu0 0
  %7865 = vmatpush1.bf16.msra.mxu0 %v7788
  %7866 = vmatprep.subr.bf16.mxu0 0
  %7867 = vmatpush1.bf16.msra.mxu0 %v7789
  %7868 = vmatprep.subr.bf16.mxu0 0
  %7869 = vmatpush1.bf16.msra.mxu0 %v7790
  %7870 = vmatprep.subr.bf16.mxu0 0
  %7871 = vmatpush1.bf16.msra.mxu0 %v7791
  %7872 = vmatprep.mubr.bf16.mxu0 %v2534
  %7873 = vmatmul.mubr.bf16.gmra.mrb[0].mxu0 %v2533
  %v7874 = vpop.f32.mrb[0].mxu0
  %v7875 = vadd.f32 %v3566, %v7874
  %v7876 = vpop.f32.mrb[0].mxu0
  %v7877 = vpop.f32.mrb[0].mxu0
  %v7878 = vpop.f32.mrb[0].mxu0
  %7879 = vdwg.mxu0
  %7880 = vmatprep.subr.bf16.mxu0 0
  %7881 = vmatpush1.bf16.msra.mxu0 %v7792
  %7882 = vmatprep.subr.bf16.mxu0 0
  %7883 = vmatpush1.bf16.msra.mxu0 %v7793
  %7884 = vmatprep.subr.bf16.mxu0 0
  %7885 = vmatpush1.bf16.msra.mxu0 %v7794
  %7886 = vmatprep.subr.bf16.mxu0 0
  %7887 = vmatpush1.bf16.msra.mxu0 %v7795
  %7888 = vmatprep.subr.bf16.mxu0 0
  %7889 = vmatpush1.bf16.msra.mxu0 %v7796
  %7890 = vmatprep.subr.bf16.mxu0 0
  %7891 = vmatpush1.bf16.msra.mxu0 %v7797
  %7892 = vmatprep.subr.bf16.mxu0 0
  %7893 = vmatpush1.bf16.msra.mxu0 %v7798
  %7894 = vmatprep.subr.bf16.mxu0 0
  %7895 = vmatpush1.bf16.msra.mxu0 %v7799
  %7896 = vmatprep.subr.bf16.mxu0 0
  %7897 = vmatpush1.bf16.msra.mxu0 %v7800
  %7898 = vmatprep.subr.bf16.mxu0 0
  %7899 = vmatpush1.bf16.msra.mxu0 %v7801
  %7900 = vmatprep.subr.bf16.mxu0 0
  %7901 = vmatpush1.bf16.msra.mxu0 %v7802
  %7902 = vmatprep.subr.bf16.mxu0 0
  %7903 = vmatpush1.bf16.msra.mxu0 %v7803
  %7904 = vmatprep.subr.bf16.mxu0 0
  %7905 = vmatpush1.bf16.msra.mxu0 %v7804
  %7906 = vmatprep.subr.bf16.mxu0 0
  %7907 = vmatpush1.bf16.msra.mxu0 %v7805
  %7908 = vmatprep.subr.bf16.mxu0 0
  %7909 = vmatpush1.bf16.msra.mxu0 %v7806
  %7910 = vmatprep.subr.bf16.mxu0 0
  %7911 = vmatpush1.bf16.msra.mxu0 %v7807
  %7912 = vmatprep.mubr.bf16.mxu0 %v2536
  %7913 = vmatmul.mubr.bf16.gmra.mrb[0].mxu0 %v2535
  %v7914 = vpop.f32.mrb[0].mxu0
  %v7915 = vadd.f32 %v7875, %v7914
  %v7916 = vpop.f32.mrb[0].mxu0
  %v7917 = vpop.f32.mrb[0].mxu0
  %v7918 = vpop.f32.mrb[0].mxu0
  %7919 = vdwg.mxu0
  %vm7920 = vcmp.gt.f32.partialorder %v3835, 0.0
  %vm7921 = vcmp.gt.f32.partialorder %v4107, 0.0
  %vm7922 = vcmp.gt.f32.partialorder %v4379, 0.0
  %vm7923 = vcmp.gt.f32.partialorder %v4651, 0.0
  %vm7924 = vcmp.gt.f32.partialorder %v4923, 0.0
  %vm7925 = vcmp.gt.f32.partialorder %v5195, 0.0
  %vm7926 = vcmp.gt.f32.partialorder %v5467, 0.0
  %vm7927 = vcmp.gt.f32.partialorder %v5739, 0.0
  %vm7928 = vcmp.gt.f32.partialorder %v6011, 0.0
  %vm7929 = vcmp.gt.f32.partialorder %v6283, 0.0
  %vm7930 = vcmp.gt.f32.partialorder %v6555, 0.0
  %vm7931 = vcmp.gt.f32.partialorder %v6827, 0.0
  %vm7932 = vcmp.gt.f32.partialorder %v7099, 0.0
  %vm7933 = vcmp.gt.f32.partialorder %v7371, 0.0
  %vm7934 = vcmp.gt.f32.partialorder %v7643, 0.0
  %vm7935 = vcmp.gt.f32.partialorder %v7915, 0.0
  %v7936 = vmul.f32 %v3835, 0.33
  %v7937 = vmul.f32 %v4107, 0.33
  %v7938 = vmul.f32 %v4379, 0.33
  %v7939 = vmul.f32 %v4651, 0.33
  %v7940 = vmul.f32 %v4923, 0.33
  %v7941 = vmul.f32 %v5195, 0.33
  %v7942 = vmul.f32 %v5467, 0.33
  %v7943 = vmul.f32 %v5739, 0.33
  %v7944 = vmul.f32 %v6011, 0.33
  %v7945 = vmul.f32 %v6283, 0.33
  %v7946 = vmul.f32 %v6555, 0.33
  %v7947 = vmul.f32 %v6827, 0.33
  %v7948 = vmul.f32 %v7099, 0.33
  %v7949 = vmul.f32 %v7371, 0.33
  %v7950 = vmul.f32 %v7643, 0.33
  %v7951 = vmul.f32 %v7915, 0.33
  %v7952 = vsel %vm7920, %v3835, %v7936
  %v7953 = vsel %vm7921, %v4107, %v7937
  %v7954 = vsel %vm7922, %v4379, %v7938
  %v7955 = vsel %vm7923, %v4651, %v7939
  %v7956 = vsel %vm7924, %v4923, %v7940
  %v7957 = vsel %vm7925, %v5195, %v7941
  %v7958 = vsel %vm7926, %v5467, %v7942
  %v7959 = vsel %vm7927, %v5739, %v7943
  %v7960 = vsel %vm7928, %v6011, %v7944
  %v7961 = vsel %vm7929, %v6283, %v7945
  %v7962 = vsel %vm7930, %v6555, %v7946
  %v7963 = vsel %vm7931, %v6827, %v7947
  %v7964 = vsel %vm7932, %v7099, %v7948
  %v7965 = vsel %vm7933, %v7371, %v7949
  %v7966 = vsel %vm7934, %v7643, %v7950
  %v7967 = vsel %vm7935, %v7915, %v7951
  %v7968 = vpack.c.bf16 %v7952, %v7952
  %v7969 = vpack.c.bf16 %v7953, %v7953
  %v7970 = vpack.c.bf16 %v7954, %v7954
  %v7971 = vpack.c.bf16 %v7955, %v7955
  %v7972 = vpack.c.bf16 %v7956, %v7956
  %v7973 = vpack.c.bf16 %v7957, %v7957
  %v7974 = vpack.c.bf16 %v7958, %v7958
  %v7975 = vpack.c.bf16 %v7959, %v7959
  %v7976 = vpack.c.bf16 %v7960, %v7960
  %v7977 = vpack.c.bf16 %v7961, %v7961
  %v7978 = vpack.c.bf16 %v7962, %v7962
  %v7979 = vpack.c.bf16 %v7963, %v7963
  %v7980 = vpack.c.bf16 %v7964, %v7964
  %v7981 = vpack.c.bf16 %v7965, %v7965
  %v7982 = vpack.c.bf16 %v7966, %v7966
  %v7983 = vpack.c.bf16 %v7967, %v7967
  %v7984 = vld [vmem:[%s6] sm:$0xf]
  %v7985 = vld [vmem:[%s6 + $0x4] sm:$0xf]
  %v7986 = vld [vmem:[%s6 + $0x8] sm:$0xf]
  %v7987 = vld [vmem:[%s6 + $0xc] sm:$0xf]
  %v7988 = vld [vmem:[%s6 + $0x10] sm:$0xf]
  %v7989 = vld [vmem:[%s6 + $0x14] sm:$0xf]
  %v7990 = vld [vmem:[%s6 + $0x18] sm:$0xf]
  %v7991 = vld [vmem:[%s6 + $0x1c] sm:$0xf]
  %v7992 = vld [vmem:[%s6 + $0x20] sm:$0xf]
  %v7993 = vld [vmem:[%s6 + $0x24] sm:$0xf]
  %v7994 = vld [vmem:[%s6 + $0x28] sm:$0xf]
  %v7995 = vld [vmem:[%s6 + $0x2c] sm:$0xf]
  %v7996 = vld [vmem:[%s6 + $0x30] sm:$0xf]
  %v7997 = vld [vmem:[%s6 + $0x34] sm:$0xf]
  %v7998 = vld [vmem:[%s6 + $0x38] sm:$0xf]
  %v7999 = vld [vmem:[%s6 + $0x3c] sm:$0xf]
  %v8000 = vld [vmem:[%s6 + $0x40] sm:$0xf]
  %v8001 = vld [vmem:[%s6 + $0x44] sm:$0xf]
  %v8002 = vld [vmem:[%s6 + $0x48] sm:$0xf]
  %v8003 = vld [vmem:[%s6 + $0x4c] sm:$0xf]
  %v8004 = vld [vmem:[%s6 + $0x50] sm:$0xf]
  %v8005 = vld [vmem:[%s6 + $0x54] sm:$0xf]
  %v8006 = vld [vmem:[%s6 + $0x58] sm:$0xf]
  %v8007 = vld [vmem:[%s6 + $0x5c] sm:$0xf]
  %v8008 = vld [vmem:[%s6 + $0x60] sm:$0xf]
  %v8009 = vld [vmem:[%s6 + $0x64] sm:$0xf]
  %v8010 = vld [vmem:[%s6 + $0x68] sm:$0xf]
  %v8011 = vld [vmem:[%s6 + $0x6c] sm:$0xf]
  %v8012 = vld [vmem:[%s6 + $0x70] sm:$0xf]
  %v8013 = vld [vmem:[%s6 + $0x74] sm:$0xf]
  %v8014 = vld [vmem:[%s6 + $0x78] sm:$0xf]
  %v8015 = vld [vmem:[%s6 + $0x7c] sm:$0xf]
  %v8016 = vld [vmem:[%s6 + $0x80] sm:$0xf]
  %v8017 = vld [vmem:[%s6 + $0x84] sm:$0xf]
  %v8018 = vld [vmem:[%s6 + $0x88] sm:$0xf]
  %v8019 = vld [vmem:[%s6 + $0x8c] sm:$0xf]
  %v8020 = vld [vmem:[%s6 + $0x90] sm:$0xf]
  %v8021 = vld [vmem:[%s6 + $0x94] sm:$0xf]
  %v8022 = vld [vmem:[%s6 + $0x98] sm:$0xf]
  %v8023 = vld [vmem:[%s6 + $0x9c] sm:$0xf]
  %v8024 = vld [vmem:[%s6 + $0xa0] sm:$0xf]
  %v8025 = vld [vmem:[%s6 + $0xa4] sm:$0xf]
  %v8026 = vld [vmem:[%s6 + $0xa8] sm:$0xf]
  %v8027 = vld [vmem:[%s6 + $0xac] sm:$0xf]
  %v8028 = vld [vmem:[%s6 + $0xb0] sm:$0xf]
  %v8029 = vld [vmem:[%s6 + $0xb4] sm:$0xf]
  %v8030 = vld [vmem:[%s6 + $0xb8] sm:$0xf]
  %v8031 = vld [vmem:[%s6 + $0xbc] sm:$0xf]
  %v8032 = vld [vmem:[%s6 + $0xc0] sm:$0xf]
  %v8033 = vld [vmem:[%s6 + $0xc4] sm:$0xf]
  %v8034 = vld [vmem:[%s6 + $0xc8] sm:$0xf]
  %v8035 = vld [vmem:[%s6 + $0xcc] sm:$0xf]
  %v8036 = vld [vmem:[%s6 + $0xd0] sm:$0xf]
  %v8037 = vld [vmem:[%s6 + $0xd4] sm:$0xf]
  %v8038 = vld [vmem:[%s6 + $0xd8] sm:$0xf]
  %v8039 = vld [vmem:[%s6 + $0xdc] sm:$0xf]
  %v8040 = vld [vmem:[%s6 + $0xe0] sm:$0xf]
  %v8041 = vld [vmem:[%s6 + $0xe4] sm:$0xf]
  %v8042 = vld [vmem:[%s6 + $0xe8] sm:$0xf]
  %v8043 = vld [vmem:[%s6 + $0xec] sm:$0xf]
  %v8044 = vld [vmem:[%s6 + $0xf0] sm:$0xf]
  %v8045 = vld [vmem:[%s6 + $0xf4] sm:$0xf]
  %v8046 = vld [vmem:[%s6 + $0xf8] sm:$0xf]
  %v8047 = vld [vmem:[%s6 + $0xfc] sm:$0xf]
  %v8048 = vld [vmem:[%s6 + $0x100] sm:$0xf]
  %v8049 = vld [vmem:[%s6 + $0x104] sm:$0xf]
  %v8050 = vld [vmem:[%s6 + $0x108] sm:$0xf]
  %v8051 = vld [vmem:[%s6 + $0x10c] sm:$0xf]
  %v8052 = vld [vmem:[%s6 + $0x110] sm:$0xf]
  %v8053 = vld [vmem:[%s6 + $0x114] sm:$0xf]
  %v8054 = vld [vmem:[%s6 + $0x118] sm:$0xf]
  %v8055 = vld [vmem:[%s6 + $0x11c] sm:$0xf]
  %v8056 = vld [vmem:[%s6 + $0x120] sm:$0xf]
  %v8057 = vld [vmem:[%s6 + $0x124] sm:$0xf]
  %v8058 = vld [vmem:[%s6 + $0x128] sm:$0xf]
  %v8059 = vld [vmem:[%s6 + $0x12c] sm:$0xf]
  %v8060 = vld [vmem:[%s6 + $0x130] sm:$0xf]
  %v8061 = vld [vmem:[%s6 + $0x134] sm:$0xf]
  %v8062 = vld [vmem:[%s6 + $0x138] sm:$0xf]
  %v8063 = vld [vmem:[%s6 + $0x13c] sm:$0xf]
  %v8064 = vld [vmem:[%s6 + $0x140] sm:$0xf]
  %v8065 = vld [vmem:[%s6 + $0x144] sm:$0xf]
  %v8066 = vld [vmem:[%s6 + $0x148] sm:$0xf]
  %v8067 = vld [vmem:[%s6 + $0x14c] sm:$0xf]
  %v8068 = vld [vmem:[%s6 + $0x150] sm:$0xf]
  %v8069 = vld [vmem:[%s6 + $0x154] sm:$0xf]
  %v8070 = vld [vmem:[%s6 + $0x158] sm:$0xf]
  %v8071 = vld [vmem:[%s6 + $0x15c] sm:$0xf]
  %v8072 = vld [vmem:[%s6 + $0x160] sm:$0xf]
  %v8073 = vld [vmem:[%s6 + $0x164] sm:$0xf]
  %v8074 = vld [vmem:[%s6 + $0x168] sm:$0xf]
  %v8075 = vld [vmem:[%s6 + $0x16c] sm:$0xf]
  %v8076 = vld [vmem:[%s6 + $0x170] sm:$0xf]
  %v8077 = vld [vmem:[%s6 + $0x174] sm:$0xf]
  %v8078 = vld [vmem:[%s6 + $0x178] sm:$0xf]
  %v8079 = vld [vmem:[%s6 + $0x17c] sm:$0xf]
  %v8080 = vld [vmem:[%s6 + $0x180] sm:$0xf]
  %v8081 = vld [vmem:[%s6 + $0x184] sm:$0xf]
  %v8082 = vld [vmem:[%s6 + $0x188] sm:$0xf]
  %v8083 = vld [vmem:[%s6 + $0x18c] sm:$0xf]
  %v8084 = vld [vmem:[%s6 + $0x190] sm:$0xf]
  %v8085 = vld [vmem:[%s6 + $0x194] sm:$0xf]
  %v8086 = vld [vmem:[%s6 + $0x198] sm:$0xf]
  %v8087 = vld [vmem:[%s6 + $0x19c] sm:$0xf]
  %v8088 = vld [vmem:[%s6 + $0x1a0] sm:$0xf]
  %v8089 = vld [vmem:[%s6 + $0x1a4] sm:$0xf]
  %v8090 = vld [vmem:[%s6 + $0x1a8] sm:$0xf]
  %v8091 = vld [vmem:[%s6 + $0x1ac] sm:$0xf]
  %v8092 = vld [vmem:[%s6 + $0x1b0] sm:$0xf]
  %v8093 = vld [vmem:[%s6 + $0x1b4] sm:$0xf]
  %v8094 = vld [vmem:[%s6 + $0x1b8] sm:$0xf]
  %v8095 = vld [vmem:[%s6 + $0x1bc] sm:$0xf]
  %v8096 = vld [vmem:[%s6 + $0x1c0] sm:$0xf]
  %v8097 = vld [vmem:[%s6 + $0x1c4] sm:$0xf]
  %v8098 = vld [vmem:[%s6 + $0x1c8] sm:$0xf]
  %v8099 = vld [vmem:[%s6 + $0x1cc] sm:$0xf]
  %v8100 = vld [vmem:[%s6 + $0x1d0] sm:$0xf]
  %v8101 = vld [vmem:[%s6 + $0x1d4] sm:$0xf]
  %v8102 = vld [vmem:[%s6 + $0x1d8] sm:$0xf]
  %v8103 = vld [vmem:[%s6 + $0x1dc] sm:$0xf]
  %v8104 = vld [vmem:[%s6 + $0x1e0] sm:$0xf]
  %v8105 = vld [vmem:[%s6 + $0x1e4] sm:$0xf]
  %v8106 = vld [vmem:[%s6 + $0x1e8] sm:$0xf]
  %v8107 = vld [vmem:[%s6 + $0x1ec] sm:$0xf]
  %v8108 = vld [vmem:[%s6 + $0x1f0] sm:$0xf]
  %v8109 = vld [vmem:[%s6 + $0x1f4] sm:$0xf]
  %v8110 = vld [vmem:[%s6 + $0x1f8] sm:$0xf]
  %v8111 = vld [vmem:[%s6 + $0x1fc] sm:$0xf]
  %v8120 = vunpack.c.l.b16 %v7984
  %v8121 = vunpack.c.l.b16 %v7985
  %v8122 = vunpack.c.l.b16 %v7986
  %v8123 = vunpack.c.l.b16 %v7987
  %v8124 = vunpack.c.l.b16 %v7988
  %v8125 = vunpack.c.l.b16 %v7989
  %v8126 = vunpack.c.l.b16 %v7990
  %v8127 = vunpack.c.l.b16 %v7991
  %v8128 = vpack.c.b16 %v8121, %v8120
  %v8129 = vpack.c.b16 %v8123, %v8122
  %v8130 = vpack.c.b16 %v8125, %v8124
  %v8131 = vpack.c.b16 %v8127, %v8126
  %vm8136 = vcmask 523264
  %v8138 = vsel %vm8136, %v7968, 0
  %8140 = vmatprep.subr.bf16.mxu0 0
  %8141 = vmatpush1.bf16.msra.mxu0 %v8128
  %8142 = vmatprep.subr.bf16.mxu0 0
  %8143 = vmatpush1.bf16.msra.mxu0 %v8129
  %8144 = vmatprep.subr.bf16.mxu0 0
  %8145 = vmatpush1.bf16.msra.mxu0 %v8130
  %8146 = vmatprep.subr.bf16.mxu0 0
  %8147 = vmatpush1.bf16.msra.mxu0 %v8131
  %8148 = vmatprep.subr.bf16.mxu0 0
  %8149 = vmatpush1.bf16.msra.mxu0 0
  %8150 = vmatprep.subr.bf16.mxu0 0
  %8151 = vmatpush1.bf16.msra.mxu0 0
  %8152 = vmatprep.subr.bf16.mxu0 0
  %8153 = vmatpush1.bf16.msra.mxu0 0
  %8154 = vmatprep.subr.bf16.mxu0 0
  %8155 = vmatpush1.bf16.msra.mxu0 0
  %8156 = vmatprep.subr.bf16.mxu0 0
  %8157 = vmatpush1.bf16.msra.mxu0 0
  %8158 = vmatprep.subr.bf16.mxu0 0
  %8159 = vmatpush1.bf16.msra.mxu0 0
  %8160 = vmatprep.subr.bf16.mxu0 0
  %8161 = vmatpush1.bf16.msra.mxu0 0
  %8162 = vmatprep.subr.bf16.mxu0 0
  %8163 = vmatpush1.bf16.msra.mxu0 0
  %8164 = vmatprep.subr.bf16.mxu0 0
  %8165 = vmatpush1.bf16.msra.mxu0 0
  %8166 = vmatprep.subr.bf16.mxu0 0
  %8167 = vmatpush1.bf16.msra.mxu0 0
  %8168 = vmatprep.subr.bf16.mxu0 0
  %8169 = vmatpush1.bf16.msra.mxu0 0
  %8170 = vmatprep.subr.bf16.mxu0 0
  %8171 = vmatpush1.bf16.msra.mxu0 0
  %8172 = vmatprep.mubr.bf16.mxu0 0
  %8173 = vmatmul.mubr.bf16.gmra.mrb[0].mxu0 %v8138
  %v8174 = vpop.f32.mrb[0].mxu0
  %v8175 = vadd.f32 0.0, %v8174
  %v8176 = vpop.f32.mrb[0].mxu0
  %v8177 = vpop.f32.mrb[0].mxu0
  %v8178 = vpop.f32.mrb[0].mxu0
  %8179 = vdwg.mxu0
  %v8188 = vunpack.c.l.b16 %v7992
  %v8189 = vunpack.c.l.b16 %v7993
  %v8190 = vunpack.c.l.b16 %v7994
  %v8191 = vunpack.c.l.b16 %v7995
  %v8192 = vunpack.c.l.b16 %v7996
  %v8193 = vunpack.c.l.b16 %v7997
  %v8194 = vunpack.c.l.b16 %v7998
  %v8195 = vunpack.c.l.b16 %v7999
  %v8196 = vpack.c.b16 %v8189, %v8188
  %v8197 = vpack.c.b16 %v8191, %v8190
  %v8198 = vpack.c.b16 %v8193, %v8192
  %v8199 = vpack.c.b16 %v8195, %v8194
  %v8205 = vsel %vm8136, %v7969, 0
  %8207 = vmatprep.subr.bf16.mxu0 0
  %8208 = vmatpush1.bf16.msra.mxu0 %v8196
  %8209 = vmatprep.subr.bf16.mxu0 0
  %8210 = vmatpush1.bf16.msra.mxu0 %v8197
  %8211 = vmatprep.subr.bf16.mxu0 0
  %8212 = vmatpush1.bf16.msra.mxu0 %v8198
  %8213 = vmatprep.subr.bf16.mxu0 0
  %8214 = vmatpush1.bf16.msra.mxu0 %v8199
  %8215 = vmatprep.subr.bf16.mxu0 0
  %8216 = vmatpush1.bf16.msra.mxu0 0
  %8217 = vmatprep.subr.bf16.mxu0 0
  %8218 = vmatpush1.bf16.msra.mxu0 0
  %8219 = vmatprep.subr.bf16.mxu0 0
  %8220 = vmatpush1.bf16.msra.mxu0 0
  %8221 = vmatprep.subr.bf16.mxu0 0
  %8222 = vmatpush1.bf16.msra.mxu0 0
  %8223 = vmatprep.subr.bf16.mxu0 0
  %8224 = vmatpush1.bf16.msra.mxu0 0
  %8225 = vmatprep.subr.bf16.mxu0 0
  %8226 = vmatpush1.bf16.msra.mxu0 0
  %8227 = vmatprep.subr.bf16.mxu0 0
  %8228 = vmatpush1.bf16.msra.mxu0 0
  %8229 = vmatprep.subr.bf16.mxu0 0
  %8230 = vmatpush1.bf16.msra.mxu0 0
  %8231 = vmatprep.subr.bf16.mxu0 0
  %8232 = vmatpush1.bf16.msra.mxu0 0
  %8233 = vmatprep.subr.bf16.mxu0 0
  %8234 = vmatpush1.bf16.msra.mxu0 0
  %8235 = vmatprep.subr.bf16.mxu0 0
  %8236 = vmatpush1.bf16.msra.mxu0 0
  %8237 = vmatprep.subr.bf16.mxu0 0
  %8238 = vmatpush1.bf16.msra.mxu0 0
  %8239 = vmatprep.mubr.bf16.mxu0 0
  %8240 = vmatmul.mubr.bf16.gmra.mrb[0].mxu0 %v8205
  %v8241 = vpop.f32.mrb[0].mxu0
  %v8242 = vadd.f32 0.0, %v8241
  %v8243 = vpop.f32.mrb[0].mxu0
  %v8244 = vpop.f32.mrb[0].mxu0
  %v8245 = vpop.f32.mrb[0].mxu0
  %8246 = vdwg.mxu0
  %v8255 = vunpack.c.l.b16 %v8000
  %v8256 = vunpack.c.l.b16 %v8001
  %v8257 = vunpack.c.l.b16 %v8002
  %v8258 = vunpack.c.l.b16 %v8003
  %v8259 = vunpack.c.l.b16 %v8004
  %v8260 = vunpack.c.l.b16 %v8005
  %v8261 = vunpack.c.l.b16 %v8006
  %v8262 = vunpack.c.l.b16 %v8007
  %v8263 = vpack.c.b16 %v8256, %v8255
  %v8264 = vpack.c.b16 %v8258, %v8257
  %v8265 = vpack.c.b16 %v8260, %v8259
  %v8266 = vpack.c.b16 %v8262, %v8261
  %v8272 = vsel %vm8136, %v7970, 0
  %8274 = vmatprep.subr.bf16.mxu0 0
  %8275 = vmatpush1.bf16.msra.mxu0 %v8263
  %8276 = vmatprep.subr.bf16.mxu0 0
  %8277 = vmatpush1.bf16.msra.mxu0 %v8264
  %8278 = vmatprep.subr.bf16.mxu0 0
  %8279 = vmatpush1.bf16.msra.mxu0 %v8265
  %8280 = vmatprep.subr.bf16.mxu0 0
  %8281 = vmatpush1.bf16.msra.mxu0 %v8266
  %8282 = vmatprep.subr.bf16.mxu0 0
  %8283 = vmatpush1.bf16.msra.mxu0 0
  %8284 = vmatprep.subr.bf16.mxu0 0
  %8285 = vmatpush1.bf16.msra.mxu0 0
  %8286 = vmatprep.subr.bf16.mxu0 0
  %8287 = vmatpush1.bf16.msra.mxu0 0
  %8288 = vmatprep.subr.bf16.mxu0 0
  %8289 = vmatpush1.bf16.msra.mxu0 0
  %8290 = vmatprep.subr.bf16.mxu0 0
  %8291 = vmatpush1.bf16.msra.mxu0 0
  %8292 = vmatprep.subr.bf16.mxu0 0
  %8293 = vmatpush1.bf16.msra.mxu0 0
  %8294 = vmatprep.subr.bf16.mxu0 0
  %8295 = vmatpush1.bf16.msra.mxu0 0
  %8296 = vmatprep.subr.bf16.mxu0 0
  %8297 = vmatpush1.bf16.msra.mxu0 0
  %8298 = vmatprep.subr.bf16.mxu0 0
  %8299 = vmatpush1.bf16.msra.mxu0 0
  %8300 = vmatprep.subr.bf16.mxu0 0
  %8301 = vmatpush1.bf16.msra.mxu0 0
  %8302 = vmatprep.subr.bf16.mxu0 0
  %8303 = vmatpush1.bf16.msra.mxu0 0
  %8304 = vmatprep.subr.bf16.mxu0 0
  %8305 = vmatpush1.bf16.msra.mxu0 0
  %8306 = vmatprep.mubr.bf16.mxu0 0
  %8307 = vmatmul.mubr.bf16.gmra.mrb[0].mxu0 %v8272
  %v8308 = vpop.f32.mrb[0].mxu0
  %v8309 = vadd.f32 0.0, %v8308
  %v8310 = vpop.f32.mrb[0].mxu0
  %v8311 = vpop.f32.mrb[0].mxu0
  %v8312 = vpop.f32.mrb[0].mxu0
  %8313 = vdwg.mxu0
  %v8322 = vunpack.c.l.b16 %v8008
  %v8323 = vunpack.c.l.b16 %v8009
  %v8324 = vunpack.c.l.b16 %v8010
  %v8325 = vunpack.c.l.b16 %v8011
  %v8326 = vunpack.c.l.b16 %v8012
  %v8327 = vunpack.c.l.b16 %v8013
  %v8328 = vunpack.c.l.b16 %v8014
  %v8329 = vunpack.c.l.b16 %v8015
  %v8330 = vpack.c.b16 %v8323, %v8322
  %v8331 = vpack.c.b16 %v8325, %v8324
  %v8332 = vpack.c.b16 %v8327, %v8326
  %v8333 = vpack.c.b16 %v8329, %v8328
  %v8339 = vsel %vm8136, %v7971, 0
  %8341 = vmatprep.subr.bf16.mxu0 0
  %8342 = vmatpush1.bf16.msra.mxu0 %v8330
  %8343 = vmatprep.subr.bf16.mxu0 0
  %8344 = vmatpush1.bf16.msra.mxu0 %v8331
  %8345 = vmatprep.subr.bf16.mxu0 0
  %8346 = vmatpush1.bf16.msra.mxu0 %v8332
  %8347 = vmatprep.subr.bf16.mxu0 0
  %8348 = vmatpush1.bf16.msra.mxu0 %v8333
  %8349 = vmatprep.subr.bf16.mxu0 0
  %8350 = vmatpush1.bf16.msra.mxu0 0
  %8351 = vmatprep.subr.bf16.mxu0 0
  %8352 = vmatpush1.bf16.msra.mxu0 0
  %8353 = vmatprep.subr.bf16.mxu0 0
  %8354 = vmatpush1.bf16.msra.mxu0 0
  %8355 = vmatprep.subr.bf16.mxu0 0
  %8356 = vmatpush1.bf16.msra.mxu0 0
  %8357 = vmatprep.subr.bf16.mxu0 0
  %8358 = vmatpush1.bf16.msra.mxu0 0
  %8359 = vmatprep.subr.bf16.mxu0 0
  %8360 = vmatpush1.bf16.msra.mxu0 0
  %8361 = vmatprep.subr.bf16.mxu0 0
  %8362 = vmatpush1.bf16.msra.mxu0 0
  %8363 = vmatprep.subr.bf16.mxu0 0
  %8364 = vmatpush1.bf16.msra.mxu0 0
  %8365 = vmatprep.subr.bf16.mxu0 0
  %8366 = vmatpush1.bf16.msra.mxu0 0
  %8367 = vmatprep.subr.bf16.mxu0 0
  %8368 = vmatpush1.bf16.msra.mxu0 0
  %8369 = vmatprep.subr.bf16.mxu0 0
  %8370 = vmatpush1.bf16.msra.mxu0 0
  %8371 = vmatprep.subr.bf16.mxu0 0
  %8372 = vmatpush1.bf16.msra.mxu0 0
  %8373 = vmatprep.mubr.bf16.mxu0 0
  %8374 = vmatmul.mubr.bf16.gmra.mrb[0].mxu0 %v8339
  %v8375 = vpop.f32.mrb[0].mxu0
  %v8376 = vadd.f32 0.0, %v8375
  %v8377 = vpop.f32.mrb[0].mxu0
  %v8378 = vpop.f32.mrb[0].mxu0
  %v8379 = vpop.f32.mrb[0].mxu0
  %8380 = vdwg.mxu0
  %v8389 = vunpack.c.l.b16 %v8016
  %v8390 = vunpack.c.l.b16 %v8017
  %v8391 = vunpack.c.l.b16 %v8018
  %v8392 = vunpack.c.l.b16 %v8019
  %v8393 = vunpack.c.l.b16 %v8020
  %v8394 = vunpack.c.l.b16 %v8021
  %v8395 = vunpack.c.l.b16 %v8022
  %v8396 = vunpack.c.l.b16 %v8023
  %v8397 = vpack.c.b16 %v8390, %v8389
  %v8398 = vpack.c.b16 %v8392, %v8391
  %v8399 = vpack.c.b16 %v8394, %v8393
  %v8400 = vpack.c.b16 %v8396, %v8395
  %v8406 = vsel %vm8136, %v7972, 0
  %8408 = vmatprep.subr.bf16.mxu0 0
  %8409 = vmatpush1.bf16.msra.mxu0 %v8397
  %8410 = vmatprep.subr.bf16.mxu0 0
  %8411 = vmatpush1.bf16.msra.mxu0 %v8398
  %8412 = vmatprep.subr.bf16.mxu0 0
  %8413 = vmatpush1.bf16.msra.mxu0 %v8399
  %8414 = vmatprep.subr.bf16.mxu0 0
  %8415 = vmatpush1.bf16.msra.mxu0 %v8400
  %8416 = vmatprep.subr.bf16.mxu0 0
  %8417 = vmatpush1.bf16.msra.mxu0 0
  %8418 = vmatprep.subr.bf16.mxu0 0
  %8419 = vmatpush1.bf16.msra.mxu0 0
  %8420 = vmatprep.subr.bf16.mxu0 0
  %8421 = vmatpush1.bf16.msra.mxu0 0
  %8422 = vmatprep.subr.bf16.mxu0 0
  %8423 = vmatpush1.bf16.msra.mxu0 0
  %8424 = vmatprep.subr.bf16.mxu0 0
  %8425 = vmatpush1.bf16.msra.mxu0 0
  %8426 = vmatprep.subr.bf16.mxu0 0
  %8427 = vmatpush1.bf16.msra.mxu0 0
  %8428 = vmatprep.subr.bf16.mxu0 0
  %8429 = vmatpush1.bf16.msra.mxu0 0
  %8430 = vmatprep.subr.bf16.mxu0 0
  %8431 = vmatpush1.bf16.msra.mxu0 0
  %8432 = vmatprep.subr.bf16.mxu0 0
  %8433 = vmatpush1.bf16.msra.mxu0 0
  %8434 = vmatprep.subr.bf16.mxu0 0
  %8435 = vmatpush1.bf16.msra.mxu0 0
  %8436 = vmatprep.subr.bf16.mxu0 0
  %8437 = vmatpush1.bf16.msra.mxu0 0
  %8438 = vmatprep.subr.bf16.mxu0 0
  %8439 = vmatpush1.bf16.msra.mxu0 0
  %8440 = vmatprep.mubr.bf16.mxu0 0
  %8441 = vmatmul.mubr.bf16.gmra.mrb[0].mxu0 %v8406
  %v8442 = vpop.f32.mrb[0].mxu0
  %v8443 = vadd.f32 0.0, %v8442
  %v8444 = vpop.f32.mrb[0].mxu0
  %v8445 = vpop.f32.mrb[0].mxu0
  %v8446 = vpop.f32.mrb[0].mxu0
  %8447 = vdwg.mxu0
  %v8456 = vunpack.c.l.b16 %v8024
  %v8457 = vunpack.c.l.b16 %v8025
  %v8458 = vunpack.c.l.b16 %v8026
  %v8459 = vunpack.c.l.b16 %v8027
  %v8460 = vunpack.c.l.b16 %v8028
  %v8461 = vunpack.c.l.b16 %v8029
  %v8462 = vunpack.c.l.b16 %v8030
  %v8463 = vunpack.c.l.b16 %v8031
  %v8464 = vpack.c.b16 %v8457, %v8456
  %v8465 = vpack.c.b16 %v8459, %v8458
  %v8466 = vpack.c.b16 %v8461, %v8460
  %v8467 = vpack.c.b16 %v8463, %v8462
  %v8473 = vsel %vm8136, %v7973, 0
  %8475 = vmatprep.subr.bf16.mxu0 0
  %8476 = vmatpush1.bf16.msra.mxu0 %v8464
  %8477 = vmatprep.subr.bf16.mxu0 0
  %8478 = vmatpush1.bf16.msra.mxu0 %v8465
  %8479 = vmatprep.subr.bf16.mxu0 0
  %8480 = vmatpush1.bf16.msra.mxu0 %v8466
  %8481 = vmatprep.subr.bf16.mxu0 0
  %8482 = vmatpush1.bf16.msra.mxu0 %v8467
  %8483 = vmatprep.subr.bf16.mxu0 0
  %8484 = vmatpush1.bf16.msra.mxu0 0
  %8485 = vmatprep.subr.bf16.mxu0 0
  %8486 = vmatpush1.bf16.msra.mxu0 0
  %8487 = vmatprep.subr.bf16.mxu0 0
  %8488 = vmatpush1.bf16.msra.mxu0 0
  %8489 = vmatprep.subr.bf16.mxu0 0
  %8490 = vmatpush1.bf16.msra.mxu0 0
  %8491 = vmatprep.subr.bf16.mxu0 0
  %8492 = vmatpush1.bf16.msra.mxu0 0
  %8493 = vmatprep.subr.bf16.mxu0 0
  %8494 = vmatpush1.bf16.msra.mxu0 0
  %8495 = vmatprep.subr.bf16.mxu0 0
  %8496 = vmatpush1.bf16.msra.mxu0 0
  %8497 = vmatprep.subr.bf16.mxu0 0
  %8498 = vmatpush1.bf16.msra.mxu0 0
  %8499 = vmatprep.subr.bf16.mxu0 0
  %8500 = vmatpush1.bf16.msra.mxu0 0
  %8501 = vmatprep.subr.bf16.mxu0 0
  %8502 = vmatpush1.bf16.msra.mxu0 0
  %8503 = vmatprep.subr.bf16.mxu0 0
  %8504 = vmatpush1.bf16.msra.mxu0 0
  %8505 = vmatprep.subr.bf16.mxu0 0
  %8506 = vmatpush1.bf16.msra.mxu0 0
  %8507 = vmatprep.mubr.bf16.mxu0 0
  %8508 = vmatmul.mubr.bf16.gmra.mrb[0].mxu0 %v8473
  %v8509 = vpop.f32.mrb[0].mxu0
  %v8510 = vadd.f32 0.0, %v8509
  %v8511 = vpop.f32.mrb[0].mxu0
  %v8512 = vpop.f32.mrb[0].mxu0
  %v8513 = vpop.f32.mrb[0].mxu0
  %8514 = vdwg.mxu0
  %v8523 = vunpack.c.l.b16 %v8032
  %v8524 = vunpack.c.l.b16 %v8033
  %v8525 = vunpack.c.l.b16 %v8034
  %v8526 = vunpack.c.l.b16 %v8035
  %v8527 = vunpack.c.l.b16 %v8036
  %v8528 = vunpack.c.l.b16 %v8037
  %v8529 = vunpack.c.l.b16 %v8038
  %v8530 = vunpack.c.l.b16 %v8039
  %v8531 = vpack.c.b16 %v8524, %v8523
  %v8532 = vpack.c.b16 %v8526, %v8525
  %v8533 = vpack.c.b16 %v8528, %v8527
  %v8534 = vpack.c.b16 %v8530, %v8529
  %v8540 = vsel %vm8136, %v7974, 0
  %8542 = vmatprep.subr.bf16.mxu0 0
  %8543 = vmatpush1.bf16.msra.mxu0 %v8531
  %8544 = vmatprep.subr.bf16.mxu0 0
  %8545 = vmatpush1.bf16.msra.mxu0 %v8532
  %8546 = vmatprep.subr.bf16.mxu0 0
  %8547 = vmatpush1.bf16.msra.mxu0 %v8533
  %8548 = vmatprep.subr.bf16.mxu0 0
  %8549 = vmatpush1.bf16.msra.mxu0 %v8534
  %8550 = vmatprep.subr.bf16.mxu0 0
  %8551 = vmatpush1.bf16.msra.mxu0 0
  %8552 = vmatprep.subr.bf16.mxu0 0
  %8553 = vmatpush1.bf16.msra.mxu0 0
  %8554 = vmatprep.subr.bf16.mxu0 0
  %8555 = vmatpush1.bf16.msra.mxu0 0
  %8556 = vmatprep.subr.bf16.mxu0 0
  %8557 = vmatpush1.bf16.msra.mxu0 0
  %8558 = vmatprep.subr.bf16.mxu0 0
  %8559 = vmatpush1.bf16.msra.mxu0 0
  %8560 = vmatprep.subr.bf16.mxu0 0
  %8561 = vmatpush1.bf16.msra.mxu0 0
  %8562 = vmatprep.subr.bf16.mxu0 0
  %8563 = vmatpush1.bf16.msra.mxu0 0
  %8564 = vmatprep.subr.bf16.mxu0 0
  %8565 = vmatpush1.bf16.msra.mxu0 0
  %8566 = vmatprep.subr.bf16.mxu0 0
  %8567 = vmatpush1.bf16.msra.mxu0 0
  %8568 = vmatprep.subr.bf16.mxu0 0
  %8569 = vmatpush1.bf16.msra.mxu0 0
  %8570 = vmatprep.subr.bf16.mxu0 0
  %8571 = vmatpush1.bf16.msra.mxu0 0
  %8572 = vmatprep.subr.bf16.mxu0 0
  %8573 = vmatpush1.bf16.msra.mxu0 0
  %8574 = vmatprep.mubr.bf16.mxu0 0
  %8575 = vmatmul.mubr.bf16.gmra.mrb[0].mxu0 %v8540
  %v8576 = vpop.f32.mrb[0].mxu0
  %v8577 = vadd.f32 0.0, %v8576
  %v8578 = vpop.f32.mrb[0].mxu0
  %v8579 = vpop.f32.mrb[0].mxu0
  %v8580 = vpop.f32.mrb[0].mxu0
  %8581 = vdwg.mxu0
  %v8590 = vunpack.c.l.b16 %v8040
  %v8591 = vunpack.c.l.b16 %v8041
  %v8592 = vunpack.c.l.b16 %v8042
  %v8593 = vunpack.c.l.b16 %v8043
  %v8594 = vunpack.c.l.b16 %v8044
  %v8595 = vunpack.c.l.b16 %v8045
  %v8596 = vunpack.c.l.b16 %v8046
  %v8597 = vunpack.c.l.b16 %v8047
  %v8598 = vpack.c.b16 %v8591, %v8590
  %v8599 = vpack.c.b16 %v8593, %v8592
  %v8600 = vpack.c.b16 %v8595, %v8594
  %v8601 = vpack.c.b16 %v8597, %v8596
  %v8607 = vsel %vm8136, %v7975, 0
  %8609 = vmatprep.subr.bf16.mxu0 0
  %8610 = vmatpush1.bf16.msra.mxu0 %v8598
  %8611 = vmatprep.subr.bf16.mxu0 0
  %8612 = vmatpush1.bf16.msra.mxu0 %v8599
  %8613 = vmatprep.subr.bf16.mxu0 0
  %8614 = vmatpush1.bf16.msra.mxu0 %v8600
  %8615 = vmatprep.subr.bf16.mxu0 0
  %8616 = vmatpush1.bf16.msra.mxu0 %v8601
  %8617 = vmatprep.subr.bf16.mxu0 0
  %8618 = vmatpush1.bf16.msra.mxu0 0
  %8619 = vmatprep.subr.bf16.mxu0 0
  %8620 = vmatpush1.bf16.msra.mxu0 0
  %8621 = vmatprep.subr.bf16.mxu0 0
  %8622 = vmatpush1.bf16.msra.mxu0 0
  %8623 = vmatprep.subr.bf16.mxu0 0
  %8624 = vmatpush1.bf16.msra.mxu0 0
  %8625 = vmatprep.subr.bf16.mxu0 0
  %8626 = vmatpush1.bf16.msra.mxu0 0
  %8627 = vmatprep.subr.bf16.mxu0 0
  %8628 = vmatpush1.bf16.msra.mxu0 0
  %8629 = vmatprep.subr.bf16.mxu0 0
  %8630 = vmatpush1.bf16.msra.mxu0 0
  %8631 = vmatprep.subr.bf16.mxu0 0
  %8632 = vmatpush1.bf16.msra.mxu0 0
  %8633 = vmatprep.subr.bf16.mxu0 0
  %8634 = vmatpush1.bf16.msra.mxu0 0
  %8635 = vmatprep.subr.bf16.mxu0 0
  %8636 = vmatpush1.bf16.msra.mxu0 0
  %8637 = vmatprep.subr.bf16.mxu0 0
  %8638 = vmatpush1.bf16.msra.mxu0 0
  %8639 = vmatprep.subr.bf16.mxu0 0
  %8640 = vmatpush1.bf16.msra.mxu0 0
  %8641 = vmatprep.mubr.bf16.mxu0 0
  %8642 = vmatmul.mubr.bf16.gmra.mrb[0].mxu0 %v8607
  %v8643 = vpop.f32.mrb[0].mxu0
  %v8644 = vadd.f32 0.0, %v8643
  %v8645 = vpop.f32.mrb[0].mxu0
  %v8646 = vpop.f32.mrb[0].mxu0
  %v8647 = vpop.f32.mrb[0].mxu0
  %8648 = vdwg.mxu0
  %v8657 = vunpack.c.l.b16 %v8048
  %v8658 = vunpack.c.l.b16 %v8049
  %v8659 = vunpack.c.l.b16 %v8050
  %v8660 = vunpack.c.l.b16 %v8051
  %v8661 = vunpack.c.l.b16 %v8052
  %v8662 = vunpack.c.l.b16 %v8053
  %v8663 = vunpack.c.l.b16 %v8054
  %v8664 = vunpack.c.l.b16 %v8055
  %v8665 = vpack.c.b16 %v8658, %v8657
  %v8666 = vpack.c.b16 %v8660, %v8659
  %v8667 = vpack.c.b16 %v8662, %v8661
  %v8668 = vpack.c.b16 %v8664, %v8663
  %v8674 = vsel %vm8136, %v7976, 0
  %8676 = vmatprep.subr.bf16.mxu0 0
  %8677 = vmatpush1.bf16.msra.mxu0 %v8665
  %8678 = vmatprep.subr.bf16.mxu0 0
  %8679 = vmatpush1.bf16.msra.mxu0 %v8666
  %8680 = vmatprep.subr.bf16.mxu0 0
  %8681 = vmatpush1.bf16.msra.mxu0 %v8667
  %8682 = vmatprep.subr.bf16.mxu0 0
  %8683 = vmatpush1.bf16.msra.mxu0 %v8668
  %8684 = vmatprep.subr.bf16.mxu0 0
  %8685 = vmatpush1.bf16.msra.mxu0 0
  %8686 = vmatprep.subr.bf16.mxu0 0
  %8687 = vmatpush1.bf16.msra.mxu0 0
  %8688 = vmatprep.subr.bf16.mxu0 0
  %8689 = vmatpush1.bf16.msra.mxu0 0
  %8690 = vmatprep.subr.bf16.mxu0 0
  %8691 = vmatpush1.bf16.msra.mxu0 0
  %8692 = vmatprep.subr.bf16.mxu0 0
  %8693 = vmatpush1.bf16.msra.mxu0 0
  %8694 = vmatprep.subr.bf16.mxu0 0
  %8695 = vmatpush1.bf16.msra.mxu0 0
  %8696 = vmatprep.subr.bf16.mxu0 0
  %8697 = vmatpush1.bf16.msra.mxu0 0
  %8698 = vmatprep.subr.bf16.mxu0 0
  %8699 = vmatpush1.bf16.msra.mxu0 0
  %8700 = vmatprep.subr.bf16.mxu0 0
  %8701 = vmatpush1.bf16.msra.mxu0 0
  %8702 = vmatprep.subr.bf16.mxu0 0
  %8703 = vmatpush1.bf16.msra.mxu0 0
  %8704 = vmatprep.subr.bf16.mxu0 0
  %8705 = vmatpush1.bf16.msra.mxu0 0
  %8706 = vmatprep.subr.bf16.mxu0 0
  %8707 = vmatpush1.bf16.msra.mxu0 0
  %8708 = vmatprep.mubr.bf16.mxu0 0
  %8709 = vmatmul.mubr.bf16.gmra.mrb[0].mxu0 %v8674
  %v8710 = vpop.f32.mrb[0].mxu0
  %v8711 = vadd.f32 0.0, %v8710
  %v8712 = vpop.f32.mrb[0].mxu0
  %v8713 = vpop.f32.mrb[0].mxu0
  %v8714 = vpop.f32.mrb[0].mxu0
  %8715 = vdwg.mxu0
  %v8724 = vunpack.c.l.b16 %v8056
  %v8725 = vunpack.c.l.b16 %v8057
  %v8726 = vunpack.c.l.b16 %v8058
  %v8727 = vunpack.c.l.b16 %v8059
  %v8728 = vunpack.c.l.b16 %v8060
  %v8729 = vunpack.c.l.b16 %v8061
  %v8730 = vunpack.c.l.b16 %v8062
  %v8731 = vunpack.c.l.b16 %v8063
  %v8732 = vpack.c.b16 %v8725, %v8724
  %v8733 = vpack.c.b16 %v8727, %v8726
  %v8734 = vpack.c.b16 %v8729, %v8728
  %v8735 = vpack.c.b16 %v8731, %v8730
  %v8741 = vsel %vm8136, %v7977, 0
  %8743 = vmatprep.subr.bf16.mxu0 0
  %8744 = vmatpush1.bf16.msra.mxu0 %v8732
  %8745 = vmatprep.subr.bf16.mxu0 0
  %8746 = vmatpush1.bf16.msra.mxu0 %v8733
  %8747 = vmatprep.subr.bf16.mxu0 0
  %8748 = vmatpush1.bf16.msra.mxu0 %v8734
  %8749 = vmatprep.subr.bf16.mxu0 0
  %8750 = vmatpush1.bf16.msra.mxu0 %v8735
  %8751 = vmatprep.subr.bf16.mxu0 0
  %8752 = vmatpush1.bf16.msra.mxu0 0
  %8753 = vmatprep.subr.bf16.mxu0 0
  %8754 = vmatpush1.bf16.msra.mxu0 0
  %8755 = vmatprep.subr.bf16.mxu0 0
  %8756 = vmatpush1.bf16.msra.mxu0 0
  %8757 = vmatprep.subr.bf16.mxu0 0
  %8758 = vmatpush1.bf16.msra.mxu0 0
  %8759 = vmatprep.subr.bf16.mxu0 0
  %8760 = vmatpush1.bf16.msra.mxu0 0
  %8761 = vmatprep.subr.bf16.mxu0 0
  %8762 = vmatpush1.bf16.msra.mxu0 0
  %8763 = vmatprep.subr.bf16.mxu0 0
  %8764 = vmatpush1.bf16.msra.mxu0 0
  %8765 = vmatprep.subr.bf16.mxu0 0
  %8766 = vmatpush1.bf16.msra.mxu0 0
  %8767 = vmatprep.subr.bf16.mxu0 0
  %8768 = vmatpush1.bf16.msra.mxu0 0
  %8769 = vmatprep.subr.bf16.mxu0 0
  %8770 = vmatpush1.bf16.msra.mxu0 0
  %8771 = vmatprep.subr.bf16.mxu0 0
  %8772 = vmatpush1.bf16.msra.mxu0 0
  %8773 = vmatprep.subr.bf16.mxu0 0
  %8774 = vmatpush1.bf16.msra.mxu0 0
  %8775 = vmatprep.mubr.bf16.mxu0 0
  %8776 = vmatmul.mubr.bf16.gmra.mrb[0].mxu0 %v8741
  %v8777 = vpop.f32.mrb[0].mxu0
  %v8778 = vadd.f32 0.0, %v8777
  %v8779 = vpop.f32.mrb[0].mxu0
  %v8780 = vpop.f32.mrb[0].mxu0
  %v8781 = vpop.f32.mrb[0].mxu0
  %8782 = vdwg.mxu0
  %v8791 = vunpack.c.l.b16 %v8064
  %v8792 = vunpack.c.l.b16 %v8065
  %v8793 = vunpack.c.l.b16 %v8066
  %v8794 = vunpack.c.l.b16 %v8067
  %v8795 = vunpack.c.l.b16 %v8068
  %v8796 = vunpack.c.l.b16 %v8069
  %v8797 = vunpack.c.l.b16 %v8070
  %v8798 = vunpack.c.l.b16 %v8071
  %v8799 = vpack.c.b16 %v8792, %v8791
  %v8800 = vpack.c.b16 %v8794, %v8793
  %v8801 = vpack.c.b16 %v8796, %v8795
  %v8802 = vpack.c.b16 %v8798, %v8797
  %v8808 = vsel %vm8136, %v7978, 0
  %8810 = vmatprep.subr.bf16.mxu0 0
  %8811 = vmatpush1.bf16.msra.mxu0 %v8799
  %8812 = vmatprep.subr.bf16.mxu0 0
  %8813 = vmatpush1.bf16.msra.mxu0 %v8800
  %8814 = vmatprep.subr.bf16.mxu0 0
  %8815 = vmatpush1.bf16.msra.mxu0 %v8801
  %8816 = vmatprep.subr.bf16.mxu0 0
  %8817 = vmatpush1.bf16.msra.mxu0 %v8802
  %8818 = vmatprep.subr.bf16.mxu0 0
  %8819 = vmatpush1.bf16.msra.mxu0 0
  %8820 = vmatprep.subr.bf16.mxu0 0
  %8821 = vmatpush1.bf16.msra.mxu0 0
  %8822 = vmatprep.subr.bf16.mxu0 0
  %8823 = vmatpush1.bf16.msra.mxu0 0
  %8824 = vmatprep.subr.bf16.mxu0 0
  %8825 = vmatpush1.bf16.msra.mxu0 0
  %8826 = vmatprep.subr.bf16.mxu0 0
  %8827 = vmatpush1.bf16.msra.mxu0 0
  %8828 = vmatprep.subr.bf16.mxu0 0
  %8829 = vmatpush1.bf16.msra.mxu0 0
  %8830 = vmatprep.subr.bf16.mxu0 0
  %8831 = vmatpush1.bf16.msra.mxu0 0
  %8832 = vmatprep.subr.bf16.mxu0 0
  %8833 = vmatpush1.bf16.msra.mxu0 0
  %8834 = vmatprep.subr.bf16.mxu0 0
  %8835 = vmatpush1.bf16.msra.mxu0 0
  %8836 = vmatprep.subr.bf16.mxu0 0
  %8837 = vmatpush1.bf16.msra.mxu0 0
  %8838 = vmatprep.subr.bf16.mxu0 0
  %8839 = vmatpush1.bf16.msra.mxu0 0
  %8840 = vmatprep.subr.bf16.mxu0 0
  %8841 = vmatpush1.bf16.msra.mxu0 0
  %8842 = vmatprep.mubr.bf16.mxu0 0
  %8843 = vmatmul.mubr.bf16.gmra.mrb[0].mxu0 %v8808
  %v8844 = vpop.f32.mrb[0].mxu0
  %v8845 = vadd.f32 0.0, %v8844
  %v8846 = vpop.f32.mrb[0].mxu0
  %v8847 = vpop.f32.mrb[0].mxu0
  %v8848 = vpop.f32.mrb[0].mxu0
  %8849 = vdwg.mxu0
  %v8858 = vunpack.c.l.b16 %v8072
  %v8859 = vunpack.c.l.b16 %v8073
  %v8860 = vunpack.c.l.b16 %v8074
  %v8861 = vunpack.c.l.b16 %v8075
  %v8862 = vunpack.c.l.b16 %v8076
  %v8863 = vunpack.c.l.b16 %v8077
  %v8864 = vunpack.c.l.b16 %v8078
  %v8865 = vunpack.c.l.b16 %v8079
  %v8866 = vpack.c.b16 %v8859, %v8858
  %v8867 = vpack.c.b16 %v8861, %v8860
  %v8868 = vpack.c.b16 %v8863, %v8862
  %v8869 = vpack.c.b16 %v8865, %v8864
  %v8875 = vsel %vm8136, %v7979, 0
  %8877 = vmatprep.subr.bf16.mxu0 0
  %8878 = vmatpush1.bf16.msra.mxu0 %v8866
  %8879 = vmatprep.subr.bf16.mxu0 0
  %8880 = vmatpush1.bf16.msra.mxu0 %v8867
  %8881 = vmatprep.subr.bf16.mxu0 0
  %8882 = vmatpush1.bf16.msra.mxu0 %v8868
  %8883 = vmatprep.subr.bf16.mxu0 0
  %8884 = vmatpush1.bf16.msra.mxu0 %v8869
  %8885 = vmatprep.subr.bf16.mxu0 0
  %8886 = vmatpush1.bf16.msra.mxu0 0
  %8887 = vmatprep.subr.bf16.mxu0 0
  %8888 = vmatpush1.bf16.msra.mxu0 0
  %8889 = vmatprep.subr.bf16.mxu0 0
  %8890 = vmatpush1.bf16.msra.mxu0 0
  %8891 = vmatprep.subr.bf16.mxu0 0
  %8892 = vmatpush1.bf16.msra.mxu0 0
  %8893 = vmatprep.subr.bf16.mxu0 0
  %8894 = vmatpush1.bf16.msra.mxu0 0
  %8895 = vmatprep.subr.bf16.mxu0 0
  %8896 = vmatpush1.bf16.msra.mxu0 0
  %8897 = vmatprep.subr.bf16.mxu0 0
  %8898 = vmatpush1.bf16.msra.mxu0 0
  %8899 = vmatprep.subr.bf16.mxu0 0
  %8900 = vmatpush1.bf16.msra.mxu0 0
  %8901 = vmatprep.subr.bf16.mxu0 0
  %8902 = vmatpush1.bf16.msra.mxu0 0
  %8903 = vmatprep.subr.bf16.mxu0 0
  %8904 = vmatpush1.bf16.msra.mxu0 0
  %8905 = vmatprep.subr.bf16.mxu0 0
  %8906 = vmatpush1.bf16.msra.mxu0 0
  %8907 = vmatprep.subr.bf16.mxu0 0
  %8908 = vmatpush1.bf16.msra.mxu0 0
  %8909 = vmatprep.mubr.bf16.mxu0 0
  %8910 = vmatmul.mubr.bf16.gmra.mrb[0].mxu0 %v8875
  %v8911 = vpop.f32.mrb[0].mxu0
  %v8912 = vadd.f32 0.0, %v8911
  %v8913 = vpop.f32.mrb[0].mxu0
  %v8914 = vpop.f32.mrb[0].mxu0
  %v8915 = vpop.f32.mrb[0].mxu0
  %8916 = vdwg.mxu0
  %v8925 = vunpack.c.l.b16 %v8080
  %v8926 = vunpack.c.l.b16 %v8081
  %v8927 = vunpack.c.l.b16 %v8082
  %v8928 = vunpack.c.l.b16 %v8083
  %v8929 = vunpack.c.l.b16 %v8084
  %v8930 = vunpack.c.l.b16 %v8085
  %v8931 = vunpack.c.l.b16 %v8086
  %v8932 = vunpack.c.l.b16 %v8087
  %v8933 = vpack.c.b16 %v8926, %v8925
  %v8934 = vpack.c.b16 %v8928, %v8927
  %v8935 = vpack.c.b16 %v8930, %v8929
  %v8936 = vpack.c.b16 %v8932, %v8931
  %v8942 = vsel %vm8136, %v7980, 0
  %8944 = vmatprep.subr.bf16.mxu0 0
  %8945 = vmatpush1.bf16.msra.mxu0 %v8933
  %8946 = vmatprep.subr.bf16.mxu0 0
  %8947 = vmatpush1.bf16.msra.mxu0 %v8934
  %8948 = vmatprep.subr.bf16.mxu0 0
  %8949 = vmatpush1.bf16.msra.mxu0 %v8935
  %8950 = vmatprep.subr.bf16.mxu0 0
  %8951 = vmatpush1.bf16.msra.mxu0 %v8936
  %8952 = vmatprep.subr.bf16.mxu0 0
  %8953 = vmatpush1.bf16.msra.mxu0 0
  %8954 = vmatprep.subr.bf16.mxu0 0
  %8955 = vmatpush1.bf16.msra.mxu0 0
  %8956 = vmatprep.subr.bf16.mxu0 0
  %8957 = vmatpush1.bf16.msra.mxu0 0
  %8958 = vmatprep.subr.bf16.mxu0 0
  %8959 = vmatpush1.bf16.msra.mxu0 0
  %8960 = vmatprep.subr.bf16.mxu0 0
  %8961 = vmatpush1.bf16.msra.mxu0 0
  %8962 = vmatprep.subr.bf16.mxu0 0
  %8963 = vmatpush1.bf16.msra.mxu0 0
  %8964 = vmatprep.subr.bf16.mxu0 0
  %8965 = vmatpush1.bf16.msra.mxu0 0
  %8966 = vmatprep.subr.bf16.mxu0 0
  %8967 = vmatpush1.bf16.msra.mxu0 0
  %8968 = vmatprep.subr.bf16.mxu0 0
  %8969 = vmatpush1.bf16.msra.mxu0 0
  %8970 = vmatprep.subr.bf16.mxu0 0
  %8971 = vmatpush1.bf16.msra.mxu0 0
  %8972 = vmatprep.subr.bf16.mxu0 0
  %8973 = vmatpush1.bf16.msra.mxu0 0
  %8974 = vmatprep.subr.bf16.mxu0 0
  %8975 = vmatpush1.bf16.msra.mxu0 0
  %8976 = vmatprep.mubr.bf16.mxu0 0
  %8977 = vmatmul.mubr.bf16.gmra.mrb[0].mxu0 %v8942
  %v8978 = vpop.f32.mrb[0].mxu0
  %v8979 = vadd.f32 0.0, %v8978
  %v8980 = vpop.f32.mrb[0].mxu0
  %v8981 = vpop.f32.mrb[0].mxu0
  %v8982 = vpop.f32.mrb[0].mxu0
  %8983 = vdwg.mxu0
  %v8992 = vunpack.c.l.b16 %v8088
  %v8993 = vunpack.c.l.b16 %v8089
  %v8994 = vunpack.c.l.b16 %v8090
  %v8995 = vunpack.c.l.b16 %v8091
  %v8996 = vunpack.c.l.b16 %v8092
  %v8997 = vunpack.c.l.b16 %v8093
  %v8998 = vunpack.c.l.b16 %v8094
  %v8999 = vunpack.c.l.b16 %v8095
  %v9000 = vpack.c.b16 %v8993, %v8992
  %v9001 = vpack.c.b16 %v8995, %v8994
  %v9002 = vpack.c.b16 %v8997, %v8996
  %v9003 = vpack.c.b16 %v8999, %v8998
  %v9009 = vsel %vm8136, %v7981, 0
  %9011 = vmatprep.subr.bf16.mxu0 0
  %9012 = vmatpush1.bf16.msra.mxu0 %v9000
  %9013 = vmatprep.subr.bf16.mxu0 0
  %9014 = vmatpush1.bf16.msra.mxu0 %v9001
  %9015 = vmatprep.subr.bf16.mxu0 0
  %9016 = vmatpush1.bf16.msra.mxu0 %v9002
  %9017 = vmatprep.subr.bf16.mxu0 0
  %9018 = vmatpush1.bf16.msra.mxu0 %v9003
  %9019 = vmatprep.subr.bf16.mxu0 0
  %9020 = vmatpush1.bf16.msra.mxu0 0
  %9021 = vmatprep.subr.bf16.mxu0 0
  %9022 = vmatpush1.bf16.msra.mxu0 0
  %9023 = vmatprep.subr.bf16.mxu0 0
  %9024 = vmatpush1.bf16.msra.mxu0 0
  %9025 = vmatprep.subr.bf16.mxu0 0
  %9026 = vmatpush1.bf16.msra.mxu0 0
  %9027 = vmatprep.subr.bf16.mxu0 0
  %9028 = vmatpush1.bf16.msra.mxu0 0
  %9029 = vmatprep.subr.bf16.mxu0 0
  %9030 = vmatpush1.bf16.msra.mxu0 0
  %9031 = vmatprep.subr.bf16.mxu0 0
  %9032 = vmatpush1.bf16.msra.mxu0 0
  %9033 = vmatprep.subr.bf16.mxu0 0
  %9034 = vmatpush1.bf16.msra.mxu0 0
  %9035 = vmatprep.subr.bf16.mxu0 0
  %9036 = vmatpush1.bf16.msra.mxu0 0
  %9037 = vmatprep.subr.bf16.mxu0 0
  %9038 = vmatpush1.bf16.msra.mxu0 0
  %9039 = vmatprep.subr.bf16.mxu0 0
  %9040 = vmatpush1.bf16.msra.mxu0 0
  %9041 = vmatprep.subr.bf16.mxu0 0
  %9042 = vmatpush1.bf16.msra.mxu0 0
  %9043 = vmatprep.mubr.bf16.mxu0 0
  %9044 = vmatmul.mubr.bf16.gmra.mrb[0].mxu0 %v9009
  %v9045 = vpop.f32.mrb[0].mxu0
  %v9046 = vadd.f32 0.0, %v9045
  %v9047 = vpop.f32.mrb[0].mxu0
  %v9048 = vpop.f32.mrb[0].mxu0
  %v9049 = vpop.f32.mrb[0].mxu0
  %9050 = vdwg.mxu0
  %v9059 = vunpack.c.l.b16 %v8096
  %v9060 = vunpack.c.l.b16 %v8097
  %v9061 = vunpack.c.l.b16 %v8098
  %v9062 = vunpack.c.l.b16 %v8099
  %v9063 = vunpack.c.l.b16 %v8100
  %v9064 = vunpack.c.l.b16 %v8101
  %v9065 = vunpack.c.l.b16 %v8102
  %v9066 = vunpack.c.l.b16 %v8103
  %v9067 = vpack.c.b16 %v9060, %v9059
  %v9068 = vpack.c.b16 %v9062, %v9061
  %v9069 = vpack.c.b16 %v9064, %v9063
  %v9070 = vpack.c.b16 %v9066, %v9065
  %v9076 = vsel %vm8136, %v7982, 0
  %9078 = vmatprep.subr.bf16.mxu0 0
  %9079 = vmatpush1.bf16.msra.mxu0 %v9067
  %9080 = vmatprep.subr.bf16.mxu0 0
  %9081 = vmatpush1.bf16.msra.mxu0 %v9068
  %9082 = vmatprep.subr.bf16.mxu0 0
  %9083 = vmatpush1.bf16.msra.mxu0 %v9069
  %9084 = vmatprep.subr.bf16.mxu0 0
  %9085 = vmatpush1.bf16.msra.mxu0 %v9070
  %9086 = vmatprep.subr.bf16.mxu0 0
  %9087 = vmatpush1.bf16.msra.mxu0 0
  %9088 = vmatprep.subr.bf16.mxu0 0
  %9089 = vmatpush1.bf16.msra.mxu0 0
  %9090 = vmatprep.subr.bf16.mxu0 0
  %9091 = vmatpush1.bf16.msra.mxu0 0
  %9092 = vmatprep.subr.bf16.mxu0 0
  %9093 = vmatpush1.bf16.msra.mxu0 0
  %9094 = vmatprep.subr.bf16.mxu0 0
  %9095 = vmatpush1.bf16.msra.mxu0 0
  %9096 = vmatprep.subr.bf16.mxu0 0
  %9097 = vmatpush1.bf16.msra.mxu0 0
  %9098 = vmatprep.subr.bf16.mxu0 0
  %9099 = vmatpush1.bf16.msra.mxu0 0
  %9100 = vmatprep.subr.bf16.mxu0 0
  %9101 = vmatpush1.bf16.msra.mxu0 0
  %9102 = vmatprep.subr.bf16.mxu0 0
  %9103 = vmatpush1.bf16.msra.mxu0 0
  %9104 = vmatprep.subr.bf16.mxu0 0
  %9105 = vmatpush1.bf16.msra.mxu0 0
  %9106 = vmatprep.subr.bf16.mxu0 0
  %9107 = vmatpush1.bf16.msra.mxu0 0
  %9108 = vmatprep.subr.bf16.mxu0 0
  %9109 = vmatpush1.bf16.msra.mxu0 0
  %9110 = vmatprep.mubr.bf16.mxu0 0
  %9111 = vmatmul.mubr.bf16.gmra.mrb[0].mxu0 %v9076
  %v9112 = vpop.f32.mrb[0].mxu0
  %v9113 = vadd.f32 0.0, %v9112
  %v9114 = vpop.f32.mrb[0].mxu0
  %v9115 = vpop.f32.mrb[0].mxu0
  %v9116 = vpop.f32.mrb[0].mxu0
  %9117 = vdwg.mxu0
  %v9126 = vunpack.c.l.b16 %v8104
  %v9127 = vunpack.c.l.b16 %v8105
  %v9128 = vunpack.c.l.b16 %v8106
  %v9129 = vunpack.c.l.b16 %v8107
  %v9130 = vunpack.c.l.b16 %v8108
  %v9131 = vunpack.c.l.b16 %v8109
  %v9132 = vunpack.c.l.b16 %v8110
  %v9133 = vunpack.c.l.b16 %v8111
  %v9134 = vpack.c.b16 %v9127, %v9126
  %v9135 = vpack.c.b16 %v9129, %v9128
  %v9136 = vpack.c.b16 %v9131, %v9130
  %v9137 = vpack.c.b16 %v9133, %v9132
  %v9143 = vsel %vm8136, %v7983, 0
  %9145 = vmatprep.subr.bf16.mxu0 0
  %9146 = vmatpush1.bf16.msra.mxu0 %v9134
  %9147 = vmatprep.subr.bf16.mxu0 0
  %9148 = vmatpush1.bf16.msra.mxu0 %v9135
  %9149 = vmatprep.subr.bf16.mxu0 0
  %9150 = vmatpush1.bf16.msra.mxu0 %v9136
  %9151 = vmatprep.subr.bf16.mxu0 0
  %9152 = vmatpush1.bf16.msra.mxu0 %v9137
  %9153 = vmatprep.subr.bf16.mxu0 0
  %9154 = vmatpush1.bf16.msra.mxu0 0
  %9155 = vmatprep.subr.bf16.mxu0 0
  %9156 = vmatpush1.bf16.msra.mxu0 0
  %9157 = vmatprep.subr.bf16.mxu0 0
  %9158 = vmatpush1.bf16.msra.mxu0 0
  %9159 = vmatprep.subr.bf16.mxu0 0
  %9160 = vmatpush1.bf16.msra.mxu0 0
  %9161 = vmatprep.subr.bf16.mxu0 0
  %9162 = vmatpush1.bf16.msra.mxu0 0
  %9163 = vmatprep.subr.bf16.mxu0 0
  %9164 = vmatpush1.bf16.msra.mxu0 0
  %9165 = vmatprep.subr.bf16.mxu0 0
  %9166 = vmatpush1.bf16.msra.mxu0 0
  %9167 = vmatprep.subr.bf16.mxu0 0
  %9168 = vmatpush1.bf16.msra.mxu0 0
  %9169 = vmatprep.subr.bf16.mxu0 0
  %9170 = vmatpush1.bf16.msra.mxu0 0
  %9171 = vmatprep.subr.bf16.mxu0 0
  %9172 = vmatpush1.bf16.msra.mxu0 0
  %9173 = vmatprep.subr.bf16.mxu0 0
  %9174 = vmatpush1.bf16.msra.mxu0 0
  %9175 = vmatprep.subr.bf16.mxu0 0
  %9176 = vmatpush1.bf16.msra.mxu0 0
  %9177 = vmatprep.mubr.bf16.mxu0 0
  %9178 = vmatmul.mubr.bf16.gmra.mrb[0].mxu0 %v9143
  %v9179 = vpop.f32.mrb[0].mxu0
  %v9180 = vadd.f32 0.0, %v9179
  %v9181 = vpop.f32.mrb[0].mxu0
  %v9182 = vpop.f32.mrb[0].mxu0
  %v9183 = vpop.f32.mrb[0].mxu0
  %9184 = vdwg.mxu0
  %v9185 = vadd.f32 %v8175, %v8242
  %v9186 = vadd.f32 %v9185, %v8309
  %v9187 = vadd.f32 %v9186, %v8376
  %v9188 = vadd.f32 %v9187, %v8443
  %v9189 = vadd.f32 %v9188, %v8510
  %v9190 = vadd.f32 %v9189, %v8577
  %v9191 = vadd.f32 %v9190, %v8644
  %v9192 = vadd.f32 %v9191, %v8711
  %v9193 = vadd.f32 %v9192, %v8778
  %v9194 = vadd.f32 %v9193, %v8845
  %v9195 = vadd.f32 %v9194, %v8912
  %v9196 = vadd.f32 %v9195, %v8979
  %v9197 = vadd.f32 %v9196, %v9046
  %v9198 = vadd.f32 %v9197, %v9113
  %v9199 = vadd.f32 %v9198, %v9180
  %v9200 = vld [vmem:[%s7] sm:$0x1]
  %v9202 = vlaneseq
  %v9203 = vshrl.u32 %v9202, 7
  %v9204 = vsub.s32 0, %v9203
  %v9205 = vrot.slane %v9200, %v9204
  %v9207 = vadd.f32 %v9199, %v9205
  %vm9208 = vcmp.gt.f32.partialorder %v9207, 0.0
  %v9209 = vmul.f32 %v9207, 0.33
  %v9210 = vsel %vm9208, %v9207, %v9209
  %v9211 = vpack.c.bf16 %v9210, %v9210
  %v9212 = vld [vmem:[%s8] sm:$0xff]
  %v9213 = vld [vmem:[%s8 + $0x8] sm:$0xff]
  %v9214 = vld [vmem:[%s8 + $0x10] sm:$0xff]
  %v9215 = vld [vmem:[%s8 + $0x18] sm:$0xff]
  %v9216 = vld [vmem:[%s8 + $0x20] sm:$0xff]
  %v9217 = vld [vmem:[%s8 + $0x28] sm:$0xff]
  %v9218 = vld [vmem:[%s8 + $0x30] sm:$0xff]
  %v9219 = vld [vmem:[%s8 + $0x38] sm:$0xff]
  %v9220 = vld [vmem:[%s8 + $0x40] sm:$0xff]
  %v9221 = vld [vmem:[%s8 + $0x48] sm:$0xff]
  %v9222 = vld [vmem:[%s8 + $0x50] sm:$0xff]
  %v9223 = vld [vmem:[%s8 + $0x58] sm:$0xff]
  %v9224 = vld [vmem:[%s8 + $0x60] sm:$0xff]
  %v9225 = vld [vmem:[%s8 + $0x68] sm:$0xff]
  %v9226 = vld [vmem:[%s8 + $0x70] sm:$0xff]
  %v9227 = vld [vmem:[%s8 + $0x78] sm:$0xff]
  %v9228 = vld [vmem:[%s9] sm:$0x3]
  %v9230 = vlaneseq
  %v9231 = vshrl.u32 %v9230, 7
  %v9232 = vsub.s32 0, %v9231
  %v9233 = vrot.slane %v9228, %v9232
  %v9234 = vlaneseq
  %v9235 = vshrl.u32 %v9234, 7
  %v9236 = vsub.s32 1, %v9235
  %v9237 = vrot.slane %v9228, %v9236
  %v9256 = vunpack.c.l.b16 %v9212
  %v9257 = vunpack.c.h.b16 %v9212
  %v9258 = vunpack.c.l.b16 %v9213
  %v9259 = vunpack.c.h.b16 %v9213
  %v9260 = vunpack.c.l.b16 %v9214
  %v9261 = vunpack.c.h.b16 %v9214
  %v9262 = vunpack.c.l.b16 %v9215
  %v9263 = vunpack.c.h.b16 %v9215
  %v9264 = vunpack.c.l.b16 %v9216
  %v9265 = vunpack.c.h.b16 %v9216
  %v9266 = vunpack.c.l.b16 %v9217
  %v9267 = vunpack.c.h.b16 %v9217
  %v9268 = vunpack.c.l.b16 %v9218
  %v9269 = vunpack.c.h.b16 %v9218
  %v9270 = vunpack.c.l.b16 %v9219
  %v9271 = vunpack.c.h.b16 %v9219
  %v9272 = vunpack.c.l.b16 %v9220
  %v9273 = vunpack.c.h.b16 %v9220
  %v9274 = vunpack.c.l.b16 %v9221
  %v9275 = vunpack.c.h.b16 %v9221
  %v9276 = vunpack.c.l.b16 %v9222
  %v9277 = vunpack.c.h.b16 %v9222
  %v9278 = vunpack.c.l.b16 %v9223
  %v9279 = vunpack.c.h.b16 %v9223
  %v9280 = vunpack.c.l.b16 %v9224
  %v9281 = vunpack.c.h.b16 %v9224
  %v9282 = vunpack.c.l.b16 %v9225
  %v9283 = vunpack.c.h.b16 %v9225
  %v9284 = vunpack.c.l.b16 %v9226
  %v9285 = vunpack.c.h.b16 %v9226
  %v9286 = vunpack.c.l.b16 %v9227
  %v9287 = vunpack.c.h.b16 %v9227
  %v9288 = vpack.c.b16 %v9258, %v9256
  %v9289 = vpack.c.b16 %v9259, %v9257
  %v9290 = vpack.c.b16 %v9262, %v9260
  %v9291 = vpack.c.b16 %v9263, %v9261
  %v9292 = vpack.c.b16 %v9266, %v9264
  %v9293 = vpack.c.b16 %v9267, %v9265
  %v9294 = vpack.c.b16 %v9270, %v9268
  %v9295 = vpack.c.b16 %v9271, %v9269
  %v9296 = vpack.c.b16 %v9274, %v9272
  %v9297 = vpack.c.b16 %v9275, %v9273
  %v9298 = vpack.c.b16 %v9278, %v9276
  %v9299 = vpack.c.b16 %v9279, %v9277
  %v9300 = vpack.c.b16 %v9282, %v9280
  %v9301 = vpack.c.b16 %v9283, %v9281
  %v9302 = vpack.c.b16 %v9286, %v9284
  %v9303 = vpack.c.b16 %v9287, %v9285
  %9320 = vmatprep.subr.bf16.mxu0 %v9289
  %9321 = vmatpush1.bf16.msra.mxu0 %v9288
  %9322 = vmatprep.subr.bf16.mxu0 %v9291
  %9323 = vmatpush1.bf16.msra.mxu0 %v9290
  %9324 = vmatprep.subr.bf16.mxu0 %v9293
  %9325 = vmatpush1.bf16.msra.mxu0 %v9292
  %9326 = vmatprep.subr.bf16.mxu0 %v9295
  %9327 = vmatpush1.bf16.msra.mxu0 %v9294
  %9328 = vmatprep.subr.bf16.mxu0 %v9297
  %9329 = vmatpush1.bf16.msra.mxu0 %v9296
  %9330 = vmatprep.subr.bf16.mxu0 %v9299
  %9331 = vmatpush1.bf16.msra.mxu0 %v9298
  %9332 = vmatprep.subr.bf16.mxu0 %v9301
  %9333 = vmatpush1.bf16.msra.mxu0 %v9300
  %9334 = vmatprep.subr.bf16.mxu0 %v9303
  %9335 = vmatpush1.bf16.msra.mxu0 %v9302
  %9336 = vmatprep.subr.bf16.mxu0 0
  %9337 = vmatpush1.bf16.msra.mxu0 0
  %9338 = vmatprep.subr.bf16.mxu0 0
  %9339 = vmatpush1.bf16.msra.mxu0 0
  %9340 = vmatprep.subr.bf16.mxu0 0
  %9341 = vmatpush1.bf16.msra.mxu0 0
  %9342 = vmatprep.subr.bf16.mxu0 0
  %9343 = vmatpush1.bf16.msra.mxu0 0
  %9344 = vmatprep.subr.bf16.mxu0 0
  %9345 = vmatpush1.bf16.msra.mxu0 0
  %9346 = vmatprep.subr.bf16.mxu0 0
  %9347 = vmatpush1.bf16.msra.mxu0 0
  %9348 = vmatprep.subr.bf16.mxu0 0
  %9349 = vmatpush1.bf16.msra.mxu0 0
  %9350 = vmatprep.subr.bf16.mxu0 0
  %9351 = vmatpush1.bf16.msra.mxu0 0
  %9352 = vmatprep.mubr.bf16.mxu0 0
  %9353 = vmatmul.mubr.bf16.gmra.mrb[0].mxu0 %v9211
  %v9354 = vpop.f32.mrb[0].mxu0
  %v9355 = vadd.f32 %v9233, %v9354
  %v9356 = vpop.f32.mrb[0].mxu0
  %v9357 = vadd.f32 %v9237, %v9356
  %v9358 = vpop.f32.mrb[0].mxu0
  %v9359 = vpop.f32.mrb[0].mxu0
  %9360 = vdwg.mxu0
  %vm9361 = vcmp.gt.f32.partialorder %v9355, 0.0
  %vm9362 = vcmp.gt.f32.partialorder %v9357, 0.0
  %v9363 = vmul.f32 %v9355, 0.33
  %v9364 = vmul.f32 %v9357, 0.33
  %v9365 = vsel %vm9361, %v9355, %v9363
  %v9366 = vsel %vm9362, %v9357, %v9364
  %9367 = vst [vmem:[%s13] sm:$0xff] %v9365
  %9368 = vst [vmem:[%s13 + $0x8] sm:$0xff] %v9366
  %v9369 = vld [vmem:[%s10] sm:$0x3]
  %v9371 = vlaneseq
  %v9372 = vshrl.u32 %v9371, 7
  %v9373 = vsub.s32 0, %v9372
  %v9374 = vrot.slane %v9369, %v9373
  %v9375 = vlaneseq
  %v9376 = vshrl.u32 %v9375, 7
  %v9377 = vsub.s32 1, %v9376
  %v9378 = vrot.slane %v9369, %v9377
  %v9381 = vmul.f32 %v9365, %v9374
  %v9382 = vmul.f32 %v9366, %v9378
  %v9383 = vadd.f32 %v9381, %v9382
  %9384 = vadd.xlane.f32.xlu0 %v9383
  %v9385 = vpop.xlane.xlu0 %9384
  %v9386 = vld [vmem:[#allocation2] sm:$0x1]
  %v9388 = vlaneseq
  %v9389 = vshrl.u32 %v9388, 7
  %v9390 = vsub.s32 0, %v9389
  %v9391 = vrot.slane %v9386, %v9390
  %v9393 = vadd.f32 %v9385, %v9391
  %v9394 = vxor.u32 %v9393, 2147483648
  %v9395 = vmul.f32 %v9394, 1.442695
  %v9396 = vpow.pop %v9395
  %v9397 = vadd.f32 %v9396, 1.0
  %v9398 = vrcp.pop %v9397
  %v9399 = vmul.f32 1.0, %v9398
  %vm9400 = vcmask 7168
  %9401 = vst.msk [vmem:[%s12] sm:$0xff] %vm9400, %v9399
  // Predicated region
  $region50: #{brainnet_forward.1} parent=0 // pred_check
    _
  $region51: #{brainnet_forward.1} parent=0 // pred_check_branch
    %9403 = sbr.rel (0) target = $region53
  $region52: #{brainnet_forward.1} parent=0 // pred_region
    _
  $region53: #{brainnet_forward.1} parent=0 // pred_fallthru
    _
  // Predicated region
  $region54: #{brainnet_forward.1} parent=0 // pred_check
    _
  $region55: #{brainnet_forward.1} parent=0 // pred_check_branch
    %9405 = sbr.rel (0) target = $region57
  $region56: #{brainnet_forward.1} parent=0 // pred_region
    _
  $region57: #{brainnet_forward.1} parent=0 // pred_fallthru
    _
  // Predicated region
  $region58: #{brainnet_forward.1} parent=0 // pred_check
    _
  $region59: #{brainnet_forward.1} parent=0 // pred_check_branch
    %9407 = sbr.rel (0) target = $region61
  $region60: #{brainnet_forward.1} parent=0 // pred_region
    _
  $region61: #{brainnet_forward.1} parent=0 // pred_fallthru
    _
  // Predicated region
  $region62: #{brainnet_forward.1} parent=0 // pred_check
    _
  $region63: #{brainnet_forward.1} parent=0 // pred_check_branch
    %9409 = sbr.rel (0) target = $region65
  $region64: #{brainnet_forward.1} parent=0 // pred_region
    _
  $region65: #{brainnet_forward.1} parent=0 // pred_fallthru
    _

</llo_original>
